<compile_context>
chip_gen: v7x
topology: tpu7x:2x2x1
jax: 0.10.0
libtpu: 0.0.40
codegen_flags: <defaults>
</compile_context>

<pallas_src>
import functools

import jax
import jax.numpy as jnp
from jax import lax
from jax.experimental import pallas as pl
from jax.experimental.pallas import tpu as pltpu

NEG_FILL = -99999.9
LANE = 128


def _ceil_to(x, m):
    return ((x + m - 1) // m) * m


# ----------------------------------------------------------------------------
# Fused rollout kernel.  Grid axis = block of K rollout steps ("arbitrary").
# Per step: stacked LSTM reasoner (fused [x|h] matmul) -> policy MLP (fused
# [h|q] matmul) -> VPU action scoring -> masked softmax / entropy / CE loss ->
# Gumbel-max categorical sample -> chosen action embedding becomes next step's
# prev_action (kept in VMEM scratch across the whole grid).
# ----------------------------------------------------------------------------
def rollout_kernel(q_ref, wl_ref, bl_ref, w1_ref, b1_ref, w2_ref, b2_ref,
                   nr_ref, mask_ref, gum_ref,
                   out_ref,
                   h_s, c_s, prev_s, xh_s,
                   *, num_layers, hp, steps_per_block):
    tb = pl.program_id(0)

    @pl.when(tb == 0)
    def _init():
        h_s[...] = jnp.zeros_like(h_s)
        c_s[...] = jnp.zeros_like(c_s)
        prev_s[...] = jnp.zeros_like(prev_s)   # prev_action = zeros_like(q_emb)

    bsz = out_ref.shape[1]
    lanes = out_ref.shape[2]
    ap = mask_ref.shape[2]

    for kk in range(steps_per_block):          # small K, fully unrolled
        # ---- stacked LSTM ("reasoner"): one K=2Hp matmul per layer ----------
        x = prev_s[...]                                    # [B, Hp] f32
        for l in range(num_layers):
            xh_s[:, 0:hp] = x.astype(xh_s.dtype)
            xh_s[:, hp:2 * hp] = h_s[l].astype(xh_s.dtype)
            gates = (jnp.dot(xh_s[...], wl_ref[l],
                             preferred_element_type=jnp.float32)
                     + bl_ref[l])                          # [B, 4Hp] f32
            # torch.nn.LSTMCell gate order: i, f, g, o
            i_g = jax.nn.sigmoid(gates[:, 0 * hp:1 * hp])
            f_g = jax.nn.sigmoid(gates[:, 1 * hp:2 * hp])
            g_g = jnp.tanh(gates[:, 2 * hp:3 * hp])
            o_g = jax.nn.sigmoid(gates[:, 3 * hp:4 * hp])
            c_new = f_g * c_s[l] + i_g * g_g
            h_new = o_g * jnp.tanh(c_new)
            h_s[l] = h_new
            c_s[l] = c_new
            x = h_new                                      # input to next layer

        # ---- policy MLP: [h_last|q] @ W1 -> ReLU -> @ W2 (dropout = 0.0) ----
        xh_s[:, 0:hp] = x.astype(xh_s.dtype)
        xh_s[:, hp:2 * hp] = q_ref[...]
        x1 = (jnp.dot(xh_s[...], w1_ref[...],
                      preferred_element_type=jnp.float32) + b1_ref[...])
        x1 = jnp.maximum(x1, 0.0)
        out = (jnp.dot(x1.astype(w2_ref.dtype), w2_ref[...],
                       preferred_element_type=jnp.float32) + b2_ref[...])  # [B, Hp]

        # ---- action scoring: VPU broadcast-multiply + lane reduce ----------
        nr = nr_ref[kk]                                    # [B, Ap, Hp] bf16
        scores = jnp.sum(out[:, None, :] * nr, axis=-1)    # [B, Ap] f32
        maskf = mask_ref[kk]                               # [B, Ap]  1.0 == invalid
        scores = jnp.where(maskf > 0.5, NEG_FILL, scores)  # masked_fill

        m = jnp.max(scores, axis=-1, keepdims=True)
        ex = jnp.exp(scores - m)
        den = jnp.sum(ex, axis=-1, keepdims=True)
        logp = (scores - m) - jnp.log(den)                 # log_softmax
        probs = ex / den                                    # softmax
        ent_keep = jnp.sum(-probs * logp, axis=-1, keepdims=True)     # [B, 1]

        # ---- Categorical(logits=scores).sample() via Gumbel-max ------------
        z = scores + gum_ref[kk]                           # precomputed Gumbel noise
        zmax = jnp.max(z, axis=-1, keepdims=True)
        idx = lax.broadcasted_iota(jnp.int32, (bsz, ap), 1)
        cand = jnp.where(z >= zmax, idx.astype(jnp.float32), jnp.float32(ap))
        choice_f = jnp.min(cand, axis=-1, keepdims=True)   # [B, 1] float index
        choice_i = choice_f.astype(jnp.int32)
        onehot = (idx == choice_i).astype(jnp.float32)     # [B, Ap]

        # cross_entropy(action_scores, chosen_action, reduction='none')
        loss_keep = -jnp.sum(onehot * logp, axis=-1, keepdims=True)   # [B, 1]

        # chosen action embedding -> prev_action for the next step (VPU select)
        prev_s[...] = jnp.sum(onehot[:, :, None] * nr, axis=1)        # [B, Hp] f32

        # ---- merged lane-dense output: lane0=loss, lane1=entropy, lane2=action
        lane_idx = lax.broadcasted_iota(jnp.int32, (bsz, lanes), 1)
        merged = (jnp.where(lane_idx == 0, loss_keep, 0.0)
                  + jnp.where(lane_idx == 1, ent_keep, 0.0)
                  + jnp.where(lane_idx == 2, choice_f, 0.0))
        out_ref[kk] = merged


# ----------------------------------------------------------------------------
# Wrapper: single pallas_call for the whole rollout; glue (bulk bf16 embedding
# gather, padding, Gumbel noise, chosen e/r gathers) stays in plain JAX.
# ----------------------------------------------------------------------------
def minerva_forward(pparams, start_e, q, e2, next_rs_all, next_es_all,
                    mask_all, sample_key):
    del start_e, e2   # only consumed by the external KB lookup in the original
    S, B, A = next_rs_all.shape
    Hp = pparams["hp"]
    Dp = pparams["dp"]
    L = pparams["num_layers"]
    Ap = _ceil_to(max(A, LANE), LANE)

    r_emb_p = pparams["r_emb_p"]                            # [R, Hp] bf16
    q_emb = jnp.take(r_emb_p, q, axis=0)                    # [B, Hp] bf16

    # lane-dense action axis; padded action slots are masked invalid
    pad_a = Ap - A
    next_rs_p = jnp.pad(next_rs_all, ((0, 0), (0, 0), (0, pad_a)))
    maskf = jnp.pad(mask_all.astype(jnp.float32), ((0, 0), (0, 0), (0, pad_a)),
                    constant_values=1.0)
    next_r_all = jnp.take(r_emb_p, next_rs_p, axis=0)       # [S, B, Ap, Hp] bf16

    # precomputed Gumbel noise for in-kernel categorical sampling (interp-safe)
    gumbel = jax.random.gumbel(sample_key, (S, B, Ap), jnp.float32)

    # rollout steps per grid iteration (amortizes per-grid-step overhead)
    K = 1
    for cand in (8, 4, 2, 1):
        if S % cand == 0:
            K = cand
            break

    # explicit scoped-VMEM budget (streamed blocks double-buffered + weights)
    stream = 2 * (K * B * Ap * Hp * 2 + 2 * K * B * Ap * 4 + K * B * LANE * 4)
    weights = 2 * (L * 2 * Hp * 4 * Hp * 2 + L * 4 * Hp * 4
                   + 2 * Hp * Dp * 2 + Dp * 4 + Dp * Hp * 2 + Hp * 4 + B * Hp * 2)
    scratch = (2 * L * B * Hp + B * Hp) * 4 + B * 2 * Hp * 2
    vmem_limit = int(min(max(2 * (stream + weights + scratch), 8 << 20), 32 << 20))

    kern = functools.partial(rollout_kernel, num_layers=L, hp=Hp,
                             steps_per_block=K)
    merged = pl.pallas_call(
        kern,
        grid=(S // K,),
        out_shape=jax.ShapeDtypeStruct((S, B, LANE), jnp.float32),
        in_specs=[
            pl.BlockSpec((B, Hp), lambda t: (0, 0)),                 # q_emb (bf16)
            pl.BlockSpec((L, 2 * Hp, 4 * Hp), lambda t: (0, 0, 0)),  # fused [W_ih;W_hh]
            pl.BlockSpec((L, 1, 4 * Hp), lambda t: (0, 0, 0)),       # b_ih + b_hh
            pl.BlockSpec((2 * Hp, Dp), lambda t: (0, 0)),            # W1 (fused)
            pl.BlockSpec((1, Dp), lambda t: (0, 0)),                 # b1
            pl.BlockSpec((Dp, Hp), lambda t: (0, 0)),                # W2
            pl.BlockSpec((1, Hp), lambda t: (0, 0)),                 # b2
            pl.BlockSpec((K, B, Ap, Hp), lambda t: (t, 0, 0, 0)),    # next_r (bf16)
            pl.BlockSpec((K, B, Ap), lambda t: (t, 0, 0)),           # mask
            pl.BlockSpec((K, B, Ap), lambda t: (t, 0, 0)),           # gumbel noise
        ],
        out_specs=pl.BlockSpec((K, B, LANE), lambda t: (t, 0, 0)),
        scratch_shapes=[pltpu.VMEM((L, B, Hp), jnp.float32),   # h
                        pltpu.VMEM((L, B, Hp), jnp.float32),   # c
                        pltpu.VMEM((B, Hp), jnp.float32),      # prev_action
                        pltpu.VMEM((B, 2 * Hp), jnp.bfloat16)],  # [x|h] / [h|q] concat
        compiler_params=pltpu.CompilerParams(
            dimension_semantics=("arbitrary",),
            vmem_limit_bytes=vmem_limit),
    )(q_emb, pparams["w_lstm_p"], pparams["b_lstm_p"],
      pparams["w1_p"], pparams["b1_p"], pparams["w2_p"], pparams["b2_p"],
      next_r_all, maskf, gumbel)

    losses = merged[..., 0]                                           # [S, B]
    entropies = jnp.mean(merged[..., 1], axis=-1)                     # [S]  (= entropy.sum(1).mean())
    chosen = merged[..., 2].astype(jnp.int32)                         # [S, B]
    chosen_e = jnp.take_along_axis(next_es_all, chosen[..., None], axis=-1)[..., 0]
    chosen_r = jnp.take_along_axis(next_rs_all, chosen[..., None], axis=-1)[..., 0]
    return losses, chosen_r, chosen_e, entropies


# ----------------------------------------------------------------------------
# Parameter init (shapes follow Minerva.__init__ with hidden = embedding = H)
# and one-time host-side padding / fusing / bf16 casting for the kernel.
# ----------------------------------------------------------------------------
def init_params(key, r_vocab, H, L):
    ks = jax.random.split(key, 10)
    bound = (6.0 / (r_vocab + H)) ** 0.5                  # xavier_uniform
    r_emb = jax.random.uniform(ks[0], (r_vocab, H), jnp.float32, -bound, bound)
    r_emb = r_emb.at[0].set(0.0)                          # padding_idx = 0

    s = 1.0 / (H ** 0.5)                                  # torch LSTMCell default
    wih = jax.random.uniform(ks[1], (L, H, 4 * H), jnp.float32, -s, s)   # pre-transposed
    whh = jax.random.uniform(ks[2], (L, H, 4 * H), jnp.float32, -s, s)
    bih = jax.random.uniform(ks[3], (L, 1, 4 * H), jnp.float32, -s, s)
    bhh = jax.random.uniform(ks[4], (L, 1, 4 * H), jnp.float32, -s, s)

    s1 = 1.0 / ((2 * H) ** 0.5)                           # policy MLP
    w1 = jax.random.uniform(ks[5], (2 * H, 2 * H), jnp.float32, -s1, s1)
    b1 = jax.random.uniform(ks[6], (1, 2 * H), jnp.float32, -s1, s1)
    w2 = jax.random.uniform(ks[7], (2 * H, H), jnp.float32, -s1, s1)
    b2 = jax.random.uniform(ks[8], (1, H), jnp.float32, -s1, s1)

    return dict(hidden=H, num_layers=L, r_emb=r_emb,
                wih=wih, whh=whh, bih=bih, bhh=bhh,
                w1=w1, b1=b1, w2=w2, b2=b2)


def prepare_padded_params(params):
    """Pad feature dims to 128 lanes, fuse [W_ih;W_hh] and [W1_state;W1_q] for
    K=2Hp MXU contractions, combine LSTM biases, cast matmul operands to bf16.
    Zero padding keeps forward numerics identical on the real slots (padded h/c
    columns stay exactly 0 through every step)."""
    H = params["hidden"]
    L = params["num_layers"]
    Hp = _ceil_to(max(H, LANE), LANE)
    Dp = _ceil_to(max(2 * H, LANE), LANE)

    def pad_gate_cols(w):                    # [..., 4H] -> [..., 4Hp] (i,f,g,o blocks)
        lead = w.shape[:-1]
        w4 = w.reshape(lead + (4, H))
        out = jnp.zeros(lead + (4, Hp), w.dtype).at[..., :H].set(w4)
        return out.reshape(lead + (4 * Hp,))

    wih_c = pad_gate_cols(params["wih"])     # [L, H, 4Hp]
    whh_c = pad_gate_cols(params["whh"])
    # fused weight for [x | h] input: rows 0:H <- W_ih, rows Hp:Hp+H <- W_hh
    w_lstm = jnp.zeros((L, 2 * Hp, 4 * Hp), jnp.float32)
    w_lstm = w_lstm.at[:, :H, :].set(wih_c)
    w_lstm = w_lstm.at[:, Hp:Hp + H, :].set(whh_c)
    b_lstm_p = pad_gate_cols(params["bih"] + params["bhh"])   # [L, 1, 4Hp]

    w1 = params["w1"]                        # [2H, 2H] rows = [policy_state; q]
    w1_p = jnp.zeros((2 * Hp, Dp), jnp.float32)
    w1_p = w1_p.at[:H, :2 * H].set(w1[:H])
    w1_p = w1_p.at[Hp:Hp + H, :2 * H].set(w1[H:])
    b1_p = jnp.zeros((1, Dp), jnp.float32).at[:, :2 * H].set(params["b1"])
    w2_p = jnp.zeros((Dp, Hp), jnp.float32).at[:2 * H, :H].set(params["w2"])
    b2_p = jnp.zeros((1, Hp), jnp.float32).at[:, :H].set(params["b2"])

    r_emb = params["r_emb"]
    r_emb_p = jnp.zeros((r_emb.shape[0], Hp), jnp.float32).at[:, :H].set(r_emb)

    return dict(hp=Hp, dp=Dp, num_layers=L,
                w_lstm_p=w_lstm.astype(jnp.bfloat16),
                b_lstm_p=b_lstm_p,
                w1_p=w1_p.astype(jnp.bfloat16), b1_p=b1_p,
                w2_p=w2_p.astype(jnp.bfloat16), b2_p=b2_p,
                r_emb_p=r_emb_p.astype(jnp.bfloat16))


if __name__ == "__main__":
    B, H, L, A = 8, 32, 2, 8          # full_batch_size, hidden, num_layers, max_num_actions
    NUM_STEPS = 2
    R_VOCAB, E_VOCAB = 16, 20

    key = jax.random.PRNGKey(0)
    k_param, k_in, k_sample = jax.random.split(key, 3)
    params = init_params(k_param, R_VOCAB, H, L)
    pparams = prepare_padded_params(params)

    kin = jax.random.split(k_in, 6)
    start_e = jax.random.randint(kin[0], (B,), 1, E_VOCAB, jnp.int32)
    q = jax.random.randint(kin[1], (B,), 1, R_VOCAB, jnp.int32)
    e2 = jax.random.randint(kin[2], (B,), 1, E_VOCAB, jnp.int32)
    # synthetic KB candidate actions / masks per step (stand-in for KB.get_next_e_r_masked)
    next_rs_all = jax.random.randint(kin[3], (NUM_STEPS, B, A), 1, R_VOCAB, jnp.int32)
    next_es_all = jax.random.randint(kin[4], (NUM_STEPS, B, A), 1, E_VOCAB, jnp.int32)
    mask_all = jax.random.bernoulli(kin[5], 0.3, (NUM_STEPS, B, A))
    mask_all = mask_all.at[:, :, 0].set(False)    # keep >=1 valid action per row

    losses, chosen_r, chosen_e, entropies = minerva_forward(
        pparams, start_e, q, e2, next_rs_all, next_es_all, mask_all, k_sample)

    losses = jax.block_until_ready(losses)        # [num_steps, B]
    entropies = jax.block_until_ready(entropies)  # [num_steps]
    chosen_r = jax.block_until_ready(chosen_r)
    chosen_e = jax.block_until_ready(chosen_e)

    # per-step lists mirroring Minerva.forward's training-branch return structure
    loss_list = [losses[t] for t in range(NUM_STEPS)]
    chosen_er = [(chosen_r[t], chosen_e[t]) for t in range(NUM_STEPS)]
    entropy_values = [entropies[t] for t in range(NUM_STEPS)]

    assert losses.shape == (NUM_STEPS, B) and bool(jnp.all(jnp.isfinite(losses)))
    assert entropies.shape == (NUM_STEPS,) and bool(jnp.all(jnp.isfinite(entropies)))
    assert bool(jnp.all((chosen_r >= 1) & (chosen_r < R_VOCAB)))
    assert bool(jnp.all((chosen_e >= 1) & (chosen_e < E_VOCAB)))
    print("KERNEL_OK")
</pallas_src>

<mosaic_0001>
module attributes {stable_mosaic.version = 11 : i64} {
  func.func @rollout_kernel(%arg0: i32, %arg1: memref<8x128xbf16, #tpu.memory_space<vmem>>, %arg2: memref<2x256x512xbf16, #tpu.memory_space<vmem>>, %arg3: memref<2x1x512xf32, #tpu.memory_space<vmem>>, %arg4: memref<256x128xbf16, #tpu.memory_space<vmem>>, %arg5: memref<1x128xf32, #tpu.memory_space<vmem>>, %arg6: memref<128x128xbf16, #tpu.memory_space<vmem>>, %arg7: memref<1x128xf32, #tpu.memory_space<vmem>>, %arg8: memref<2x8x128x128xbf16, #tpu.memory_space<vmem>>, %arg9: memref<2x8x128xf32, #tpu.memory_space<vmem>>, %arg10: memref<2x8x128xf32, #tpu.memory_space<vmem>>, %arg11: memref<2x8x128xf32, #tpu.memory_space<vmem>>, %arg12: memref<2x8x128xf32, #tpu.memory_space<vmem>>, %arg13: memref<2x8x128xf32, #tpu.memory_space<vmem>>, %arg14: memref<8x128xf32, #tpu.memory_space<vmem>>, %arg15: memref<8x256xbf16, #tpu.memory_space<vmem>>) attributes {dimension_semantics = [#tpu.dimension_semantics<arbitrary>], iteration_bounds = array<i64: 1>, scalar_prefetch = 0 : i64, scratch_operands = 4 : i64, tpu.core_type = #tpu.core_type<tc>, window_params = [{pipeline_mode = #tpu.pipeline_mode<synchronous>, transform_indices = @transform_0, window_bounds = array<i64: 8, 128>}, {pipeline_mode = #tpu.pipeline_mode<synchronous>, transform_indices = @transform_1, window_bounds = array<i64: 2, 256, 512>}, {pipeline_mode = #tpu.pipeline_mode<synchronous>, transform_indices = @transform_2, window_bounds = array<i64: 2, 1, 512>}, {pipeline_mode = #tpu.pipeline_mode<synchronous>, transform_indices = @transform_3, window_bounds = array<i64: 256, 128>}, {pipeline_mode = #tpu.pipeline_mode<synchronous>, transform_indices = @transform_4, window_bounds = array<i64: 1, 128>}, {pipeline_mode = #tpu.pipeline_mode<synchronous>, transform_indices = @transform_5, window_bounds = array<i64: 128, 128>}, {pipeline_mode = #tpu.pipeline_mode<synchronous>, transform_indices = @transform_6, window_bounds = array<i64: 1, 128>}, {transform_indices = @transform_7, window_bounds = array<i64: 2, 8, 128, 128>}, {transform_indices = @transform_8, window_bounds = array<i64: 2, 8, 128>}, {transform_indices = @transform_9, window_bounds = array<i64: 2, 8, 128>}, {transform_indices = @transform_10, window_bounds = array<i64: 2, 8, 128>}]} {
    %c0_i32 = arith.constant 0 : i32
    %0 = arith.cmpi eq, %arg0, %c0_i32 : i32
    %1 = arith.extui %0 : i1 to i32
    %c0_i32_0 = arith.constant 0 : i32
    %2 = arith.cmpi ne, %1, %c0_i32_0 : i32
    scf.if %2 {
      %cst_217 = arith.constant 0.000000e+00 : f32
      %399 = vector.broadcast %cst_217 : f32 to vector<2x8x128xf32>
      %c0_218 = arith.constant 0 : index
      %c0_219 = arith.constant 0 : index
      %c0_220 = arith.constant 0 : index
      %400 = vector.load %arg12[%c0_218, %c0_219, %c0_220] : memref<2x8x128xf32, #tpu.memory_space<vmem>>, vector<2x8x128xf32>
      tpu.vector_store %arg12[%c0_218, %c0_219, %c0_220], %399 {strides = array<i32>} : memref<2x8x128xf32, #tpu.memory_space<vmem>>, vector<2x8x128xf32>,
      %cst_221 = arith.constant 0.000000e+00 : f32
      %401 = vector.broadcast %cst_221 : f32 to vector<2x8x128xf32>
      %c0_222 = arith.constant 0 : index
      %c0_223 = arith.constant 0 : index
      %c0_224 = arith.constant 0 : index
      %402 = vector.load %arg13[%c0_222, %c0_223, %c0_224] : memref<2x8x128xf32, #tpu.memory_space<vmem>>, vector<2x8x128xf32>
      tpu.vector_store %arg13[%c0_222, %c0_223, %c0_224], %401 {strides = array<i32>} : memref<2x8x128xf32, #tpu.memory_space<vmem>>, vector<2x8x128xf32>,
      %cst_225 = arith.constant 0.000000e+00 : f32
      %403 = vector.broadcast %cst_225 : f32 to vector<8x128xf32>
      %c0_226 = arith.constant 0 : index
      %c0_227 = arith.constant 0 : index
      %404 = vector.load %arg14[%c0_226, %c0_227] : memref<8x128xf32, #tpu.memory_space<vmem>>, vector<8x128xf32>
      tpu.vector_store %arg14[%c0_226, %c0_227], %403 {strides = array<i32>} : memref<8x128xf32, #tpu.memory_space<vmem>>, vector<8x128xf32>,
    } else {
    }
    %c0 = arith.constant 0 : index
    %c0_1 = arith.constant 0 : index
    %3 = vector.load %arg14[%c0, %c0_1] : memref<8x128xf32, #tpu.memory_space<vmem>>, vector<8x128xf32>
    %4 = arith.truncf %3 : vector<8x128xf32> to vector<8x128xbf16>
    %c0_2 = arith.constant 0 : index
    %c0_3 = arith.constant 0 : index
    %5 = vector.load %arg15[%c0_2, %c0_3] : memref<8x256xbf16, #tpu.memory_space<vmem>>, vector<8x128xbf16>
    tpu.vector_store %arg15[%c0_2, %c0_3], %4 {strides = array<i32>} : memref<8x256xbf16, #tpu.memory_space<vmem>>, vector<8x128xbf16>,
    %c0_4 = arith.constant 0 : index
    %c0_5 = arith.constant 0 : index
    %c0_6 = arith.constant 0 : index
    %6 = vector.load %arg12[%c0_4, %c0_5, %c0_6] : memref<2x8x128xf32, #tpu.memory_space<vmem>>, vector<1x8x128xf32>
    %7 = vector.shape_cast %6 : vector<1x8x128xf32> to vector<8x128xf32>
    %8 = arith.truncf %7 : vector<8x128xf32> to vector<8x128xbf16>
    %c0_7 = arith.constant 0 : index
    %c128 = arith.constant 128 : index
    %9 = vector.load %arg15[%c0_7, %c128] : memref<8x256xbf16, #tpu.memory_space<vmem>>, vector<8x128xbf16>
    tpu.vector_store %arg15[%c0_7, %c128], %8 {strides = array<i32>} : memref<8x256xbf16, #tpu.memory_space<vmem>>, vector<8x128xbf16>,
    %c0_8 = arith.constant 0 : index
    %c0_9 = arith.constant 0 : index
    %10 = vector.load %arg15[%c0_8, %c0_9] : memref<8x256xbf16, #tpu.memory_space<vmem>>, vector<8x256xbf16>
    %c0_10 = arith.constant 0 : index
    %c0_11 = arith.constant 0 : index
    %c0_12 = arith.constant 0 : index
    %11 = vector.load %arg2[%c0_10, %c0_11, %c0_12] : memref<2x256x512xbf16, #tpu.memory_space<vmem>>, vector<1x256x512xbf16>
    %12 = vector.shape_cast %11 : vector<1x256x512xbf16> to vector<256x512xbf16>
    %cst = arith.constant dense<0.000000e+00> : vector<8x512xf32>
    %13 = tpu.matmul %10, %12, %cst {dimension_numbers = #tpu.dot_dimension_numbers<[1], [0], [0], [1], [0, 0, 1, 1], [], []>} : vector<8x256xbf16>, vector<256x512xbf16>, vector<8x512xf32> -> vector<8x512xf32>
    %c0_13 = arith.constant 0 : index
    %c0_14 = arith.constant 0 : index
    %c0_15 = arith.constant 0 : index
    %14 = vector.load %arg3[%c0_13, %c0_14, %c0_15] : memref<2x1x512xf32, #tpu.memory_space<vmem>>, vector<1x1x512xf32>
    %15 = vector.shape_cast %14 : vector<1x1x512xf32> to vector<1x512xf32>
    %16 = vector.broadcast %15 : vector<1x512xf32> to vector<8x512xf32>
    %17 = arith.addf %13, %16 : vector<8x512xf32>
    %18 = vector.extract_strided_slice %17 {offsets = [0, 0], sizes = [8, 128], strides = [1, 1]} : vector<8x512xf32> to vector<8x128xf32>
    %19 = arith.negf %18 : vector<8x128xf32>
    %20 = math.exp %19 : vector<8x128xf32>
    %cst_16 = arith.constant 1.000000e+00 : f32
    %21 = vector.broadcast %cst_16 : f32 to vector<8x128xf32>
    %22 = arith.addf %21, %20 : vector<8x128xf32>
    %23 = arith.divf %21, %22 : vector<8x128xf32>
    %24 = vector.extract_strided_slice %17 {offsets = [0, 128], sizes = [8, 128], strides = [1, 1]} : vector<8x512xf32> to vector<8x128xf32>
    %25 = arith.negf %24 : vector<8x128xf32>
    %26 = math.exp %25 : vector<8x128xf32>
    %cst_17 = arith.constant 1.000000e+00 : f32
    %27 = vector.broadcast %cst_17 : f32 to vector<8x128xf32>
    %28 = arith.addf %27, %26 : vector<8x128xf32>
    %29 = arith.divf %27, %28 : vector<8x128xf32>
    %30 = vector.extract_strided_slice %17 {offsets = [0, 256], sizes = [8, 128], strides = [1, 1]} : vector<8x512xf32> to vector<8x128xf32>
    %31 = math.tanh %30 : vector<8x128xf32>
    %32 = vector.extract_strided_slice %17 {offsets = [0, 384], sizes = [8, 128], strides = [1, 1]} : vector<8x512xf32> to vector<8x128xf32>
    %33 = arith.negf %32 : vector<8x128xf32>
    %34 = math.exp %33 : vector<8x128xf32>
    %cst_18 = arith.constant 1.000000e+00 : f32
    %35 = vector.broadcast %cst_18 : f32 to vector<8x128xf32>
    %36 = arith.addf %35, %34 : vector<8x128xf32>
    %37 = arith.divf %35, %36 : vector<8x128xf32>
    %c0_19 = arith.constant 0 : index
    %c0_20 = arith.constant 0 : index
    %c0_21 = arith.constant 0 : index
    %38 = vector.load %arg13[%c0_19, %c0_20, %c0_21] : memref<2x8x128xf32, #tpu.memory_space<vmem>>, vector<1x8x128xf32>
    %39 = vector.shape_cast %38 : vector<1x8x128xf32> to vector<8x128xf32>
    %40 = arith.mulf %29, %39 : vector<8x128xf32>
    %41 = arith.mulf %23, %31 : vector<8x128xf32>
    %42 = arith.addf %40, %41 : vector<8x128xf32>
    %43 = math.tanh %42 : vector<8x128xf32>
    %44 = arith.mulf %37, %43 : vector<8x128xf32>
    %c0_22 = arith.constant 0 : index
    %c0_23 = arith.constant 0 : index
    %c0_24 = arith.constant 0 : index
    %45 = vector.load %arg12[%c0_22, %c0_23, %c0_24] : memref<2x8x128xf32, #tpu.memory_space<vmem>>, vector<1x8x128xf32>
    %46 = vector.shape_cast %45 : vector<1x8x128xf32> to vector<8x128xf32>
    %47 = vector.shape_cast %44 : vector<8x128xf32> to vector<1x8x128xf32>
    tpu.vector_store %arg12[%c0_22, %c0_23, %c0_24], %47 {strides = array<i32>} : memref<2x8x128xf32, #tpu.memory_space<vmem>>, vector<1x8x128xf32>,
    %c0_25 = arith.constant 0 : index
    %c0_26 = arith.constant 0 : index
    %c0_27 = arith.constant 0 : index
    %48 = vector.load %arg13[%c0_25, %c0_26, %c0_27] : memref<2x8x128xf32, #tpu.memory_space<vmem>>, vector<1x8x128xf32>
    %49 = vector.shape_cast %48 : vector<1x8x128xf32> to vector<8x128xf32>
    %50 = vector.shape_cast %42 : vector<8x128xf32> to vector<1x8x128xf32>
    tpu.vector_store %arg13[%c0_25, %c0_26, %c0_27], %50 {strides = array<i32>} : memref<2x8x128xf32, #tpu.memory_space<vmem>>, vector<1x8x128xf32>,
    %51 = arith.truncf %44 : vector<8x128xf32> to vector<8x128xbf16>
    %c0_28 = arith.constant 0 : index
    %c0_29 = arith.constant 0 : index
    %52 = vector.load %arg15[%c0_28, %c0_29] : memref<8x256xbf16, #tpu.memory_space<vmem>>, vector<8x128xbf16>
    tpu.vector_store %arg15[%c0_28, %c0_29], %51 {strides = array<i32>} : memref<8x256xbf16, #tpu.memory_space<vmem>>, vector<8x128xbf16>,
    %c1 = arith.constant 1 : index
    %c0_30 = arith.constant 0 : index
    %c0_31 = arith.constant 0 : index
    %53 = vector.load %arg12[%c1, %c0_30, %c0_31] : memref<2x8x128xf32, #tpu.memory_space<vmem>>, vector<1x8x128xf32>
    %54 = vector.shape_cast %53 : vector<1x8x128xf32> to vector<8x128xf32>
    %55 = arith.truncf %54 : vector<8x128xf32> to vector<8x128xbf16>
    %c0_32 = arith.constant 0 : index
    %c128_33 = arith.constant 128 : index
    %56 = vector.load %arg15[%c0_32, %c128_33] : memref<8x256xbf16, #tpu.memory_space<vmem>>, vector<8x128xbf16>
    tpu.vector_store %arg15[%c0_32, %c128_33], %55 {strides = array<i32>} : memref<8x256xbf16, #tpu.memory_space<vmem>>, vector<8x128xbf16>,
    %c0_34 = arith.constant 0 : index
    %c0_35 = arith.constant 0 : index
    %57 = vector.load %arg15[%c0_34, %c0_35] : memref<8x256xbf16, #tpu.memory_space<vmem>>, vector<8x256xbf16>
    %c1_36 = arith.constant 1 : index
    %c0_37 = arith.constant 0 : index
    %c0_38 = arith.constant 0 : index
    %58 = vector.load %arg2[%c1_36, %c0_37, %c0_38] : memref<2x256x512xbf16, #tpu.memory_space<vmem>>, vector<1x256x512xbf16>
    %59 = vector.shape_cast %58 : vector<1x256x512xbf16> to vector<256x512xbf16>
    %cst_39 = arith.constant dense<0.000000e+00> : vector<8x512xf32>
    %60 = tpu.matmul %57, %59, %cst_39 {dimension_numbers = #tpu.dot_dimension_numbers<[1], [0], [0], [1], [0, 0, 1, 1], [], []>} : vector<8x256xbf16>, vector<256x512xbf16>, vector<8x512xf32> -> vector<8x512xf32>
    %c1_40 = arith.constant 1 : index
    %c0_41 = arith.constant 0 : index
    %c0_42 = arith.constant 0 : index
    %61 = vector.load %arg3[%c1_40, %c0_41, %c0_42] : memref<2x1x512xf32, #tpu.memory_space<vmem>>, vector<1x1x512xf32>
    %62 = vector.shape_cast %61 : vector<1x1x512xf32> to vector<1x512xf32>
    %63 = vector.broadcast %62 : vector<1x512xf32> to vector<8x512xf32>
    %64 = arith.addf %60, %63 : vector<8x512xf32>
    %65 = vector.extract_strided_slice %64 {offsets = [0, 0], sizes = [8, 128], strides = [1, 1]} : vector<8x512xf32> to vector<8x128xf32>
    %66 = arith.negf %65 : vector<8x128xf32>
    %67 = math.exp %66 : vector<8x128xf32>
    %cst_43 = arith.constant 1.000000e+00 : f32
    %68 = vector.broadcast %cst_43 : f32 to vector<8x128xf32>
    %69 = arith.addf %68, %67 : vector<8x128xf32>
    %70 = arith.divf %68, %69 : vector<8x128xf32>
    %71 = vector.extract_strided_slice %64 {offsets = [0, 128], sizes = [8, 128], strides = [1, 1]} : vector<8x512xf32> to vector<8x128xf32>
    %72 = arith.negf %71 : vector<8x128xf32>
    %73 = math.exp %72 : vector<8x128xf32>
    %cst_44 = arith.constant 1.000000e+00 : f32
    %74 = vector.broadcast %cst_44 : f32 to vector<8x128xf32>
    %75 = arith.addf %74, %73 : vector<8x128xf32>
    %76 = arith.divf %74, %75 : vector<8x128xf32>
    %77 = vector.extract_strided_slice %64 {offsets = [0, 256], sizes = [8, 128], strides = [1, 1]} : vector<8x512xf32> to vector<8x128xf32>
    %78 = math.tanh %77 : vector<8x128xf32>
    %79 = vector.extract_strided_slice %64 {offsets = [0, 384], sizes = [8, 128], strides = [1, 1]} : vector<8x512xf32> to vector<8x128xf32>
    %80 = arith.negf %79 : vector<8x128xf32>
    %81 = math.exp %80 : vector<8x128xf32>
    %cst_45 = arith.constant 1.000000e+00 : f32
    %82 = vector.broadcast %cst_45 : f32 to vector<8x128xf32>
    %83 = arith.addf %82, %81 : vector<8x128xf32>
    %84 = arith.divf %82, %83 : vector<8x128xf32>
    %c1_46 = arith.constant 1 : index
    %c0_47 = arith.constant 0 : index
    %c0_48 = arith.constant 0 : index
    %85 = vector.load %arg13[%c1_46, %c0_47, %c0_48] : memref<2x8x128xf32, #tpu.memory_space<vmem>>, vector<1x8x128xf32>
    %86 = vector.shape_cast %85 : vector<1x8x128xf32> to vector<8x128xf32>
    %87 = arith.mulf %76, %86 : vector<8x128xf32>
    %88 = arith.mulf %70, %78 : vector<8x128xf32>
    %89 = arith.addf %87, %88 : vector<8x128xf32>
    %90 = math.tanh %89 : vector<8x128xf32>
    %91 = arith.mulf %84, %90 : vector<8x128xf32>
    %c1_49 = arith.constant 1 : index
    %c0_50 = arith.constant 0 : index
    %c0_51 = arith.constant 0 : index
    %92 = vector.load %arg12[%c1_49, %c0_50, %c0_51] : memref<2x8x128xf32, #tpu.memory_space<vmem>>, vector<1x8x128xf32>
    %93 = vector.shape_cast %92 : vector<1x8x128xf32> to vector<8x128xf32>
    %94 = vector.shape_cast %91 : vector<8x128xf32> to vector<1x8x128xf32>
    tpu.vector_store %arg12[%c1_49, %c0_50, %c0_51], %94 {strides = array<i32>} : memref<2x8x128xf32, #tpu.memory_space<vmem>>, vector<1x8x128xf32>,
    %c1_52 = arith.constant 1 : index
    %c0_53 = arith.constant 0 : index
    %c0_54 = arith.constant 0 : index
    %95 = vector.load %arg13[%c1_52, %c0_53, %c0_54] : memref<2x8x128xf32, #tpu.memory_space<vmem>>, vector<1x8x128xf32>
    %96 = vector.shape_cast %95 : vector<1x8x128xf32> to vector<8x128xf32>
    %97 = vector.shape_cast %89 : vector<8x128xf32> to vector<1x8x128xf32>
    tpu.vector_store %arg13[%c1_52, %c0_53, %c0_54], %97 {strides = array<i32>} : memref<2x8x128xf32, #tpu.memory_space<vmem>>, vector<1x8x128xf32>,
    %98 = arith.truncf %91 : vector<8x128xf32> to vector<8x128xbf16>
    %c0_55 = arith.constant 0 : index
    %c0_56 = arith.constant 0 : index
    %99 = vector.load %arg15[%c0_55, %c0_56] : memref<8x256xbf16, #tpu.memory_space<vmem>>, vector<8x128xbf16>
    tpu.vector_store %arg15[%c0_55, %c0_56], %98 {strides = array<i32>} : memref<8x256xbf16, #tpu.memory_space<vmem>>, vector<8x128xbf16>,
    %c0_57 = arith.constant 0 : index
    %c0_58 = arith.constant 0 : index
    %100 = vector.load %arg1[%c0_57, %c0_58] : memref<8x128xbf16, #tpu.memory_space<vmem>>, vector<8x128xbf16>
    %c0_59 = arith.constant 0 : index
    %c128_60 = arith.constant 128 : index
    %101 = vector.load %arg15[%c0_59, %c128_60] : memref<8x256xbf16, #tpu.memory_space<vmem>>, vector<8x128xbf16>
    tpu.vector_store %arg15[%c0_59, %c128_60], %100 {strides = array<i32>} : memref<8x256xbf16, #tpu.memory_space<vmem>>, vector<8x128xbf16>,
    %c0_61 = arith.constant 0 : index
    %c0_62 = arith.constant 0 : index
    %102 = vector.load %arg15[%c0_61, %c0_62] : memref<8x256xbf16, #tpu.memory_space<vmem>>, vector<8x256xbf16>
    %c0_63 = arith.constant 0 : index
    %c0_64 = arith.constant 0 : index
    %103 = vector.load %arg4[%c0_63, %c0_64] : memref<256x128xbf16, #tpu.memory_space<vmem>>, vector<256x128xbf16>
    %cst_65 = arith.constant dense<0.000000e+00> : vector<8x128xf32>
    %104 = tpu.matmul %102, %103, %cst_65 {dimension_numbers = #tpu.dot_dimension_numbers<[1], [0], [0], [1], [0, 0, 1, 1], [], []>} : vector<8x256xbf16>, vector<256x128xbf16>, vector<8x128xf32> -> vector<8x128xf32>
    %c0_66 = arith.constant 0 : index
    %c0_67 = arith.constant 0 : index
    %105 = vector.load %arg5[%c0_66, %c0_67] : memref<1x128xf32, #tpu.memory_space<vmem>>, vector<1x128xf32>
    %106 = vector.broadcast %105 : vector<1x128xf32> to vector<8x128xf32>
    %107 = arith.addf %104, %106 : vector<8x128xf32>
    %cst_68 = arith.constant 0.000000e+00 : f32
    %108 = vector.broadcast %cst_68 : f32 to vector<8x128xf32>
    %109 = arith.maximumf %107, %108 : vector<8x128xf32>
    %110 = arith.truncf %109 : vector<8x128xf32> to vector<8x128xbf16>
    %c0_69 = arith.constant 0 : index
    %c0_70 = arith.constant 0 : index
    %111 = vector.load %arg6[%c0_69, %c0_70] : memref<128x128xbf16, #tpu.memory_space<vmem>>, vector<128x128xbf16>
    %cst_71 = arith.constant dense<0.000000e+00> : vector<8x128xf32>
    %112 = tpu.matmul %110, %111, %cst_71 {dimension_numbers = #tpu.dot_dimension_numbers<[1], [0], [0], [1], [0, 0, 1, 1], [], []>} : vector<8x128xbf16>, vector<128x128xbf16>, vector<8x128xf32> -> vector<8x128xf32>
    %c0_72 = arith.constant 0 : index
    %c0_73 = arith.constant 0 : index
    %113 = vector.load %arg7[%c0_72, %c0_73] : memref<1x128xf32, #tpu.memory_space<vmem>>, vector<1x128xf32>
    %114 = vector.broadcast %113 : vector<1x128xf32> to vector<8x128xf32>
    %115 = arith.addf %112, %114 : vector<8x128xf32>
    %c0_74 = arith.constant 0 : index
    %c0_75 = arith.constant 0 : index
    %c0_76 = arith.constant 0 : index
    %c0_77 = arith.constant 0 : index
    %116 = vector.load %arg8[%c0_74, %c0_75, %c0_76, %c0_77] : memref<2x8x128x128xbf16, #tpu.memory_space<vmem>>, vector<1x8x128x128xbf16>
    %117 = vector.shape_cast %116 : vector<1x8x128x128xbf16> to vector<8x128x128xbf16>
    %118 = vector.shape_cast %115 : vector<8x128xf32> to vector<8x1x128xf32>
    %119 = arith.extf %117 : vector<8x128x128xbf16> to vector<8x128x128xf32>
    %120 = vector.broadcast %118 : vector<8x1x128xf32> to vector<8x128x128xf32>
    %121 = arith.mulf %120, %119 : vector<8x128x128xf32>
    %cst_78 = arith.constant dense<0.000000e+00> : vector<8x128xf32>
    %122 = vector.multi_reduction <add>, %121, %cst_78 [2] : vector<8x128x128xf32> to vector<8x128xf32>
    %c0_79 = arith.constant 0 : index
    %c0_80 = arith.constant 0 : index
    %c0_81 = arith.constant 0 : index
    %123 = vector.load %arg9[%c0_79, %c0_80, %c0_81] : memref<2x8x128xf32, #tpu.memory_space<vmem>>, vector<1x8x128xf32>
    %124 = vector.shape_cast %123 : vector<1x8x128xf32> to vector<8x128xf32>
    %cst_82 = arith.constant 5.000000e-01 : f32
    %125 = vector.broadcast %cst_82 : f32 to vector<8x128xf32>
    %126 = arith.cmpf ogt, %124, %125 : vector<8x128xf32>
    %cst_83 = arith.constant -99999.8984 : f32
    %127 = vector.broadcast %cst_83 : f32 to vector<8x128xf32>
    %128 = arith.select %126, %127, %122 : vector<8x128xi1>, vector<8x128xf32>
    %cst_84 = arith.constant dense<0xFF800000> : vector<8xf32>
    %129 = vector.multi_reduction <maximumf>, %128, %cst_84 [1] : vector<8x128xf32> to vector<8xf32>
    %130 = vector.shape_cast %129 : vector<8xf32> to vector<8x1xf32>
    %131 = vector.broadcast %130 : vector<8x1xf32> to vector<8x128xf32>
    %132 = arith.subf %128, %131 : vector<8x128xf32>
    %133 = math.exp %132 : vector<8x128xf32>
    %cst_85 = arith.constant dense<0.000000e+00> : vector<8xf32>
    %134 = vector.multi_reduction <add>, %133, %cst_85 [1] : vector<8x128xf32> to vector<8xf32>
    %135 = vector.shape_cast %134 : vector<8xf32> to vector<8x1xf32>
    %136 = vector.broadcast %130 : vector<8x1xf32> to vector<8x128xf32>
    %137 = arith.subf %128, %136 : vector<8x128xf32>
    %138 = math.log %135 : vector<8x1xf32>
    %139 = vector.broadcast %138 : vector<8x1xf32> to vector<8x128xf32>
    %140 = arith.subf %137, %139 : vector<8x128xf32>
    %141 = vector.broadcast %135 : vector<8x1xf32> to vector<8x128xf32>
    %142 = arith.divf %133, %141 : vector<8x128xf32>
    %cst_86 = arith.constant 0.000000e+00 : f32
    %143 = vector.broadcast %cst_86 : f32 to vector<8x128xf32>
    %144 = arith.subf %143, %142 : vector<8x128xf32>
    %145 = arith.mulf %144, %140 : vector<8x128xf32>
    %cst_87 = arith.constant dense<0.000000e+00> : vector<8xf32>
    %146 = vector.multi_reduction <add>, %145, %cst_87 [1] : vector<8x128xf32> to vector<8xf32>
    %147 = vector.shape_cast %146 : vector<8xf32> to vector<8x1xf32>
    %c0_88 = arith.constant 0 : index
    %c0_89 = arith.constant 0 : index
    %c0_90 = arith.constant 0 : index
    %148 = vector.load %arg10[%c0_88, %c0_89, %c0_90] : memref<2x8x128xf32, #tpu.memory_space<vmem>>, vector<1x8x128xf32>
    %149 = vector.shape_cast %148 : vector<1x8x128xf32> to vector<8x128xf32>
    %150 = arith.addf %128, %149 : vector<8x128xf32>
    %cst_91 = arith.constant dense<0xFF800000> : vector<8xf32>
    %151 = vector.multi_reduction <maximumf>, %150, %cst_91 [1] : vector<8x128xf32> to vector<8xf32>
    %152 = vector.shape_cast %151 : vector<8xf32> to vector<8x1xf32>
    %153 = tpu.iota {dimensions = array<i32: 1>} : vector<8x128xi32>
    %154 = vector.broadcast %152 : vector<8x1xf32> to vector<8x128xf32>
    %155 = arith.cmpf oge, %150, %154 : vector<8x128xf32>
    %156 = arith.sitofp %153 : vector<8x128xi32> to vector<8x128xf32>
    %cst_92 = arith.constant 1.280000e+02 : f32
    %157 = vector.broadcast %cst_92 : f32 to vector<8x128xf32>
    %158 = arith.select %155, %156, %157 : vector<8x128xi1>, vector<8x128xf32>
    %cst_93 = arith.constant dense<0x7F800000> : vector<8xf32>
    %159 = vector.multi_reduction <minimumf>, %158, %cst_93 [1] : vector<8x128xf32> to vector<8xf32>
    %160 = vector.shape_cast %159 : vector<8xf32> to vector<8x1xf32>
    %161 = arith.fptosi %160 : vector<8x1xf32> to vector<8x1xi32>
    %162 = vector.broadcast %161 : vector<8x1xi32> to vector<8x128xi32>
    %163 = arith.cmpi eq, %153, %162 : vector<8x128xi32>
    %164 = arith.extui %163 : vector<8x128xi1> to vector<8x128xi32>
    %165 = arith.sitofp %164 : vector<8x128xi32> to vector<8x128xf32>
    %166 = arith.mulf %165, %140 : vector<8x128xf32>
    %cst_94 = arith.constant dense<0.000000e+00> : vector<8xf32>
    %167 = vector.multi_reduction <add>, %166, %cst_94 [1] : vector<8x128xf32> to vector<8xf32>
    %168 = vector.shape_cast %167 : vector<8xf32> to vector<8x1xf32>
    %cst_95 = arith.constant 0.000000e+00 : f32
    %169 = vector.broadcast %cst_95 : f32 to vector<8x1xf32>
    %170 = arith.subf %169, %168 : vector<8x1xf32>
    %171 = vector.shape_cast %165 : vector<8x128xf32> to vector<8x128x1xf32>
    %172 = arith.extf %117 : vector<8x128x128xbf16> to vector<8x128x128xf32>
    %173 = vector.broadcast %171 : vector<8x128x1xf32> to vector<8x128x128xf32>
    %174 = arith.mulf %173, %172 : vector<8x128x128xf32>
    %cst_96 = arith.constant dense<0.000000e+00> : vector<8x128xf32>
    %175 = vector.multi_reduction <add>, %174, %cst_96 [1] : vector<8x128x128xf32> to vector<8x128xf32>
    %c0_97 = arith.constant 0 : index
    %c0_98 = arith.constant 0 : index
    %176 = vector.load %arg14[%c0_97, %c0_98] : memref<8x128xf32, #tpu.memory_space<vmem>>, vector<8x128xf32>
    tpu.vector_store %arg14[%c0_97, %c0_98], %175 {strides = array<i32>} : memref<8x128xf32, #tpu.memory_space<vmem>>, vector<8x128xf32>,
    %177 = tpu.iota {dimensions = array<i32: 1>} : vector<8x128xi32>
    %c0_i32_99 = arith.constant 0 : i32
    %178 = vector.broadcast %c0_i32_99 : i32 to vector<8x128xi32>
    %179 = arith.cmpi eq, %177, %178 : vector<8x128xi32>
    %cst_100 = arith.constant 0.000000e+00 : f32
    %180 = vector.shape_cast %170 : vector<8x1xf32> to vector<8x1xf32>
    %181 = vector.broadcast %180 : vector<8x1xf32> to vector<8x128xf32>
    %182 = vector.broadcast %cst_100 : f32 to vector<8x128xf32>
    %183 = arith.select %179, %181, %182 : vector<8x128xi1>, vector<8x128xf32>
    %c1_i32 = arith.constant 1 : i32
    %184 = vector.broadcast %c1_i32 : i32 to vector<8x128xi32>
    %185 = arith.cmpi eq, %177, %184 : vector<8x128xi32>
    %cst_101 = arith.constant 0.000000e+00 : f32
    %186 = vector.shape_cast %147 : vector<8x1xf32> to vector<8x1xf32>
    %187 = vector.broadcast %186 : vector<8x1xf32> to vector<8x128xf32>
    %188 = vector.broadcast %cst_101 : f32 to vector<8x128xf32>
    %189 = arith.select %185, %187, %188 : vector<8x128xi1>, vector<8x128xf32>
    %190 = arith.addf %183, %189 : vector<8x128xf32>
    %c2_i32 = arith.constant 2 : i32
    %191 = vector.broadcast %c2_i32 : i32 to vector<8x128xi32>
    %192 = arith.cmpi eq, %177, %191 : vector<8x128xi32>
    %cst_102 = arith.constant 0.000000e+00 : f32
    %193 = vector.shape_cast %160 : vector<8x1xf32> to vector<8x1xf32>
    %194 = vector.broadcast %193 : vector<8x1xf32> to vector<8x128xf32>
    %195 = vector.broadcast %cst_102 : f32 to vector<8x128xf32>
    %196 = arith.select %192, %194, %195 : vector<8x128xi1>, vector<8x128xf32>
    %197 = arith.addf %190, %196 : vector<8x128xf32>
    %c0_103 = arith.constant 0 : index
    %c0_104 = arith.constant 0 : index
    %c0_105 = arith.constant 0 : index
    %198 = vector.load %arg11[%c0_103, %c0_104, %c0_105] : memref<2x8x128xf32, #tpu.memory_space<vmem>>, vector<1x8x128xf32>
    %199 = vector.shape_cast %198 : vector<1x8x128xf32> to vector<8x128xf32>
    %200 = vector.shape_cast %197 : vector<8x128xf32> to vector<1x8x128xf32>
    tpu.vector_store %arg11[%c0_103, %c0_104, %c0_105], %200 {strides = array<i32>} : memref<2x8x128xf32, #tpu.memory_space<vmem>>, vector<1x8x128xf32>,
    %c0_106 = arith.constant 0 : index
    %c0_107 = arith.constant 0 : index
    %201 = vector.load %arg14[%c0_106, %c0_107] : memref<8x128xf32, #tpu.memory_space<vmem>>, vector<8x128xf32>
    %202 = arith.truncf %201 : vector<8x128xf32> to vector<8x128xbf16>
    %c0_108 = arith.constant 0 : index
    %c0_109 = arith.constant 0 : index
    %203 = vector.load %arg15[%c0_108, %c0_109] : memref<8x256xbf16, #tpu.memory_space<vmem>>, vector<8x128xbf16>
    tpu.vector_store %arg15[%c0_108, %c0_109], %202 {strides = array<i32>} : memref<8x256xbf16, #tpu.memory_space<vmem>>, vector<8x128xbf16>,
    %c0_110 = arith.constant 0 : index
    %c0_111 = arith.constant 0 : index
    %c0_112 = arith.constant 0 : index
    %204 = vector.load %arg12[%c0_110, %c0_111, %c0_112] : memref<2x8x128xf32, #tpu.memory_space<vmem>>, vector<1x8x128xf32>
    %205 = vector.shape_cast %204 : vector<1x8x128xf32> to vector<8x128xf32>
    %206 = arith.truncf %205 : vector<8x128xf32> to vector<8x128xbf16>
    %c0_113 = arith.constant 0 : index
    %c128_114 = arith.constant 128 : index
    %207 = vector.load %arg15[%c0_113, %c128_114] : memref<8x256xbf16, #tpu.memory_space<vmem>>, vector<8x128xbf16>
    tpu.vector_store %arg15[%c0_113, %c128_114], %206 {strides = array<i32>} : memref<8x256xbf16, #tpu.memory_space<vmem>>, vector<8x128xbf16>,
    %c0_115 = arith.constant 0 : index
    %c0_116 = arith.constant 0 : index
    %208 = vector.load %arg15[%c0_115, %c0_116] : memref<8x256xbf16, #tpu.memory_space<vmem>>, vector<8x256xbf16>
    %c0_117 = arith.constant 0 : index
    %c0_118 = arith.constant 0 : index
    %c0_119 = arith.constant 0 : index
    %209 = vector.load %arg2[%c0_117, %c0_118, %c0_119] : memref<2x256x512xbf16, #tpu.memory_space<vmem>>, vector<1x256x512xbf16>
    %210 = vector.shape_cast %209 : vector<1x256x512xbf16> to vector<256x512xbf16>
    %cst_120 = arith.constant dense<0.000000e+00> : vector<8x512xf32>
    %211 = tpu.matmul %208, %210, %cst_120 {dimension_numbers = #tpu.dot_dimension_numbers<[1], [0], [0], [1], [0, 0, 1, 1], [], []>} : vector<8x256xbf16>, vector<256x512xbf16>, vector<8x512xf32> -> vector<8x512xf32>
    %c0_121 = arith.constant 0 : index
    %c0_122 = arith.constant 0 : index
    %c0_123 = arith.constant 0 : index
    %212 = vector.load %arg3[%c0_121, %c0_122, %c0_123] : memref<2x1x512xf32, #tpu.memory_space<vmem>>, vector<1x1x512xf32>
    %213 = vector.shape_cast %212 : vector<1x1x512xf32> to vector<1x512xf32>
    %214 = vector.broadcast %213 : vector<1x512xf32> to vector<8x512xf32>
    %215 = arith.addf %211, %214 : vector<8x512xf32>
    %216 = vector.extract_strided_slice %215 {offsets = [0, 0], sizes = [8, 128], strides = [1, 1]} : vector<8x512xf32> to vector<8x128xf32>
    %217 = arith.negf %216 : vector<8x128xf32>
    %218 = math.exp %217 : vector<8x128xf32>
    %cst_124 = arith.constant 1.000000e+00 : f32
    %219 = vector.broadcast %cst_124 : f32 to vector<8x128xf32>
    %220 = arith.addf %219, %218 : vector<8x128xf32>
    %221 = arith.divf %219, %220 : vector<8x128xf32>
    %222 = vector.extract_strided_slice %215 {offsets = [0, 128], sizes = [8, 128], strides = [1, 1]} : vector<8x512xf32> to vector<8x128xf32>
    %223 = arith.negf %222 : vector<8x128xf32>
    %224 = math.exp %223 : vector<8x128xf32>
    %cst_125 = arith.constant 1.000000e+00 : f32
    %225 = vector.broadcast %cst_125 : f32 to vector<8x128xf32>
    %226 = arith.addf %225, %224 : vector<8x128xf32>
    %227 = arith.divf %225, %226 : vector<8x128xf32>
    %228 = vector.extract_strided_slice %215 {offsets = [0, 256], sizes = [8, 128], strides = [1, 1]} : vector<8x512xf32> to vector<8x128xf32>
    %229 = math.tanh %228 : vector<8x128xf32>
    %230 = vector.extract_strided_slice %215 {offsets = [0, 384], sizes = [8, 128], strides = [1, 1]} : vector<8x512xf32> to vector<8x128xf32>
    %231 = arith.negf %230 : vector<8x128xf32>
    %232 = math.exp %231 : vector<8x128xf32>
    %cst_126 = arith.constant 1.000000e+00 : f32
    %233 = vector.broadcast %cst_126 : f32 to vector<8x128xf32>
    %234 = arith.addf %233, %232 : vector<8x128xf32>
    %235 = arith.divf %233, %234 : vector<8x128xf32>
    %c0_127 = arith.constant 0 : index
    %c0_128 = arith.constant 0 : index
    %c0_129 = arith.constant 0 : index
    %236 = vector.load %arg13[%c0_127, %c0_128, %c0_129] : memref<2x8x128xf32, #tpu.memory_space<vmem>>, vector<1x8x128xf32>
    %237 = vector.shape_cast %236 : vector<1x8x128xf32> to vector<8x128xf32>
    %238 = arith.mulf %227, %237 : vector<8x128xf32>
    %239 = arith.mulf %221, %229 : vector<8x128xf32>
    %240 = arith.addf %238, %239 : vector<8x128xf32>
    %241 = math.tanh %240 : vector<8x128xf32>
    %242 = arith.mulf %235, %241 : vector<8x128xf32>
    %c0_130 = arith.constant 0 : index
    %c0_131 = arith.constant 0 : index
    %c0_132 = arith.constant 0 : index
    %243 = vector.load %arg12[%c0_130, %c0_131, %c0_132] : memref<2x8x128xf32, #tpu.memory_space<vmem>>, vector<1x8x128xf32>
    %244 = vector.shape_cast %243 : vector<1x8x128xf32> to vector<8x128xf32>
    %245 = vector.shape_cast %242 : vector<8x128xf32> to vector<1x8x128xf32>
    tpu.vector_store %arg12[%c0_130, %c0_131, %c0_132], %245 {strides = array<i32>} : memref<2x8x128xf32, #tpu.memory_space<vmem>>, vector<1x8x128xf32>,
    %c0_133 = arith.constant 0 : index
    %c0_134 = arith.constant 0 : index
    %c0_135 = arith.constant 0 : index
    %246 = vector.load %arg13[%c0_133, %c0_134, %c0_135] : memref<2x8x128xf32, #tpu.memory_space<vmem>>, vector<1x8x128xf32>
    %247 = vector.shape_cast %246 : vector<1x8x128xf32> to vector<8x128xf32>
    %248 = vector.shape_cast %240 : vector<8x128xf32> to vector<1x8x128xf32>
    tpu.vector_store %arg13[%c0_133, %c0_134, %c0_135], %248 {strides = array<i32>} : memref<2x8x128xf32, #tpu.memory_space<vmem>>, vector<1x8x128xf32>,
    %249 = arith.truncf %242 : vector<8x128xf32> to vector<8x128xbf16>
    %c0_136 = arith.constant 0 : index
    %c0_137 = arith.constant 0 : index
    %250 = vector.load %arg15[%c0_136, %c0_137] : memref<8x256xbf16, #tpu.memory_space<vmem>>, vector<8x128xbf16>
    tpu.vector_store %arg15[%c0_136, %c0_137], %249 {strides = array<i32>} : memref<8x256xbf16, #tpu.memory_space<vmem>>, vector<8x128xbf16>,
    %c1_138 = arith.constant 1 : index
    %c0_139 = arith.constant 0 : index
    %c0_140 = arith.constant 0 : index
    %251 = vector.load %arg12[%c1_138, %c0_139, %c0_140] : memref<2x8x128xf32, #tpu.memory_space<vmem>>, vector<1x8x128xf32>
    %252 = vector.shape_cast %251 : vector<1x8x128xf32> to vector<8x128xf32>
    %253 = arith.truncf %252 : vector<8x128xf32> to vector<8x128xbf16>
    %c0_141 = arith.constant 0 : index
    %c128_142 = arith.constant 128 : index
    %254 = vector.load %arg15[%c0_141, %c128_142] : memref<8x256xbf16, #tpu.memory_space<vmem>>, vector<8x128xbf16>
    tpu.vector_store %arg15[%c0_141, %c128_142], %253 {strides = array<i32>} : memref<8x256xbf16, #tpu.memory_space<vmem>>, vector<8x128xbf16>,
    %c0_143 = arith.constant 0 : index
    %c0_144 = arith.constant 0 : index
    %255 = vector.load %arg15[%c0_143, %c0_144] : memref<8x256xbf16, #tpu.memory_space<vmem>>, vector<8x256xbf16>
    %c1_145 = arith.constant 1 : index
    %c0_146 = arith.constant 0 : index
    %c0_147 = arith.constant 0 : index
    %256 = vector.load %arg2[%c1_145, %c0_146, %c0_147] : memref<2x256x512xbf16, #tpu.memory_space<vmem>>, vector<1x256x512xbf16>
    %257 = vector.shape_cast %256 : vector<1x256x512xbf16> to vector<256x512xbf16>
    %cst_148 = arith.constant dense<0.000000e+00> : vector<8x512xf32>
    %258 = tpu.matmul %255, %257, %cst_148 {dimension_numbers = #tpu.dot_dimension_numbers<[1], [0], [0], [1], [0, 0, 1, 1], [], []>} : vector<8x256xbf16>, vector<256x512xbf16>, vector<8x512xf32> -> vector<8x512xf32>
    %c1_149 = arith.constant 1 : index
    %c0_150 = arith.constant 0 : index
    %c0_151 = arith.constant 0 : index
    %259 = vector.load %arg3[%c1_149, %c0_150, %c0_151] : memref<2x1x512xf32, #tpu.memory_space<vmem>>, vector<1x1x512xf32>
    %260 = vector.shape_cast %259 : vector<1x1x512xf32> to vector<1x512xf32>
    %261 = vector.broadcast %260 : vector<1x512xf32> to vector<8x512xf32>
    %262 = arith.addf %258, %261 : vector<8x512xf32>
    %263 = vector.extract_strided_slice %262 {offsets = [0, 0], sizes = [8, 128], strides = [1, 1]} : vector<8x512xf32> to vector<8x128xf32>
    %264 = arith.negf %263 : vector<8x128xf32>
    %265 = math.exp %264 : vector<8x128xf32>
    %cst_152 = arith.constant 1.000000e+00 : f32
    %266 = vector.broadcast %cst_152 : f32 to vector<8x128xf32>
    %267 = arith.addf %266, %265 : vector<8x128xf32>
    %268 = arith.divf %266, %267 : vector<8x128xf32>
    %269 = vector.extract_strided_slice %262 {offsets = [0, 128], sizes = [8, 128], strides = [1, 1]} : vector<8x512xf32> to vector<8x128xf32>
    %270 = arith.negf %269 : vector<8x128xf32>
    %271 = math.exp %270 : vector<8x128xf32>
    %cst_153 = arith.constant 1.000000e+00 : f32
    %272 = vector.broadcast %cst_153 : f32 to vector<8x128xf32>
    %273 = arith.addf %272, %271 : vector<8x128xf32>
    %274 = arith.divf %272, %273 : vector<8x128xf32>
    %275 = vector.extract_strided_slice %262 {offsets = [0, 256], sizes = [8, 128], strides = [1, 1]} : vector<8x512xf32> to vector<8x128xf32>
    %276 = math.tanh %275 : vector<8x128xf32>
    %277 = vector.extract_strided_slice %262 {offsets = [0, 384], sizes = [8, 128], strides = [1, 1]} : vector<8x512xf32> to vector<8x128xf32>
    %278 = arith.negf %277 : vector<8x128xf32>
    %279 = math.exp %278 : vector<8x128xf32>
    %cst_154 = arith.constant 1.000000e+00 : f32
    %280 = vector.broadcast %cst_154 : f32 to vector<8x128xf32>
    %281 = arith.addf %280, %279 : vector<8x128xf32>
    %282 = arith.divf %280, %281 : vector<8x128xf32>
    %c1_155 = arith.constant 1 : index
    %c0_156 = arith.constant 0 : index
    %c0_157 = arith.constant 0 : index
    %283 = vector.load %arg13[%c1_155, %c0_156, %c0_157] : memref<2x8x128xf32, #tpu.memory_space<vmem>>, vector<1x8x128xf32>
    %284 = vector.shape_cast %283 : vector<1x8x128xf32> to vector<8x128xf32>
    %285 = arith.mulf %274, %284 : vector<8x128xf32>
    %286 = arith.mulf %268, %276 : vector<8x128xf32>
    %287 = arith.addf %285, %286 : vector<8x128xf32>
    %288 = math.tanh %287 : vector<8x128xf32>
    %289 = arith.mulf %282, %288 : vector<8x128xf32>
    %c1_158 = arith.constant 1 : index
    %c0_159 = arith.constant 0 : index
    %c0_160 = arith.constant 0 : index
    %290 = vector.load %arg12[%c1_158, %c0_159, %c0_160] : memref<2x8x128xf32, #tpu.memory_space<vmem>>, vector<1x8x128xf32>
    %291 = vector.shape_cast %290 : vector<1x8x128xf32> to vector<8x128xf32>
    %292 = vector.shape_cast %289 : vector<8x128xf32> to vector<1x8x128xf32>
    tpu.vector_store %arg12[%c1_158, %c0_159, %c0_160], %292 {strides = array<i32>} : memref<2x8x128xf32, #tpu.memory_space<vmem>>, vector<1x8x128xf32>,
    %c1_161 = arith.constant 1 : index
    %c0_162 = arith.constant 0 : index
    %c0_163 = arith.constant 0 : index
    %293 = vector.load %arg13[%c1_161, %c0_162, %c0_163] : memref<2x8x128xf32, #tpu.memory_space<vmem>>, vector<1x8x128xf32>
    %294 = vector.shape_cast %293 : vector<1x8x128xf32> to vector<8x128xf32>
    %295 = vector.shape_cast %287 : vector<8x128xf32> to vector<1x8x128xf32>
    tpu.vector_store %arg13[%c1_161, %c0_162, %c0_163], %295 {strides = array<i32>} : memref<2x8x128xf32, #tpu.memory_space<vmem>>, vector<1x8x128xf32>,
    %296 = arith.truncf %289 : vector<8x128xf32> to vector<8x128xbf16>
    %c0_164 = arith.constant 0 : index
    %c0_165 = arith.constant 0 : index
    %297 = vector.load %arg15[%c0_164, %c0_165] : memref<8x256xbf16, #tpu.memory_space<vmem>>, vector<8x128xbf16>
    tpu.vector_store %arg15[%c0_164, %c0_165], %296 {strides = array<i32>} : memref<8x256xbf16, #tpu.memory_space<vmem>>, vector<8x128xbf16>,
    %c0_166 = arith.constant 0 : index
    %c0_167 = arith.constant 0 : index
    %298 = vector.load %arg1[%c0_166, %c0_167] : memref<8x128xbf16, #tpu.memory_space<vmem>>, vector<8x128xbf16>
    %c0_168 = arith.constant 0 : index
    %c128_169 = arith.constant 128 : index
    %299 = vector.load %arg15[%c0_168, %c128_169] : memref<8x256xbf16, #tpu.memory_space<vmem>>, vector<8x128xbf16>
    tpu.vector_store %arg15[%c0_168, %c128_169], %298 {strides = array<i32>} : memref<8x256xbf16, #tpu.memory_space<vmem>>, vector<8x128xbf16>,
    %c0_170 = arith.constant 0 : index
    %c0_171 = arith.constant 0 : index
    %300 = vector.load %arg15[%c0_170, %c0_171] : memref<8x256xbf16, #tpu.memory_space<vmem>>, vector<8x256xbf16>
    %c0_172 = arith.constant 0 : index
    %c0_173 = arith.constant 0 : index
    %301 = vector.load %arg4[%c0_172, %c0_173] : memref<256x128xbf16, #tpu.memory_space<vmem>>, vector<256x128xbf16>
    %cst_174 = arith.constant dense<0.000000e+00> : vector<8x128xf32>
    %302 = tpu.matmul %300, %301, %cst_174 {dimension_numbers = #tpu.dot_dimension_numbers<[1], [0], [0], [1], [0, 0, 1, 1], [], []>} : vector<8x256xbf16>, vector<256x128xbf16>, vector<8x128xf32> -> vector<8x128xf32>
    %c0_175 = arith.constant 0 : index
    %c0_176 = arith.constant 0 : index
    %303 = vector.load %arg5[%c0_175, %c0_176] : memref<1x128xf32, #tpu.memory_space<vmem>>, vector<1x128xf32>
    %304 = vector.broadcast %303 : vector<1x128xf32> to vector<8x128xf32>
    %305 = arith.addf %302, %304 : vector<8x128xf32>
    %cst_177 = arith.constant 0.000000e+00 : f32
    %306 = vector.broadcast %cst_177 : f32 to vector<8x128xf32>
    %307 = arith.maximumf %305, %306 : vector<8x128xf32>
    %308 = arith.truncf %307 : vector<8x128xf32> to vector<8x128xbf16>
    %c0_178 = arith.constant 0 : index
    %c0_179 = arith.constant 0 : index
    %309 = vector.load %arg6[%c0_178, %c0_179] : memref<128x128xbf16, #tpu.memory_space<vmem>>, vector<128x128xbf16>
    %cst_180 = arith.constant dense<0.000000e+00> : vector<8x128xf32>
    %310 = tpu.matmul %308, %309, %cst_180 {dimension_numbers = #tpu.dot_dimension_numbers<[1], [0], [0], [1], [0, 0, 1, 1], [], []>} : vector<8x128xbf16>, vector<128x128xbf16>, vector<8x128xf32> -> vector<8x128xf32>
    %c0_181 = arith.constant 0 : index
    %c0_182 = arith.constant 0 : index
    %311 = vector.load %arg7[%c0_181, %c0_182] : memref<1x128xf32, #tpu.memory_space<vmem>>, vector<1x128xf32>
    %312 = vector.broadcast %311 : vector<1x128xf32> to vector<8x128xf32>
    %313 = arith.addf %310, %312 : vector<8x128xf32>
    %c1_183 = arith.constant 1 : index
    %c0_184 = arith.constant 0 : index
    %c0_185 = arith.constant 0 : index
    %c0_186 = arith.constant 0 : index
    %314 = vector.load %arg8[%c1_183, %c0_184, %c0_185, %c0_186] : memref<2x8x128x128xbf16, #tpu.memory_space<vmem>>, vector<1x8x128x128xbf16>
    %315 = vector.shape_cast %314 : vector<1x8x128x128xbf16> to vector<8x128x128xbf16>
    %316 = vector.shape_cast %313 : vector<8x128xf32> to vector<8x1x128xf32>
    %317 = arith.extf %315 : vector<8x128x128xbf16> to vector<8x128x128xf32>
    %318 = vector.broadcast %316 : vector<8x1x128xf32> to vector<8x128x128xf32>
    %319 = arith.mulf %318, %317 : vector<8x128x128xf32>
    %cst_187 = arith.constant dense<0.000000e+00> : vector<8x128xf32>
    %320 = vector.multi_reduction <add>, %319, %cst_187 [2] : vector<8x128x128xf32> to vector<8x128xf32>
    %c1_188 = arith.constant 1 : index
    %c0_189 = arith.constant 0 : index
    %c0_190 = arith.constant 0 : index
    %321 = vector.load %arg9[%c1_188, %c0_189, %c0_190] : memref<2x8x128xf32, #tpu.memory_space<vmem>>, vector<1x8x128xf32>
    %322 = vector.shape_cast %321 : vector<1x8x128xf32> to vector<8x128xf32>
    %cst_191 = arith.constant 5.000000e-01 : f32
    %323 = vector.broadcast %cst_191 : f32 to vector<8x128xf32>
    %324 = arith.cmpf ogt, %322, %323 : vector<8x128xf32>
    %cst_192 = arith.constant -99999.8984 : f32
    %325 = vector.broadcast %cst_192 : f32 to vector<8x128xf32>
    %326 = arith.select %324, %325, %320 : vector<8x128xi1>, vector<8x128xf32>
    %cst_193 = arith.constant dense<0xFF800000> : vector<8xf32>
    %327 = vector.multi_reduction <maximumf>, %326, %cst_193 [1] : vector<8x128xf32> to vector<8xf32>
    %328 = vector.shape_cast %327 : vector<8xf32> to vector<8x1xf32>
    %329 = vector.broadcast %328 : vector<8x1xf32> to vector<8x128xf32>
    %330 = arith.subf %326, %329 : vector<8x128xf32>
    %331 = math.exp %330 : vector<8x128xf32>
    %cst_194 = arith.constant dense<0.000000e+00> : vector<8xf32>
    %332 = vector.multi_reduction <add>, %331, %cst_194 [1] : vector<8x128xf32> to vector<8xf32>
    %333 = vector.shape_cast %332 : vector<8xf32> to vector<8x1xf32>
    %334 = vector.broadcast %328 : vector<8x1xf32> to vector<8x128xf32>
    %335 = arith.subf %326, %334 : vector<8x128xf32>
    %336 = math.log %333 : vector<8x1xf32>
    %337 = vector.broadcast %336 : vector<8x1xf32> to vector<8x128xf32>
    %338 = arith.subf %335, %337 : vector<8x128xf32>
    %339 = vector.broadcast %333 : vector<8x1xf32> to vector<8x128xf32>
    %340 = arith.divf %331, %339 : vector<8x128xf32>
    %cst_195 = arith.constant 0.000000e+00 : f32
    %341 = vector.broadcast %cst_195 : f32 to vector<8x128xf32>
    %342 = arith.subf %341, %340 : vector<8x128xf32>
    %343 = arith.mulf %342, %338 : vector<8x128xf32>
    %cst_196 = arith.constant dense<0.000000e+00> : vector<8xf32>
    %344 = vector.multi_reduction <add>, %343, %cst_196 [1] : vector<8x128xf32> to vector<8xf32>
    %345 = vector.shape_cast %344 : vector<8xf32> to vector<8x1xf32>
    %c1_197 = arith.constant 1 : index
    %c0_198 = arith.constant 0 : index
    %c0_199 = arith.constant 0 : index
    %346 = vector.load %arg10[%c1_197, %c0_198, %c0_199] : memref<2x8x128xf32, #tpu.memory_space<vmem>>, vector<1x8x128xf32>
    %347 = vector.shape_cast %346 : vector<1x8x128xf32> to vector<8x128xf32>
    %348 = arith.addf %326, %347 : vector<8x128xf32>
    %cst_200 = arith.constant dense<0xFF800000> : vector<8xf32>
    %349 = vector.multi_reduction <maximumf>, %348, %cst_200 [1] : vector<8x128xf32> to vector<8xf32>
    %350 = vector.shape_cast %349 : vector<8xf32> to vector<8x1xf32>
    %351 = tpu.iota {dimensions = array<i32: 1>} : vector<8x128xi32>
    %352 = vector.broadcast %350 : vector<8x1xf32> to vector<8x128xf32>
    %353 = arith.cmpf oge, %348, %352 : vector<8x128xf32>
    %354 = arith.sitofp %351 : vector<8x128xi32> to vector<8x128xf32>
    %cst_201 = arith.constant 1.280000e+02 : f32
    %355 = vector.broadcast %cst_201 : f32 to vector<8x128xf32>
    %356 = arith.select %353, %354, %355 : vector<8x128xi1>, vector<8x128xf32>
    %cst_202 = arith.constant dense<0x7F800000> : vector<8xf32>
    %357 = vector.multi_reduction <minimumf>, %356, %cst_202 [1] : vector<8x128xf32> to vector<8xf32>
    %358 = vector.shape_cast %357 : vector<8xf32> to vector<8x1xf32>
    %359 = arith.fptosi %358 : vector<8x1xf32> to vector<8x1xi32>
    %360 = vector.broadcast %359 : vector<8x1xi32> to vector<8x128xi32>
    %361 = arith.cmpi eq, %351, %360 : vector<8x128xi32>
    %362 = arith.extui %361 : vector<8x128xi1> to vector<8x128xi32>
    %363 = arith.sitofp %362 : vector<8x128xi32> to vector<8x128xf32>
    %364 = arith.mulf %363, %338 : vector<8x128xf32>
    %cst_203 = arith.constant dense<0.000000e+00> : vector<8xf32>
    %365 = vector.multi_reduction <add>, %364, %cst_203 [1] : vector<8x128xf32> to vector<8xf32>
    %366 = vector.shape_cast %365 : vector<8xf32> to vector<8x1xf32>
    %cst_204 = arith.constant 0.000000e+00 : f32
    %367 = vector.broadcast %cst_204 : f32 to vector<8x1xf32>
    %368 = arith.subf %367, %366 : vector<8x1xf32>
    %369 = vector.shape_cast %363 : vector<8x128xf32> to vector<8x128x1xf32>
    %370 = arith.extf %315 : vector<8x128x128xbf16> to vector<8x128x128xf32>
    %371 = vector.broadcast %369 : vector<8x128x1xf32> to vector<8x128x128xf32>
    %372 = arith.mulf %371, %370 : vector<8x128x128xf32>
    %cst_205 = arith.constant dense<0.000000e+00> : vector<8x128xf32>
    %373 = vector.multi_reduction <add>, %372, %cst_205 [1] : vector<8x128x128xf32> to vector<8x128xf32>
    %c0_206 = arith.constant 0 : index
    %c0_207 = arith.constant 0 : index
    %374 = vector.load %arg14[%c0_206, %c0_207] : memref<8x128xf32, #tpu.memory_space<vmem>>, vector<8x128xf32>
    tpu.vector_store %arg14[%c0_206, %c0_207], %373 {strides = array<i32>} : memref<8x128xf32, #tpu.memory_space<vmem>>, vector<8x128xf32>,
    %375 = tpu.iota {dimensions = array<i32: 1>} : vector<8x128xi32>
    %c0_i32_208 = arith.constant 0 : i32
    %376 = vector.broadcast %c0_i32_208 : i32 to vector<8x128xi32>
    %377 = arith.cmpi eq, %375, %376 : vector<8x128xi32>
    %cst_209 = arith.constant 0.000000e+00 : f32
    %378 = vector.shape_cast %368 : vector<8x1xf32> to vector<8x1xf32>
    %379 = vector.broadcast %378 : vector<8x1xf32> to vector<8x128xf32>
    %380 = vector.broadcast %cst_209 : f32 to vector<8x128xf32>
    %381 = arith.select %377, %379, %380 : vector<8x128xi1>, vector<8x128xf32>
    %c1_i32_210 = arith.constant 1 : i32
    %382 = vector.broadcast %c1_i32_210 : i32 to vector<8x128xi32>
    %383 = arith.cmpi eq, %375, %382 : vector<8x128xi32>
    %cst_211 = arith.constant 0.000000e+00 : f32
    %384 = vector.shape_cast %345 : vector<8x1xf32> to vector<8x1xf32>
    %385 = vector.broadcast %384 : vector<8x1xf32> to vector<8x128xf32>
    %386 = vector.broadcast %cst_211 : f32 to vector<8x128xf32>
    %387 = arith.select %383, %385, %386 : vector<8x128xi1>, vector<8x128xf32>
    %388 = arith.addf %381, %387 : vector<8x128xf32>
    %c2_i32_212 = arith.constant 2 : i32
    %389 = vector.broadcast %c2_i32_212 : i32 to vector<8x128xi32>
    %390 = arith.cmpi eq, %375, %389 : vector<8x128xi32>
    %cst_213 = arith.constant 0.000000e+00 : f32
    %391 = vector.shape_cast %358 : vector<8x1xf32> to vector<8x1xf32>
    %392 = vector.broadcast %391 : vector<8x1xf32> to vector<8x128xf32>
    %393 = vector.broadcast %cst_213 : f32 to vector<8x128xf32>
    %394 = arith.select %390, %392, %393 : vector<8x128xi1>, vector<8x128xf32>
    %395 = arith.addf %388, %394 : vector<8x128xf32>
    %c1_214 = arith.constant 1 : index
    %c0_215 = arith.constant 0 : index
    %c0_216 = arith.constant 0 : index
    %396 = vector.load %arg11[%c1_214, %c0_215, %c0_216] : memref<2x8x128xf32, #tpu.memory_space<vmem>>, vector<1x8x128xf32>
    %397 = vector.shape_cast %396 : vector<1x8x128xf32> to vector<8x128xf32>
    %398 = vector.shape_cast %395 : vector<8x128xf32> to vector<1x8x128xf32>
    tpu.vector_store %arg11[%c1_214, %c0_215, %c0_216], %398 {strides = array<i32>} : memref<2x8x128xf32, #tpu.memory_space<vmem>>, vector<1x8x128xf32>,
    return
  }
  func.func @transform_0(%arg0: i32) -> (i32, i32) {
    %c0_i32 = arith.constant 0 : i32
    %c0_i32_0 = arith.constant 0 : i32
    %c0_i32_1 = arith.constant 0 : i32
    return %c0_i32, %c0_i32_0 : i32, i32
  }
  func.func @transform_1(%arg0: i32) -> (i32, i32, i32) {
    %c0_i32 = arith.constant 0 : i32
    %c0_i32_0 = arith.constant 0 : i32
    %c0_i32_1 = arith.constant 0 : i32
    %c0_i32_2 = arith.constant 0 : i32
    return %c0_i32, %c0_i32_0, %c0_i32_1 : i32, i32, i32
  }
  func.func @transform_2(%arg0: i32) -> (i32, i32, i32) {
    %c0_i32 = arith.constant 0 : i32
    %c0_i32_0 = arith.constant 0 : i32
    %c0_i32_1 = arith.constant 0 : i32
    %c0_i32_2 = arith.constant 0 : i32
    return %c0_i32, %c0_i32_0, %c0_i32_1 : i32, i32, i32
  }
  func.func @transform_3(%arg0: i32) -> (i32, i32) {
    %c0_i32 = arith.constant 0 : i32
    %c0_i32_0 = arith.constant 0 : i32
    %c0_i32_1 = arith.constant 0 : i32
    return %c0_i32, %c0_i32_0 : i32, i32
  }
  func.func @transform_4(%arg0: i32) -> (i32, i32) {
    %c0_i32 = arith.constant 0 : i32
    %c0_i32_0 = arith.constant 0 : i32
    %c0_i32_1 = arith.constant 0 : i32
    return %c0_i32, %c0_i32_0 : i32, i32
  }
  func.func @transform_5(%arg0: i32) -> (i32, i32) {
    %c0_i32 = arith.constant 0 : i32
    %c0_i32_0 = arith.constant 0 : i32
    %c0_i32_1 = arith.constant 0 : i32
    return %c0_i32, %c0_i32_0 : i32, i32
  }
  func.func @transform_6(%arg0: i32) -> (i32, i32) {
    %c0_i32 = arith.constant 0 : i32
    %c0_i32_0 = arith.constant 0 : i32
    %c0_i32_1 = arith.constant 0 : i32
    return %c0_i32, %c0_i32_0 : i32, i32
  }
  func.func @transform_7(%arg0: i32) -> (i32, i32, i32, i32) {
    %c0_i32 = arith.constant 0 : i32
    %c0_i32_0 = arith.constant 0 : i32
    %c0_i32_1 = arith.constant 0 : i32
    %c0_i32_2 = arith.constant 0 : i32
    return %arg0, %c0_i32, %c0_i32_0, %c0_i32_1 : i32, i32, i32, i32
  }
  func.func @transform_8(%arg0: i32) -> (i32, i32, i32) {
    %c0_i32 = arith.constant 0 : i32
    %c0_i32_0 = arith.constant 0 : i32
    %c0_i32_1 = arith.constant 0 : i32
    return %arg0, %c0_i32, %c0_i32_0 : i32, i32, i32
  }
  func.func @transform_9(%arg0: i32) -> (i32, i32, i32) {
    %c0_i32 = arith.constant 0 : i32
    %c0_i32_0 = arith.constant 0 : i32
    %c0_i32_1 = arith.constant 0 : i32
    return %arg0, %c0_i32, %c0_i32_0 : i32, i32, i32
  }
  func.func @transform_10(%arg0: i32) -> (i32, i32, i32) {
    %c0_i32 = arith.constant 0 : i32
    %c0_i32_0 = arith.constant 0 : i32
    %c0_i32_1 = arith.constant 0 : i32
    return %arg0, %c0_i32, %c0_i32_0 : i32, i32, i32
  }
}

</mosaic_0001>

<llo_original>
// kernel: tpu_custom_call.1
$region0: #{tpu_custom_call.1}
  #allocation0 [shape = 'u32[]', space=smem, size = 0x4, offset = 0x4, fixed_abs, tag = 'smem constant byte address 0x4 - core index']
  #allocation1 [shape = 'u32[144,128]{1,0:T(1,128)}', space=vmem, size = 0x12000, scoped, tag = 'internal scratch']
  #allocation2 [shape = 'f32[2,8,128]{2,1,0:T(8,128)}', space=vmem, size = 0x2000, scoped, tag = 'scratch operand']
  #allocation3 [shape = 'f32[2,8,128]{2,1,0:T(8,128)}', space=vmem, size = 0x2000, scoped, tag = 'scratch operand']
  #allocation4 [shape = 'f32[8,128]{1,0:T(8,128)}', space=vmem, size = 0x1000, scoped, tag = 'scratch operand']
  #allocation5 [shape = 'bf16[8,256]{1,0:T(8,128)(2,1)}', space=vmem, size = 0x1000, scoped, tag = 'scratch operand']
  %s0 = inlined_call_operand.hbm [shape: bf16[8,128], index: 0, kind: input, shape index: {}]
  %s1 = inlined_call_operand.hbm [shape: bf16[2,256,512], index: 1, kind: input, shape index: {}]
  %s2 = inlined_call_operand.hbm [shape: f32[2,1,512], index: 2, kind: input, shape index: {}]
  %s3 = inlined_call_operand.hbm [shape: bf16[256,128], index: 3, kind: input, shape index: {}]
  %s4 = inlined_call_operand.vmem [shape: f32[1,128], index: 4, kind: input, shape index: {}]
  %s5 = inlined_call_operand.hbm [shape: bf16[128,128], index: 5, kind: input, shape index: {}]
  %s6 = inlined_call_operand.vmem [shape: f32[1,128], index: 6, kind: input, shape index: {}]
  %s7 = inlined_call_operand.hbm [shape: bf16[2,8,128,128], index: 7, kind: input, shape index: {}]
  %s8 = inlined_call_operand.vmem [shape: f32[2,8,128], index: 8, kind: input, shape index: {}]
  %s9 = inlined_call_operand.vmem [shape: f32[2,8,128], index: 9, kind: input, shape index: {}]
  %s10 = inlined_call_operand.hbm [shape: f32[2,8,128], index: 10, kind: output, shape index: {}]
  %s11 = sld [smem:[#allocation0]]
  $region78: #{tpu_custom_call.1} parent=0
    _
  %s13 = ssub.s32 1, %s11
  %s14 = scalar_select 0, %s13, %s11
  $region1: #{tpu_custom_call.1} parent=0
    #allocation6 [shape = 'u8[2048]{0}', space=vmem, size = 0x800, scoped, tag = 'input window, operand 0, single buffered']
    #allocation7 [shape = 's32[1]{0}', space=sflag, size = 0x4, scoped, tag = 'scoped memory for tpu_custom_call.1']
    #allocation8 [shape = 's32[1]{0}', space=sflag, size = 0x4, scoped, tag = 'scoped memory for tpu_custom_call.1']
    #allocation9 [shape = 'u8[524288]{0}', space=vmem, size = 0x80000, scoped, tag = 'input window, operand 1, single buffered']
    #allocation10 [shape = 's32[1]{0}', space=sflag, size = 0x4, scoped, tag = 'scoped memory for tpu_custom_call.1']
    #allocation11 [shape = 'u8[4096]{0}', space=vmem, size = 0x1000, scoped, tag = 'input window, operand 2, single buffered']
    #allocation12 [shape = 'u8[65536]{0}', space=vmem, size = 0x10000, scoped, tag = 'input window, operand 3, single buffered']
    #allocation13 [shape = 's32[1]{0}', space=sflag, size = 0x4, scoped, tag = 'scoped memory for tpu_custom_call.1']
    #allocation14 [shape = 'u8[32768]{0}', space=vmem, size = 0x8000, scoped, tag = 'input window, operand 5, single buffered']
    #allocation15 [shape = 'u8[524288]{0}', space=vmem, size = 0x80000, scoped, tag = 'input window, operand 7, single buffered']
    #allocation16 [shape = 's32[1]{0}', space=sflag, size = 0x4, scoped, tag = 'scoped memory for tpu_custom_call.1']
    #allocation17 [shape = 'u8[8192]{0}', space=vmem, size = 0x2000, scoped, tag = 'output window, operand 0, single buffered']
    %15 = vsyncpa [#allocation7], 0
    %16 = vsyncpa [#allocation10], 0
    %17 = vsyncpa [#allocation13], 0
    %18 = vsyncpa [#allocation16], 0
    %19 = vsyncpa [#allocation8], 0
    // Predicated region
    $region2: #{tpu_custom_call.1} parent=1 // pred_check
      _
    $region3: #{tpu_custom_call.1} parent=1 // pred_check_branch
      %21 = sbr.rel (0) target = $region5
    $region4: #{tpu_custom_call.1} parent=1 // pred_region
      %s23 = ssub.s32 64, 64
      %24 = vsyncadd [#allocation7], %s23
      %s26 = sshll.u32 [#allocation6], 4
      %s27 = int_to_ptr.vmem [resolvable:$true] %s26
      %29 = dma.hbm_to_vmem [thread:$0]  %s0, 64, %s27, [#allocation7]
    $region5: #{tpu_custom_call.1} parent=1 // pred_fallthru
      _
    // Predicated region
    $region6: #{tpu_custom_call.1} parent=1 // pred_check
      _
    $region7: #{tpu_custom_call.1} parent=1 // pred_check_branch
      %31 = sbr.rel (0) target = $region9
    $region8: #{tpu_custom_call.1} parent=1 // pred_region
      %s33 = ssub.s32 16384, 16384
      %34 = vsyncadd [#allocation10], %s33
      %s35 = sshll.u32 [#allocation9], 4
      %s36 = int_to_ptr.vmem [resolvable:$true] %s35
      %41 = dma.hbm_to_vmem [thread:$0]  %s1, 16384, %s36, [#allocation10], 256, 256, 16
    $region9: #{tpu_custom_call.1} parent=1 // pred_fallthru
      _
    // Predicated region
    $region10: #{tpu_custom_call.1} parent=1 // pred_check
      _
    $region11: #{tpu_custom_call.1} parent=1 // pred_check_branch
      %43 = sbr.rel (0) target = $region13
    $region12: #{tpu_custom_call.1} parent=1 // pred_region
      %s45 = ssub.s32 128, 128
      %46 = vsyncadd [#allocation10], %s45
      %s47 = sshll.u32 [#allocation11], 4
      %s48 = int_to_ptr.vmem [resolvable:$true] %s47
      %53 = dma.hbm_to_vmem [thread:$0]  %s2, 128, %s48, [#allocation10], 64, 64, 4
    $region13: #{tpu_custom_call.1} parent=1 // pred_fallthru
      _
    // Predicated region
    $region14: #{tpu_custom_call.1} parent=1 // pred_check
      _
    $region15: #{tpu_custom_call.1} parent=1 // pred_check_branch
      %55 = sbr.rel (0) target = $region17
    $region16: #{tpu_custom_call.1} parent=1 // pred_region
      %s57 = ssub.s32 2048, 2048
      %58 = vsyncadd [#allocation13], %s57
      %s59 = sshll.u32 [#allocation12], 4
      %s60 = int_to_ptr.vmem [resolvable:$true] %s59
      %65 = dma.hbm_to_vmem [thread:$0]  %s3, 2048, %s60, [#allocation13], 64, 64, 4
    $region17: #{tpu_custom_call.1} parent=1 // pred_fallthru
      _
    // Predicated region
    $region18: #{tpu_custom_call.1} parent=1 // pred_check
      _
    $region19: #{tpu_custom_call.1} parent=1 // pred_check_branch
      %67 = sbr.rel (0) target = $region21
    $region20: #{tpu_custom_call.1} parent=1 // pred_region
      _
    $region21: #{tpu_custom_call.1} parent=1 // pred_fallthru
      _
    // Predicated region
    $region22: #{tpu_custom_call.1} parent=1 // pred_check
      _
    $region23: #{tpu_custom_call.1} parent=1 // pred_check_branch
      %69 = sbr.rel (0) target = $region25
    $region24: #{tpu_custom_call.1} parent=1 // pred_region
      %s71 = ssub.s32 1024, 1024
      %72 = vsyncadd [#allocation13], %s71
      %s73 = sshll.u32 [#allocation14], 4
      %s74 = int_to_ptr.vmem [resolvable:$true] %s73
      %79 = dma.hbm_to_vmem [thread:$0]  %s5, 1024, %s74, [#allocation13], 64, 64, 4
    $region25: #{tpu_custom_call.1} parent=1 // pred_fallthru
      _
    // Predicated region
    $region26: #{tpu_custom_call.1} parent=1 // pred_check
      _
    $region27: #{tpu_custom_call.1} parent=1 // pred_check_branch
      %81 = sbr.rel (0) target = $region29
    $region28: #{tpu_custom_call.1} parent=1 // pred_region
      _
    $region29: #{tpu_custom_call.1} parent=1 // pred_fallthru
      _
    // Predicated region
    $region30: #{tpu_custom_call.1} parent=1 // pred_check
      _
    $region31: #{tpu_custom_call.1} parent=1 // pred_check_branch
      %83 = sbr.rel (0) target = $region33
    $region32: #{tpu_custom_call.1} parent=1 // pred_region
      %s85 = ssub.s32 16384, 16384
      %86 = vsyncadd [#allocation16], %s85
      %s87 = sshll.u32 [#allocation15], 4
      %s88 = int_to_ptr.vmem [resolvable:$true] %s87
      %93 = dma.hbm_to_vmem [thread:$0]  %s7, 16384, %s88, [#allocation16], 64, 64, 4
    $region33: #{tpu_custom_call.1} parent=1 // pred_fallthru
      _
    // Predicated region
    $region34: #{tpu_custom_call.1} parent=1 // pred_check
      _
    $region35: #{tpu_custom_call.1} parent=1 // pred_check_branch
      %95 = sbr.rel (0) target = $region37
    $region36: #{tpu_custom_call.1} parent=1 // pred_region
      _
    $region37: #{tpu_custom_call.1} parent=1 // pred_fallthru
      _
    // Predicated region
    $region38: #{tpu_custom_call.1} parent=1 // pred_check
      _
    $region39: #{tpu_custom_call.1} parent=1 // pred_check_branch
      %97 = sbr.rel (0) target = $region41
    $region40: #{tpu_custom_call.1} parent=1 // pred_region
      _
    $region41: #{tpu_custom_call.1} parent=1 // pred_fallthru
      _
    // Predicated region
    $region42: #{tpu_custom_call.1} parent=1 // pred_check
      _
    $region43: #{tpu_custom_call.1} parent=1 // pred_check_branch
      %99 = sbr.rel (0) target = $region45
    $region44: #{tpu_custom_call.1} parent=1 // pred_region
      %100 = dma.done [#allocation7], 64
    $region45: #{tpu_custom_call.1} parent=1 // pred_fallthru
      _
    // Predicated region
    $region46: #{tpu_custom_call.1} parent=1 // pred_check
      _
    $region47: #{tpu_custom_call.1} parent=1 // pred_check_branch
      %102 = sbr.rel (0) target = $region49
    $region48: #{tpu_custom_call.1} parent=1 // pred_region
      %103 = dma.done [#allocation10], 16384
    $region49: #{tpu_custom_call.1} parent=1 // pred_fallthru
      _
    // Predicated region
    $region50: #{tpu_custom_call.1} parent=1 // pred_check
      _
    $region51: #{tpu_custom_call.1} parent=1 // pred_check_branch
      %105 = sbr.rel (0) target = $region53
    $region52: #{tpu_custom_call.1} parent=1 // pred_region
      %106 = dma.done [#allocation10], 128
    $region53: #{tpu_custom_call.1} parent=1 // pred_fallthru
      _
    // Predicated region
    $region54: #{tpu_custom_call.1} parent=1 // pred_check
      _
    $region55: #{tpu_custom_call.1} parent=1 // pred_check_branch
      %108 = sbr.rel (0) target = $region57
    $region56: #{tpu_custom_call.1} parent=1 // pred_region
      %109 = dma.done [#allocation13], 2048
    $region57: #{tpu_custom_call.1} parent=1 // pred_fallthru
      _
    // Predicated region
    $region58: #{tpu_custom_call.1} parent=1 // pred_check
      _
    $region59: #{tpu_custom_call.1} parent=1 // pred_check_branch
      %111 = sbr.rel (0) target = $region61
    $region60: #{tpu_custom_call.1} parent=1 // pred_region
      %112 = dma.done [#allocation13], 1024
    $region61: #{tpu_custom_call.1} parent=1 // pred_fallthru
      _
    // Predicated region
    $region62: #{tpu_custom_call.1} parent=1 // pred_check
      _
    $region63: #{tpu_custom_call.1} parent=1 // pred_check_branch
      %114 = sbr.rel (0) target = $region65
    $region64: #{tpu_custom_call.1} parent=1 // pred_region
      %115 = dma.done [#allocation16], 16384
    $region65: #{tpu_custom_call.1} parent=1 // pred_fallthru
      _
    %p117 = scmp.eq.s32.totalorder 0, 0
    // Predicated region
    $region66: #{tpu_custom_call.1} parent=1 // pred_check
      %p118 = pneg %p117
    $region67: #{tpu_custom_call.1} parent=1 // pred_check_branch
      %120 = sbr.rel (%p118) target = $region69
    $region68: #{tpu_custom_call.1} parent=1 // pred_region
      %121 = vst [vmem:[#allocation2] sm:$0xff] 0.0
      %122 = vst [vmem:[#allocation2 + $0x8] sm:$0xff] 0.0
      %123 = vst [vmem:[#allocation3] sm:$0xff] 0.0
      %124 = vst [vmem:[#allocation3 + $0x8] sm:$0xff] 0.0
      %125 = vst [vmem:[#allocation4] sm:$0xff] 0.0
    $region69: #{tpu_custom_call.1} parent=1 // pred_fallthru
      _
    %v126 = vld [vmem:[#allocation4] sm:$0xff]
    %v127 = vpack.c.bf16 %v126, %v126
    %128 = vst [vmem:[#allocation5] sm:$0xf] %v127
    %v129 = vld [vmem:[#allocation2] sm:$0xff]
    %v130 = vpack.c.bf16 %v129, %v129
    %131 = vst [vmem:[#allocation5 + $0x4] sm:$0xf] %v130
    %v132 = vld [vmem:[#allocation5] sm:$0xff]
    %v133 = vld [vmem:[#allocation9] sm:$0xff]
    %v134 = vld [vmem:[#allocation9 + $0x8] sm:$0xff]
    %v135 = vld [vmem:[#allocation9 + $0x10] sm:$0xff]
    %v136 = vld [vmem:[#allocation9 + $0x18] sm:$0xff]
    %v137 = vld [vmem:[#allocation9 + $0x20] sm:$0xff]
    %v138 = vld [vmem:[#allocation9 + $0x28] sm:$0xff]
    %v139 = vld [vmem:[#allocation9 + $0x30] sm:$0xff]
    %v140 = vld [vmem:[#allocation9 + $0x38] sm:$0xff]
    %v141 = vld [vmem:[#allocation9 + $0x40] sm:$0xff]
    %v142 = vld [vmem:[#allocation9 + $0x48] sm:$0xff]
    %v143 = vld [vmem:[#allocation9 + $0x50] sm:$0xff]
    %v144 = vld [vmem:[#allocation9 + $0x58] sm:$0xff]
    %v145 = vld [vmem:[#allocation9 + $0x60] sm:$0xff]
    %v146 = vld [vmem:[#allocation9 + $0x68] sm:$0xff]
    %v147 = vld [vmem:[#allocation9 + $0x70] sm:$0xff]
    %v148 = vld [vmem:[#allocation9 + $0x78] sm:$0xff]
    %v149 = vld [vmem:[#allocation9 + $0x80] sm:$0xff]
    %v150 = vld [vmem:[#allocation9 + $0x88] sm:$0xff]
    %v151 = vld [vmem:[#allocation9 + $0x90] sm:$0xff]
    %v152 = vld [vmem:[#allocation9 + $0x98] sm:$0xff]
    %v153 = vld [vmem:[#allocation9 + $0xa0] sm:$0xff]
    %v154 = vld [vmem:[#allocation9 + $0xa8] sm:$0xff]
    %v155 = vld [vmem:[#allocation9 + $0xb0] sm:$0xff]
    %v156 = vld [vmem:[#allocation9 + $0xb8] sm:$0xff]
    %v157 = vld [vmem:[#allocation9 + $0xc0] sm:$0xff]
    %v158 = vld [vmem:[#allocation9 + $0xc8] sm:$0xff]
    %v159 = vld [vmem:[#allocation9 + $0xd0] sm:$0xff]
    %v160 = vld [vmem:[#allocation9 + $0xd8] sm:$0xff]
    %v161 = vld [vmem:[#allocation9 + $0xe0] sm:$0xff]
    %v162 = vld [vmem:[#allocation9 + $0xe8] sm:$0xff]
    %v163 = vld [vmem:[#allocation9 + $0xf0] sm:$0xff]
    %v164 = vld [vmem:[#allocation9 + $0xf8] sm:$0xff]
    %v165 = vld [vmem:[#allocation9 + $0x100] sm:$0xff]
    %v166 = vld [vmem:[#allocation9 + $0x108] sm:$0xff]
    %v167 = vld [vmem:[#allocation9 + $0x110] sm:$0xff]
    %v168 = vld [vmem:[#allocation9 + $0x118] sm:$0xff]
    %v169 = vld [vmem:[#allocation9 + $0x120] sm:$0xff]
    %v170 = vld [vmem:[#allocation9 + $0x128] sm:$0xff]
    %v171 = vld [vmem:[#allocation9 + $0x130] sm:$0xff]
    %v172 = vld [vmem:[#allocation9 + $0x138] sm:$0xff]
    %v173 = vld [vmem:[#allocation9 + $0x140] sm:$0xff]
    %v174 = vld [vmem:[#allocation9 + $0x148] sm:$0xff]
    %v175 = vld [vmem:[#allocation9 + $0x150] sm:$0xff]
    %v176 = vld [vmem:[#allocation9 + $0x158] sm:$0xff]
    %v177 = vld [vmem:[#allocation9 + $0x160] sm:$0xff]
    %v178 = vld [vmem:[#allocation9 + $0x168] sm:$0xff]
    %v179 = vld [vmem:[#allocation9 + $0x170] sm:$0xff]
    %v180 = vld [vmem:[#allocation9 + $0x178] sm:$0xff]
    %v181 = vld [vmem:[#allocation9 + $0x180] sm:$0xff]
    %v182 = vld [vmem:[#allocation9 + $0x188] sm:$0xff]
    %v183 = vld [vmem:[#allocation9 + $0x190] sm:$0xff]
    %v184 = vld [vmem:[#allocation9 + $0x198] sm:$0xff]
    %v185 = vld [vmem:[#allocation9 + $0x1a0] sm:$0xff]
    %v186 = vld [vmem:[#allocation9 + $0x1a8] sm:$0xff]
    %v187 = vld [vmem:[#allocation9 + $0x1b0] sm:$0xff]
    %v188 = vld [vmem:[#allocation9 + $0x1b8] sm:$0xff]
    %v189 = vld [vmem:[#allocation9 + $0x1c0] sm:$0xff]
    %v190 = vld [vmem:[#allocation9 + $0x1c8] sm:$0xff]
    %v191 = vld [vmem:[#allocation9 + $0x1d0] sm:$0xff]
    %v192 = vld [vmem:[#allocation9 + $0x1d8] sm:$0xff]
    %v193 = vld [vmem:[#allocation9 + $0x1e0] sm:$0xff]
    %v194 = vld [vmem:[#allocation9 + $0x1e8] sm:$0xff]
    %v195 = vld [vmem:[#allocation9 + $0x1f0] sm:$0xff]
    %v196 = vld [vmem:[#allocation9 + $0x1f8] sm:$0xff]
    %v197 = vld [vmem:[#allocation11] sm:$0xf]
    %v199 = vlaneseq
    %v200 = vshrl.u32 %v199, 7
    %v201 = vsub.s32 0, %v200
    %v202 = vrot.slane %v197, %v201
    %v203 = vlaneseq
    %v204 = vshrl.u32 %v203, 7
    %v205 = vsub.s32 1, %v204
    %v206 = vrot.slane %v197, %v205
    %v207 = vlaneseq
    %v208 = vshrl.u32 %v207, 7
    %v209 = vsub.s32 2, %v208
    %v210 = vrot.slane %v197, %v209
    %v211 = vlaneseq
    %v212 = vshrl.u32 %v211, 7
    %v213 = vsub.s32 3, %v212
    %v214 = vrot.slane %v197, %v213
    %v220 = vunpack.c.l.b16 %v132
    %v221 = vunpack.c.h.b16 %v132
    %v222 = vpack.c.b16 %v220, %v220
    %v223 = vpack.c.b16 %v221, %v221
    %v290 = vunpack.c.l.b16 %v133
    %v291 = vunpack.c.h.b16 %v133
    %v292 = vunpack.c.l.b16 %v134
    %v293 = vunpack.c.h.b16 %v134
    %v294 = vunpack.c.l.b16 %v135
    %v295 = vunpack.c.h.b16 %v135
    %v296 = vunpack.c.l.b16 %v136
    %v297 = vunpack.c.h.b16 %v136
    %v298 = vunpack.c.l.b16 %v137
    %v299 = vunpack.c.h.b16 %v137
    %v300 = vunpack.c.l.b16 %v138
    %v301 = vunpack.c.h.b16 %v138
    %v302 = vunpack.c.l.b16 %v139
    %v303 = vunpack.c.h.b16 %v139
    %v304 = vunpack.c.l.b16 %v140
    %v305 = vunpack.c.h.b16 %v140
    %v306 = vunpack.c.l.b16 %v141
    %v307 = vunpack.c.h.b16 %v141
    %v308 = vunpack.c.l.b16 %v142
    %v309 = vunpack.c.h.b16 %v142
    %v310 = vunpack.c.l.b16 %v143
    %v311 = vunpack.c.h.b16 %v143
    %v312 = vunpack.c.l.b16 %v144
    %v313 = vunpack.c.h.b16 %v144
    %v314 = vunpack.c.l.b16 %v145
    %v315 = vunpack.c.h.b16 %v145
    %v316 = vunpack.c.l.b16 %v146
    %v317 = vunpack.c.h.b16 %v146
    %v318 = vunpack.c.l.b16 %v147
    %v319 = vunpack.c.h.b16 %v147
    %v320 = vunpack.c.l.b16 %v148
    %v321 = vunpack.c.h.b16 %v148
    %v322 = vunpack.c.l.b16 %v149
    %v323 = vunpack.c.h.b16 %v149
    %v324 = vunpack.c.l.b16 %v150
    %v325 = vunpack.c.h.b16 %v150
    %v326 = vunpack.c.l.b16 %v151
    %v327 = vunpack.c.h.b16 %v151
    %v328 = vunpack.c.l.b16 %v152
    %v329 = vunpack.c.h.b16 %v152
    %v330 = vunpack.c.l.b16 %v153
    %v331 = vunpack.c.h.b16 %v153
    %v332 = vunpack.c.l.b16 %v154
    %v333 = vunpack.c.h.b16 %v154
    %v334 = vunpack.c.l.b16 %v155
    %v335 = vunpack.c.h.b16 %v155
    %v336 = vunpack.c.l.b16 %v156
    %v337 = vunpack.c.h.b16 %v156
    %v338 = vunpack.c.l.b16 %v157
    %v339 = vunpack.c.h.b16 %v157
    %v340 = vunpack.c.l.b16 %v158
    %v341 = vunpack.c.h.b16 %v158
    %v342 = vunpack.c.l.b16 %v159
    %v343 = vunpack.c.h.b16 %v159
    %v344 = vunpack.c.l.b16 %v160
    %v345 = vunpack.c.h.b16 %v160
    %v346 = vunpack.c.l.b16 %v161
    %v347 = vunpack.c.h.b16 %v161
    %v348 = vunpack.c.l.b16 %v162
    %v349 = vunpack.c.h.b16 %v162
    %v350 = vunpack.c.l.b16 %v163
    %v351 = vunpack.c.h.b16 %v163
    %v352 = vunpack.c.l.b16 %v164
    %v353 = vunpack.c.h.b16 %v164
    %v354 = vunpack.c.l.b16 %v165
    %v355 = vunpack.c.h.b16 %v165
    %v356 = vunpack.c.l.b16 %v166
    %v357 = vunpack.c.h.b16 %v166
    %v358 = vunpack.c.l.b16 %v167
    %v359 = vunpack.c.h.b16 %v167
    %v360 = vunpack.c.l.b16 %v168
    %v361 = vunpack.c.h.b16 %v168
    %v362 = vunpack.c.l.b16 %v169
    %v363 = vunpack.c.h.b16 %v169
    %v364 = vunpack.c.l.b16 %v170
    %v365 = vunpack.c.h.b16 %v170
    %v366 = vunpack.c.l.b16 %v171
    %v367 = vunpack.c.h.b16 %v171
    %v368 = vunpack.c.l.b16 %v172
    %v369 = vunpack.c.h.b16 %v172
    %v370 = vunpack.c.l.b16 %v173
    %v371 = vunpack.c.h.b16 %v173
    %v372 = vunpack.c.l.b16 %v174
    %v373 = vunpack.c.h.b16 %v174
    %v374 = vunpack.c.l.b16 %v175
    %v375 = vunpack.c.h.b16 %v175
    %v376 = vunpack.c.l.b16 %v176
    %v377 = vunpack.c.h.b16 %v176
    %v378 = vunpack.c.l.b16 %v177
    %v379 = vunpack.c.h.b16 %v177
    %v380 = vunpack.c.l.b16 %v178
    %v381 = vunpack.c.h.b16 %v178
    %v382 = vunpack.c.l.b16 %v179
    %v383 = vunpack.c.h.b16 %v179
    %v384 = vunpack.c.l.b16 %v180
    %v385 = vunpack.c.h.b16 %v180
    %v386 = vunpack.c.l.b16 %v181
    %v387 = vunpack.c.h.b16 %v181
    %v388 = vunpack.c.l.b16 %v182
    %v389 = vunpack.c.h.b16 %v182
    %v390 = vunpack.c.l.b16 %v183
    %v391 = vunpack.c.h.b16 %v183
    %v392 = vunpack.c.l.b16 %v184
    %v393 = vunpack.c.h.b16 %v184
    %v394 = vunpack.c.l.b16 %v185
    %v395 = vunpack.c.h.b16 %v185
    %v396 = vunpack.c.l.b16 %v186
    %v397 = vunpack.c.h.b16 %v186
    %v398 = vunpack.c.l.b16 %v187
    %v399 = vunpack.c.h.b16 %v187
    %v400 = vunpack.c.l.b16 %v188
    %v401 = vunpack.c.h.b16 %v188
    %v402 = vunpack.c.l.b16 %v189
    %v403 = vunpack.c.h.b16 %v189
    %v404 = vunpack.c.l.b16 %v190
    %v405 = vunpack.c.h.b16 %v190
    %v406 = vunpack.c.l.b16 %v191
    %v407 = vunpack.c.h.b16 %v191
    %v408 = vunpack.c.l.b16 %v192
    %v409 = vunpack.c.h.b16 %v192
    %v410 = vunpack.c.l.b16 %v193
    %v411 = vunpack.c.h.b16 %v193
    %v412 = vunpack.c.l.b16 %v194
    %v413 = vunpack.c.h.b16 %v194
    %v414 = vunpack.c.l.b16 %v195
    %v415 = vunpack.c.h.b16 %v195
    %v416 = vunpack.c.l.b16 %v196
    %v417 = vunpack.c.h.b16 %v196
    %v418 = vpack.c.b16 %v294, %v290
    %v419 = vpack.c.b16 %v295, %v291
    %v420 = vpack.c.b16 %v296, %v292
    %v421 = vpack.c.b16 %v297, %v293
    %v422 = vpack.c.b16 %v302, %v298
    %v423 = vpack.c.b16 %v303, %v299
    %v424 = vpack.c.b16 %v304, %v300
    %v425 = vpack.c.b16 %v305, %v301
    %v426 = vpack.c.b16 %v310, %v306
    %v427 = vpack.c.b16 %v311, %v307
    %v428 = vpack.c.b16 %v312, %v308
    %v429 = vpack.c.b16 %v313, %v309
    %v430 = vpack.c.b16 %v318, %v314
    %v431 = vpack.c.b16 %v319, %v315
    %v432 = vpack.c.b16 %v320, %v316
    %v433 = vpack.c.b16 %v321, %v317
    %v434 = vpack.c.b16 %v326, %v322
    %v435 = vpack.c.b16 %v327, %v323
    %v436 = vpack.c.b16 %v328, %v324
    %v437 = vpack.c.b16 %v329, %v325
    %v438 = vpack.c.b16 %v334, %v330
    %v439 = vpack.c.b16 %v335, %v331
    %v440 = vpack.c.b16 %v336, %v332
    %v441 = vpack.c.b16 %v337, %v333
    %v442 = vpack.c.b16 %v342, %v338
    %v443 = vpack.c.b16 %v343, %v339
    %v444 = vpack.c.b16 %v344, %v340
    %v445 = vpack.c.b16 %v345, %v341
    %v446 = vpack.c.b16 %v350, %v346
    %v447 = vpack.c.b16 %v351, %v347
    %v448 = vpack.c.b16 %v352, %v348
    %v449 = vpack.c.b16 %v353, %v349
    %v450 = vpack.c.b16 %v358, %v354
    %v451 = vpack.c.b16 %v359, %v355
    %v452 = vpack.c.b16 %v360, %v356
    %v453 = vpack.c.b16 %v361, %v357
    %v454 = vpack.c.b16 %v366, %v362
    %v455 = vpack.c.b16 %v367, %v363
    %v456 = vpack.c.b16 %v368, %v364
    %v457 = vpack.c.b16 %v369, %v365
    %v458 = vpack.c.b16 %v374, %v370
    %v459 = vpack.c.b16 %v375, %v371
    %v460 = vpack.c.b16 %v376, %v372
    %v461 = vpack.c.b16 %v377, %v373
    %v462 = vpack.c.b16 %v382, %v378
    %v463 = vpack.c.b16 %v383, %v379
    %v464 = vpack.c.b16 %v384, %v380
    %v465 = vpack.c.b16 %v385, %v381
    %v466 = vpack.c.b16 %v390, %v386
    %v467 = vpack.c.b16 %v391, %v387
    %v468 = vpack.c.b16 %v392, %v388
    %v469 = vpack.c.b16 %v393, %v389
    %v470 = vpack.c.b16 %v398, %v394
    %v471 = vpack.c.b16 %v399, %v395
    %v472 = vpack.c.b16 %v400, %v396
    %v473 = vpack.c.b16 %v401, %v397
    %v474 = vpack.c.b16 %v406, %v402
    %v475 = vpack.c.b16 %v407, %v403
    %v476 = vpack.c.b16 %v408, %v404
    %v477 = vpack.c.b16 %v409, %v405
    %v478 = vpack.c.b16 %v414, %v410
    %v479 = vpack.c.b16 %v415, %v411
    %v480 = vpack.c.b16 %v416, %v412
    %v481 = vpack.c.b16 %v417, %v413
    %546 = vmatprep.subr.bf16.mxu0 %v419
    %547 = vmatpush1.bf16.msra.mxu0 %v418
    %548 = vmatprep.subr.bf16.mxu0 %v423
    %549 = vmatpush1.bf16.msra.mxu0 %v422
    %550 = vmatprep.subr.bf16.mxu0 %v427
    %551 = vmatpush1.bf16.msra.mxu0 %v426
    %552 = vmatprep.subr.bf16.mxu0 %v431
    %553 = vmatpush1.bf16.msra.mxu0 %v430
    %554 = vmatprep.subr.bf16.mxu0 %v435
    %555 = vmatpush1.bf16.msra.mxu0 %v434
    %556 = vmatprep.subr.bf16.mxu0 %v439
    %557 = vmatpush1.bf16.msra.mxu0 %v438
    %558 = vmatprep.subr.bf16.mxu0 %v443
    %559 = vmatpush1.bf16.msra.mxu0 %v442
    %560 = vmatprep.subr.bf16.mxu0 %v447
    %561 = vmatpush1.bf16.msra.mxu0 %v446
    %562 = vmatprep.subr.bf16.mxu0 %v451
    %563 = vmatpush1.bf16.msra.mxu0 %v450
    %564 = vmatprep.subr.bf16.mxu0 %v455
    %565 = vmatpush1.bf16.msra.mxu0 %v454
    %566 = vmatprep.subr.bf16.mxu0 %v459
    %567 = vmatpush1.bf16.msra.mxu0 %v458
    %568 = vmatprep.subr.bf16.mxu0 %v463
    %569 = vmatpush1.bf16.msra.mxu0 %v462
    %570 = vmatprep.subr.bf16.mxu0 %v467
    %571 = vmatpush1.bf16.msra.mxu0 %v466
    %572 = vmatprep.subr.bf16.mxu0 %v471
    %573 = vmatpush1.bf16.msra.mxu0 %v470
    %574 = vmatprep.subr.bf16.mxu0 %v475
    %575 = vmatpush1.bf16.msra.mxu0 %v474
    %576 = vmatprep.subr.bf16.mxu0 %v479
    %577 = vmatpush1.bf16.msra.mxu0 %v478
    %578 = vmatprep.mubr.bf16.mxu0 %v223
    %579 = vmatmul.mubr.bf16.gmra.mrb[0].mxu0 %v222
    %v580 = vpop.f32.mrb[0].mxu0
    %v581 = vadd.f32 %v202, %v580
    %v582 = vpop.f32.mrb[0].mxu0
    %v583 = vadd.f32 %v206, %v582
    %v584 = vpop.f32.mrb[0].mxu0
    %v585 = vpop.f32.mrb[0].mxu0
    %586 = vdwg.mxu0
    %587 = vmatprep.subr.bf16.mxu0 %v421
    %588 = vmatpush1.bf16.msra.mxu0 %v420
    %589 = vmatprep.subr.bf16.mxu0 %v425
    %590 = vmatpush1.bf16.msra.mxu0 %v424
    %591 = vmatprep.subr.bf16.mxu0 %v429
    %592 = vmatpush1.bf16.msra.mxu0 %v428
    %593 = vmatprep.subr.bf16.mxu0 %v433
    %594 = vmatpush1.bf16.msra.mxu0 %v432
    %595 = vmatprep.subr.bf16.mxu0 %v437
    %596 = vmatpush1.bf16.msra.mxu0 %v436
    %597 = vmatprep.subr.bf16.mxu0 %v441
    %598 = vmatpush1.bf16.msra.mxu0 %v440
    %599 = vmatprep.subr.bf16.mxu0 %v445
    %600 = vmatpush1.bf16.msra.mxu0 %v444
    %601 = vmatprep.subr.bf16.mxu0 %v449
    %602 = vmatpush1.bf16.msra.mxu0 %v448
    %603 = vmatprep.subr.bf16.mxu0 %v453
    %604 = vmatpush1.bf16.msra.mxu0 %v452
    %605 = vmatprep.subr.bf16.mxu0 %v457
    %606 = vmatpush1.bf16.msra.mxu0 %v456
    %607 = vmatprep.subr.bf16.mxu0 %v461
    %608 = vmatpush1.bf16.msra.mxu0 %v460
    %609 = vmatprep.subr.bf16.mxu0 %v465
    %610 = vmatpush1.bf16.msra.mxu0 %v464
    %611 = vmatprep.subr.bf16.mxu0 %v469
    %612 = vmatpush1.bf16.msra.mxu0 %v468
    %613 = vmatprep.subr.bf16.mxu0 %v473
    %614 = vmatpush1.bf16.msra.mxu0 %v472
    %615 = vmatprep.subr.bf16.mxu0 %v477
    %616 = vmatpush1.bf16.msra.mxu0 %v476
    %617 = vmatprep.subr.bf16.mxu0 %v481
    %618 = vmatpush1.bf16.msra.mxu0 %v480
    %619 = vmatprep.mubr.bf16.mxu0 %v223
    %620 = vmatmul.mubr.bf16.gmra.mrb[0].mxu0 %v222
    %v621 = vpop.f32.mrb[0].mxu0
    %v622 = vadd.f32 %v210, %v621
    %v623 = vpop.f32.mrb[0].mxu0
    %v624 = vadd.f32 %v214, %v623
    %v625 = vpop.f32.mrb[0].mxu0
    %v626 = vpop.f32.mrb[0].mxu0
    %627 = vdwg.mxu0
    %v628 = vxor.u32 %v581, 2147483648
    %v629 = vmul.f32 %v628, 1.442695
    %v630 = vpow.pop %v629
    %v631 = vadd.f32 %v630, 1.0
    %v632 = vrcp.pop %v631
    %v633 = vmul.f32 1.0, %v632
    %v634 = vxor.u32 %v583, 2147483648
    %v635 = vmul.f32 %v634, 1.442695
    %v636 = vpow.pop %v635
    %v637 = vadd.f32 %v636, 1.0
    %v638 = vrcp.pop %v637
    %v639 = vmul.f32 1.0, %v638
    %v640 = vtanh.pop %v622
    %v641 = vxor.u32 %v624, 2147483648
    %v642 = vmul.f32 %v641, 1.442695
    %v643 = vpow.pop %v642
    %v644 = vadd.f32 %v643, 1.0
    %v645 = vrcp.pop %v644
    %v646 = vmul.f32 1.0, %v645
    %v647 = vld [vmem:[#allocation3] sm:$0xff]
    %v648 = vmul.f32 %v639, %v647
    %v649 = vmul.f32 %v633, %v640
    %v650 = vadd.f32 %v648, %v649
    %v651 = vtanh.pop %v650
    %v652 = vmul.f32 %v646, %v651
    %653 = vst [vmem:[#allocation2] sm:$0xff] %v652
    %654 = vst [vmem:[#allocation3] sm:$0xff] %v650
    %v655 = vpack.c.bf16 %v652, %v652
    %656 = vst [vmem:[#allocation5] sm:$0xf] %v655
    %s657 = scalar_lea.vmem [#allocation2], 8
    %v658 = vld [vmem:[%s657] sm:$0xff]
    %v659 = vpack.c.bf16 %v658, %v658
    %660 = vst [vmem:[#allocation5 + $0x4] sm:$0xf] %v659
    %v661 = vld [vmem:[#allocation5] sm:$0xff]
    %s662 = scalar_lea.vmem [#allocation9], 512
    %v663 = vld [vmem:[%s662] sm:$0xff]
    %v664 = vld [vmem:[%s662 + $0x8] sm:$0xff]
    %v665 = vld [vmem:[%s662 + $0x10] sm:$0xff]
    %v666 = vld [vmem:[%s662 + $0x18] sm:$0xff]
    %v667 = vld [vmem:[%s662 + $0x20] sm:$0xff]
    %v668 = vld [vmem:[%s662 + $0x28] sm:$0xff]
    %v669 = vld [vmem:[%s662 + $0x30] sm:$0xff]
    %v670 = vld [vmem:[%s662 + $0x38] sm:$0xff]
    %v671 = vld [vmem:[%s662 + $0x40] sm:$0xff]
    %v672 = vld [vmem:[%s662 + $0x48] sm:$0xff]
    %v673 = vld [vmem:[%s662 + $0x50] sm:$0xff]
    %v674 = vld [vmem:[%s662 + $0x58] sm:$0xff]
    %v675 = vld [vmem:[%s662 + $0x60] sm:$0xff]
    %v676 = vld [vmem:[%s662 + $0x68] sm:$0xff]
    %v677 = vld [vmem:[%s662 + $0x70] sm:$0xff]
    %v678 = vld [vmem:[%s662 + $0x78] sm:$0xff]
    %v679 = vld [vmem:[%s662 + $0x80] sm:$0xff]
    %v680 = vld [vmem:[%s662 + $0x88] sm:$0xff]
    %v681 = vld [vmem:[%s662 + $0x90] sm:$0xff]
    %v682 = vld [vmem:[%s662 + $0x98] sm:$0xff]
    %v683 = vld [vmem:[%s662 + $0xa0] sm:$0xff]
    %v684 = vld [vmem:[%s662 + $0xa8] sm:$0xff]
    %v685 = vld [vmem:[%s662 + $0xb0] sm:$0xff]
    %v686 = vld [vmem:[%s662 + $0xb8] sm:$0xff]
    %v687 = vld [vmem:[%s662 + $0xc0] sm:$0xff]
    %v688 = vld [vmem:[%s662 + $0xc8] sm:$0xff]
    %v689 = vld [vmem:[%s662 + $0xd0] sm:$0xff]
    %v690 = vld [vmem:[%s662 + $0xd8] sm:$0xff]
    %v691 = vld [vmem:[%s662 + $0xe0] sm:$0xff]
    %v692 = vld [vmem:[%s662 + $0xe8] sm:$0xff]
    %v693 = vld [vmem:[%s662 + $0xf0] sm:$0xff]
    %v694 = vld [vmem:[%s662 + $0xf8] sm:$0xff]
    %v695 = vld [vmem:[%s662 + $0x100] sm:$0xff]
    %v696 = vld [vmem:[%s662 + $0x108] sm:$0xff]
    %v697 = vld [vmem:[%s662 + $0x110] sm:$0xff]
    %v698 = vld [vmem:[%s662 + $0x118] sm:$0xff]
    %v699 = vld [vmem:[%s662 + $0x120] sm:$0xff]
    %v700 = vld [vmem:[%s662 + $0x128] sm:$0xff]
    %v701 = vld [vmem:[%s662 + $0x130] sm:$0xff]
    %v702 = vld [vmem:[%s662 + $0x138] sm:$0xff]
    %v703 = vld [vmem:[%s662 + $0x140] sm:$0xff]
    %v704 = vld [vmem:[%s662 + $0x148] sm:$0xff]
    %v705 = vld [vmem:[%s662 + $0x150] sm:$0xff]
    %v706 = vld [vmem:[%s662 + $0x158] sm:$0xff]
    %v707 = vld [vmem:[%s662 + $0x160] sm:$0xff]
    %v708 = vld [vmem:[%s662 + $0x168] sm:$0xff]
    %v709 = vld [vmem:[%s662 + $0x170] sm:$0xff]
    %v710 = vld [vmem:[%s662 + $0x178] sm:$0xff]
    %v711 = vld [vmem:[%s662 + $0x180] sm:$0xff]
    %v712 = vld [vmem:[%s662 + $0x188] sm:$0xff]
    %v713 = vld [vmem:[%s662 + $0x190] sm:$0xff]
    %v714 = vld [vmem:[%s662 + $0x198] sm:$0xff]
    %v715 = vld [vmem:[%s662 + $0x1a0] sm:$0xff]
    %v716 = vld [vmem:[%s662 + $0x1a8] sm:$0xff]
    %v717 = vld [vmem:[%s662 + $0x1b0] sm:$0xff]
    %v718 = vld [vmem:[%s662 + $0x1b8] sm:$0xff]
    %v719 = vld [vmem:[%s662 + $0x1c0] sm:$0xff]
    %v720 = vld [vmem:[%s662 + $0x1c8] sm:$0xff]
    %v721 = vld [vmem:[%s662 + $0x1d0] sm:$0xff]
    %v722 = vld [vmem:[%s662 + $0x1d8] sm:$0xff]
    %v723 = vld [vmem:[%s662 + $0x1e0] sm:$0xff]
    %v724 = vld [vmem:[%s662 + $0x1e8] sm:$0xff]
    %v725 = vld [vmem:[%s662 + $0x1f0] sm:$0xff]
    %v726 = vld [vmem:[%s662 + $0x1f8] sm:$0xff]
    %s727 = scalar_lea.vmem [#allocation11], 4
    %v728 = vld [vmem:[%s727] sm:$0xf]
    %v730 = vlaneseq
    %v731 = vshrl.u32 %v730, 7
    %v732 = vsub.s32 0, %v731
    %v733 = vrot.slane %v728, %v732
    %v734 = vlaneseq
    %v735 = vshrl.u32 %v734, 7
    %v736 = vsub.s32 1, %v735
    %v737 = vrot.slane %v728, %v736
    %v738 = vlaneseq
    %v739 = vshrl.u32 %v738, 7
    %v740 = vsub.s32 2, %v739
    %v741 = vrot.slane %v728, %v740
    %v742 = vlaneseq
    %v743 = vshrl.u32 %v742, 7
    %v744 = vsub.s32 3, %v743
    %v745 = vrot.slane %v728, %v744
    %v751 = vunpack.c.l.b16 %v661
    %v752 = vunpack.c.h.b16 %v661
    %v753 = vpack.c.b16 %v751, %v751
    %v754 = vpack.c.b16 %v752, %v752
    %v821 = vunpack.c.l.b16 %v663
    %v822 = vunpack.c.h.b16 %v663
    %v823 = vunpack.c.l.b16 %v664
    %v824 = vunpack.c.h.b16 %v664
    %v825 = vunpack.c.l.b16 %v665
    %v826 = vunpack.c.h.b16 %v665
    %v827 = vunpack.c.l.b16 %v666
    %v828 = vunpack.c.h.b16 %v666
    %v829 = vunpack.c.l.b16 %v667
    %v830 = vunpack.c.h.b16 %v667
    %v831 = vunpack.c.l.b16 %v668
    %v832 = vunpack.c.h.b16 %v668
    %v833 = vunpack.c.l.b16 %v669
    %v834 = vunpack.c.h.b16 %v669
    %v835 = vunpack.c.l.b16 %v670
    %v836 = vunpack.c.h.b16 %v670
    %v837 = vunpack.c.l.b16 %v671
    %v838 = vunpack.c.h.b16 %v671
    %v839 = vunpack.c.l.b16 %v672
    %v840 = vunpack.c.h.b16 %v672
    %v841 = vunpack.c.l.b16 %v673
    %v842 = vunpack.c.h.b16 %v673
    %v843 = vunpack.c.l.b16 %v674
    %v844 = vunpack.c.h.b16 %v674
    %v845 = vunpack.c.l.b16 %v675
    %v846 = vunpack.c.h.b16 %v675
    %v847 = vunpack.c.l.b16 %v676
    %v848 = vunpack.c.h.b16 %v676
    %v849 = vunpack.c.l.b16 %v677
    %v850 = vunpack.c.h.b16 %v677
    %v851 = vunpack.c.l.b16 %v678
    %v852 = vunpack.c.h.b16 %v678
    %v853 = vunpack.c.l.b16 %v679
    %v854 = vunpack.c.h.b16 %v679
    %v855 = vunpack.c.l.b16 %v680
    %v856 = vunpack.c.h.b16 %v680
    %v857 = vunpack.c.l.b16 %v681
    %v858 = vunpack.c.h.b16 %v681
    %v859 = vunpack.c.l.b16 %v682
    %v860 = vunpack.c.h.b16 %v682
    %v861 = vunpack.c.l.b16 %v683
    %v862 = vunpack.c.h.b16 %v683
    %v863 = vunpack.c.l.b16 %v684
    %v864 = vunpack.c.h.b16 %v684
    %v865 = vunpack.c.l.b16 %v685
    %v866 = vunpack.c.h.b16 %v685
    %v867 = vunpack.c.l.b16 %v686
    %v868 = vunpack.c.h.b16 %v686
    %v869 = vunpack.c.l.b16 %v687
    %v870 = vunpack.c.h.b16 %v687
    %v871 = vunpack.c.l.b16 %v688
    %v872 = vunpack.c.h.b16 %v688
    %v873 = vunpack.c.l.b16 %v689
    %v874 = vunpack.c.h.b16 %v689
    %v875 = vunpack.c.l.b16 %v690
    %v876 = vunpack.c.h.b16 %v690
    %v877 = vunpack.c.l.b16 %v691
    %v878 = vunpack.c.h.b16 %v691
    %v879 = vunpack.c.l.b16 %v692
    %v880 = vunpack.c.h.b16 %v692
    %v881 = vunpack.c.l.b16 %v693
    %v882 = vunpack.c.h.b16 %v693
    %v883 = vunpack.c.l.b16 %v694
    %v884 = vunpack.c.h.b16 %v694
    %v885 = vunpack.c.l.b16 %v695
    %v886 = vunpack.c.h.b16 %v695
    %v887 = vunpack.c.l.b16 %v696
    %v888 = vunpack.c.h.b16 %v696
    %v889 = vunpack.c.l.b16 %v697
    %v890 = vunpack.c.h.b16 %v697
    %v891 = vunpack.c.l.b16 %v698
    %v892 = vunpack.c.h.b16 %v698
    %v893 = vunpack.c.l.b16 %v699
    %v894 = vunpack.c.h.b16 %v699
    %v895 = vunpack.c.l.b16 %v700
    %v896 = vunpack.c.h.b16 %v700
    %v897 = vunpack.c.l.b16 %v701
    %v898 = vunpack.c.h.b16 %v701
    %v899 = vunpack.c.l.b16 %v702
    %v900 = vunpack.c.h.b16 %v702
    %v901 = vunpack.c.l.b16 %v703
    %v902 = vunpack.c.h.b16 %v703
    %v903 = vunpack.c.l.b16 %v704
    %v904 = vunpack.c.h.b16 %v704
    %v905 = vunpack.c.l.b16 %v705
    %v906 = vunpack.c.h.b16 %v705
    %v907 = vunpack.c.l.b16 %v706
    %v908 = vunpack.c.h.b16 %v706
    %v909 = vunpack.c.l.b16 %v707
    %v910 = vunpack.c.h.b16 %v707
    %v911 = vunpack.c.l.b16 %v708
    %v912 = vunpack.c.h.b16 %v708
    %v913 = vunpack.c.l.b16 %v709
    %v914 = vunpack.c.h.b16 %v709
    %v915 = vunpack.c.l.b16 %v710
    %v916 = vunpack.c.h.b16 %v710
    %v917 = vunpack.c.l.b16 %v711
    %v918 = vunpack.c.h.b16 %v711
    %v919 = vunpack.c.l.b16 %v712
    %v920 = vunpack.c.h.b16 %v712
    %v921 = vunpack.c.l.b16 %v713
    %v922 = vunpack.c.h.b16 %v713
    %v923 = vunpack.c.l.b16 %v714
    %v924 = vunpack.c.h.b16 %v714
    %v925 = vunpack.c.l.b16 %v715
    %v926 = vunpack.c.h.b16 %v715
    %v927 = vunpack.c.l.b16 %v716
    %v928 = vunpack.c.h.b16 %v716
    %v929 = vunpack.c.l.b16 %v717
    %v930 = vunpack.c.h.b16 %v717
    %v931 = vunpack.c.l.b16 %v718
    %v932 = vunpack.c.h.b16 %v718
    %v933 = vunpack.c.l.b16 %v719
    %v934 = vunpack.c.h.b16 %v719
    %v935 = vunpack.c.l.b16 %v720
    %v936 = vunpack.c.h.b16 %v720
    %v937 = vunpack.c.l.b16 %v721
    %v938 = vunpack.c.h.b16 %v721
    %v939 = vunpack.c.l.b16 %v722
    %v940 = vunpack.c.h.b16 %v722
    %v941 = vunpack.c.l.b16 %v723
    %v942 = vunpack.c.h.b16 %v723
    %v943 = vunpack.c.l.b16 %v724
    %v944 = vunpack.c.h.b16 %v724
    %v945 = vunpack.c.l.b16 %v725
    %v946 = vunpack.c.h.b16 %v725
    %v947 = vunpack.c.l.b16 %v726
    %v948 = vunpack.c.h.b16 %v726
    %v949 = vpack.c.b16 %v825, %v821
    %v950 = vpack.c.b16 %v826, %v822
    %v951 = vpack.c.b16 %v827, %v823
    %v952 = vpack.c.b16 %v828, %v824
    %v953 = vpack.c.b16 %v833, %v829
    %v954 = vpack.c.b16 %v834, %v830
    %v955 = vpack.c.b16 %v835, %v831
    %v956 = vpack.c.b16 %v836, %v832
    %v957 = vpack.c.b16 %v841, %v837
    %v958 = vpack.c.b16 %v842, %v838
    %v959 = vpack.c.b16 %v843, %v839
    %v960 = vpack.c.b16 %v844, %v840
    %v961 = vpack.c.b16 %v849, %v845
    %v962 = vpack.c.b16 %v850, %v846
    %v963 = vpack.c.b16 %v851, %v847
    %v964 = vpack.c.b16 %v852, %v848
    %v965 = vpack.c.b16 %v857, %v853
    %v966 = vpack.c.b16 %v858, %v854
    %v967 = vpack.c.b16 %v859, %v855
    %v968 = vpack.c.b16 %v860, %v856
    %v969 = vpack.c.b16 %v865, %v861
    %v970 = vpack.c.b16 %v866, %v862
    %v971 = vpack.c.b16 %v867, %v863
    %v972 = vpack.c.b16 %v868, %v864
    %v973 = vpack.c.b16 %v873, %v869
    %v974 = vpack.c.b16 %v874, %v870
    %v975 = vpack.c.b16 %v875, %v871
    %v976 = vpack.c.b16 %v876, %v872
    %v977 = vpack.c.b16 %v881, %v877
    %v978 = vpack.c.b16 %v882, %v878
    %v979 = vpack.c.b16 %v883, %v879
    %v980 = vpack.c.b16 %v884, %v880
    %v981 = vpack.c.b16 %v889, %v885
    %v982 = vpack.c.b16 %v890, %v886
    %v983 = vpack.c.b16 %v891, %v887
    %v984 = vpack.c.b16 %v892, %v888
    %v985 = vpack.c.b16 %v897, %v893
    %v986 = vpack.c.b16 %v898, %v894
    %v987 = vpack.c.b16 %v899, %v895
    %v988 = vpack.c.b16 %v900, %v896
    %v989 = vpack.c.b16 %v905, %v901
    %v990 = vpack.c.b16 %v906, %v902
    %v991 = vpack.c.b16 %v907, %v903
    %v992 = vpack.c.b16 %v908, %v904
    %v993 = vpack.c.b16 %v913, %v909
    %v994 = vpack.c.b16 %v914, %v910
    %v995 = vpack.c.b16 %v915, %v911
    %v996 = vpack.c.b16 %v916, %v912
    %v997 = vpack.c.b16 %v921, %v917
    %v998 = vpack.c.b16 %v922, %v918
    %v999 = vpack.c.b16 %v923, %v919
    %v1000 = vpack.c.b16 %v924, %v920
    %v1001 = vpack.c.b16 %v929, %v925
    %v1002 = vpack.c.b16 %v930, %v926
    %v1003 = vpack.c.b16 %v931, %v927
    %v1004 = vpack.c.b16 %v932, %v928
    %v1005 = vpack.c.b16 %v937, %v933
    %v1006 = vpack.c.b16 %v938, %v934
    %v1007 = vpack.c.b16 %v939, %v935
    %v1008 = vpack.c.b16 %v940, %v936
    %v1009 = vpack.c.b16 %v945, %v941
    %v1010 = vpack.c.b16 %v946, %v942
    %v1011 = vpack.c.b16 %v947, %v943
    %v1012 = vpack.c.b16 %v948, %v944
    %1077 = vmatprep.subr.bf16.mxu0 %v950
    %1078 = vmatpush1.bf16.msra.mxu0 %v949
    %1079 = vmatprep.subr.bf16.mxu0 %v954
    %1080 = vmatpush1.bf16.msra.mxu0 %v953
    %1081 = vmatprep.subr.bf16.mxu0 %v958
    %1082 = vmatpush1.bf16.msra.mxu0 %v957
    %1083 = vmatprep.subr.bf16.mxu0 %v962
    %1084 = vmatpush1.bf16.msra.mxu0 %v961
    %1085 = vmatprep.subr.bf16.mxu0 %v966
    %1086 = vmatpush1.bf16.msra.mxu0 %v965
    %1087 = vmatprep.subr.bf16.mxu0 %v970
    %1088 = vmatpush1.bf16.msra.mxu0 %v969
    %1089 = vmatprep.subr.bf16.mxu0 %v974
    %1090 = vmatpush1.bf16.msra.mxu0 %v973
    %1091 = vmatprep.subr.bf16.mxu0 %v978
    %1092 = vmatpush1.bf16.msra.mxu0 %v977
    %1093 = vmatprep.subr.bf16.mxu0 %v982
    %1094 = vmatpush1.bf16.msra.mxu0 %v981
    %1095 = vmatprep.subr.bf16.mxu0 %v986
    %1096 = vmatpush1.bf16.msra.mxu0 %v985
    %1097 = vmatprep.subr.bf16.mxu0 %v990
    %1098 = vmatpush1.bf16.msra.mxu0 %v989
    %1099 = vmatprep.subr.bf16.mxu0 %v994
    %1100 = vmatpush1.bf16.msra.mxu0 %v993
    %1101 = vmatprep.subr.bf16.mxu0 %v998
    %1102 = vmatpush1.bf16.msra.mxu0 %v997
    %1103 = vmatprep.subr.bf16.mxu0 %v1002
    %1104 = vmatpush1.bf16.msra.mxu0 %v1001
    %1105 = vmatprep.subr.bf16.mxu0 %v1006
    %1106 = vmatpush1.bf16.msra.mxu0 %v1005
    %1107 = vmatprep.subr.bf16.mxu0 %v1010
    %1108 = vmatpush1.bf16.msra.mxu0 %v1009
    %1109 = vmatprep.mubr.bf16.mxu0 %v754
    %1110 = vmatmul.mubr.bf16.gmra.mrb[0].mxu0 %v753
    %v1111 = vpop.f32.mrb[0].mxu0
    %v1112 = vadd.f32 %v733, %v1111
    %v1113 = vpop.f32.mrb[0].mxu0
    %v1114 = vadd.f32 %v737, %v1113
    %v1115 = vpop.f32.mrb[0].mxu0
    %v1116 = vpop.f32.mrb[0].mxu0
    %1117 = vdwg.mxu0
    %1118 = vmatprep.subr.bf16.mxu0 %v952
    %1119 = vmatpush1.bf16.msra.mxu0 %v951
    %1120 = vmatprep.subr.bf16.mxu0 %v956
    %1121 = vmatpush1.bf16.msra.mxu0 %v955
    %1122 = vmatprep.subr.bf16.mxu0 %v960
    %1123 = vmatpush1.bf16.msra.mxu0 %v959
    %1124 = vmatprep.subr.bf16.mxu0 %v964
    %1125 = vmatpush1.bf16.msra.mxu0 %v963
    %1126 = vmatprep.subr.bf16.mxu0 %v968
    %1127 = vmatpush1.bf16.msra.mxu0 %v967
    %1128 = vmatprep.subr.bf16.mxu0 %v972
    %1129 = vmatpush1.bf16.msra.mxu0 %v971
    %1130 = vmatprep.subr.bf16.mxu0 %v976
    %1131 = vmatpush1.bf16.msra.mxu0 %v975
    %1132 = vmatprep.subr.bf16.mxu0 %v980
    %1133 = vmatpush1.bf16.msra.mxu0 %v979
    %1134 = vmatprep.subr.bf16.mxu0 %v984
    %1135 = vmatpush1.bf16.msra.mxu0 %v983
    %1136 = vmatprep.subr.bf16.mxu0 %v988
    %1137 = vmatpush1.bf16.msra.mxu0 %v987
    %1138 = vmatprep.subr.bf16.mxu0 %v992
    %1139 = vmatpush1.bf16.msra.mxu0 %v991
    %1140 = vmatprep.subr.bf16.mxu0 %v996
    %1141 = vmatpush1.bf16.msra.mxu0 %v995
    %1142 = vmatprep.subr.bf16.mxu0 %v1000
    %1143 = vmatpush1.bf16.msra.mxu0 %v999
    %1144 = vmatprep.subr.bf16.mxu0 %v1004
    %1145 = vmatpush1.bf16.msra.mxu0 %v1003
    %1146 = vmatprep.subr.bf16.mxu0 %v1008
    %1147 = vmatpush1.bf16.msra.mxu0 %v1007
    %1148 = vmatprep.subr.bf16.mxu0 %v1012
    %1149 = vmatpush1.bf16.msra.mxu0 %v1011
    %1150 = vmatprep.mubr.bf16.mxu0 %v754
    %1151 = vmatmul.mubr.bf16.gmra.mrb[0].mxu0 %v753
    %v1152 = vpop.f32.mrb[0].mxu0
    %v1153 = vadd.f32 %v741, %v1152
    %v1154 = vpop.f32.mrb[0].mxu0
    %v1155 = vadd.f32 %v745, %v1154
    %v1156 = vpop.f32.mrb[0].mxu0
    %v1157 = vpop.f32.mrb[0].mxu0
    %1158 = vdwg.mxu0
    %v1159 = vxor.u32 %v1112, 2147483648
    %v1160 = vmul.f32 %v1159, 1.442695
    %v1161 = vpow.pop %v1160
    %v1162 = vadd.f32 %v1161, 1.0
    %v1163 = vrcp.pop %v1162
    %v1164 = vmul.f32 1.0, %v1163
    %v1165 = vxor.u32 %v1114, 2147483648
    %v1166 = vmul.f32 %v1165, 1.442695
    %v1167 = vpow.pop %v1166
    %v1168 = vadd.f32 %v1167, 1.0
    %v1169 = vrcp.pop %v1168
    %v1170 = vmul.f32 1.0, %v1169
    %v1171 = vtanh.pop %v1153
    %v1172 = vxor.u32 %v1155, 2147483648
    %v1173 = vmul.f32 %v1172, 1.442695
    %v1174 = vpow.pop %v1173
    %v1175 = vadd.f32 %v1174, 1.0
    %v1176 = vrcp.pop %v1175
    %v1177 = vmul.f32 1.0, %v1176
    %s1178 = scalar_lea.vmem [#allocation3], 8
    %v1179 = vld [vmem:[%s1178] sm:$0xff]
    %v1180 = vmul.f32 %v1170, %v1179
    %v1181 = vmul.f32 %v1164, %v1171
    %v1182 = vadd.f32 %v1180, %v1181
    %v1183 = vtanh.pop %v1182
    %v1184 = vmul.f32 %v1177, %v1183
    %1185 = vst [vmem:[%s657] sm:$0xff] %v1184
    %1186 = vst [vmem:[%s1178] sm:$0xff] %v1182
    %v1187 = vpack.c.bf16 %v1184, %v1184
    %1188 = vst [vmem:[#allocation5] sm:$0xf] %v1187
    %v1189 = vld [vmem:[#allocation6] sm:$0xf]
    %1190 = vst [vmem:[#allocation5 + $0x4] sm:$0xf] %v1189
    %v1191 = vld [vmem:[#allocation5] sm:$0xff]
    %v1192 = vld [vmem:[#allocation12] sm:$0xf]
    %v1193 = vld [vmem:[#allocation12 + $0x4] sm:$0xf]
    %v1194 = vld [vmem:[#allocation12 + $0x8] sm:$0xf]
    %v1195 = vld [vmem:[#allocation12 + $0xc] sm:$0xf]
    %v1196 = vld [vmem:[#allocation12 + $0x10] sm:$0xf]
    %v1197 = vld [vmem:[#allocation12 + $0x14] sm:$0xf]
    %v1198 = vld [vmem:[#allocation12 + $0x18] sm:$0xf]
    %v1199 = vld [vmem:[#allocation12 + $0x1c] sm:$0xf]
    %v1200 = vld [vmem:[#allocation12 + $0x20] sm:$0xf]
    %v1201 = vld [vmem:[#allocation12 + $0x24] sm:$0xf]
    %v1202 = vld [vmem:[#allocation12 + $0x28] sm:$0xf]
    %v1203 = vld [vmem:[#allocation12 + $0x2c] sm:$0xf]
    %v1204 = vld [vmem:[#allocation12 + $0x30] sm:$0xf]
    %v1205 = vld [vmem:[#allocation12 + $0x34] sm:$0xf]
    %v1206 = vld [vmem:[#allocation12 + $0x38] sm:$0xf]
    %v1207 = vld [vmem:[#allocation12 + $0x3c] sm:$0xf]
    %v1208 = vld [vmem:[#allocation12 + $0x40] sm:$0xf]
    %v1209 = vld [vmem:[#allocation12 + $0x44] sm:$0xf]
    %v1210 = vld [vmem:[#allocation12 + $0x48] sm:$0xf]
    %v1211 = vld [vmem:[#allocation12 + $0x4c] sm:$0xf]
    %v1212 = vld [vmem:[#allocation12 + $0x50] sm:$0xf]
    %v1213 = vld [vmem:[#allocation12 + $0x54] sm:$0xf]
    %v1214 = vld [vmem:[#allocation12 + $0x58] sm:$0xf]
    %v1215 = vld [vmem:[#allocation12 + $0x5c] sm:$0xf]
    %v1216 = vld [vmem:[#allocation12 + $0x60] sm:$0xf]
    %v1217 = vld [vmem:[#allocation12 + $0x64] sm:$0xf]
    %v1218 = vld [vmem:[#allocation12 + $0x68] sm:$0xf]
    %v1219 = vld [vmem:[#allocation12 + $0x6c] sm:$0xf]
    %v1220 = vld [vmem:[#allocation12 + $0x70] sm:$0xf]
    %v1221 = vld [vmem:[#allocation12 + $0x74] sm:$0xf]
    %v1222 = vld [vmem:[#allocation12 + $0x78] sm:$0xf]
    %v1223 = vld [vmem:[#allocation12 + $0x7c] sm:$0xf]
    %v1224 = vld [vmem:[%s4] sm:$0x1]
    %v1226 = vlaneseq
    %v1227 = vshrl.u32 %v1226, 7
    %v1228 = vsub.s32 0, %v1227
    %v1229 = vrot.slane %v1224, %v1228
    %v1232 = vunpack.c.l.b16 %v1191
    %v1233 = vunpack.c.h.b16 %v1191
    %v1234 = vpack.c.b16 %v1232, %v1232
    %v1235 = vpack.c.b16 %v1233, %v1233
    %v1270 = vunpack.c.l.b16 %v1192
    %v1271 = vunpack.c.l.b16 %v1193
    %v1272 = vunpack.c.l.b16 %v1194
    %v1273 = vunpack.c.l.b16 %v1195
    %v1274 = vunpack.c.l.b16 %v1196
    %v1275 = vunpack.c.l.b16 %v1197
    %v1276 = vunpack.c.l.b16 %v1198
    %v1277 = vunpack.c.l.b16 %v1199
    %v1278 = vunpack.c.l.b16 %v1200
    %v1279 = vunpack.c.l.b16 %v1201
    %v1280 = vunpack.c.l.b16 %v1202
    %v1281 = vunpack.c.l.b16 %v1203
    %v1282 = vunpack.c.l.b16 %v1204
    %v1283 = vunpack.c.l.b16 %v1205
    %v1284 = vunpack.c.l.b16 %v1206
    %v1285 = vunpack.c.l.b16 %v1207
    %v1286 = vunpack.c.l.b16 %v1208
    %v1287 = vunpack.c.l.b16 %v1209
    %v1288 = vunpack.c.l.b16 %v1210
    %v1289 = vunpack.c.l.b16 %v1211
    %v1290 = vunpack.c.l.b16 %v1212
    %v1291 = vunpack.c.l.b16 %v1213
    %v1292 = vunpack.c.l.b16 %v1214
    %v1293 = vunpack.c.l.b16 %v1215
    %v1294 = vunpack.c.l.b16 %v1216
    %v1295 = vunpack.c.l.b16 %v1217
    %v1296 = vunpack.c.l.b16 %v1218
    %v1297 = vunpack.c.l.b16 %v1219
    %v1298 = vunpack.c.l.b16 %v1220
    %v1299 = vunpack.c.l.b16 %v1221
    %v1300 = vunpack.c.l.b16 %v1222
    %v1301 = vunpack.c.l.b16 %v1223
    %v1302 = vpack.c.b16 %v1271, %v1270
    %v1303 = vpack.c.b16 %v1273, %v1272
    %v1304 = vpack.c.b16 %v1275, %v1274
    %v1305 = vpack.c.b16 %v1277, %v1276
    %v1306 = vpack.c.b16 %v1279, %v1278
    %v1307 = vpack.c.b16 %v1281, %v1280
    %v1308 = vpack.c.b16 %v1283, %v1282
    %v1309 = vpack.c.b16 %v1285, %v1284
    %v1310 = vpack.c.b16 %v1287, %v1286
    %v1311 = vpack.c.b16 %v1289, %v1288
    %v1312 = vpack.c.b16 %v1291, %v1290
    %v1313 = vpack.c.b16 %v1293, %v1292
    %v1314 = vpack.c.b16 %v1295, %v1294
    %v1315 = vpack.c.b16 %v1297, %v1296
    %v1316 = vpack.c.b16 %v1299, %v1298
    %v1317 = vpack.c.b16 %v1301, %v1300
    %1334 = vmatprep.subr.bf16.mxu0 0
    %1335 = vmatpush1.bf16.msra.mxu0 %v1302
    %1336 = vmatprep.subr.bf16.mxu0 0
    %1337 = vmatpush1.bf16.msra.mxu0 %v1303
    %1338 = vmatprep.subr.bf16.mxu0 0
    %1339 = vmatpush1.bf16.msra.mxu0 %v1304
    %1340 = vmatprep.subr.bf16.mxu0 0
    %1341 = vmatpush1.bf16.msra.mxu0 %v1305
    %1342 = vmatprep.subr.bf16.mxu0 0
    %1343 = vmatpush1.bf16.msra.mxu0 %v1306
    %1344 = vmatprep.subr.bf16.mxu0 0
    %1345 = vmatpush1.bf16.msra.mxu0 %v1307
    %1346 = vmatprep.subr.bf16.mxu0 0
    %1347 = vmatpush1.bf16.msra.mxu0 %v1308
    %1348 = vmatprep.subr.bf16.mxu0 0
    %1349 = vmatpush1.bf16.msra.mxu0 %v1309
    %1350 = vmatprep.subr.bf16.mxu0 0
    %1351 = vmatpush1.bf16.msra.mxu0 %v1310
    %1352 = vmatprep.subr.bf16.mxu0 0
    %1353 = vmatpush1.bf16.msra.mxu0 %v1311
    %1354 = vmatprep.subr.bf16.mxu0 0
    %1355 = vmatpush1.bf16.msra.mxu0 %v1312
    %1356 = vmatprep.subr.bf16.mxu0 0
    %1357 = vmatpush1.bf16.msra.mxu0 %v1313
    %1358 = vmatprep.subr.bf16.mxu0 0
    %1359 = vmatpush1.bf16.msra.mxu0 %v1314
    %1360 = vmatprep.subr.bf16.mxu0 0
    %1361 = vmatpush1.bf16.msra.mxu0 %v1315
    %1362 = vmatprep.subr.bf16.mxu0 0
    %1363 = vmatpush1.bf16.msra.mxu0 %v1316
    %1364 = vmatprep.subr.bf16.mxu0 0
    %1365 = vmatpush1.bf16.msra.mxu0 %v1317
    %1366 = vmatprep.mubr.bf16.mxu0 %v1235
    %1367 = vmatmul.mubr.bf16.gmra.mrb[0].mxu0 %v1234
    %v1368 = vpop.f32.mrb[0].mxu0
    %v1369 = vadd.f32 %v1229, %v1368
    %v1370 = vpop.f32.mrb[0].mxu0
    %v1371 = vpop.f32.mrb[0].mxu0
    %v1372 = vpop.f32.mrb[0].mxu0
    %1373 = vdwg.mxu0
    %v1374 = vmax.f32 %v1369, 0.0
    %v1375 = vpack.c.bf16 %v1374, %v1374
    %v1376 = vld [vmem:[#allocation14] sm:$0xf]
    %v1377 = vld [vmem:[#allocation14 + $0x4] sm:$0xf]
    %v1378 = vld [vmem:[#allocation14 + $0x8] sm:$0xf]
    %v1379 = vld [vmem:[#allocation14 + $0xc] sm:$0xf]
    %v1380 = vld [vmem:[#allocation14 + $0x10] sm:$0xf]
    %v1381 = vld [vmem:[#allocation14 + $0x14] sm:$0xf]
    %v1382 = vld [vmem:[#allocation14 + $0x18] sm:$0xf]
    %v1383 = vld [vmem:[#allocation14 + $0x1c] sm:$0xf]
    %v1384 = vld [vmem:[#allocation14 + $0x20] sm:$0xf]
    %v1385 = vld [vmem:[#allocation14 + $0x24] sm:$0xf]
    %v1386 = vld [vmem:[#allocation14 + $0x28] sm:$0xf]
    %v1387 = vld [vmem:[#allocation14 + $0x2c] sm:$0xf]
    %v1388 = vld [vmem:[#allocation14 + $0x30] sm:$0xf]
    %v1389 = vld [vmem:[#allocation14 + $0x34] sm:$0xf]
    %v1390 = vld [vmem:[#allocation14 + $0x38] sm:$0xf]
    %v1391 = vld [vmem:[#allocation14 + $0x3c] sm:$0xf]
    %v1392 = vld [vmem:[%s6] sm:$0x1]
    %v1394 = vlaneseq
    %v1395 = vshrl.u32 %v1394, 7
    %v1396 = vsub.s32 0, %v1395
    %v1397 = vrot.slane %v1392, %v1396
    %v1415 = vunpack.c.l.b16 %v1376
    %v1416 = vunpack.c.l.b16 %v1377
    %v1417 = vunpack.c.l.b16 %v1378
    %v1418 = vunpack.c.l.b16 %v1379
    %v1419 = vunpack.c.l.b16 %v1380
    %v1420 = vunpack.c.l.b16 %v1381
    %v1421 = vunpack.c.l.b16 %v1382
    %v1422 = vunpack.c.l.b16 %v1383
    %v1423 = vunpack.c.l.b16 %v1384
    %v1424 = vunpack.c.l.b16 %v1385
    %v1425 = vunpack.c.l.b16 %v1386
    %v1426 = vunpack.c.l.b16 %v1387
    %v1427 = vunpack.c.l.b16 %v1388
    %v1428 = vunpack.c.l.b16 %v1389
    %v1429 = vunpack.c.l.b16 %v1390
    %v1430 = vunpack.c.l.b16 %v1391
    %v1431 = vpack.c.b16 %v1416, %v1415
    %v1432 = vpack.c.b16 %v1418, %v1417
    %v1433 = vpack.c.b16 %v1420, %v1419
    %v1434 = vpack.c.b16 %v1422, %v1421
    %v1435 = vpack.c.b16 %v1424, %v1423
    %v1436 = vpack.c.b16 %v1426, %v1425
    %v1437 = vpack.c.b16 %v1428, %v1427
    %v1438 = vpack.c.b16 %v1430, %v1429
    %1447 = vmatprep.subr.bf16.mxu0 0
    %1448 = vmatpush1.bf16.msra.mxu0 %v1431
    %1449 = vmatprep.subr.bf16.mxu0 0
    %1450 = vmatpush1.bf16.msra.mxu0 %v1432
    %1451 = vmatprep.subr.bf16.mxu0 0
    %1452 = vmatpush1.bf16.msra.mxu0 %v1433
    %1453 = vmatprep.subr.bf16.mxu0 0
    %1454 = vmatpush1.bf16.msra.mxu0 %v1434
    %1455 = vmatprep.subr.bf16.mxu0 0
    %1456 = vmatpush1.bf16.msra.mxu0 %v1435
    %1457 = vmatprep.subr.bf16.mxu0 0
    %1458 = vmatpush1.bf16.msra.mxu0 %v1436
    %1459 = vmatprep.subr.bf16.mxu0 0
    %1460 = vmatpush1.bf16.msra.mxu0 %v1437
    %1461 = vmatprep.subr.bf16.mxu0 0
    %1462 = vmatpush1.bf16.msra.mxu0 %v1438
    %1463 = vmatprep.subr.bf16.mxu0 0
    %1464 = vmatpush1.bf16.msra.mxu0 0
    %1465 = vmatprep.subr.bf16.mxu0 0
    %1466 = vmatpush1.bf16.msra.mxu0 0
    %1467 = vmatprep.subr.bf16.mxu0 0
    %1468 = vmatpush1.bf16.msra.mxu0 0
    %1469 = vmatprep.subr.bf16.mxu0 0
    %1470 = vmatpush1.bf16.msra.mxu0 0
    %1471 = vmatprep.subr.bf16.mxu0 0
    %1472 = vmatpush1.bf16.msra.mxu0 0
    %1473 = vmatprep.subr.bf16.mxu0 0
    %1474 = vmatpush1.bf16.msra.mxu0 0
    %1475 = vmatprep.subr.bf16.mxu0 0
    %1476 = vmatpush1.bf16.msra.mxu0 0
    %1477 = vmatprep.subr.bf16.mxu0 0
    %1478 = vmatpush1.bf16.msra.mxu0 0
    %1479 = vmatprep.mubr.bf16.mxu0 0
    %1480 = vmatmul.mubr.bf16.gmra.mrb[0].mxu0 %v1375
    %v1481 = vpop.f32.mrb[0].mxu0
    %v1482 = vadd.f32 %v1397, %v1481
    %v1483 = vpop.f32.mrb[0].mxu0
    %v1484 = vpop.f32.mrb[0].mxu0
    %v1485 = vpop.f32.mrb[0].mxu0
    %1486 = vdwg.mxu0
    %v1487 = vld [vmem:[#allocation15] sm:$0xf]
    %v1488 = vld [vmem:[#allocation15 + $0x4] sm:$0xf]
    %v1489 = vld [vmem:[#allocation15 + $0x8] sm:$0xf]
    %v1490 = vld [vmem:[#allocation15 + $0xc] sm:$0xf]
    %v1491 = vld [vmem:[#allocation15 + $0x10] sm:$0xf]
    %v1492 = vld [vmem:[#allocation15 + $0x14] sm:$0xf]
    %v1493 = vld [vmem:[#allocation15 + $0x18] sm:$0xf]
    %v1494 = vld [vmem:[#allocation15 + $0x1c] sm:$0xf]
    %v1495 = vld [vmem:[#allocation15 + $0x20] sm:$0xf]
    %v1496 = vld [vmem:[#allocation15 + $0x24] sm:$0xf]
    %v1497 = vld [vmem:[#allocation15 + $0x28] sm:$0xf]
    %v1498 = vld [vmem:[#allocation15 + $0x2c] sm:$0xf]
    %v1499 = vld [vmem:[#allocation15 + $0x30] sm:$0xf]
    %v1500 = vld [vmem:[#allocation15 + $0x34] sm:$0xf]
    %v1501 = vld [vmem:[#allocation15 + $0x38] sm:$0xf]
    %v1502 = vld [vmem:[#allocation15 + $0x3c] sm:$0xf]
    %v1503 = vld [vmem:[#allocation15 + $0x40] sm:$0xf]
    %v1504 = vld [vmem:[#allocation15 + $0x44] sm:$0xf]
    %v1505 = vld [vmem:[#allocation15 + $0x48] sm:$0xf]
    %v1506 = vld [vmem:[#allocation15 + $0x4c] sm:$0xf]
    %v1507 = vld [vmem:[#allocation15 + $0x50] sm:$0xf]
    %v1508 = vld [vmem:[#allocation15 + $0x54] sm:$0xf]
    %v1509 = vld [vmem:[#allocation15 + $0x58] sm:$0xf]
    %v1510 = vld [vmem:[#allocation15 + $0x5c] sm:$0xf]
    %v1511 = vld [vmem:[#allocation15 + $0x60] sm:$0xf]
    %v1512 = vld [vmem:[#allocation15 + $0x64] sm:$0xf]
    %v1513 = vld [vmem:[#allocation15 + $0x68] sm:$0xf]
    %v1514 = vld [vmem:[#allocation15 + $0x6c] sm:$0xf]
    %v1515 = vld [vmem:[#allocation15 + $0x70] sm:$0xf]
    %v1516 = vld [vmem:[#allocation15 + $0x74] sm:$0xf]
    %v1517 = vld [vmem:[#allocation15 + $0x78] sm:$0xf]
    %v1518 = vld [vmem:[#allocation15 + $0x7c] sm:$0xf]
    %v1519 = vld [vmem:[#allocation15 + $0x80] sm:$0xf]
    %v1520 = vld [vmem:[#allocation15 + $0x84] sm:$0xf]
    %v1521 = vld [vmem:[#allocation15 + $0x88] sm:$0xf]
    %v1522 = vld [vmem:[#allocation15 + $0x8c] sm:$0xf]
    %v1523 = vld [vmem:[#allocation15 + $0x90] sm:$0xf]
    %v1524 = vld [vmem:[#allocation15 + $0x94] sm:$0xf]
    %v1525 = vld [vmem:[#allocation15 + $0x98] sm:$0xf]
    %v1526 = vld [vmem:[#allocation15 + $0x9c] sm:$0xf]
    %v1527 = vld [vmem:[#allocation15 + $0xa0] sm:$0xf]
    %v1528 = vld [vmem:[#allocation15 + $0xa4] sm:$0xf]
    %v1529 = vld [vmem:[#allocation15 + $0xa8] sm:$0xf]
    %v1530 = vld [vmem:[#allocation15 + $0xac] sm:$0xf]
    %v1531 = vld [vmem:[#allocation15 + $0xb0] sm:$0xf]
    %v1532 = vld [vmem:[#allocation15 + $0xb4] sm:$0xf]
    %v1533 = vld [vmem:[#allocation15 + $0xb8] sm:$0xf]
    %v1534 = vld [vmem:[#allocation15 + $0xbc] sm:$0xf]
    %v1535 = vld [vmem:[#allocation15 + $0xc0] sm:$0xf]
    %v1536 = vld [vmem:[#allocation15 + $0xc4] sm:$0xf]
    %v1537 = vld [vmem:[#allocation15 + $0xc8] sm:$0xf]
    %v1538 = vld [vmem:[#allocation15 + $0xcc] sm:$0xf]
    %v1539 = vld [vmem:[#allocation15 + $0xd0] sm:$0xf]
    %v1540 = vld [vmem:[#allocation15 + $0xd4] sm:$0xf]
    %v1541 = vld [vmem:[#allocation15 + $0xd8] sm:$0xf]
    %v1542 = vld [vmem:[#allocation15 + $0xdc] sm:$0xf]
    %v1543 = vld [vmem:[#allocation15 + $0xe0] sm:$0xf]
    %v1544 = vld [vmem:[#allocation15 + $0xe4] sm:$0xf]
    %v1545 = vld [vmem:[#allocation15 + $0xe8] sm:$0xf]
    %v1546 = vld [vmem:[#allocation15 + $0xec] sm:$0xf]
    %v1547 = vld [vmem:[#allocation15 + $0xf0] sm:$0xf]
    %v1548 = vld [vmem:[#allocation15 + $0xf4] sm:$0xf]
    %v1549 = vld [vmem:[#allocation15 + $0xf8] sm:$0xf]
    %v1550 = vld [vmem:[#allocation15 + $0xfc] sm:$0xf]
    %v1551 = vld [vmem:[#allocation15 + $0x100] sm:$0xf]
    %v1552 = vld [vmem:[#allocation15 + $0x104] sm:$0xf]
    %v1553 = vld [vmem:[#allocation15 + $0x108] sm:$0xf]
    %v1554 = vld [vmem:[#allocation15 + $0x10c] sm:$0xf]
    %v1555 = vld [vmem:[#allocation15 + $0x110] sm:$0xf]
    %v1556 = vld [vmem:[#allocation15 + $0x114] sm:$0xf]
    %v1557 = vld [vmem:[#allocation15 + $0x118] sm:$0xf]
    %v1558 = vld [vmem:[#allocation15 + $0x11c] sm:$0xf]
    %v1559 = vld [vmem:[#allocation15 + $0x120] sm:$0xf]
    %v1560 = vld [vmem:[#allocation15 + $0x124] sm:$0xf]
    %v1561 = vld [vmem:[#allocation15 + $0x128] sm:$0xf]
    %v1562 = vld [vmem:[#allocation15 + $0x12c] sm:$0xf]
    %v1563 = vld [vmem:[#allocation15 + $0x130] sm:$0xf]
    %v1564 = vld [vmem:[#allocation15 + $0x134] sm:$0xf]
    %v1565 = vld [vmem:[#allocation15 + $0x138] sm:$0xf]
    %v1566 = vld [vmem:[#allocation15 + $0x13c] sm:$0xf]
    %v1567 = vld [vmem:[#allocation15 + $0x140] sm:$0xf]
    %v1568 = vld [vmem:[#allocation15 + $0x144] sm:$0xf]
    %v1569 = vld [vmem:[#allocation15 + $0x148] sm:$0xf]
    %v1570 = vld [vmem:[#allocation15 + $0x14c] sm:$0xf]
    %v1571 = vld [vmem:[#allocation15 + $0x150] sm:$0xf]
    %v1572 = vld [vmem:[#allocation15 + $0x154] sm:$0xf]
    %v1573 = vld [vmem:[#allocation15 + $0x158] sm:$0xf]
    %v1574 = vld [vmem:[#allocation15 + $0x15c] sm:$0xf]
    %v1575 = vld [vmem:[#allocation15 + $0x160] sm:$0xf]
    %v1576 = vld [vmem:[#allocation15 + $0x164] sm:$0xf]
    %v1577 = vld [vmem:[#allocation15 + $0x168] sm:$0xf]
    %v1578 = vld [vmem:[#allocation15 + $0x16c] sm:$0xf]
    %v1579 = vld [vmem:[#allocation15 + $0x170] sm:$0xf]
    %v1580 = vld [vmem:[#allocation15 + $0x174] sm:$0xf]
    %v1581 = vld [vmem:[#allocation15 + $0x178] sm:$0xf]
    %v1582 = vld [vmem:[#allocation15 + $0x17c] sm:$0xf]
    %v1583 = vld [vmem:[#allocation15 + $0x180] sm:$0xf]
    %v1584 = vld [vmem:[#allocation15 + $0x184] sm:$0xf]
    %v1585 = vld [vmem:[#allocation15 + $0x188] sm:$0xf]
    %v1586 = vld [vmem:[#allocation15 + $0x18c] sm:$0xf]
    %v1587 = vld [vmem:[#allocation15 + $0x190] sm:$0xf]
    %v1588 = vld [vmem:[#allocation15 + $0x194] sm:$0xf]
    %v1589 = vld [vmem:[#allocation15 + $0x198] sm:$0xf]
    %v1590 = vld [vmem:[#allocation15 + $0x19c] sm:$0xf]
    %v1591 = vld [vmem:[#allocation15 + $0x1a0] sm:$0xf]
    %v1592 = vld [vmem:[#allocation15 + $0x1a4] sm:$0xf]
    %v1593 = vld [vmem:[#allocation15 + $0x1a8] sm:$0xf]
    %v1594 = vld [vmem:[#allocation15 + $0x1ac] sm:$0xf]
    %v1595 = vld [vmem:[#allocation15 + $0x1b0] sm:$0xf]
    %v1596 = vld [vmem:[#allocation15 + $0x1b4] sm:$0xf]
    %v1597 = vld [vmem:[#allocation15 + $0x1b8] sm:$0xf]
    %v1598 = vld [vmem:[#allocation15 + $0x1bc] sm:$0xf]
    %v1599 = vld [vmem:[#allocation15 + $0x1c0] sm:$0xf]
    %v1600 = vld [vmem:[#allocation15 + $0x1c4] sm:$0xf]
    %v1601 = vld [vmem:[#allocation15 + $0x1c8] sm:$0xf]
    %v1602 = vld [vmem:[#allocation15 + $0x1cc] sm:$0xf]
    %v1603 = vld [vmem:[#allocation15 + $0x1d0] sm:$0xf]
    %v1604 = vld [vmem:[#allocation15 + $0x1d4] sm:$0xf]
    %v1605 = vld [vmem:[#allocation15 + $0x1d8] sm:$0xf]
    %v1606 = vld [vmem:[#allocation15 + $0x1dc] sm:$0xf]
    %v1607 = vld [vmem:[#allocation15 + $0x1e0] sm:$0xf]
    %v1608 = vld [vmem:[#allocation15 + $0x1e4] sm:$0xf]
    %v1609 = vld [vmem:[#allocation15 + $0x1e8] sm:$0xf]
    %v1610 = vld [vmem:[#allocation15 + $0x1ec] sm:$0xf]
    %v1611 = vld [vmem:[#allocation15 + $0x1f0] sm:$0xf]
    %v1612 = vld [vmem:[#allocation15 + $0x1f4] sm:$0xf]
    %v1613 = vld [vmem:[#allocation15 + $0x1f8] sm:$0xf]
    %v1614 = vld [vmem:[#allocation15 + $0x1fc] sm:$0xf]
    %v1616 = vcombine.high %v1482, %v1482
    %v1618 = vunpack.c.l.s4 1966171168
    %v1619 = vunpack.c.0.s8 %v1618
    %v1620 = vlaneseq
    %v1621 = vshrl.u32 %v1620, 7
    %v1622 = vsub.s32 %v1619, %v1621
    %v1623 = vrot.slane %v1482, %v1622
    %v1625 = vunpack.c.l.s4 1966171168
    %v1626 = vunpack.c.0.s8 %v1625
    %v1627 = vlaneseq
    %v1628 = vshrl.u32 %v1627, 7
    %v1629 = vsub.s32 %v1626, %v1628
    %v1630 = vrot.slane %v1616, %v1629
    %v1631 = vcombine.high %v1623, %v1623
    %v1632 = vcombine.high %v1630, %v1630
    %v1634 = vunpack.c.l.s4 1966171168
    %v1635 = vunpack.c.0.s8 %v1634
    %v1636 = vlaneseq
    %v1637 = vshrl.u32 %v1636, 7
    %v1638 = vsub.s32 %v1635, %v1637
    %v1639 = vrot.slane %v1623, %v1638
    %v1641 = vunpack.c.l.s4 1966171168
    %v1642 = vunpack.c.0.s8 %v1641
    %v1643 = vlaneseq
    %v1644 = vshrl.u32 %v1643, 7
    %v1645 = vsub.s32 %v1642, %v1644
    %v1646 = vrot.slane %v1630, %v1645
    %v1648 = vunpack.c.l.s4 1966171168
    %v1649 = vunpack.c.0.s8 %v1648
    %v1650 = vlaneseq
    %v1651 = vshrl.u32 %v1650, 7
    %v1652 = vsub.s32 %v1649, %v1651
    %v1653 = vrot.slane %v1631, %v1652
    %v1655 = vunpack.c.l.s4 1966171168
    %v1656 = vunpack.c.0.s8 %v1655
    %v1657 = vlaneseq
    %v1658 = vshrl.u32 %v1657, 7
    %v1659 = vsub.s32 %v1656, %v1658
    %v1660 = vrot.slane %v1632, %v1659
    %v1661 = vcombine.high %v1639, %v1639
    %v1662 = vcombine.high %v1646, %v1646
    %v1663 = vcombine.high %v1653, %v1653
    %v1664 = vcombine.high %v1660, %v1660
    %v1665 = vunpack.c.l.bf16 %v1487
    %v1666 = vunpack.c.l.bf16 %v1488
    %v1667 = vunpack.c.l.bf16 %v1489
    %v1668 = vunpack.c.l.bf16 %v1490
    %v1669 = vunpack.c.l.bf16 %v1491
    %v1670 = vunpack.c.l.bf16 %v1492
    %v1671 = vunpack.c.l.bf16 %v1493
    %v1672 = vunpack.c.l.bf16 %v1494
    %v1673 = vunpack.c.l.bf16 %v1495
    %v1674 = vunpack.c.l.bf16 %v1496
    %v1675 = vunpack.c.l.bf16 %v1497
    %v1676 = vunpack.c.l.bf16 %v1498
    %v1677 = vunpack.c.l.bf16 %v1499
    %v1678 = vunpack.c.l.bf16 %v1500
    %v1679 = vunpack.c.l.bf16 %v1501
    %v1680 = vunpack.c.l.bf16 %v1502
    %v1681 = vunpack.c.l.bf16 %v1503
    %v1682 = vunpack.c.l.bf16 %v1504
    %v1683 = vunpack.c.l.bf16 %v1505
    %v1684 = vunpack.c.l.bf16 %v1506
    %v1685 = vunpack.c.l.bf16 %v1507
    %v1686 = vunpack.c.l.bf16 %v1508
    %v1687 = vunpack.c.l.bf16 %v1509
    %v1688 = vunpack.c.l.bf16 %v1510
    %v1689 = vunpack.c.l.bf16 %v1511
    %v1690 = vunpack.c.l.bf16 %v1512
    %v1691 = vunpack.c.l.bf16 %v1513
    %v1692 = vunpack.c.l.bf16 %v1514
    %v1693 = vunpack.c.l.bf16 %v1515
    %v1694 = vunpack.c.l.bf16 %v1516
    %v1695 = vunpack.c.l.bf16 %v1517
    %v1696 = vunpack.c.l.bf16 %v1518
    %v1697 = vunpack.c.l.bf16 %v1519
    %v1698 = vunpack.c.l.bf16 %v1520
    %v1699 = vunpack.c.l.bf16 %v1521
    %v1700 = vunpack.c.l.bf16 %v1522
    %v1701 = vunpack.c.l.bf16 %v1523
    %v1702 = vunpack.c.l.bf16 %v1524
    %v1703 = vunpack.c.l.bf16 %v1525
    %v1704 = vunpack.c.l.bf16 %v1526
    %v1705 = vunpack.c.l.bf16 %v1527
    %v1706 = vunpack.c.l.bf16 %v1528
    %v1707 = vunpack.c.l.bf16 %v1529
    %v1708 = vunpack.c.l.bf16 %v1530
    %v1709 = vunpack.c.l.bf16 %v1531
    %v1710 = vunpack.c.l.bf16 %v1532
    %v1711 = vunpack.c.l.bf16 %v1533
    %v1712 = vunpack.c.l.bf16 %v1534
    %v1713 = vunpack.c.l.bf16 %v1535
    %v1714 = vunpack.c.l.bf16 %v1536
    %v1715 = vunpack.c.l.bf16 %v1537
    %v1716 = vunpack.c.l.bf16 %v1538
    %v1717 = vunpack.c.l.bf16 %v1539
    %v1718 = vunpack.c.l.bf16 %v1540
    %v1719 = vunpack.c.l.bf16 %v1541
    %v1720 = vunpack.c.l.bf16 %v1542
    %v1721 = vunpack.c.l.bf16 %v1543
    %v1722 = vunpack.c.l.bf16 %v1544
    %v1723 = vunpack.c.l.bf16 %v1545
    %v1724 = vunpack.c.l.bf16 %v1546
    %v1725 = vunpack.c.l.bf16 %v1547
    %v1726 = vunpack.c.l.bf16 %v1548
    %v1727 = vunpack.c.l.bf16 %v1549
    %v1728 = vunpack.c.l.bf16 %v1550
    %v1729 = vunpack.c.l.bf16 %v1551
    %v1730 = vunpack.c.l.bf16 %v1552
    %v1731 = vunpack.c.l.bf16 %v1553
    %v1732 = vunpack.c.l.bf16 %v1554
    %v1733 = vunpack.c.l.bf16 %v1555
    %v1734 = vunpack.c.l.bf16 %v1556
    %v1735 = vunpack.c.l.bf16 %v1557
    %v1736 = vunpack.c.l.bf16 %v1558
    %v1737 = vunpack.c.l.bf16 %v1559
    %v1738 = vunpack.c.l.bf16 %v1560
    %v1739 = vunpack.c.l.bf16 %v1561
    %v1740 = vunpack.c.l.bf16 %v1562
    %v1741 = vunpack.c.l.bf16 %v1563
    %v1742 = vunpack.c.l.bf16 %v1564
    %v1743 = vunpack.c.l.bf16 %v1565
    %v1744 = vunpack.c.l.bf16 %v1566
    %v1745 = vunpack.c.l.bf16 %v1567
    %v1746 = vunpack.c.l.bf16 %v1568
    %v1747 = vunpack.c.l.bf16 %v1569
    %v1748 = vunpack.c.l.bf16 %v1570
    %v1749 = vunpack.c.l.bf16 %v1571
    %v1750 = vunpack.c.l.bf16 %v1572
    %v1751 = vunpack.c.l.bf16 %v1573
    %v1752 = vunpack.c.l.bf16 %v1574
    %v1753 = vunpack.c.l.bf16 %v1575
    %v1754 = vunpack.c.l.bf16 %v1576
    %v1755 = vunpack.c.l.bf16 %v1577
    %v1756 = vunpack.c.l.bf16 %v1578
    %v1757 = vunpack.c.l.bf16 %v1579
    %v1758 = vunpack.c.l.bf16 %v1580
    %v1759 = vunpack.c.l.bf16 %v1581
    %v1760 = vunpack.c.l.bf16 %v1582
    %v1761 = vunpack.c.l.bf16 %v1583
    %v1762 = vunpack.c.l.bf16 %v1584
    %v1763 = vunpack.c.l.bf16 %v1585
    %v1764 = vunpack.c.l.bf16 %v1586
    %v1765 = vunpack.c.l.bf16 %v1587
    %v1766 = vunpack.c.l.bf16 %v1588
    %v1767 = vunpack.c.l.bf16 %v1589
    %v1768 = vunpack.c.l.bf16 %v1590
    %v1769 = vunpack.c.l.bf16 %v1591
    %v1770 = vunpack.c.l.bf16 %v1592
    %v1771 = vunpack.c.l.bf16 %v1593
    %v1772 = vunpack.c.l.bf16 %v1594
    %v1773 = vunpack.c.l.bf16 %v1595
    %v1774 = vunpack.c.l.bf16 %v1596
    %v1775 = vunpack.c.l.bf16 %v1597
    %v1776 = vunpack.c.l.bf16 %v1598
    %v1777 = vunpack.c.l.bf16 %v1599
    %v1778 = vunpack.c.l.bf16 %v1600
    %v1779 = vunpack.c.l.bf16 %v1601
    %v1780 = vunpack.c.l.bf16 %v1602
    %v1781 = vunpack.c.l.bf16 %v1603
    %v1782 = vunpack.c.l.bf16 %v1604
    %v1783 = vunpack.c.l.bf16 %v1605
    %v1784 = vunpack.c.l.bf16 %v1606
    %v1785 = vunpack.c.l.bf16 %v1607
    %v1786 = vunpack.c.l.bf16 %v1608
    %v1787 = vunpack.c.l.bf16 %v1609
    %v1788 = vunpack.c.l.bf16 %v1610
    %v1789 = vunpack.c.l.bf16 %v1611
    %v1790 = vunpack.c.l.bf16 %v1612
    %v1791 = vunpack.c.l.bf16 %v1613
    %v1792 = vunpack.c.l.bf16 %v1614
    %v1793 = vlaneseq
    %v1794 = vshrl.u32 %v1793, 7
    %v1795 = vsub.s32 0, %v1794
    %v1796 = vrot.slane %v1639, %v1795
    %v1797 = vlaneseq
    %v1798 = vshrl.u32 %v1797, 7
    %v1799 = vsub.s32 0, %v1798
    %v1800 = vrot.slane %v1653, %v1799
    %v1801 = vlaneseq
    %v1802 = vshrl.u32 %v1801, 7
    %v1803 = vsub.s32 0, %v1802
    %v1804 = vrot.slane %v1661, %v1803
    %v1805 = vlaneseq
    %v1806 = vshrl.u32 %v1805, 7
    %v1807 = vsub.s32 0, %v1806
    %v1808 = vrot.slane %v1663, %v1807
    %v1809 = vlaneseq
    %v1810 = vshrl.u32 %v1809, 7
    %v1811 = vsub.s32 0, %v1810
    %v1812 = vrot.slane %v1646, %v1811
    %v1813 = vlaneseq
    %v1814 = vshrl.u32 %v1813, 7
    %v1815 = vsub.s32 0, %v1814
    %v1816 = vrot.slane %v1660, %v1815
    %v1817 = vlaneseq
    %v1818 = vshrl.u32 %v1817, 7
    %v1819 = vsub.s32 0, %v1818
    %v1820 = vrot.slane %v1662, %v1819
    %v1821 = vlaneseq
    %v1822 = vshrl.u32 %v1821, 7
    %v1823 = vsub.s32 0, %v1822
    %v1824 = vrot.slane %v1664, %v1823
    %v1833 = vmul.f32 %v1796, %v1665
    %v1834 = vmul.f32 %v1796, %v1666
    %v1835 = vmul.f32 %v1796, %v1667
    %v1836 = vmul.f32 %v1796, %v1668
    %v1837 = vmul.f32 %v1796, %v1669
    %v1838 = vmul.f32 %v1796, %v1670
    %v1839 = vmul.f32 %v1796, %v1671
    %v1840 = vmul.f32 %v1796, %v1672
    %v1841 = vmul.f32 %v1796, %v1673
    %v1842 = vmul.f32 %v1796, %v1674
    %v1843 = vmul.f32 %v1796, %v1675
    %v1844 = vmul.f32 %v1796, %v1676
    %v1845 = vmul.f32 %v1796, %v1677
    %v1846 = vmul.f32 %v1796, %v1678
    %v1847 = vmul.f32 %v1796, %v1679
    %v1848 = vmul.f32 %v1796, %v1680
    %v1849 = vmul.f32 %v1800, %v1681
    %v1850 = vmul.f32 %v1800, %v1682
    %v1851 = vmul.f32 %v1800, %v1683
    %v1852 = vmul.f32 %v1800, %v1684
    %v1853 = vmul.f32 %v1800, %v1685
    %v1854 = vmul.f32 %v1800, %v1686
    %v1855 = vmul.f32 %v1800, %v1687
    %v1856 = vmul.f32 %v1800, %v1688
    %v1857 = vmul.f32 %v1800, %v1689
    %v1858 = vmul.f32 %v1800, %v1690
    %v1859 = vmul.f32 %v1800, %v1691
    %v1860 = vmul.f32 %v1800, %v1692
    %v1861 = vmul.f32 %v1800, %v1693
    %v1862 = vmul.f32 %v1800, %v1694
    %v1863 = vmul.f32 %v1800, %v1695
    %v1864 = vmul.f32 %v1800, %v1696
    %v1865 = vmul.f32 %v1804, %v1697
    %v1866 = vmul.f32 %v1804, %v1698
    %v1867 = vmul.f32 %v1804, %v1699
    %v1868 = vmul.f32 %v1804, %v1700
    %v1869 = vmul.f32 %v1804, %v1701
    %v1870 = vmul.f32 %v1804, %v1702
    %v1871 = vmul.f32 %v1804, %v1703
    %v1872 = vmul.f32 %v1804, %v1704
    %v1873 = vmul.f32 %v1804, %v1705
    %v1874 = vmul.f32 %v1804, %v1706
    %v1875 = vmul.f32 %v1804, %v1707
    %v1876 = vmul.f32 %v1804, %v1708
    %v1877 = vmul.f32 %v1804, %v1709
    %v1878 = vmul.f32 %v1804, %v1710
    %v1879 = vmul.f32 %v1804, %v1711
    %v1880 = vmul.f32 %v1804, %v1712
    %v1881 = vmul.f32 %v1808, %v1713
    %v1882 = vmul.f32 %v1808, %v1714
    %v1883 = vmul.f32 %v1808, %v1715
    %v1884 = vmul.f32 %v1808, %v1716
    %v1885 = vmul.f32 %v1808, %v1717
    %v1886 = vmul.f32 %v1808, %v1718
    %v1887 = vmul.f32 %v1808, %v1719
    %v1888 = vmul.f32 %v1808, %v1720
    %v1889 = vmul.f32 %v1808, %v1721
    %v1890 = vmul.f32 %v1808, %v1722
    %v1891 = vmul.f32 %v1808, %v1723
    %v1892 = vmul.f32 %v1808, %v1724
    %v1893 = vmul.f32 %v1808, %v1725
    %v1894 = vmul.f32 %v1808, %v1726
    %v1895 = vmul.f32 %v1808, %v1727
    %v1896 = vmul.f32 %v1808, %v1728
    %v1897 = vmul.f32 %v1812, %v1729
    %v1898 = vmul.f32 %v1812, %v1730
    %v1899 = vmul.f32 %v1812, %v1731
    %v1900 = vmul.f32 %v1812, %v1732
    %v1901 = vmul.f32 %v1812, %v1733
    %v1902 = vmul.f32 %v1812, %v1734
    %v1903 = vmul.f32 %v1812, %v1735
    %v1904 = vmul.f32 %v1812, %v1736
    %v1905 = vmul.f32 %v1812, %v1737
    %v1906 = vmul.f32 %v1812, %v1738
    %v1907 = vmul.f32 %v1812, %v1739
    %v1908 = vmul.f32 %v1812, %v1740
    %v1909 = vmul.f32 %v1812, %v1741
    %v1910 = vmul.f32 %v1812, %v1742
    %v1911 = vmul.f32 %v1812, %v1743
    %v1912 = vmul.f32 %v1812, %v1744
    %v1913 = vmul.f32 %v1816, %v1745
    %v1914 = vmul.f32 %v1816, %v1746
    %v1915 = vmul.f32 %v1816, %v1747
    %v1916 = vmul.f32 %v1816, %v1748
    %v1917 = vmul.f32 %v1816, %v1749
    %v1918 = vmul.f32 %v1816, %v1750
    %v1919 = vmul.f32 %v1816, %v1751
    %v1920 = vmul.f32 %v1816, %v1752
    %v1921 = vmul.f32 %v1816, %v1753
    %v1922 = vmul.f32 %v1816, %v1754
    %v1923 = vmul.f32 %v1816, %v1755
    %v1924 = vmul.f32 %v1816, %v1756
    %v1925 = vmul.f32 %v1816, %v1757
    %v1926 = vmul.f32 %v1816, %v1758
    %v1927 = vmul.f32 %v1816, %v1759
    %v1928 = vmul.f32 %v1816, %v1760
    %v1929 = vmul.f32 %v1820, %v1761
    %v1930 = vmul.f32 %v1820, %v1762
    %v1931 = vmul.f32 %v1820, %v1763
    %v1932 = vmul.f32 %v1820, %v1764
    %v1933 = vmul.f32 %v1820, %v1765
    %v1934 = vmul.f32 %v1820, %v1766
    %v1935 = vmul.f32 %v1820, %v1767
    %v1936 = vmul.f32 %v1820, %v1768
    %v1937 = vmul.f32 %v1820, %v1769
    %v1938 = vmul.f32 %v1820, %v1770
    %v1939 = vmul.f32 %v1820, %v1771
    %v1940 = vmul.f32 %v1820, %v1772
    %v1941 = vmul.f32 %v1820, %v1773
    %v1942 = vmul.f32 %v1820, %v1774
    %v1943 = vmul.f32 %v1820, %v1775
    %v1944 = vmul.f32 %v1820, %v1776
    %v1945 = vmul.f32 %v1824, %v1777
    %v1946 = vmul.f32 %v1824, %v1778
    %v1947 = vmul.f32 %v1824, %v1779
    %v1948 = vmul.f32 %v1824, %v1780
    %v1949 = vmul.f32 %v1824, %v1781
    %v1950 = vmul.f32 %v1824, %v1782
    %v1951 = vmul.f32 %v1824, %v1783
    %v1952 = vmul.f32 %v1824, %v1784
    %v1953 = vmul.f32 %v1824, %v1785
    %v1954 = vmul.f32 %v1824, %v1786
    %v1955 = vmul.f32 %v1824, %v1787
    %v1956 = vmul.f32 %v1824, %v1788
    %v1957 = vmul.f32 %v1824, %v1789
    %v1958 = vmul.f32 %v1824, %v1790
    %v1959 = vmul.f32 %v1824, %v1791
    %v1960 = vmul.f32 %v1824, %v1792
    %1961 = vadd.xlane.f32.xlu0 %v1833
    %v1962 = vpop.xlane.xlu0 %1961
    %1963 = vadd.xlane.f32.xlu0 %v1834
    %v1964 = vpop.xlane.xlu0 %1963
    %1965 = vadd.xlane.f32.xlu0 %v1835
    %v1966 = vpop.xlane.xlu0 %1965
    %1967 = vadd.xlane.f32.xlu0 %v1836
    %v1968 = vpop.xlane.xlu0 %1967
    %1969 = vadd.xlane.f32.xlu0 %v1837
    %v1970 = vpop.xlane.xlu0 %1969
    %1971 = vadd.xlane.f32.xlu0 %v1838
    %v1972 = vpop.xlane.xlu0 %1971
    %1973 = vadd.xlane.f32.xlu0 %v1839
    %v1974 = vpop.xlane.xlu0 %1973
    %1975 = vadd.xlane.f32.xlu0 %v1840
    %v1976 = vpop.xlane.xlu0 %1975
    %1977 = vadd.xlane.f32.xlu0 %v1841
    %v1978 = vpop.xlane.xlu0 %1977
    %1979 = vadd.xlane.f32.xlu0 %v1842
    %v1980 = vpop.xlane.xlu0 %1979
    %1981 = vadd.xlane.f32.xlu0 %v1843
    %v1982 = vpop.xlane.xlu0 %1981
    %1983 = vadd.xlane.f32.xlu0 %v1844
    %v1984 = vpop.xlane.xlu0 %1983
    %1985 = vadd.xlane.f32.xlu0 %v1845
    %v1986 = vpop.xlane.xlu0 %1985
    %1987 = vadd.xlane.f32.xlu0 %v1846
    %v1988 = vpop.xlane.xlu0 %1987
    %1989 = vadd.xlane.f32.xlu0 %v1847
    %v1990 = vpop.xlane.xlu0 %1989
    %1991 = vadd.xlane.f32.xlu0 %v1848
    %v1992 = vpop.xlane.xlu0 %1991
    %1993 = vadd.xlane.f32.xlu0 %v1849
    %v1994 = vpop.xlane.xlu0 %1993
    %1995 = vadd.xlane.f32.xlu0 %v1850
    %v1996 = vpop.xlane.xlu0 %1995
    %1997 = vadd.xlane.f32.xlu0 %v1851
    %v1998 = vpop.xlane.xlu0 %1997
    %1999 = vadd.xlane.f32.xlu0 %v1852
    %v2000 = vpop.xlane.xlu0 %1999
    %2001 = vadd.xlane.f32.xlu0 %v1853
    %v2002 = vpop.xlane.xlu0 %2001
    %2003 = vadd.xlane.f32.xlu0 %v1854
    %v2004 = vpop.xlane.xlu0 %2003
    %2005 = vadd.xlane.f32.xlu0 %v1855
    %v2006 = vpop.xlane.xlu0 %2005
    %2007 = vadd.xlane.f32.xlu0 %v1856
    %v2008 = vpop.xlane.xlu0 %2007
    %2009 = vadd.xlane.f32.xlu0 %v1857
    %v2010 = vpop.xlane.xlu0 %2009
    %2011 = vadd.xlane.f32.xlu0 %v1858
    %v2012 = vpop.xlane.xlu0 %2011
    %2013 = vadd.xlane.f32.xlu0 %v1859
    %v2014 = vpop.xlane.xlu0 %2013
    %2015 = vadd.xlane.f32.xlu0 %v1860
    %v2016 = vpop.xlane.xlu0 %2015
    %2017 = vadd.xlane.f32.xlu0 %v1861
    %v2018 = vpop.xlane.xlu0 %2017
    %2019 = vadd.xlane.f32.xlu0 %v1862
    %v2020 = vpop.xlane.xlu0 %2019
    %2021 = vadd.xlane.f32.xlu0 %v1863
    %v2022 = vpop.xlane.xlu0 %2021
    %2023 = vadd.xlane.f32.xlu0 %v1864
    %v2024 = vpop.xlane.xlu0 %2023
    %2025 = vadd.xlane.f32.xlu0 %v1865
    %v2026 = vpop.xlane.xlu0 %2025
    %2027 = vadd.xlane.f32.xlu0 %v1866
    %v2028 = vpop.xlane.xlu0 %2027
    %2029 = vadd.xlane.f32.xlu0 %v1867
    %v2030 = vpop.xlane.xlu0 %2029
    %2031 = vadd.xlane.f32.xlu0 %v1868
    %v2032 = vpop.xlane.xlu0 %2031
    %2033 = vadd.xlane.f32.xlu0 %v1869
    %v2034 = vpop.xlane.xlu0 %2033
    %2035 = vadd.xlane.f32.xlu0 %v1870
    %v2036 = vpop.xlane.xlu0 %2035
    %2037 = vadd.xlane.f32.xlu0 %v1871
    %v2038 = vpop.xlane.xlu0 %2037
    %2039 = vadd.xlane.f32.xlu0 %v1872
    %v2040 = vpop.xlane.xlu0 %2039
    %2041 = vadd.xlane.f32.xlu0 %v1873
    %v2042 = vpop.xlane.xlu0 %2041
    %2043 = vadd.xlane.f32.xlu0 %v1874
    %v2044 = vpop.xlane.xlu0 %2043
    %2045 = vadd.xlane.f32.xlu0 %v1875
    %v2046 = vpop.xlane.xlu0 %2045
    %2047 = vadd.xlane.f32.xlu0 %v1876
    %v2048 = vpop.xlane.xlu0 %2047
    %2049 = vadd.xlane.f32.xlu0 %v1877
    %v2050 = vpop.xlane.xlu0 %2049
    %2051 = vadd.xlane.f32.xlu0 %v1878
    %v2052 = vpop.xlane.xlu0 %2051
    %2053 = vadd.xlane.f32.xlu0 %v1879
    %v2054 = vpop.xlane.xlu0 %2053
    %2055 = vadd.xlane.f32.xlu0 %v1880
    %v2056 = vpop.xlane.xlu0 %2055
    %2057 = vadd.xlane.f32.xlu0 %v1881
    %v2058 = vpop.xlane.xlu0 %2057
    %2059 = vadd.xlane.f32.xlu0 %v1882
    %v2060 = vpop.xlane.xlu0 %2059
    %2061 = vadd.xlane.f32.xlu0 %v1883
    %v2062 = vpop.xlane.xlu0 %2061
    %2063 = vadd.xlane.f32.xlu0 %v1884
    %v2064 = vpop.xlane.xlu0 %2063
    %2065 = vadd.xlane.f32.xlu0 %v1885
    %v2066 = vpop.xlane.xlu0 %2065
    %2067 = vadd.xlane.f32.xlu0 %v1886
    %v2068 = vpop.xlane.xlu0 %2067
    %2069 = vadd.xlane.f32.xlu0 %v1887
    %v2070 = vpop.xlane.xlu0 %2069
    %2071 = vadd.xlane.f32.xlu0 %v1888
    %v2072 = vpop.xlane.xlu0 %2071
    %2073 = vadd.xlane.f32.xlu0 %v1889
    %v2074 = vpop.xlane.xlu0 %2073
    %2075 = vadd.xlane.f32.xlu0 %v1890
    %v2076 = vpop.xlane.xlu0 %2075
    %2077 = vadd.xlane.f32.xlu0 %v1891
    %v2078 = vpop.xlane.xlu0 %2077
    %2079 = vadd.xlane.f32.xlu0 %v1892
    %v2080 = vpop.xlane.xlu0 %2079
    %2081 = vadd.xlane.f32.xlu0 %v1893
    %v2082 = vpop.xlane.xlu0 %2081
    %2083 = vadd.xlane.f32.xlu0 %v1894
    %v2084 = vpop.xlane.xlu0 %2083
    %2085 = vadd.xlane.f32.xlu0 %v1895
    %v2086 = vpop.xlane.xlu0 %2085
    %2087 = vadd.xlane.f32.xlu0 %v1896
    %v2088 = vpop.xlane.xlu0 %2087
    %2089 = vadd.xlane.f32.xlu0 %v1897
    %v2090 = vpop.xlane.xlu0 %2089
    %2091 = vadd.xlane.f32.xlu0 %v1898
    %v2092 = vpop.xlane.xlu0 %2091
    %2093 = vadd.xlane.f32.xlu0 %v1899
    %v2094 = vpop.xlane.xlu0 %2093
    %2095 = vadd.xlane.f32.xlu0 %v1900
    %v2096 = vpop.xlane.xlu0 %2095
    %2097 = vadd.xlane.f32.xlu0 %v1901
    %v2098 = vpop.xlane.xlu0 %2097
    %2099 = vadd.xlane.f32.xlu0 %v1902
    %v2100 = vpop.xlane.xlu0 %2099
    %2101 = vadd.xlane.f32.xlu0 %v1903
    %v2102 = vpop.xlane.xlu0 %2101
    %2103 = vadd.xlane.f32.xlu0 %v1904
    %v2104 = vpop.xlane.xlu0 %2103
    %2105 = vadd.xlane.f32.xlu0 %v1905
    %v2106 = vpop.xlane.xlu0 %2105
    %2107 = vadd.xlane.f32.xlu0 %v1906
    %v2108 = vpop.xlane.xlu0 %2107
    %2109 = vadd.xlane.f32.xlu0 %v1907
    %v2110 = vpop.xlane.xlu0 %2109
    %2111 = vadd.xlane.f32.xlu0 %v1908
    %v2112 = vpop.xlane.xlu0 %2111
    %2113 = vadd.xlane.f32.xlu0 %v1909
    %v2114 = vpop.xlane.xlu0 %2113
    %2115 = vadd.xlane.f32.xlu0 %v1910
    %v2116 = vpop.xlane.xlu0 %2115
    %2117 = vadd.xlane.f32.xlu0 %v1911
    %v2118 = vpop.xlane.xlu0 %2117
    %2119 = vadd.xlane.f32.xlu0 %v1912
    %v2120 = vpop.xlane.xlu0 %2119
    %2121 = vadd.xlane.f32.xlu0 %v1913
    %v2122 = vpop.xlane.xlu0 %2121
    %2123 = vadd.xlane.f32.xlu0 %v1914
    %v2124 = vpop.xlane.xlu0 %2123
    %2125 = vadd.xlane.f32.xlu0 %v1915
    %v2126 = vpop.xlane.xlu0 %2125
    %2127 = vadd.xlane.f32.xlu0 %v1916
    %v2128 = vpop.xlane.xlu0 %2127
    %2129 = vadd.xlane.f32.xlu0 %v1917
    %v2130 = vpop.xlane.xlu0 %2129
    %2131 = vadd.xlane.f32.xlu0 %v1918
    %v2132 = vpop.xlane.xlu0 %2131
    %2133 = vadd.xlane.f32.xlu0 %v1919
    %v2134 = vpop.xlane.xlu0 %2133
    %2135 = vadd.xlane.f32.xlu0 %v1920
    %v2136 = vpop.xlane.xlu0 %2135
    %2137 = vadd.xlane.f32.xlu0 %v1921
    %v2138 = vpop.xlane.xlu0 %2137
    %2139 = vadd.xlane.f32.xlu0 %v1922
    %v2140 = vpop.xlane.xlu0 %2139
    %2141 = vadd.xlane.f32.xlu0 %v1923
    %v2142 = vpop.xlane.xlu0 %2141
    %2143 = vadd.xlane.f32.xlu0 %v1924
    %v2144 = vpop.xlane.xlu0 %2143
    %2145 = vadd.xlane.f32.xlu0 %v1925
    %v2146 = vpop.xlane.xlu0 %2145
    %2147 = vadd.xlane.f32.xlu0 %v1926
    %v2148 = vpop.xlane.xlu0 %2147
    %2149 = vadd.xlane.f32.xlu0 %v1927
    %v2150 = vpop.xlane.xlu0 %2149
    %2151 = vadd.xlane.f32.xlu0 %v1928
    %v2152 = vpop.xlane.xlu0 %2151
    %2153 = vadd.xlane.f32.xlu0 %v1929
    %v2154 = vpop.xlane.xlu0 %2153
    %2155 = vadd.xlane.f32.xlu0 %v1930
    %v2156 = vpop.xlane.xlu0 %2155
    %2157 = vadd.xlane.f32.xlu0 %v1931
    %v2158 = vpop.xlane.xlu0 %2157
    %2159 = vadd.xlane.f32.xlu0 %v1932
    %v2160 = vpop.xlane.xlu0 %2159
    %2161 = vadd.xlane.f32.xlu0 %v1933
    %v2162 = vpop.xlane.xlu0 %2161
    %2163 = vadd.xlane.f32.xlu0 %v1934
    %v2164 = vpop.xlane.xlu0 %2163
    %2165 = vadd.xlane.f32.xlu0 %v1935
    %v2166 = vpop.xlane.xlu0 %2165
    %2167 = vadd.xlane.f32.xlu0 %v1936
    %v2168 = vpop.xlane.xlu0 %2167
    %2169 = vadd.xlane.f32.xlu0 %v1937
    %v2170 = vpop.xlane.xlu0 %2169
    %2171 = vadd.xlane.f32.xlu0 %v1938
    %v2172 = vpop.xlane.xlu0 %2171
    %2173 = vadd.xlane.f32.xlu0 %v1939
    %v2174 = vpop.xlane.xlu0 %2173
    %2175 = vadd.xlane.f32.xlu0 %v1940
    %v2176 = vpop.xlane.xlu0 %2175
    %2177 = vadd.xlane.f32.xlu0 %v1941
    %v2178 = vpop.xlane.xlu0 %2177
    %2179 = vadd.xlane.f32.xlu0 %v1942
    %v2180 = vpop.xlane.xlu0 %2179
    %2181 = vadd.xlane.f32.xlu0 %v1943
    %v2182 = vpop.xlane.xlu0 %2181
    %2183 = vadd.xlane.f32.xlu0 %v1944
    %v2184 = vpop.xlane.xlu0 %2183
    %2185 = vadd.xlane.f32.xlu0 %v1945
    %v2186 = vpop.xlane.xlu0 %2185
    %2187 = vadd.xlane.f32.xlu0 %v1946
    %v2188 = vpop.xlane.xlu0 %2187
    %2189 = vadd.xlane.f32.xlu0 %v1947
    %v2190 = vpop.xlane.xlu0 %2189
    %2191 = vadd.xlane.f32.xlu0 %v1948
    %v2192 = vpop.xlane.xlu0 %2191
    %2193 = vadd.xlane.f32.xlu0 %v1949
    %v2194 = vpop.xlane.xlu0 %2193
    %2195 = vadd.xlane.f32.xlu0 %v1950
    %v2196 = vpop.xlane.xlu0 %2195
    %2197 = vadd.xlane.f32.xlu0 %v1951
    %v2198 = vpop.xlane.xlu0 %2197
    %2199 = vadd.xlane.f32.xlu0 %v1952
    %v2200 = vpop.xlane.xlu0 %2199
    %2201 = vadd.xlane.f32.xlu0 %v1953
    %v2202 = vpop.xlane.xlu0 %2201
    %2203 = vadd.xlane.f32.xlu0 %v1954
    %v2204 = vpop.xlane.xlu0 %2203
    %2205 = vadd.xlane.f32.xlu0 %v1955
    %v2206 = vpop.xlane.xlu0 %2205
    %2207 = vadd.xlane.f32.xlu0 %v1956
    %v2208 = vpop.xlane.xlu0 %2207
    %2209 = vadd.xlane.f32.xlu0 %v1957
    %v2210 = vpop.xlane.xlu0 %2209
    %2211 = vadd.xlane.f32.xlu0 %v1958
    %v2212 = vpop.xlane.xlu0 %2211
    %2213 = vadd.xlane.f32.xlu0 %v1959
    %v2214 = vpop.xlane.xlu0 %2213
    %2215 = vadd.xlane.f32.xlu0 %v1960
    %v2216 = vpop.xlane.xlu0 %2215
    %v2217 = vld [vmem:[%s8] sm:$0xff]
    %vm2218 = vcmp.gt.f32.partialorder %v2217, 0.5
    %v2347 = vlaneseq
    %v2348 = vand.u32 %v2347, 127
    %v2349 = vlaneseq
    %v2350 = vshrl.u32 %v2349, 7
    %v2351 = vsub.s32 %v2348, %v2350
    %v2352 = vrot.slane %v1962, %v2351
    %v2353 = vadd.s32 %v2348, 4294967288
    %v2354 = vlaneseq
    %v2355 = vshrl.u32 %v2354, 7
    %v2356 = vsub.s32 %v2353, %v2355
    %v2357 = vrot.slane %v1964, %v2356
    %vm2358 = vcmask 130112
    %v2359 = vsel %vm2358, %v2357, %v2352
    %v2360 = vadd.s32 %v2348, 4294967280
    %v2361 = vlaneseq
    %v2362 = vshrl.u32 %v2361, 7
    %v2363 = vsub.s32 %v2360, %v2362
    %v2364 = vrot.slane %v1966, %v2363
    %vm2365 = vcmask 195712
    %v2366 = vsel %vm2365, %v2364, %v2359
    %v2367 = vadd.s32 %v2348, 4294967272
    %v2368 = vlaneseq
    %v2369 = vshrl.u32 %v2368, 7
    %v2370 = vsub.s32 %v2367, %v2369
    %v2371 = vrot.slane %v1968, %v2370
    %vm2372 = vcmask 261312
    %v2373 = vsel %vm2372, %v2371, %v2366
    %v2374 = vadd.s32 %v2348, 4294967264
    %v2375 = vlaneseq
    %v2376 = vshrl.u32 %v2375, 7
    %v2377 = vsub.s32 %v2374, %v2376
    %v2378 = vrot.slane %v1970, %v2377
    %vm2379 = vcmask 326912
    %v2380 = vsel %vm2379, %v2378, %v2373
    %v2381 = vadd.s32 %v2348, 4294967256
    %v2382 = vlaneseq
    %v2383 = vshrl.u32 %v2382, 7
    %v2384 = vsub.s32 %v2381, %v2383
    %v2385 = vrot.slane %v1972, %v2384
    %vm2386 = vcmask 392512
    %v2387 = vsel %vm2386, %v2385, %v2380
    %v2388 = vadd.s32 %v2348, 4294967248
    %v2389 = vlaneseq
    %v2390 = vshrl.u32 %v2389, 7
    %v2391 = vsub.s32 %v2388, %v2390
    %v2392 = vrot.slane %v1974, %v2391
    %vm2393 = vcmask 458112
    %v2394 = vsel %vm2393, %v2392, %v2387
    %v2395 = vadd.s32 %v2348, 4294967240
    %v2396 = vlaneseq
    %v2397 = vshrl.u32 %v2396, 7
    %v2398 = vsub.s32 %v2395, %v2397
    %v2399 = vrot.slane %v1976, %v2398
    %vm2400 = vcmask 523712
    %v2401 = vsel %vm2400, %v2399, %v2394
    %v2402 = vadd.s32 %v2348, 4294967232
    %v2403 = vlaneseq
    %v2404 = vshrl.u32 %v2403, 7
    %v2405 = vsub.s32 %v2402, %v2404
    %v2406 = vrot.slane %v1978, %v2405
    %vm2407 = vcmask 589312
    %v2408 = vsel %vm2407, %v2406, %v2401
    %v2409 = vadd.s32 %v2348, 4294967224
    %v2410 = vlaneseq
    %v2411 = vshrl.u32 %v2410, 7
    %v2412 = vsub.s32 %v2409, %v2411
    %v2413 = vrot.slane %v1980, %v2412
    %vm2414 = vcmask 654912
    %v2415 = vsel %vm2414, %v2413, %v2408
    %v2416 = vadd.s32 %v2348, 4294967216
    %v2417 = vlaneseq
    %v2418 = vshrl.u32 %v2417, 7
    %v2419 = vsub.s32 %v2416, %v2418
    %v2420 = vrot.slane %v1982, %v2419
    %vm2421 = vcmask 720512
    %v2422 = vsel %vm2421, %v2420, %v2415
    %v2423 = vadd.s32 %v2348, 4294967208
    %v2424 = vlaneseq
    %v2425 = vshrl.u32 %v2424, 7
    %v2426 = vsub.s32 %v2423, %v2425
    %v2427 = vrot.slane %v1984, %v2426
    %vm2428 = vcmask 786112
    %v2429 = vsel %vm2428, %v2427, %v2422
    %v2430 = vadd.s32 %v2348, 4294967200
    %v2431 = vlaneseq
    %v2432 = vshrl.u32 %v2431, 7
    %v2433 = vsub.s32 %v2430, %v2432
    %v2434 = vrot.slane %v1986, %v2433
    %vm2435 = vcmask 851712
    %v2436 = vsel %vm2435, %v2434, %v2429
    %v2437 = vadd.s32 %v2348, 4294967192
    %v2438 = vlaneseq
    %v2439 = vshrl.u32 %v2438, 7
    %v2440 = vsub.s32 %v2437, %v2439
    %v2441 = vrot.slane %v1988, %v2440
    %vm2442 = vcmask 917312
    %v2443 = vsel %vm2442, %v2441, %v2436
    %v2444 = vadd.s32 %v2348, 4294967184
    %v2445 = vlaneseq
    %v2446 = vshrl.u32 %v2445, 7
    %v2447 = vsub.s32 %v2444, %v2446
    %v2448 = vrot.slane %v1990, %v2447
    %vm2449 = vcmask 982912
    %v2450 = vsel %vm2449, %v2448, %v2443
    %v2451 = vadd.s32 %v2348, 4294967176
    %v2452 = vlaneseq
    %v2453 = vshrl.u32 %v2452, 7
    %v2454 = vsub.s32 %v2451, %v2453
    %v2455 = vrot.slane %v1992, %v2454
    %vm2456 = vcmask 1048512
    %v2457 = vsel %vm2456, %v2455, %v2450
    %v2458 = vlaneseq
    %v2459 = vshrl.u32 %v2458, 7
    %v2460 = vsub.s32 %v2348, %v2459
    %v2461 = vrot.slane %v1994, %v2460
    %v2462 = vlaneseq
    %v2463 = vshrl.u32 %v2462, 7
    %v2464 = vsub.s32 %v2353, %v2463
    %v2465 = vrot.slane %v1996, %v2464
    %v2466 = vsel %vm2358, %v2465, %v2461
    %v2467 = vlaneseq
    %v2468 = vshrl.u32 %v2467, 7
    %v2469 = vsub.s32 %v2360, %v2468
    %v2470 = vrot.slane %v1998, %v2469
    %v2471 = vsel %vm2365, %v2470, %v2466
    %v2472 = vlaneseq
    %v2473 = vshrl.u32 %v2472, 7
    %v2474 = vsub.s32 %v2367, %v2473
    %v2475 = vrot.slane %v2000, %v2474
    %v2476 = vsel %vm2372, %v2475, %v2471
    %v2477 = vlaneseq
    %v2478 = vshrl.u32 %v2477, 7
    %v2479 = vsub.s32 %v2374, %v2478
    %v2480 = vrot.slane %v2002, %v2479
    %v2481 = vsel %vm2379, %v2480, %v2476
    %v2482 = vlaneseq
    %v2483 = vshrl.u32 %v2482, 7
    %v2484 = vsub.s32 %v2381, %v2483
    %v2485 = vrot.slane %v2004, %v2484
    %v2486 = vsel %vm2386, %v2485, %v2481
    %v2487 = vlaneseq
    %v2488 = vshrl.u32 %v2487, 7
    %v2489 = vsub.s32 %v2388, %v2488
    %v2490 = vrot.slane %v2006, %v2489
    %v2491 = vsel %vm2393, %v2490, %v2486
    %v2492 = vlaneseq
    %v2493 = vshrl.u32 %v2492, 7
    %v2494 = vsub.s32 %v2395, %v2493
    %v2495 = vrot.slane %v2008, %v2494
    %v2496 = vsel %vm2400, %v2495, %v2491
    %v2497 = vlaneseq
    %v2498 = vshrl.u32 %v2497, 7
    %v2499 = vsub.s32 %v2402, %v2498
    %v2500 = vrot.slane %v2010, %v2499
    %v2501 = vsel %vm2407, %v2500, %v2496
    %v2502 = vlaneseq
    %v2503 = vshrl.u32 %v2502, 7
    %v2504 = vsub.s32 %v2409, %v2503
    %v2505 = vrot.slane %v2012, %v2504
    %v2506 = vsel %vm2414, %v2505, %v2501
    %v2507 = vlaneseq
    %v2508 = vshrl.u32 %v2507, 7
    %v2509 = vsub.s32 %v2416, %v2508
    %v2510 = vrot.slane %v2014, %v2509
    %v2511 = vsel %vm2421, %v2510, %v2506
    %v2512 = vlaneseq
    %v2513 = vshrl.u32 %v2512, 7
    %v2514 = vsub.s32 %v2423, %v2513
    %v2515 = vrot.slane %v2016, %v2514
    %v2516 = vsel %vm2428, %v2515, %v2511
    %v2517 = vlaneseq
    %v2518 = vshrl.u32 %v2517, 7
    %v2519 = vsub.s32 %v2430, %v2518
    %v2520 = vrot.slane %v2018, %v2519
    %v2521 = vsel %vm2435, %v2520, %v2516
    %v2522 = vlaneseq
    %v2523 = vshrl.u32 %v2522, 7
    %v2524 = vsub.s32 %v2437, %v2523
    %v2525 = vrot.slane %v2020, %v2524
    %v2526 = vsel %vm2442, %v2525, %v2521
    %v2527 = vlaneseq
    %v2528 = vshrl.u32 %v2527, 7
    %v2529 = vsub.s32 %v2444, %v2528
    %v2530 = vrot.slane %v2022, %v2529
    %v2531 = vsel %vm2449, %v2530, %v2526
    %v2532 = vlaneseq
    %v2533 = vshrl.u32 %v2532, 7
    %v2534 = vsub.s32 %v2451, %v2533
    %v2535 = vrot.slane %v2024, %v2534
    %v2536 = vsel %vm2456, %v2535, %v2531
    %v2537 = vlaneseq
    %v2538 = vshrl.u32 %v2537, 7
    %v2539 = vsub.s32 %v2348, %v2538
    %v2540 = vrot.slane %v2026, %v2539
    %v2541 = vlaneseq
    %v2542 = vshrl.u32 %v2541, 7
    %v2543 = vsub.s32 %v2353, %v2542
    %v2544 = vrot.slane %v2028, %v2543
    %v2545 = vsel %vm2358, %v2544, %v2540
    %v2546 = vlaneseq
    %v2547 = vshrl.u32 %v2546, 7
    %v2548 = vsub.s32 %v2360, %v2547
    %v2549 = vrot.slane %v2030, %v2548
    %v2550 = vsel %vm2365, %v2549, %v2545
    %v2551 = vlaneseq
    %v2552 = vshrl.u32 %v2551, 7
    %v2553 = vsub.s32 %v2367, %v2552
    %v2554 = vrot.slane %v2032, %v2553
    %v2555 = vsel %vm2372, %v2554, %v2550
    %v2556 = vlaneseq
    %v2557 = vshrl.u32 %v2556, 7
    %v2558 = vsub.s32 %v2374, %v2557
    %v2559 = vrot.slane %v2034, %v2558
    %v2560 = vsel %vm2379, %v2559, %v2555
    %v2561 = vlaneseq
    %v2562 = vshrl.u32 %v2561, 7
    %v2563 = vsub.s32 %v2381, %v2562
    %v2564 = vrot.slane %v2036, %v2563
    %v2565 = vsel %vm2386, %v2564, %v2560
    %v2566 = vlaneseq
    %v2567 = vshrl.u32 %v2566, 7
    %v2568 = vsub.s32 %v2388, %v2567
    %v2569 = vrot.slane %v2038, %v2568
    %v2570 = vsel %vm2393, %v2569, %v2565
    %v2571 = vlaneseq
    %v2572 = vshrl.u32 %v2571, 7
    %v2573 = vsub.s32 %v2395, %v2572
    %v2574 = vrot.slane %v2040, %v2573
    %v2575 = vsel %vm2400, %v2574, %v2570
    %v2576 = vlaneseq
    %v2577 = vshrl.u32 %v2576, 7
    %v2578 = vsub.s32 %v2402, %v2577
    %v2579 = vrot.slane %v2042, %v2578
    %v2580 = vsel %vm2407, %v2579, %v2575
    %v2581 = vlaneseq
    %v2582 = vshrl.u32 %v2581, 7
    %v2583 = vsub.s32 %v2409, %v2582
    %v2584 = vrot.slane %v2044, %v2583
    %v2585 = vsel %vm2414, %v2584, %v2580
    %v2586 = vlaneseq
    %v2587 = vshrl.u32 %v2586, 7
    %v2588 = vsub.s32 %v2416, %v2587
    %v2589 = vrot.slane %v2046, %v2588
    %v2590 = vsel %vm2421, %v2589, %v2585
    %v2591 = vlaneseq
    %v2592 = vshrl.u32 %v2591, 7
    %v2593 = vsub.s32 %v2423, %v2592
    %v2594 = vrot.slane %v2048, %v2593
    %v2595 = vsel %vm2428, %v2594, %v2590
    %v2596 = vlaneseq
    %v2597 = vshrl.u32 %v2596, 7
    %v2598 = vsub.s32 %v2430, %v2597
    %v2599 = vrot.slane %v2050, %v2598
    %v2600 = vsel %vm2435, %v2599, %v2595
    %v2601 = vlaneseq
    %v2602 = vshrl.u32 %v2601, 7
    %v2603 = vsub.s32 %v2437, %v2602
    %v2604 = vrot.slane %v2052, %v2603
    %v2605 = vsel %vm2442, %v2604, %v2600
    %v2606 = vlaneseq
    %v2607 = vshrl.u32 %v2606, 7
    %v2608 = vsub.s32 %v2444, %v2607
    %v2609 = vrot.slane %v2054, %v2608
    %v2610 = vsel %vm2449, %v2609, %v2605
    %v2611 = vlaneseq
    %v2612 = vshrl.u32 %v2611, 7
    %v2613 = vsub.s32 %v2451, %v2612
    %v2614 = vrot.slane %v2056, %v2613
    %v2615 = vsel %vm2456, %v2614, %v2610
    %v2616 = vlaneseq
    %v2617 = vshrl.u32 %v2616, 7
    %v2618 = vsub.s32 %v2348, %v2617
    %v2619 = vrot.slane %v2058, %v2618
    %v2620 = vlaneseq
    %v2621 = vshrl.u32 %v2620, 7
    %v2622 = vsub.s32 %v2353, %v2621
    %v2623 = vrot.slane %v2060, %v2622
    %v2624 = vsel %vm2358, %v2623, %v2619
    %v2625 = vlaneseq
    %v2626 = vshrl.u32 %v2625, 7
    %v2627 = vsub.s32 %v2360, %v2626
    %v2628 = vrot.slane %v2062, %v2627
    %v2629 = vsel %vm2365, %v2628, %v2624
    %v2630 = vlaneseq
    %v2631 = vshrl.u32 %v2630, 7
    %v2632 = vsub.s32 %v2367, %v2631
    %v2633 = vrot.slane %v2064, %v2632
    %v2634 = vsel %vm2372, %v2633, %v2629
    %v2635 = vlaneseq
    %v2636 = vshrl.u32 %v2635, 7
    %v2637 = vsub.s32 %v2374, %v2636
    %v2638 = vrot.slane %v2066, %v2637
    %v2639 = vsel %vm2379, %v2638, %v2634
    %v2640 = vlaneseq
    %v2641 = vshrl.u32 %v2640, 7
    %v2642 = vsub.s32 %v2381, %v2641
    %v2643 = vrot.slane %v2068, %v2642
    %v2644 = vsel %vm2386, %v2643, %v2639
    %v2645 = vlaneseq
    %v2646 = vshrl.u32 %v2645, 7
    %v2647 = vsub.s32 %v2388, %v2646
    %v2648 = vrot.slane %v2070, %v2647
    %v2649 = vsel %vm2393, %v2648, %v2644
    %v2650 = vlaneseq
    %v2651 = vshrl.u32 %v2650, 7
    %v2652 = vsub.s32 %v2395, %v2651
    %v2653 = vrot.slane %v2072, %v2652
    %v2654 = vsel %vm2400, %v2653, %v2649
    %v2655 = vlaneseq
    %v2656 = vshrl.u32 %v2655, 7
    %v2657 = vsub.s32 %v2402, %v2656
    %v2658 = vrot.slane %v2074, %v2657
    %v2659 = vsel %vm2407, %v2658, %v2654
    %v2660 = vlaneseq
    %v2661 = vshrl.u32 %v2660, 7
    %v2662 = vsub.s32 %v2409, %v2661
    %v2663 = vrot.slane %v2076, %v2662
    %v2664 = vsel %vm2414, %v2663, %v2659
    %v2665 = vlaneseq
    %v2666 = vshrl.u32 %v2665, 7
    %v2667 = vsub.s32 %v2416, %v2666
    %v2668 = vrot.slane %v2078, %v2667
    %v2669 = vsel %vm2421, %v2668, %v2664
    %v2670 = vlaneseq
    %v2671 = vshrl.u32 %v2670, 7
    %v2672 = vsub.s32 %v2423, %v2671
    %v2673 = vrot.slane %v2080, %v2672
    %v2674 = vsel %vm2428, %v2673, %v2669
    %v2675 = vlaneseq
    %v2676 = vshrl.u32 %v2675, 7
    %v2677 = vsub.s32 %v2430, %v2676
    %v2678 = vrot.slane %v2082, %v2677
    %v2679 = vsel %vm2435, %v2678, %v2674
    %v2680 = vlaneseq
    %v2681 = vshrl.u32 %v2680, 7
    %v2682 = vsub.s32 %v2437, %v2681
    %v2683 = vrot.slane %v2084, %v2682
    %v2684 = vsel %vm2442, %v2683, %v2679
    %v2685 = vlaneseq
    %v2686 = vshrl.u32 %v2685, 7
    %v2687 = vsub.s32 %v2444, %v2686
    %v2688 = vrot.slane %v2086, %v2687
    %v2689 = vsel %vm2449, %v2688, %v2684
    %v2690 = vlaneseq
    %v2691 = vshrl.u32 %v2690, 7
    %v2692 = vsub.s32 %v2451, %v2691
    %v2693 = vrot.slane %v2088, %v2692
    %v2694 = vsel %vm2456, %v2693, %v2689
    %v2695 = vlaneseq
    %v2696 = vshrl.u32 %v2695, 7
    %v2697 = vsub.s32 %v2348, %v2696
    %v2698 = vrot.slane %v2090, %v2697
    %v2699 = vlaneseq
    %v2700 = vshrl.u32 %v2699, 7
    %v2701 = vsub.s32 %v2353, %v2700
    %v2702 = vrot.slane %v2092, %v2701
    %v2703 = vsel %vm2358, %v2702, %v2698
    %v2704 = vlaneseq
    %v2705 = vshrl.u32 %v2704, 7
    %v2706 = vsub.s32 %v2360, %v2705
    %v2707 = vrot.slane %v2094, %v2706
    %v2708 = vsel %vm2365, %v2707, %v2703
    %v2709 = vlaneseq
    %v2710 = vshrl.u32 %v2709, 7
    %v2711 = vsub.s32 %v2367, %v2710
    %v2712 = vrot.slane %v2096, %v2711
    %v2713 = vsel %vm2372, %v2712, %v2708
    %v2714 = vlaneseq
    %v2715 = vshrl.u32 %v2714, 7
    %v2716 = vsub.s32 %v2374, %v2715
    %v2717 = vrot.slane %v2098, %v2716
    %v2718 = vsel %vm2379, %v2717, %v2713
    %v2719 = vlaneseq
    %v2720 = vshrl.u32 %v2719, 7
    %v2721 = vsub.s32 %v2381, %v2720
    %v2722 = vrot.slane %v2100, %v2721
    %v2723 = vsel %vm2386, %v2722, %v2718
    %v2724 = vlaneseq
    %v2725 = vshrl.u32 %v2724, 7
    %v2726 = vsub.s32 %v2388, %v2725
    %v2727 = vrot.slane %v2102, %v2726
    %v2728 = vsel %vm2393, %v2727, %v2723
    %v2729 = vlaneseq
    %v2730 = vshrl.u32 %v2729, 7
    %v2731 = vsub.s32 %v2395, %v2730
    %v2732 = vrot.slane %v2104, %v2731
    %v2733 = vsel %vm2400, %v2732, %v2728
    %v2734 = vlaneseq
    %v2735 = vshrl.u32 %v2734, 7
    %v2736 = vsub.s32 %v2402, %v2735
    %v2737 = vrot.slane %v2106, %v2736
    %v2738 = vsel %vm2407, %v2737, %v2733
    %v2739 = vlaneseq
    %v2740 = vshrl.u32 %v2739, 7
    %v2741 = vsub.s32 %v2409, %v2740
    %v2742 = vrot.slane %v2108, %v2741
    %v2743 = vsel %vm2414, %v2742, %v2738
    %v2744 = vlaneseq
    %v2745 = vshrl.u32 %v2744, 7
    %v2746 = vsub.s32 %v2416, %v2745
    %v2747 = vrot.slane %v2110, %v2746
    %v2748 = vsel %vm2421, %v2747, %v2743
    %v2749 = vlaneseq
    %v2750 = vshrl.u32 %v2749, 7
    %v2751 = vsub.s32 %v2423, %v2750
    %v2752 = vrot.slane %v2112, %v2751
    %v2753 = vsel %vm2428, %v2752, %v2748
    %v2754 = vlaneseq
    %v2755 = vshrl.u32 %v2754, 7
    %v2756 = vsub.s32 %v2430, %v2755
    %v2757 = vrot.slane %v2114, %v2756
    %v2758 = vsel %vm2435, %v2757, %v2753
    %v2759 = vlaneseq
    %v2760 = vshrl.u32 %v2759, 7
    %v2761 = vsub.s32 %v2437, %v2760
    %v2762 = vrot.slane %v2116, %v2761
    %v2763 = vsel %vm2442, %v2762, %v2758
    %v2764 = vlaneseq
    %v2765 = vshrl.u32 %v2764, 7
    %v2766 = vsub.s32 %v2444, %v2765
    %v2767 = vrot.slane %v2118, %v2766
    %v2768 = vsel %vm2449, %v2767, %v2763
    %v2769 = vlaneseq
    %v2770 = vshrl.u32 %v2769, 7
    %v2771 = vsub.s32 %v2451, %v2770
    %v2772 = vrot.slane %v2120, %v2771
    %v2773 = vsel %vm2456, %v2772, %v2768
    %v2774 = vlaneseq
    %v2775 = vshrl.u32 %v2774, 7
    %v2776 = vsub.s32 %v2348, %v2775
    %v2777 = vrot.slane %v2122, %v2776
    %v2778 = vlaneseq
    %v2779 = vshrl.u32 %v2778, 7
    %v2780 = vsub.s32 %v2353, %v2779
    %v2781 = vrot.slane %v2124, %v2780
    %v2782 = vsel %vm2358, %v2781, %v2777
    %v2783 = vlaneseq
    %v2784 = vshrl.u32 %v2783, 7
    %v2785 = vsub.s32 %v2360, %v2784
    %v2786 = vrot.slane %v2126, %v2785
    %v2787 = vsel %vm2365, %v2786, %v2782
    %v2788 = vlaneseq
    %v2789 = vshrl.u32 %v2788, 7
    %v2790 = vsub.s32 %v2367, %v2789
    %v2791 = vrot.slane %v2128, %v2790
    %v2792 = vsel %vm2372, %v2791, %v2787
    %v2793 = vlaneseq
    %v2794 = vshrl.u32 %v2793, 7
    %v2795 = vsub.s32 %v2374, %v2794
    %v2796 = vrot.slane %v2130, %v2795
    %v2797 = vsel %vm2379, %v2796, %v2792
    %v2798 = vlaneseq
    %v2799 = vshrl.u32 %v2798, 7
    %v2800 = vsub.s32 %v2381, %v2799
    %v2801 = vrot.slane %v2132, %v2800
    %v2802 = vsel %vm2386, %v2801, %v2797
    %v2803 = vlaneseq
    %v2804 = vshrl.u32 %v2803, 7
    %v2805 = vsub.s32 %v2388, %v2804
    %v2806 = vrot.slane %v2134, %v2805
    %v2807 = vsel %vm2393, %v2806, %v2802
    %v2808 = vlaneseq
    %v2809 = vshrl.u32 %v2808, 7
    %v2810 = vsub.s32 %v2395, %v2809
    %v2811 = vrot.slane %v2136, %v2810
    %v2812 = vsel %vm2400, %v2811, %v2807
    %v2813 = vlaneseq
    %v2814 = vshrl.u32 %v2813, 7
    %v2815 = vsub.s32 %v2402, %v2814
    %v2816 = vrot.slane %v2138, %v2815
    %v2817 = vsel %vm2407, %v2816, %v2812
    %v2818 = vlaneseq
    %v2819 = vshrl.u32 %v2818, 7
    %v2820 = vsub.s32 %v2409, %v2819
    %v2821 = vrot.slane %v2140, %v2820
    %v2822 = vsel %vm2414, %v2821, %v2817
    %v2823 = vlaneseq
    %v2824 = vshrl.u32 %v2823, 7
    %v2825 = vsub.s32 %v2416, %v2824
    %v2826 = vrot.slane %v2142, %v2825
    %v2827 = vsel %vm2421, %v2826, %v2822
    %v2828 = vlaneseq
    %v2829 = vshrl.u32 %v2828, 7
    %v2830 = vsub.s32 %v2423, %v2829
    %v2831 = vrot.slane %v2144, %v2830
    %v2832 = vsel %vm2428, %v2831, %v2827
    %v2833 = vlaneseq
    %v2834 = vshrl.u32 %v2833, 7
    %v2835 = vsub.s32 %v2430, %v2834
    %v2836 = vrot.slane %v2146, %v2835
    %v2837 = vsel %vm2435, %v2836, %v2832
    %v2838 = vlaneseq
    %v2839 = vshrl.u32 %v2838, 7
    %v2840 = vsub.s32 %v2437, %v2839
    %v2841 = vrot.slane %v2148, %v2840
    %v2842 = vsel %vm2442, %v2841, %v2837
    %v2843 = vlaneseq
    %v2844 = vshrl.u32 %v2843, 7
    %v2845 = vsub.s32 %v2444, %v2844
    %v2846 = vrot.slane %v2150, %v2845
    %v2847 = vsel %vm2449, %v2846, %v2842
    %v2848 = vlaneseq
    %v2849 = vshrl.u32 %v2848, 7
    %v2850 = vsub.s32 %v2451, %v2849
    %v2851 = vrot.slane %v2152, %v2850
    %v2852 = vsel %vm2456, %v2851, %v2847
    %v2853 = vlaneseq
    %v2854 = vshrl.u32 %v2853, 7
    %v2855 = vsub.s32 %v2348, %v2854
    %v2856 = vrot.slane %v2154, %v2855
    %v2857 = vlaneseq
    %v2858 = vshrl.u32 %v2857, 7
    %v2859 = vsub.s32 %v2353, %v2858
    %v2860 = vrot.slane %v2156, %v2859
    %v2861 = vsel %vm2358, %v2860, %v2856
    %v2862 = vlaneseq
    %v2863 = vshrl.u32 %v2862, 7
    %v2864 = vsub.s32 %v2360, %v2863
    %v2865 = vrot.slane %v2158, %v2864
    %v2866 = vsel %vm2365, %v2865, %v2861
    %v2867 = vlaneseq
    %v2868 = vshrl.u32 %v2867, 7
    %v2869 = vsub.s32 %v2367, %v2868
    %v2870 = vrot.slane %v2160, %v2869
    %v2871 = vsel %vm2372, %v2870, %v2866
    %v2872 = vlaneseq
    %v2873 = vshrl.u32 %v2872, 7
    %v2874 = vsub.s32 %v2374, %v2873
    %v2875 = vrot.slane %v2162, %v2874
    %v2876 = vsel %vm2379, %v2875, %v2871
    %v2877 = vlaneseq
    %v2878 = vshrl.u32 %v2877, 7
    %v2879 = vsub.s32 %v2381, %v2878
    %v2880 = vrot.slane %v2164, %v2879
    %v2881 = vsel %vm2386, %v2880, %v2876
    %v2882 = vlaneseq
    %v2883 = vshrl.u32 %v2882, 7
    %v2884 = vsub.s32 %v2388, %v2883
    %v2885 = vrot.slane %v2166, %v2884
    %v2886 = vsel %vm2393, %v2885, %v2881
    %v2887 = vlaneseq
    %v2888 = vshrl.u32 %v2887, 7
    %v2889 = vsub.s32 %v2395, %v2888
    %v2890 = vrot.slane %v2168, %v2889
    %v2891 = vsel %vm2400, %v2890, %v2886
    %v2892 = vlaneseq
    %v2893 = vshrl.u32 %v2892, 7
    %v2894 = vsub.s32 %v2402, %v2893
    %v2895 = vrot.slane %v2170, %v2894
    %v2896 = vsel %vm2407, %v2895, %v2891
    %v2897 = vlaneseq
    %v2898 = vshrl.u32 %v2897, 7
    %v2899 = vsub.s32 %v2409, %v2898
    %v2900 = vrot.slane %v2172, %v2899
    %v2901 = vsel %vm2414, %v2900, %v2896
    %v2902 = vlaneseq
    %v2903 = vshrl.u32 %v2902, 7
    %v2904 = vsub.s32 %v2416, %v2903
    %v2905 = vrot.slane %v2174, %v2904
    %v2906 = vsel %vm2421, %v2905, %v2901
    %v2907 = vlaneseq
    %v2908 = vshrl.u32 %v2907, 7
    %v2909 = vsub.s32 %v2423, %v2908
    %v2910 = vrot.slane %v2176, %v2909
    %v2911 = vsel %vm2428, %v2910, %v2906
    %v2912 = vlaneseq
    %v2913 = vshrl.u32 %v2912, 7
    %v2914 = vsub.s32 %v2430, %v2913
    %v2915 = vrot.slane %v2178, %v2914
    %v2916 = vsel %vm2435, %v2915, %v2911
    %v2917 = vlaneseq
    %v2918 = vshrl.u32 %v2917, 7
    %v2919 = vsub.s32 %v2437, %v2918
    %v2920 = vrot.slane %v2180, %v2919
    %v2921 = vsel %vm2442, %v2920, %v2916
    %v2922 = vlaneseq
    %v2923 = vshrl.u32 %v2922, 7
    %v2924 = vsub.s32 %v2444, %v2923
    %v2925 = vrot.slane %v2182, %v2924
    %v2926 = vsel %vm2449, %v2925, %v2921
    %v2927 = vlaneseq
    %v2928 = vshrl.u32 %v2927, 7
    %v2929 = vsub.s32 %v2451, %v2928
    %v2930 = vrot.slane %v2184, %v2929
    %v2931 = vsel %vm2456, %v2930, %v2926
    %v2932 = vlaneseq
    %v2933 = vshrl.u32 %v2932, 7
    %v2934 = vsub.s32 %v2348, %v2933
    %v2935 = vrot.slane %v2186, %v2934
    %v2936 = vlaneseq
    %v2937 = vshrl.u32 %v2936, 7
    %v2938 = vsub.s32 %v2353, %v2937
    %v2939 = vrot.slane %v2188, %v2938
    %v2940 = vsel %vm2358, %v2939, %v2935
    %v2941 = vlaneseq
    %v2942 = vshrl.u32 %v2941, 7
    %v2943 = vsub.s32 %v2360, %v2942
    %v2944 = vrot.slane %v2190, %v2943
    %v2945 = vsel %vm2365, %v2944, %v2940
    %v2946 = vlaneseq
    %v2947 = vshrl.u32 %v2946, 7
    %v2948 = vsub.s32 %v2367, %v2947
    %v2949 = vrot.slane %v2192, %v2948
    %v2950 = vsel %vm2372, %v2949, %v2945
    %v2951 = vlaneseq
    %v2952 = vshrl.u32 %v2951, 7
    %v2953 = vsub.s32 %v2374, %v2952
    %v2954 = vrot.slane %v2194, %v2953
    %v2955 = vsel %vm2379, %v2954, %v2950
    %v2956 = vlaneseq
    %v2957 = vshrl.u32 %v2956, 7
    %v2958 = vsub.s32 %v2381, %v2957
    %v2959 = vrot.slane %v2196, %v2958
    %v2960 = vsel %vm2386, %v2959, %v2955
    %v2961 = vlaneseq
    %v2962 = vshrl.u32 %v2961, 7
    %v2963 = vsub.s32 %v2388, %v2962
    %v2964 = vrot.slane %v2198, %v2963
    %v2965 = vsel %vm2393, %v2964, %v2960
    %v2966 = vlaneseq
    %v2967 = vshrl.u32 %v2966, 7
    %v2968 = vsub.s32 %v2395, %v2967
    %v2969 = vrot.slane %v2200, %v2968
    %v2970 = vsel %vm2400, %v2969, %v2965
    %v2971 = vlaneseq
    %v2972 = vshrl.u32 %v2971, 7
    %v2973 = vsub.s32 %v2402, %v2972
    %v2974 = vrot.slane %v2202, %v2973
    %v2975 = vsel %vm2407, %v2974, %v2970
    %v2976 = vlaneseq
    %v2977 = vshrl.u32 %v2976, 7
    %v2978 = vsub.s32 %v2409, %v2977
    %v2979 = vrot.slane %v2204, %v2978
    %v2980 = vsel %vm2414, %v2979, %v2975
    %v2981 = vlaneseq
    %v2982 = vshrl.u32 %v2981, 7
    %v2983 = vsub.s32 %v2416, %v2982
    %v2984 = vrot.slane %v2206, %v2983
    %v2985 = vsel %vm2421, %v2984, %v2980
    %v2986 = vlaneseq
    %v2987 = vshrl.u32 %v2986, 7
    %v2988 = vsub.s32 %v2423, %v2987
    %v2989 = vrot.slane %v2208, %v2988
    %v2990 = vsel %vm2428, %v2989, %v2985
    %v2991 = vlaneseq
    %v2992 = vshrl.u32 %v2991, 7
    %v2993 = vsub.s32 %v2430, %v2992
    %v2994 = vrot.slane %v2210, %v2993
    %v2995 = vsel %vm2435, %v2994, %v2990
    %v2996 = vlaneseq
    %v2997 = vshrl.u32 %v2996, 7
    %v2998 = vsub.s32 %v2437, %v2997
    %v2999 = vrot.slane %v2212, %v2998
    %v3000 = vsel %vm2442, %v2999, %v2995
    %v3001 = vlaneseq
    %v3002 = vshrl.u32 %v3001, 7
    %v3003 = vsub.s32 %v2444, %v3002
    %v3004 = vrot.slane %v2214, %v3003
    %v3005 = vsel %vm2449, %v3004, %v3000
    %v3006 = vlaneseq
    %v3007 = vshrl.u32 %v3006, 7
    %v3008 = vsub.s32 %v2451, %v3007
    %v3009 = vrot.slane %v2216, %v3008
    %v3010 = vsel %vm2456, %v3009, %v3005
    %vm3011 = vcmask 1041409
    %v3012 = vsel %vm3011, %v2536, %v2457
    %vm3013 = vcmask 1042434
    %v3014 = vsel %vm3013, %v2615, %v3012
    %vm3015 = vcmask 1043459
    %v3016 = vsel %vm3015, %v2694, %v3014
    %vm3017 = vcmask 1044484
    %v3018 = vsel %vm3017, %v2773, %v3016
    %vm3019 = vcmask 1045509
    %v3020 = vsel %vm3019, %v2852, %v3018
    %vm3021 = vcmask 1046534
    %v3022 = vsel %vm3021, %v2931, %v3020
    %vm3023 = vcmask 1047559
    %v3024 = vsel %vm3023, %v3010, %v3022
    %v3026 = vsel %vm2218, -99999.9, %v3024
    %3027 = vmax.xlane.f32.xlu0 %v3026
    %v3028 = vpop.xlane.xlu0 %3027
    %v3029 = vsub.f32 %v3026, %v3028
    %v3030 = vmul.f32 %v3029, 1.442695
    %v3031 = vpow.pop %v3030
    %3032 = vadd.xlane.f32.xlu0 %v3031
    %v3033 = vpop.xlane.xlu0 %3032
    %v3034 = vlog2.pop %v3033
    %v3035 = vmul.f32 %v3034, 0.6931472
    %v3036 = vsub.f32 %v3029, %v3035
    %v3037 = vrcp.pop %v3033
    %v3038 = vmul.f32 %v3031, %v3037
    %v3039 = vsub.f32 0.0, %v3038
    %v3040 = vmul.f32 %v3039, %v3036
    %3041 = vadd.xlane.f32.xlu0 %v3040
    %v3042 = vpop.xlane.xlu0 %3041
    %v3043 = vld [vmem:[%s9] sm:$0xff]
    %v3044 = vadd.f32 %v3026, %v3043
    %3045 = vmax.xlane.f32.xlu0 %v3044
    %v3046 = vpop.xlane.xlu0 %3045
    %vm3047 = vcmp.ge.f32.partialorder %v3044, %v3046
    %v3048 = vcvt.s32.f32 %v2348
    %v3049 = vsel %vm3047, %v3048, 128.0
    %3050 = vmin.xlane.f32.xlu0 %v3049
    %v3051 = vpop.xlane.xlu0 %3050
    %v3052 = vcvt.f32.s32.to.zero.pseudo %v3051
    %vm3053 = vcmp.eq.s32.totalorder %v2348, %v3052
    %v3054 = vsel %vm3053, 1, 0
    %v3055 = vcvt.s32.f32 %v3054
    %v3056 = vmul.f32 %v3055, %v3036
    %3057 = vadd.xlane.f32.xlu0 %v3056
    %v3058 = vpop.xlane.xlu0 %3057
    %v3059 = vsub.f32 0.0, %v3058
    %v3060 = vlaneseq
    %v3061 = vshrl.u32 %v3060, 7
    %v3062 = vsub.s32 0, %v3061
    %v3063 = vrot.slane %v3055, %v3062
    %3065 = vbcast.lane.b32.xlu0 %v3063, 256
    %v3066 = vpop.permute.xlu0 %3065
    %s3068 = sor.u32 256, 8
    %3069 = vbcast.lane.b32.xlu0 %v3063, %s3068
    %v3070 = vpop.permute.xlu0 %3069
    %s3072 = sor.u32 256, 16
    %3073 = vbcast.lane.b32.xlu0 %v3063, %s3072
    %v3074 = vpop.permute.xlu0 %3073
    %s3076 = sor.u32 256, 24
    %3077 = vbcast.lane.b32.xlu0 %v3063, %s3076
    %v3078 = vpop.permute.xlu0 %3077
    %s3080 = sor.u32 256, 32
    %3081 = vbcast.lane.b32.xlu0 %v3063, %s3080
    %v3082 = vpop.permute.xlu0 %3081
    %s3084 = sor.u32 256, 40
    %3085 = vbcast.lane.b32.xlu0 %v3063, %s3084
    %v3086 = vpop.permute.xlu0 %3085
    %s3088 = sor.u32 256, 48
    %3089 = vbcast.lane.b32.xlu0 %v3063, %s3088
    %v3090 = vpop.permute.xlu0 %3089
    %s3092 = sor.u32 256, 56
    %3093 = vbcast.lane.b32.xlu0 %v3063, %s3092
    %v3094 = vpop.permute.xlu0 %3093
    %s3096 = sor.u32 256, 64
    %3097 = vbcast.lane.b32.xlu0 %v3063, %s3096
    %v3098 = vpop.permute.xlu0 %3097
    %s3100 = sor.u32 256, 72
    %3101 = vbcast.lane.b32.xlu0 %v3063, %s3100
    %v3102 = vpop.permute.xlu0 %3101
    %s3104 = sor.u32 256, 80
    %3105 = vbcast.lane.b32.xlu0 %v3063, %s3104
    %v3106 = vpop.permute.xlu0 %3105
    %s3108 = sor.u32 256, 88
    %3109 = vbcast.lane.b32.xlu0 %v3063, %s3108
    %v3110 = vpop.permute.xlu0 %3109
    %s3112 = sor.u32 256, 96
    %3113 = vbcast.lane.b32.xlu0 %v3063, %s3112
    %v3114 = vpop.permute.xlu0 %3113
    %s3116 = sor.u32 256, 104
    %3117 = vbcast.lane.b32.xlu0 %v3063, %s3116
    %v3118 = vpop.permute.xlu0 %3117
    %s3120 = sor.u32 256, 112
    %3121 = vbcast.lane.b32.xlu0 %v3063, %s3120
    %v3122 = vpop.permute.xlu0 %3121
    %s3124 = sor.u32 256, 120
    %3125 = vbcast.lane.b32.xlu0 %v3063, %s3124
    %v3126 = vpop.permute.xlu0 %3125
    %v3127 = vlaneseq
    %v3128 = vshrl.u32 %v3127, 7
    %v3129 = vsub.s32 1, %v3128
    %v3130 = vrot.slane %v3055, %v3129
    %3132 = vbcast.lane.b32.xlu0 %v3130, 256
    %v3133 = vpop.permute.xlu0 %3132
    %s3135 = sor.u32 256, 8
    %3136 = vbcast.lane.b32.xlu0 %v3130, %s3135
    %v3137 = vpop.permute.xlu0 %3136
    %s3139 = sor.u32 256, 16
    %3140 = vbcast.lane.b32.xlu0 %v3130, %s3139
    %v3141 = vpop.permute.xlu0 %3140
    %s3143 = sor.u32 256, 24
    %3144 = vbcast.lane.b32.xlu0 %v3130, %s3143
    %v3145 = vpop.permute.xlu0 %3144
    %s3147 = sor.u32 256, 32
    %3148 = vbcast.lane.b32.xlu0 %v3130, %s3147
    %v3149 = vpop.permute.xlu0 %3148
    %s3151 = sor.u32 256, 40
    %3152 = vbcast.lane.b32.xlu0 %v3130, %s3151
    %v3153 = vpop.permute.xlu0 %3152
    %s3155 = sor.u32 256, 48
    %3156 = vbcast.lane.b32.xlu0 %v3130, %s3155
    %v3157 = vpop.permute.xlu0 %3156
    %s3159 = sor.u32 256, 56
    %3160 = vbcast.lane.b32.xlu0 %v3130, %s3159
    %v3161 = vpop.permute.xlu0 %3160
    %s3163 = sor.u32 256, 64
    %3164 = vbcast.lane.b32.xlu0 %v3130, %s3163
    %v3165 = vpop.permute.xlu0 %3164
    %s3167 = sor.u32 256, 72
    %3168 = vbcast.lane.b32.xlu0 %v3130, %s3167
    %v3169 = vpop.permute.xlu0 %3168
    %s3171 = sor.u32 256, 80
    %3172 = vbcast.lane.b32.xlu0 %v3130, %s3171
    %v3173 = vpop.permute.xlu0 %3172
    %s3175 = sor.u32 256, 88
    %3176 = vbcast.lane.b32.xlu0 %v3130, %s3175
    %v3177 = vpop.permute.xlu0 %3176
    %s3179 = sor.u32 256, 96
    %3180 = vbcast.lane.b32.xlu0 %v3130, %s3179
    %v3181 = vpop.permute.xlu0 %3180
    %s3183 = sor.u32 256, 104
    %3184 = vbcast.lane.b32.xlu0 %v3130, %s3183
    %v3185 = vpop.permute.xlu0 %3184
    %s3187 = sor.u32 256, 112
    %3188 = vbcast.lane.b32.xlu0 %v3130, %s3187
    %v3189 = vpop.permute.xlu0 %3188
    %s3191 = sor.u32 256, 120
    %3192 = vbcast.lane.b32.xlu0 %v3130, %s3191
    %v3193 = vpop.permute.xlu0 %3192
    %v3194 = vlaneseq
    %v3195 = vshrl.u32 %v3194, 7
    %v3196 = vsub.s32 2, %v3195
    %v3197 = vrot.slane %v3055, %v3196
    %3199 = vbcast.lane.b32.xlu0 %v3197, 256
    %v3200 = vpop.permute.xlu0 %3199
    %s3202 = sor.u32 256, 8
    %3203 = vbcast.lane.b32.xlu0 %v3197, %s3202
    %v3204 = vpop.permute.xlu0 %3203
    %s3206 = sor.u32 256, 16
    %3207 = vbcast.lane.b32.xlu0 %v3197, %s3206
    %v3208 = vpop.permute.xlu0 %3207
    %s3210 = sor.u32 256, 24
    %3211 = vbcast.lane.b32.xlu0 %v3197, %s3210
    %v3212 = vpop.permute.xlu0 %3211
    %s3214 = sor.u32 256, 32
    %3215 = vbcast.lane.b32.xlu0 %v3197, %s3214
    %v3216 = vpop.permute.xlu0 %3215
    %s3218 = sor.u32 256, 40
    %3219 = vbcast.lane.b32.xlu0 %v3197, %s3218
    %v3220 = vpop.permute.xlu0 %3219
    %s3222 = sor.u32 256, 48
    %3223 = vbcast.lane.b32.xlu0 %v3197, %s3222
    %v3224 = vpop.permute.xlu0 %3223
    %s3226 = sor.u32 256, 56
    %3227 = vbcast.lane.b32.xlu0 %v3197, %s3226
    %v3228 = vpop.permute.xlu0 %3227
    %s3230 = sor.u32 256, 64
    %3231 = vbcast.lane.b32.xlu0 %v3197, %s3230
    %v3232 = vpop.permute.xlu0 %3231
    %s3234 = sor.u32 256, 72
    %3235 = vbcast.lane.b32.xlu0 %v3197, %s3234
    %v3236 = vpop.permute.xlu0 %3235
    %s3238 = sor.u32 256, 80
    %3239 = vbcast.lane.b32.xlu0 %v3197, %s3238
    %v3240 = vpop.permute.xlu0 %3239
    %s3242 = sor.u32 256, 88
    %3243 = vbcast.lane.b32.xlu0 %v3197, %s3242
    %v3244 = vpop.permute.xlu0 %3243
    %s3246 = sor.u32 256, 96
    %3247 = vbcast.lane.b32.xlu0 %v3197, %s3246
    %v3248 = vpop.permute.xlu0 %3247
    %s3250 = sor.u32 256, 104
    %3251 = vbcast.lane.b32.xlu0 %v3197, %s3250
    %v3252 = vpop.permute.xlu0 %3251
    %s3254 = sor.u32 256, 112
    %3255 = vbcast.lane.b32.xlu0 %v3197, %s3254
    %v3256 = vpop.permute.xlu0 %3255
    %s3258 = sor.u32 256, 120
    %3259 = vbcast.lane.b32.xlu0 %v3197, %s3258
    %v3260 = vpop.permute.xlu0 %3259
    %v3261 = vlaneseq
    %v3262 = vshrl.u32 %v3261, 7
    %v3263 = vsub.s32 3, %v3262
    %v3264 = vrot.slane %v3055, %v3263
    %3266 = vbcast.lane.b32.xlu0 %v3264, 256
    %v3267 = vpop.permute.xlu0 %3266
    %s3269 = sor.u32 256, 8
    %3270 = vbcast.lane.b32.xlu0 %v3264, %s3269
    %v3271 = vpop.permute.xlu0 %3270
    %s3273 = sor.u32 256, 16
    %3274 = vbcast.lane.b32.xlu0 %v3264, %s3273
    %v3275 = vpop.permute.xlu0 %3274
    %s3277 = sor.u32 256, 24
    %3278 = vbcast.lane.b32.xlu0 %v3264, %s3277
    %v3279 = vpop.permute.xlu0 %3278
    %s3281 = sor.u32 256, 32
    %3282 = vbcast.lane.b32.xlu0 %v3264, %s3281
    %v3283 = vpop.permute.xlu0 %3282
    %s3285 = sor.u32 256, 40
    %3286 = vbcast.lane.b32.xlu0 %v3264, %s3285
    %v3287 = vpop.permute.xlu0 %3286
    %s3289 = sor.u32 256, 48
    %3290 = vbcast.lane.b32.xlu0 %v3264, %s3289
    %v3291 = vpop.permute.xlu0 %3290
    %s3293 = sor.u32 256, 56
    %3294 = vbcast.lane.b32.xlu0 %v3264, %s3293
    %v3295 = vpop.permute.xlu0 %3294
    %s3297 = sor.u32 256, 64
    %3298 = vbcast.lane.b32.xlu0 %v3264, %s3297
    %v3299 = vpop.permute.xlu0 %3298
    %s3301 = sor.u32 256, 72
    %3302 = vbcast.lane.b32.xlu0 %v3264, %s3301
    %v3303 = vpop.permute.xlu0 %3302
    %s3305 = sor.u32 256, 80
    %3306 = vbcast.lane.b32.xlu0 %v3264, %s3305
    %v3307 = vpop.permute.xlu0 %3306
    %s3309 = sor.u32 256, 88
    %3310 = vbcast.lane.b32.xlu0 %v3264, %s3309
    %v3311 = vpop.permute.xlu0 %3310
    %s3313 = sor.u32 256, 96
    %3314 = vbcast.lane.b32.xlu0 %v3264, %s3313
    %v3315 = vpop.permute.xlu0 %3314
    %s3317 = sor.u32 256, 104
    %3318 = vbcast.lane.b32.xlu0 %v3264, %s3317
    %v3319 = vpop.permute.xlu0 %3318
    %s3321 = sor.u32 256, 112
    %3322 = vbcast.lane.b32.xlu0 %v3264, %s3321
    %v3323 = vpop.permute.xlu0 %3322
    %s3325 = sor.u32 256, 120
    %3326 = vbcast.lane.b32.xlu0 %v3264, %s3325
    %v3327 = vpop.permute.xlu0 %3326
    %v3328 = vlaneseq
    %v3329 = vshrl.u32 %v3328, 7
    %v3330 = vsub.s32 4, %v3329
    %v3331 = vrot.slane %v3055, %v3330
    %3333 = vbcast.lane.b32.xlu0 %v3331, 256
    %v3334 = vpop.permute.xlu0 %3333
    %s3336 = sor.u32 256, 8
    %3337 = vbcast.lane.b32.xlu0 %v3331, %s3336
    %v3338 = vpop.permute.xlu0 %3337
    %s3340 = sor.u32 256, 16
    %3341 = vbcast.lane.b32.xlu0 %v3331, %s3340
    %v3342 = vpop.permute.xlu0 %3341
    %s3344 = sor.u32 256, 24
    %3345 = vbcast.lane.b32.xlu0 %v3331, %s3344
    %v3346 = vpop.permute.xlu0 %3345
    %s3348 = sor.u32 256, 32
    %3349 = vbcast.lane.b32.xlu0 %v3331, %s3348
    %v3350 = vpop.permute.xlu0 %3349
    %s3352 = sor.u32 256, 40
    %3353 = vbcast.lane.b32.xlu0 %v3331, %s3352
    %v3354 = vpop.permute.xlu0 %3353
    %s3356 = sor.u32 256, 48
    %3357 = vbcast.lane.b32.xlu0 %v3331, %s3356
    %v3358 = vpop.permute.xlu0 %3357
    %s3360 = sor.u32 256, 56
    %3361 = vbcast.lane.b32.xlu0 %v3331, %s3360
    %v3362 = vpop.permute.xlu0 %3361
    %s3364 = sor.u32 256, 64
    %3365 = vbcast.lane.b32.xlu0 %v3331, %s3364
    %v3366 = vpop.permute.xlu0 %3365
    %s3368 = sor.u32 256, 72
    %3369 = vbcast.lane.b32.xlu0 %v3331, %s3368
    %v3370 = vpop.permute.xlu0 %3369
    %s3372 = sor.u32 256, 80
    %3373 = vbcast.lane.b32.xlu0 %v3331, %s3372
    %v3374 = vpop.permute.xlu0 %3373
    %s3376 = sor.u32 256, 88
    %3377 = vbcast.lane.b32.xlu0 %v3331, %s3376
    %v3378 = vpop.permute.xlu0 %3377
    %s3380 = sor.u32 256, 96
    %3381 = vbcast.lane.b32.xlu0 %v3331, %s3380
    %v3382 = vpop.permute.xlu0 %3381
    %s3384 = sor.u32 256, 104
    %3385 = vbcast.lane.b32.xlu0 %v3331, %s3384
    %v3386 = vpop.permute.xlu0 %3385
    %s3388 = sor.u32 256, 112
    %3389 = vbcast.lane.b32.xlu0 %v3331, %s3388
    %v3390 = vpop.permute.xlu0 %3389
    %s3392 = sor.u32 256, 120
    %3393 = vbcast.lane.b32.xlu0 %v3331, %s3392
    %v3394 = vpop.permute.xlu0 %3393
    %v3395 = vlaneseq
    %v3396 = vshrl.u32 %v3395, 7
    %v3397 = vsub.s32 5, %v3396
    %v3398 = vrot.slane %v3055, %v3397
    %3400 = vbcast.lane.b32.xlu0 %v3398, 256
    %v3401 = vpop.permute.xlu0 %3400
    %s3403 = sor.u32 256, 8
    %3404 = vbcast.lane.b32.xlu0 %v3398, %s3403
    %v3405 = vpop.permute.xlu0 %3404
    %s3407 = sor.u32 256, 16
    %3408 = vbcast.lane.b32.xlu0 %v3398, %s3407
    %v3409 = vpop.permute.xlu0 %3408
    %s3411 = sor.u32 256, 24
    %3412 = vbcast.lane.b32.xlu0 %v3398, %s3411
    %v3413 = vpop.permute.xlu0 %3412
    %s3415 = sor.u32 256, 32
    %3416 = vbcast.lane.b32.xlu0 %v3398, %s3415
    %v3417 = vpop.permute.xlu0 %3416
    %s3419 = sor.u32 256, 40
    %3420 = vbcast.lane.b32.xlu0 %v3398, %s3419
    %v3421 = vpop.permute.xlu0 %3420
    %s3423 = sor.u32 256, 48
    %3424 = vbcast.lane.b32.xlu0 %v3398, %s3423
    %v3425 = vpop.permute.xlu0 %3424
    %s3427 = sor.u32 256, 56
    %3428 = vbcast.lane.b32.xlu0 %v3398, %s3427
    %v3429 = vpop.permute.xlu0 %3428
    %s3431 = sor.u32 256, 64
    %3432 = vbcast.lane.b32.xlu0 %v3398, %s3431
    %v3433 = vpop.permute.xlu0 %3432
    %s3435 = sor.u32 256, 72
    %3436 = vbcast.lane.b32.xlu0 %v3398, %s3435
    %v3437 = vpop.permute.xlu0 %3436
    %s3439 = sor.u32 256, 80
    %3440 = vbcast.lane.b32.xlu0 %v3398, %s3439
    %v3441 = vpop.permute.xlu0 %3440
    %s3443 = sor.u32 256, 88
    %3444 = vbcast.lane.b32.xlu0 %v3398, %s3443
    %v3445 = vpop.permute.xlu0 %3444
    %s3447 = sor.u32 256, 96
    %3448 = vbcast.lane.b32.xlu0 %v3398, %s3447
    %v3449 = vpop.permute.xlu0 %3448
    %s3451 = sor.u32 256, 104
    %3452 = vbcast.lane.b32.xlu0 %v3398, %s3451
    %v3453 = vpop.permute.xlu0 %3452
    %s3455 = sor.u32 256, 112
    %3456 = vbcast.lane.b32.xlu0 %v3398, %s3455
    %v3457 = vpop.permute.xlu0 %3456
    %s3459 = sor.u32 256, 120
    %3460 = vbcast.lane.b32.xlu0 %v3398, %s3459
    %v3461 = vpop.permute.xlu0 %3460
    %v3462 = vlaneseq
    %v3463 = vshrl.u32 %v3462, 7
    %v3464 = vsub.s32 6, %v3463
    %v3465 = vrot.slane %v3055, %v3464
    %3467 = vbcast.lane.b32.xlu0 %v3465, 256
    %v3468 = vpop.permute.xlu0 %3467
    %s3470 = sor.u32 256, 8
    %3471 = vbcast.lane.b32.xlu0 %v3465, %s3470
    %v3472 = vpop.permute.xlu0 %3471
    %s3474 = sor.u32 256, 16
    %3475 = vbcast.lane.b32.xlu0 %v3465, %s3474
    %v3476 = vpop.permute.xlu0 %3475
    %s3478 = sor.u32 256, 24
    %3479 = vbcast.lane.b32.xlu0 %v3465, %s3478
    %v3480 = vpop.permute.xlu0 %3479
    %s3482 = sor.u32 256, 32
    %3483 = vbcast.lane.b32.xlu0 %v3465, %s3482
    %v3484 = vpop.permute.xlu0 %3483
    %s3486 = sor.u32 256, 40
    %3487 = vbcast.lane.b32.xlu0 %v3465, %s3486
    %v3488 = vpop.permute.xlu0 %3487
    %s3490 = sor.u32 256, 48
    %3491 = vbcast.lane.b32.xlu0 %v3465, %s3490
    %v3492 = vpop.permute.xlu0 %3491
    %s3494 = sor.u32 256, 56
    %3495 = vbcast.lane.b32.xlu0 %v3465, %s3494
    %v3496 = vpop.permute.xlu0 %3495
    %s3498 = sor.u32 256, 64
    %3499 = vbcast.lane.b32.xlu0 %v3465, %s3498
    %v3500 = vpop.permute.xlu0 %3499
    %s3502 = sor.u32 256, 72
    %3503 = vbcast.lane.b32.xlu0 %v3465, %s3502
    %v3504 = vpop.permute.xlu0 %3503
    %s3506 = sor.u32 256, 80
    %3507 = vbcast.lane.b32.xlu0 %v3465, %s3506
    %v3508 = vpop.permute.xlu0 %3507
    %s3510 = sor.u32 256, 88
    %3511 = vbcast.lane.b32.xlu0 %v3465, %s3510
    %v3512 = vpop.permute.xlu0 %3511
    %s3514 = sor.u32 256, 96
    %3515 = vbcast.lane.b32.xlu0 %v3465, %s3514
    %v3516 = vpop.permute.xlu0 %3515
    %s3518 = sor.u32 256, 104
    %3519 = vbcast.lane.b32.xlu0 %v3465, %s3518
    %v3520 = vpop.permute.xlu0 %3519
    %s3522 = sor.u32 256, 112
    %3523 = vbcast.lane.b32.xlu0 %v3465, %s3522
    %v3524 = vpop.permute.xlu0 %3523
    %s3526 = sor.u32 256, 120
    %3527 = vbcast.lane.b32.xlu0 %v3465, %s3526
    %v3528 = vpop.permute.xlu0 %3527
    %v3529 = vlaneseq
    %v3530 = vshrl.u32 %v3529, 7
    %v3531 = vsub.s32 7, %v3530
    %v3532 = vrot.slane %v3055, %v3531
    %3534 = vbcast.lane.b32.xlu0 %v3532, 256
    %v3535 = vpop.permute.xlu0 %3534
    %s3537 = sor.u32 256, 8
    %3538 = vbcast.lane.b32.xlu0 %v3532, %s3537
    %v3539 = vpop.permute.xlu0 %3538
    %s3541 = sor.u32 256, 16
    %3542 = vbcast.lane.b32.xlu0 %v3532, %s3541
    %v3543 = vpop.permute.xlu0 %3542
    %s3545 = sor.u32 256, 24
    %3546 = vbcast.lane.b32.xlu0 %v3532, %s3545
    %v3547 = vpop.permute.xlu0 %3546
    %s3549 = sor.u32 256, 32
    %3550 = vbcast.lane.b32.xlu0 %v3532, %s3549
    %v3551 = vpop.permute.xlu0 %3550
    %s3553 = sor.u32 256, 40
    %3554 = vbcast.lane.b32.xlu0 %v3532, %s3553
    %v3555 = vpop.permute.xlu0 %3554
    %s3557 = sor.u32 256, 48
    %3558 = vbcast.lane.b32.xlu0 %v3532, %s3557
    %v3559 = vpop.permute.xlu0 %3558
    %s3561 = sor.u32 256, 56
    %3562 = vbcast.lane.b32.xlu0 %v3532, %s3561
    %v3563 = vpop.permute.xlu0 %3562
    %s3565 = sor.u32 256, 64
    %3566 = vbcast.lane.b32.xlu0 %v3532, %s3565
    %v3567 = vpop.permute.xlu0 %3566
    %s3569 = sor.u32 256, 72
    %3570 = vbcast.lane.b32.xlu0 %v3532, %s3569
    %v3571 = vpop.permute.xlu0 %3570
    %s3573 = sor.u32 256, 80
    %3574 = vbcast.lane.b32.xlu0 %v3532, %s3573
    %v3575 = vpop.permute.xlu0 %3574
    %s3577 = sor.u32 256, 88
    %3578 = vbcast.lane.b32.xlu0 %v3532, %s3577
    %v3579 = vpop.permute.xlu0 %3578
    %s3581 = sor.u32 256, 96
    %3582 = vbcast.lane.b32.xlu0 %v3532, %s3581
    %v3583 = vpop.permute.xlu0 %3582
    %s3585 = sor.u32 256, 104
    %3586 = vbcast.lane.b32.xlu0 %v3532, %s3585
    %v3587 = vpop.permute.xlu0 %3586
    %s3589 = sor.u32 256, 112
    %3590 = vbcast.lane.b32.xlu0 %v3532, %s3589
    %v3591 = vpop.permute.xlu0 %3590
    %s3593 = sor.u32 256, 120
    %3594 = vbcast.lane.b32.xlu0 %v3532, %s3593
    %v3595 = vpop.permute.xlu0 %3594
    %v3596 = vmul.f32 %v3066, %v1665
    %v3597 = vmul.f32 %v3070, %v1666
    %v3598 = vmul.f32 %v3074, %v1667
    %v3599 = vmul.f32 %v3078, %v1668
    %v3600 = vmul.f32 %v3082, %v1669
    %v3601 = vmul.f32 %v3086, %v1670
    %v3602 = vmul.f32 %v3090, %v1671
    %v3603 = vmul.f32 %v3094, %v1672
    %v3604 = vmul.f32 %v3098, %v1673
    %v3605 = vmul.f32 %v3102, %v1674
    %v3606 = vmul.f32 %v3106, %v1675
    %v3607 = vmul.f32 %v3110, %v1676
    %v3608 = vmul.f32 %v3114, %v1677
    %v3609 = vmul.f32 %v3118, %v1678
    %v3610 = vmul.f32 %v3122, %v1679
    %v3611 = vmul.f32 %v3126, %v1680
    %v3612 = vmul.f32 %v3133, %v1681
    %v3613 = vmul.f32 %v3137, %v1682
    %v3614 = vmul.f32 %v3141, %v1683
    %v3615 = vmul.f32 %v3145, %v1684
    %v3616 = vmul.f32 %v3149, %v1685
    %v3617 = vmul.f32 %v3153, %v1686
    %v3618 = vmul.f32 %v3157, %v1687
    %v3619 = vmul.f32 %v3161, %v1688
    %v3620 = vmul.f32 %v3165, %v1689
    %v3621 = vmul.f32 %v3169, %v1690
    %v3622 = vmul.f32 %v3173, %v1691
    %v3623 = vmul.f32 %v3177, %v1692
    %v3624 = vmul.f32 %v3181, %v1693
    %v3625 = vmul.f32 %v3185, %v1694
    %v3626 = vmul.f32 %v3189, %v1695
    %v3627 = vmul.f32 %v3193, %v1696
    %v3628 = vmul.f32 %v3200, %v1697
    %v3629 = vmul.f32 %v3204, %v1698
    %v3630 = vmul.f32 %v3208, %v1699
    %v3631 = vmul.f32 %v3212, %v1700
    %v3632 = vmul.f32 %v3216, %v1701
    %v3633 = vmul.f32 %v3220, %v1702
    %v3634 = vmul.f32 %v3224, %v1703
    %v3635 = vmul.f32 %v3228, %v1704
    %v3636 = vmul.f32 %v3232, %v1705
    %v3637 = vmul.f32 %v3236, %v1706
    %v3638 = vmul.f32 %v3240, %v1707
    %v3639 = vmul.f32 %v3244, %v1708
    %v3640 = vmul.f32 %v3248, %v1709
    %v3641 = vmul.f32 %v3252, %v1710
    %v3642 = vmul.f32 %v3256, %v1711
    %v3643 = vmul.f32 %v3260, %v1712
    %v3644 = vmul.f32 %v3267, %v1713
    %v3645 = vmul.f32 %v3271, %v1714
    %v3646 = vmul.f32 %v3275, %v1715
    %v3647 = vmul.f32 %v3279, %v1716
    %v3648 = vmul.f32 %v3283, %v1717
    %v3649 = vmul.f32 %v3287, %v1718
    %v3650 = vmul.f32 %v3291, %v1719
    %v3651 = vmul.f32 %v3295, %v1720
    %v3652 = vmul.f32 %v3299, %v1721
    %v3653 = vmul.f32 %v3303, %v1722
    %v3654 = vmul.f32 %v3307, %v1723
    %v3655 = vmul.f32 %v3311, %v1724
    %v3656 = vmul.f32 %v3315, %v1725
    %v3657 = vmul.f32 %v3319, %v1726
    %v3658 = vmul.f32 %v3323, %v1727
    %v3659 = vmul.f32 %v3327, %v1728
    %v3660 = vmul.f32 %v3334, %v1729
    %v3661 = vmul.f32 %v3338, %v1730
    %v3662 = vmul.f32 %v3342, %v1731
    %v3663 = vmul.f32 %v3346, %v1732
    %v3664 = vmul.f32 %v3350, %v1733
    %v3665 = vmul.f32 %v3354, %v1734
    %v3666 = vmul.f32 %v3358, %v1735
    %v3667 = vmul.f32 %v3362, %v1736
    %v3668 = vmul.f32 %v3366, %v1737
    %v3669 = vmul.f32 %v3370, %v1738
    %v3670 = vmul.f32 %v3374, %v1739
    %v3671 = vmul.f32 %v3378, %v1740
    %v3672 = vmul.f32 %v3382, %v1741
    %v3673 = vmul.f32 %v3386, %v1742
    %v3674 = vmul.f32 %v3390, %v1743
    %v3675 = vmul.f32 %v3394, %v1744
    %v3676 = vmul.f32 %v3401, %v1745
    %v3677 = vmul.f32 %v3405, %v1746
    %v3678 = vmul.f32 %v3409, %v1747
    %v3679 = vmul.f32 %v3413, %v1748
    %v3680 = vmul.f32 %v3417, %v1749
    %v3681 = vmul.f32 %v3421, %v1750
    %v3682 = vmul.f32 %v3425, %v1751
    %v3683 = vmul.f32 %v3429, %v1752
    %v3684 = vmul.f32 %v3433, %v1753
    %v3685 = vmul.f32 %v3437, %v1754
    %v3686 = vmul.f32 %v3441, %v1755
    %v3687 = vmul.f32 %v3445, %v1756
    %v3688 = vmul.f32 %v3449, %v1757
    %v3689 = vmul.f32 %v3453, %v1758
    %v3690 = vmul.f32 %v3457, %v1759
    %v3691 = vmul.f32 %v3461, %v1760
    %v3692 = vmul.f32 %v3468, %v1761
    %v3693 = vmul.f32 %v3472, %v1762
    %v3694 = vmul.f32 %v3476, %v1763
    %v3695 = vmul.f32 %v3480, %v1764
    %v3696 = vmul.f32 %v3484, %v1765
    %v3697 = vmul.f32 %v3488, %v1766
    %v3698 = vmul.f32 %v3492, %v1767
    %v3699 = vmul.f32 %v3496, %v1768
    %v3700 = vmul.f32 %v3500, %v1769
    %v3701 = vmul.f32 %v3504, %v1770
    %v3702 = vmul.f32 %v3508, %v1771
    %v3703 = vmul.f32 %v3512, %v1772
    %v3704 = vmul.f32 %v3516, %v1773
    %v3705 = vmul.f32 %v3520, %v1774
    %v3706 = vmul.f32 %v3524, %v1775
    %v3707 = vmul.f32 %v3528, %v1776
    %v3708 = vmul.f32 %v3535, %v1777
    %v3709 = vmul.f32 %v3539, %v1778
    %v3710 = vmul.f32 %v3543, %v1779
    %v3711 = vmul.f32 %v3547, %v1780
    %v3712 = vmul.f32 %v3551, %v1781
    %v3713 = vmul.f32 %v3555, %v1782
    %v3714 = vmul.f32 %v3559, %v1783
    %v3715 = vmul.f32 %v3563, %v1784
    %v3716 = vmul.f32 %v3567, %v1785
    %v3717 = vmul.f32 %v3571, %v1786
    %v3718 = vmul.f32 %v3575, %v1787
    %v3719 = vmul.f32 %v3579, %v1788
    %v3720 = vmul.f32 %v3583, %v1789
    %v3721 = vmul.f32 %v3587, %v1790
    %v3722 = vmul.f32 %v3591, %v1791
    %v3723 = vmul.f32 %v3595, %v1792
    %v3724 = vadd.f32 %v3596, %v3597
    %v3725 = vadd.f32 %v3724, %v3598
    %v3726 = vadd.f32 %v3725, %v3599
    %v3727 = vadd.f32 %v3726, %v3600
    %v3728 = vadd.f32 %v3727, %v3601
    %v3729 = vadd.f32 %v3728, %v3602
    %v3730 = vadd.f32 %v3729, %v3603
    %v3731 = vadd.f32 %v3730, %v3604
    %v3732 = vadd.f32 %v3731, %v3605
    %v3733 = vadd.f32 %v3732, %v3606
    %v3734 = vadd.f32 %v3733, %v3607
    %v3735 = vadd.f32 %v3734, %v3608
    %v3736 = vadd.f32 %v3735, %v3609
    %v3737 = vadd.f32 %v3736, %v3610
    %v3738 = vadd.f32 %v3737, %v3611
    %v3739 = vrot.slane %v3738, 4
    %v3740 = vadd.f32 %v3738, %v3739
    %v3741 = vrot.slane %v3740, 2
    %v3742 = vadd.f32 %v3740, %v3741
    %v3743 = vrot.slane %v3742, 1
    %v3744 = vadd.f32 %v3742, %v3743
    %v3745 = vadd.f32 %v3612, %v3613
    %v3746 = vadd.f32 %v3745, %v3614
    %v3747 = vadd.f32 %v3746, %v3615
    %v3748 = vadd.f32 %v3747, %v3616
    %v3749 = vadd.f32 %v3748, %v3617
    %v3750 = vadd.f32 %v3749, %v3618
    %v3751 = vadd.f32 %v3750, %v3619
    %v3752 = vadd.f32 %v3751, %v3620
    %v3753 = vadd.f32 %v3752, %v3621
    %v3754 = vadd.f32 %v3753, %v3622
    %v3755 = vadd.f32 %v3754, %v3623
    %v3756 = vadd.f32 %v3755, %v3624
    %v3757 = vadd.f32 %v3756, %v3625
    %v3758 = vadd.f32 %v3757, %v3626
    %v3759 = vadd.f32 %v3758, %v3627
    %v3760 = vrot.slane %v3759, 4
    %v3761 = vadd.f32 %v3759, %v3760
    %v3762 = vrot.slane %v3761, 2
    %v3763 = vadd.f32 %v3761, %v3762
    %v3764 = vrot.slane %v3763, 1
    %v3765 = vadd.f32 %v3763, %v3764
    %v3766 = vadd.f32 %v3628, %v3629
    %v3767 = vadd.f32 %v3766, %v3630
    %v3768 = vadd.f32 %v3767, %v3631
    %v3769 = vadd.f32 %v3768, %v3632
    %v3770 = vadd.f32 %v3769, %v3633
    %v3771 = vadd.f32 %v3770, %v3634
    %v3772 = vadd.f32 %v3771, %v3635
    %v3773 = vadd.f32 %v3772, %v3636
    %v3774 = vadd.f32 %v3773, %v3637
    %v3775 = vadd.f32 %v3774, %v3638
    %v3776 = vadd.f32 %v3775, %v3639
    %v3777 = vadd.f32 %v3776, %v3640
    %v3778 = vadd.f32 %v3777, %v3641
    %v3779 = vadd.f32 %v3778, %v3642
    %v3780 = vadd.f32 %v3779, %v3643
    %v3781 = vrot.slane %v3780, 4
    %v3782 = vadd.f32 %v3780, %v3781
    %v3783 = vrot.slane %v3782, 2
    %v3784 = vadd.f32 %v3782, %v3783
    %v3785 = vrot.slane %v3784, 1
    %v3786 = vadd.f32 %v3784, %v3785
    %v3787 = vadd.f32 %v3644, %v3645
    %v3788 = vadd.f32 %v3787, %v3646
    %v3789 = vadd.f32 %v3788, %v3647
    %v3790 = vadd.f32 %v3789, %v3648
    %v3791 = vadd.f32 %v3790, %v3649
    %v3792 = vadd.f32 %v3791, %v3650
    %v3793 = vadd.f32 %v3792, %v3651
    %v3794 = vadd.f32 %v3793, %v3652
    %v3795 = vadd.f32 %v3794, %v3653
    %v3796 = vadd.f32 %v3795, %v3654
    %v3797 = vadd.f32 %v3796, %v3655
    %v3798 = vadd.f32 %v3797, %v3656
    %v3799 = vadd.f32 %v3798, %v3657
    %v3800 = vadd.f32 %v3799, %v3658
    %v3801 = vadd.f32 %v3800, %v3659
    %v3802 = vrot.slane %v3801, 4
    %v3803 = vadd.f32 %v3801, %v3802
    %v3804 = vrot.slane %v3803, 2
    %v3805 = vadd.f32 %v3803, %v3804
    %v3806 = vrot.slane %v3805, 1
    %v3807 = vadd.f32 %v3805, %v3806
    %v3808 = vadd.f32 %v3660, %v3661
    %v3809 = vadd.f32 %v3808, %v3662
    %v3810 = vadd.f32 %v3809, %v3663
    %v3811 = vadd.f32 %v3810, %v3664
    %v3812 = vadd.f32 %v3811, %v3665
    %v3813 = vadd.f32 %v3812, %v3666
    %v3814 = vadd.f32 %v3813, %v3667
    %v3815 = vadd.f32 %v3814, %v3668
    %v3816 = vadd.f32 %v3815, %v3669
    %v3817 = vadd.f32 %v3816, %v3670
    %v3818 = vadd.f32 %v3817, %v3671
    %v3819 = vadd.f32 %v3818, %v3672
    %v3820 = vadd.f32 %v3819, %v3673
    %v3821 = vadd.f32 %v3820, %v3674
    %v3822 = vadd.f32 %v3821, %v3675
    %v3823 = vrot.slane %v3822, 4
    %v3824 = vadd.f32 %v3822, %v3823
    %v3825 = vrot.slane %v3824, 2
    %v3826 = vadd.f32 %v3824, %v3825
    %v3827 = vrot.slane %v3826, 1
    %v3828 = vadd.f32 %v3826, %v3827
    %v3829 = vadd.f32 %v3676, %v3677
    %v3830 = vadd.f32 %v3829, %v3678
    %v3831 = vadd.f32 %v3830, %v3679
    %v3832 = vadd.f32 %v3831, %v3680
    %v3833 = vadd.f32 %v3832, %v3681
    %v3834 = vadd.f32 %v3833, %v3682
    %v3835 = vadd.f32 %v3834, %v3683
    %v3836 = vadd.f32 %v3835, %v3684
    %v3837 = vadd.f32 %v3836, %v3685
    %v3838 = vadd.f32 %v3837, %v3686
    %v3839 = vadd.f32 %v3838, %v3687
    %v3840 = vadd.f32 %v3839, %v3688
    %v3841 = vadd.f32 %v3840, %v3689
    %v3842 = vadd.f32 %v3841, %v3690
    %v3843 = vadd.f32 %v3842, %v3691
    %v3844 = vrot.slane %v3843, 4
    %v3845 = vadd.f32 %v3843, %v3844
    %v3846 = vrot.slane %v3845, 2
    %v3847 = vadd.f32 %v3845, %v3846
    %v3848 = vrot.slane %v3847, 1
    %v3849 = vadd.f32 %v3847, %v3848
    %v3850 = vadd.f32 %v3692, %v3693
    %v3851 = vadd.f32 %v3850, %v3694
    %v3852 = vadd.f32 %v3851, %v3695
    %v3853 = vadd.f32 %v3852, %v3696
    %v3854 = vadd.f32 %v3853, %v3697
    %v3855 = vadd.f32 %v3854, %v3698
    %v3856 = vadd.f32 %v3855, %v3699
    %v3857 = vadd.f32 %v3856, %v3700
    %v3858 = vadd.f32 %v3857, %v3701
    %v3859 = vadd.f32 %v3858, %v3702
    %v3860 = vadd.f32 %v3859, %v3703
    %v3861 = vadd.f32 %v3860, %v3704
    %v3862 = vadd.f32 %v3861, %v3705
    %v3863 = vadd.f32 %v3862, %v3706
    %v3864 = vadd.f32 %v3863, %v3707
    %v3865 = vrot.slane %v3864, 4
    %v3866 = vadd.f32 %v3864, %v3865
    %v3867 = vrot.slane %v3866, 2
    %v3868 = vadd.f32 %v3866, %v3867
    %v3869 = vrot.slane %v3868, 1
    %v3870 = vadd.f32 %v3868, %v3869
    %v3871 = vadd.f32 %v3708, %v3709
    %v3872 = vadd.f32 %v3871, %v3710
    %v3873 = vadd.f32 %v3872, %v3711
    %v3874 = vadd.f32 %v3873, %v3712
    %v3875 = vadd.f32 %v3874, %v3713
    %v3876 = vadd.f32 %v3875, %v3714
    %v3877 = vadd.f32 %v3876, %v3715
    %v3878 = vadd.f32 %v3877, %v3716
    %v3879 = vadd.f32 %v3878, %v3717
    %v3880 = vadd.f32 %v3879, %v3718
    %v3881 = vadd.f32 %v3880, %v3719
    %v3882 = vadd.f32 %v3881, %v3720
    %v3883 = vadd.f32 %v3882, %v3721
    %v3884 = vadd.f32 %v3883, %v3722
    %v3885 = vadd.f32 %v3884, %v3723
    %v3886 = vrot.slane %v3885, 4
    %v3887 = vadd.f32 %v3885, %v3886
    %v3888 = vrot.slane %v3887, 2
    %v3889 = vadd.f32 %v3887, %v3888
    %v3890 = vrot.slane %v3889, 1
    %v3891 = vadd.f32 %v3889, %v3890
    %v3900 = vsel %vm3011, %v3765, %v3744
    %v3901 = vsel %vm3013, %v3786, %v3900
    %v3902 = vsel %vm3015, %v3807, %v3901
    %v3903 = vsel %vm3017, %v3828, %v3902
    %v3904 = vsel %vm3019, %v3849, %v3903
    %v3905 = vsel %vm3021, %v3870, %v3904
    %v3906 = vsel %vm3023, %v3891, %v3905
    %3908 = vst [vmem:[#allocation4] sm:$0xff] %v3906
    %vm3909 = vcmp.eq.s32.totalorder %v2348, 0
    %v3910 = vsel %vm3909, %v3059, 0.0
    %vm3911 = vcmp.eq.s32.totalorder %v2348, 1
    %v3912 = vsel %vm3911, %v3042, 0.0
    %v3913 = vadd.f32 %v3910, %v3912
    %vm3914 = vcmp.eq.s32.totalorder %v2348, 2
    %v3915 = vsel %vm3914, %v3051, 0.0
    %v3916 = vadd.f32 %v3913, %v3915
    %3917 = vst [vmem:[#allocation17] sm:$0xff] %v3916
    %v3918 = vld [vmem:[#allocation4] sm:$0xff]
    %v3919 = vpack.c.bf16 %v3918, %v3918
    %3920 = vst [vmem:[#allocation5] sm:$0xf] %v3919
    %v3921 = vld [vmem:[#allocation2] sm:$0xff]
    %v3922 = vpack.c.bf16 %v3921, %v3921
    %3923 = vst [vmem:[#allocation5 + $0x4] sm:$0xf] %v3922
    %v3924 = vld [vmem:[#allocation5] sm:$0xff]
    %v3925 = vld [vmem:[#allocation9] sm:$0xff]
    %v3926 = vld [vmem:[#allocation9 + $0x8] sm:$0xff]
    %v3927 = vld [vmem:[#allocation9 + $0x10] sm:$0xff]
    %v3928 = vld [vmem:[#allocation9 + $0x18] sm:$0xff]
    %v3929 = vld [vmem:[#allocation9 + $0x20] sm:$0xff]
    %v3930 = vld [vmem:[#allocation9 + $0x28] sm:$0xff]
    %v3931 = vld [vmem:[#allocation9 + $0x30] sm:$0xff]
    %v3932 = vld [vmem:[#allocation9 + $0x38] sm:$0xff]
    %v3933 = vld [vmem:[#allocation9 + $0x40] sm:$0xff]
    %v3934 = vld [vmem:[#allocation9 + $0x48] sm:$0xff]
    %v3935 = vld [vmem:[#allocation9 + $0x50] sm:$0xff]
    %v3936 = vld [vmem:[#allocation9 + $0x58] sm:$0xff]
    %v3937 = vld [vmem:[#allocation9 + $0x60] sm:$0xff]
    %v3938 = vld [vmem:[#allocation9 + $0x68] sm:$0xff]
    %v3939 = vld [vmem:[#allocation9 + $0x70] sm:$0xff]
    %v3940 = vld [vmem:[#allocation9 + $0x78] sm:$0xff]
    %v3941 = vld [vmem:[#allocation9 + $0x80] sm:$0xff]
    %v3942 = vld [vmem:[#allocation9 + $0x88] sm:$0xff]
    %v3943 = vld [vmem:[#allocation9 + $0x90] sm:$0xff]
    %v3944 = vld [vmem:[#allocation9 + $0x98] sm:$0xff]
    %v3945 = vld [vmem:[#allocation9 + $0xa0] sm:$0xff]
    %v3946 = vld [vmem:[#allocation9 + $0xa8] sm:$0xff]
    %v3947 = vld [vmem:[#allocation9 + $0xb0] sm:$0xff]
    %v3948 = vld [vmem:[#allocation9 + $0xb8] sm:$0xff]
    %v3949 = vld [vmem:[#allocation9 + $0xc0] sm:$0xff]
    %v3950 = vld [vmem:[#allocation9 + $0xc8] sm:$0xff]
    %v3951 = vld [vmem:[#allocation9 + $0xd0] sm:$0xff]
    %v3952 = vld [vmem:[#allocation9 + $0xd8] sm:$0xff]
    %v3953 = vld [vmem:[#allocation9 + $0xe0] sm:$0xff]
    %v3954 = vld [vmem:[#allocation9 + $0xe8] sm:$0xff]
    %v3955 = vld [vmem:[#allocation9 + $0xf0] sm:$0xff]
    %v3956 = vld [vmem:[#allocation9 + $0xf8] sm:$0xff]
    %v3957 = vld [vmem:[#allocation9 + $0x100] sm:$0xff]
    %v3958 = vld [vmem:[#allocation9 + $0x108] sm:$0xff]
    %v3959 = vld [vmem:[#allocation9 + $0x110] sm:$0xff]
    %v3960 = vld [vmem:[#allocation9 + $0x118] sm:$0xff]
    %v3961 = vld [vmem:[#allocation9 + $0x120] sm:$0xff]
    %v3962 = vld [vmem:[#allocation9 + $0x128] sm:$0xff]
    %v3963 = vld [vmem:[#allocation9 + $0x130] sm:$0xff]
    %v3964 = vld [vmem:[#allocation9 + $0x138] sm:$0xff]
    %v3965 = vld [vmem:[#allocation9 + $0x140] sm:$0xff]
    %v3966 = vld [vmem:[#allocation9 + $0x148] sm:$0xff]
    %v3967 = vld [vmem:[#allocation9 + $0x150] sm:$0xff]
    %v3968 = vld [vmem:[#allocation9 + $0x158] sm:$0xff]
    %v3969 = vld [vmem:[#allocation9 + $0x160] sm:$0xff]
    %v3970 = vld [vmem:[#allocation9 + $0x168] sm:$0xff]
    %v3971 = vld [vmem:[#allocation9 + $0x170] sm:$0xff]
    %v3972 = vld [vmem:[#allocation9 + $0x178] sm:$0xff]
    %v3973 = vld [vmem:[#allocation9 + $0x180] sm:$0xff]
    %v3974 = vld [vmem:[#allocation9 + $0x188] sm:$0xff]
    %v3975 = vld [vmem:[#allocation9 + $0x190] sm:$0xff]
    %v3976 = vld [vmem:[#allocation9 + $0x198] sm:$0xff]
    %v3977 = vld [vmem:[#allocation9 + $0x1a0] sm:$0xff]
    %v3978 = vld [vmem:[#allocation9 + $0x1a8] sm:$0xff]
    %v3979 = vld [vmem:[#allocation9 + $0x1b0] sm:$0xff]
    %v3980 = vld [vmem:[#allocation9 + $0x1b8] sm:$0xff]
    %v3981 = vld [vmem:[#allocation9 + $0x1c0] sm:$0xff]
    %v3982 = vld [vmem:[#allocation9 + $0x1c8] sm:$0xff]
    %v3983 = vld [vmem:[#allocation9 + $0x1d0] sm:$0xff]
    %v3984 = vld [vmem:[#allocation9 + $0x1d8] sm:$0xff]
    %v3985 = vld [vmem:[#allocation9 + $0x1e0] sm:$0xff]
    %v3986 = vld [vmem:[#allocation9 + $0x1e8] sm:$0xff]
    %v3987 = vld [vmem:[#allocation9 + $0x1f0] sm:$0xff]
    %v3988 = vld [vmem:[#allocation9 + $0x1f8] sm:$0xff]
    %v3989 = vld [vmem:[#allocation11] sm:$0xf]
    %v3991 = vlaneseq
    %v3992 = vshrl.u32 %v3991, 7
    %v3993 = vsub.s32 0, %v3992
    %v3994 = vrot.slane %v3989, %v3993
    %v3995 = vlaneseq
    %v3996 = vshrl.u32 %v3995, 7
    %v3997 = vsub.s32 1, %v3996
    %v3998 = vrot.slane %v3989, %v3997
    %v3999 = vlaneseq
    %v4000 = vshrl.u32 %v3999, 7
    %v4001 = vsub.s32 2, %v4000
    %v4002 = vrot.slane %v3989, %v4001
    %v4003 = vlaneseq
    %v4004 = vshrl.u32 %v4003, 7
    %v4005 = vsub.s32 3, %v4004
    %v4006 = vrot.slane %v3989, %v4005
    %v4012 = vunpack.c.l.b16 %v3924
    %v4013 = vunpack.c.h.b16 %v3924
    %v4014 = vpack.c.b16 %v4012, %v4012
    %v4015 = vpack.c.b16 %v4013, %v4013
    %v4082 = vunpack.c.l.b16 %v3925
    %v4083 = vunpack.c.h.b16 %v3925
    %v4084 = vunpack.c.l.b16 %v3926
    %v4085 = vunpack.c.h.b16 %v3926
    %v4086 = vunpack.c.l.b16 %v3927
    %v4087 = vunpack.c.h.b16 %v3927
    %v4088 = vunpack.c.l.b16 %v3928
    %v4089 = vunpack.c.h.b16 %v3928
    %v4090 = vunpack.c.l.b16 %v3929
    %v4091 = vunpack.c.h.b16 %v3929
    %v4092 = vunpack.c.l.b16 %v3930
    %v4093 = vunpack.c.h.b16 %v3930
    %v4094 = vunpack.c.l.b16 %v3931
    %v4095 = vunpack.c.h.b16 %v3931
    %v4096 = vunpack.c.l.b16 %v3932
    %v4097 = vunpack.c.h.b16 %v3932
    %v4098 = vunpack.c.l.b16 %v3933
    %v4099 = vunpack.c.h.b16 %v3933
    %v4100 = vunpack.c.l.b16 %v3934
    %v4101 = vunpack.c.h.b16 %v3934
    %v4102 = vunpack.c.l.b16 %v3935
    %v4103 = vunpack.c.h.b16 %v3935
    %v4104 = vunpack.c.l.b16 %v3936
    %v4105 = vunpack.c.h.b16 %v3936
    %v4106 = vunpack.c.l.b16 %v3937
    %v4107 = vunpack.c.h.b16 %v3937
    %v4108 = vunpack.c.l.b16 %v3938
    %v4109 = vunpack.c.h.b16 %v3938
    %v4110 = vunpack.c.l.b16 %v3939
    %v4111 = vunpack.c.h.b16 %v3939
    %v4112 = vunpack.c.l.b16 %v3940
    %v4113 = vunpack.c.h.b16 %v3940
    %v4114 = vunpack.c.l.b16 %v3941
    %v4115 = vunpack.c.h.b16 %v3941
    %v4116 = vunpack.c.l.b16 %v3942
    %v4117 = vunpack.c.h.b16 %v3942
    %v4118 = vunpack.c.l.b16 %v3943
    %v4119 = vunpack.c.h.b16 %v3943
    %v4120 = vunpack.c.l.b16 %v3944
    %v4121 = vunpack.c.h.b16 %v3944
    %v4122 = vunpack.c.l.b16 %v3945
    %v4123 = vunpack.c.h.b16 %v3945
    %v4124 = vunpack.c.l.b16 %v3946
    %v4125 = vunpack.c.h.b16 %v3946
    %v4126 = vunpack.c.l.b16 %v3947
    %v4127 = vunpack.c.h.b16 %v3947
    %v4128 = vunpack.c.l.b16 %v3948
    %v4129 = vunpack.c.h.b16 %v3948
    %v4130 = vunpack.c.l.b16 %v3949
    %v4131 = vunpack.c.h.b16 %v3949
    %v4132 = vunpack.c.l.b16 %v3950
    %v4133 = vunpack.c.h.b16 %v3950
    %v4134 = vunpack.c.l.b16 %v3951
    %v4135 = vunpack.c.h.b16 %v3951
    %v4136 = vunpack.c.l.b16 %v3952
    %v4137 = vunpack.c.h.b16 %v3952
    %v4138 = vunpack.c.l.b16 %v3953
    %v4139 = vunpack.c.h.b16 %v3953
    %v4140 = vunpack.c.l.b16 %v3954
    %v4141 = vunpack.c.h.b16 %v3954
    %v4142 = vunpack.c.l.b16 %v3955
    %v4143 = vunpack.c.h.b16 %v3955
    %v4144 = vunpack.c.l.b16 %v3956
    %v4145 = vunpack.c.h.b16 %v3956
    %v4146 = vunpack.c.l.b16 %v3957
    %v4147 = vunpack.c.h.b16 %v3957
    %v4148 = vunpack.c.l.b16 %v3958
    %v4149 = vunpack.c.h.b16 %v3958
    %v4150 = vunpack.c.l.b16 %v3959
    %v4151 = vunpack.c.h.b16 %v3959
    %v4152 = vunpack.c.l.b16 %v3960
    %v4153 = vunpack.c.h.b16 %v3960
    %v4154 = vunpack.c.l.b16 %v3961
    %v4155 = vunpack.c.h.b16 %v3961
    %v4156 = vunpack.c.l.b16 %v3962
    %v4157 = vunpack.c.h.b16 %v3962
    %v4158 = vunpack.c.l.b16 %v3963
    %v4159 = vunpack.c.h.b16 %v3963
    %v4160 = vunpack.c.l.b16 %v3964
    %v4161 = vunpack.c.h.b16 %v3964
    %v4162 = vunpack.c.l.b16 %v3965
    %v4163 = vunpack.c.h.b16 %v3965
    %v4164 = vunpack.c.l.b16 %v3966
    %v4165 = vunpack.c.h.b16 %v3966
    %v4166 = vunpack.c.l.b16 %v3967
    %v4167 = vunpack.c.h.b16 %v3967
    %v4168 = vunpack.c.l.b16 %v3968
    %v4169 = vunpack.c.h.b16 %v3968
    %v4170 = vunpack.c.l.b16 %v3969
    %v4171 = vunpack.c.h.b16 %v3969
    %v4172 = vunpack.c.l.b16 %v3970
    %v4173 = vunpack.c.h.b16 %v3970
    %v4174 = vunpack.c.l.b16 %v3971
    %v4175 = vunpack.c.h.b16 %v3971
    %v4176 = vunpack.c.l.b16 %v3972
    %v4177 = vunpack.c.h.b16 %v3972
    %v4178 = vunpack.c.l.b16 %v3973
    %v4179 = vunpack.c.h.b16 %v3973
    %v4180 = vunpack.c.l.b16 %v3974
    %v4181 = vunpack.c.h.b16 %v3974
    %v4182 = vunpack.c.l.b16 %v3975
    %v4183 = vunpack.c.h.b16 %v3975
    %v4184 = vunpack.c.l.b16 %v3976
    %v4185 = vunpack.c.h.b16 %v3976
    %v4186 = vunpack.c.l.b16 %v3977
    %v4187 = vunpack.c.h.b16 %v3977
    %v4188 = vunpack.c.l.b16 %v3978
    %v4189 = vunpack.c.h.b16 %v3978
    %v4190 = vunpack.c.l.b16 %v3979
    %v4191 = vunpack.c.h.b16 %v3979
    %v4192 = vunpack.c.l.b16 %v3980
    %v4193 = vunpack.c.h.b16 %v3980
    %v4194 = vunpack.c.l.b16 %v3981
    %v4195 = vunpack.c.h.b16 %v3981
    %v4196 = vunpack.c.l.b16 %v3982
    %v4197 = vunpack.c.h.b16 %v3982
    %v4198 = vunpack.c.l.b16 %v3983
    %v4199 = vunpack.c.h.b16 %v3983
    %v4200 = vunpack.c.l.b16 %v3984
    %v4201 = vunpack.c.h.b16 %v3984
    %v4202 = vunpack.c.l.b16 %v3985
    %v4203 = vunpack.c.h.b16 %v3985
    %v4204 = vunpack.c.l.b16 %v3986
    %v4205 = vunpack.c.h.b16 %v3986
    %v4206 = vunpack.c.l.b16 %v3987
    %v4207 = vunpack.c.h.b16 %v3987
    %v4208 = vunpack.c.l.b16 %v3988
    %v4209 = vunpack.c.h.b16 %v3988
    %v4210 = vpack.c.b16 %v4086, %v4082
    %v4211 = vpack.c.b16 %v4087, %v4083
    %v4212 = vpack.c.b16 %v4088, %v4084
    %v4213 = vpack.c.b16 %v4089, %v4085
    %v4214 = vpack.c.b16 %v4094, %v4090
    %v4215 = vpack.c.b16 %v4095, %v4091
    %v4216 = vpack.c.b16 %v4096, %v4092
    %v4217 = vpack.c.b16 %v4097, %v4093
    %v4218 = vpack.c.b16 %v4102, %v4098
    %v4219 = vpack.c.b16 %v4103, %v4099
    %v4220 = vpack.c.b16 %v4104, %v4100
    %v4221 = vpack.c.b16 %v4105, %v4101
    %v4222 = vpack.c.b16 %v4110, %v4106
    %v4223 = vpack.c.b16 %v4111, %v4107
    %v4224 = vpack.c.b16 %v4112, %v4108
    %v4225 = vpack.c.b16 %v4113, %v4109
    %v4226 = vpack.c.b16 %v4118, %v4114
    %v4227 = vpack.c.b16 %v4119, %v4115
    %v4228 = vpack.c.b16 %v4120, %v4116
    %v4229 = vpack.c.b16 %v4121, %v4117
    %v4230 = vpack.c.b16 %v4126, %v4122
    %v4231 = vpack.c.b16 %v4127, %v4123
    %v4232 = vpack.c.b16 %v4128, %v4124
    %v4233 = vpack.c.b16 %v4129, %v4125
    %v4234 = vpack.c.b16 %v4134, %v4130
    %v4235 = vpack.c.b16 %v4135, %v4131
    %v4236 = vpack.c.b16 %v4136, %v4132
    %v4237 = vpack.c.b16 %v4137, %v4133
    %v4238 = vpack.c.b16 %v4142, %v4138
    %v4239 = vpack.c.b16 %v4143, %v4139
    %v4240 = vpack.c.b16 %v4144, %v4140
    %v4241 = vpack.c.b16 %v4145, %v4141
    %v4242 = vpack.c.b16 %v4150, %v4146
    %v4243 = vpack.c.b16 %v4151, %v4147
    %v4244 = vpack.c.b16 %v4152, %v4148
    %v4245 = vpack.c.b16 %v4153, %v4149
    %v4246 = vpack.c.b16 %v4158, %v4154
    %v4247 = vpack.c.b16 %v4159, %v4155
    %v4248 = vpack.c.b16 %v4160, %v4156
    %v4249 = vpack.c.b16 %v4161, %v4157
    %v4250 = vpack.c.b16 %v4166, %v4162
    %v4251 = vpack.c.b16 %v4167, %v4163
    %v4252 = vpack.c.b16 %v4168, %v4164
    %v4253 = vpack.c.b16 %v4169, %v4165
    %v4254 = vpack.c.b16 %v4174, %v4170
    %v4255 = vpack.c.b16 %v4175, %v4171
    %v4256 = vpack.c.b16 %v4176, %v4172
    %v4257 = vpack.c.b16 %v4177, %v4173
    %v4258 = vpack.c.b16 %v4182, %v4178
    %v4259 = vpack.c.b16 %v4183, %v4179
    %v4260 = vpack.c.b16 %v4184, %v4180
    %v4261 = vpack.c.b16 %v4185, %v4181
    %v4262 = vpack.c.b16 %v4190, %v4186
    %v4263 = vpack.c.b16 %v4191, %v4187
    %v4264 = vpack.c.b16 %v4192, %v4188
    %v4265 = vpack.c.b16 %v4193, %v4189
    %v4266 = vpack.c.b16 %v4198, %v4194
    %v4267 = vpack.c.b16 %v4199, %v4195
    %v4268 = vpack.c.b16 %v4200, %v4196
    %v4269 = vpack.c.b16 %v4201, %v4197
    %v4270 = vpack.c.b16 %v4206, %v4202
    %v4271 = vpack.c.b16 %v4207, %v4203
    %v4272 = vpack.c.b16 %v4208, %v4204
    %v4273 = vpack.c.b16 %v4209, %v4205
    %4338 = vmatprep.subr.bf16.mxu0 %v4211
    %4339 = vmatpush1.bf16.msra.mxu0 %v4210
    %4340 = vmatprep.subr.bf16.mxu0 %v4215
    %4341 = vmatpush1.bf16.msra.mxu0 %v4214
    %4342 = vmatprep.subr.bf16.mxu0 %v4219
    %4343 = vmatpush1.bf16.msra.mxu0 %v4218
    %4344 = vmatprep.subr.bf16.mxu0 %v4223
    %4345 = vmatpush1.bf16.msra.mxu0 %v4222
    %4346 = vmatprep.subr.bf16.mxu0 %v4227
    %4347 = vmatpush1.bf16.msra.mxu0 %v4226
    %4348 = vmatprep.subr.bf16.mxu0 %v4231
    %4349 = vmatpush1.bf16.msra.mxu0 %v4230
    %4350 = vmatprep.subr.bf16.mxu0 %v4235
    %4351 = vmatpush1.bf16.msra.mxu0 %v4234
    %4352 = vmatprep.subr.bf16.mxu0 %v4239
    %4353 = vmatpush1.bf16.msra.mxu0 %v4238
    %4354 = vmatprep.subr.bf16.mxu0 %v4243
    %4355 = vmatpush1.bf16.msra.mxu0 %v4242
    %4356 = vmatprep.subr.bf16.mxu0 %v4247
    %4357 = vmatpush1.bf16.msra.mxu0 %v4246
    %4358 = vmatprep.subr.bf16.mxu0 %v4251
    %4359 = vmatpush1.bf16.msra.mxu0 %v4250
    %4360 = vmatprep.subr.bf16.mxu0 %v4255
    %4361 = vmatpush1.bf16.msra.mxu0 %v4254
    %4362 = vmatprep.subr.bf16.mxu0 %v4259
    %4363 = vmatpush1.bf16.msra.mxu0 %v4258
    %4364 = vmatprep.subr.bf16.mxu0 %v4263
    %4365 = vmatpush1.bf16.msra.mxu0 %v4262
    %4366 = vmatprep.subr.bf16.mxu0 %v4267
    %4367 = vmatpush1.bf16.msra.mxu0 %v4266
    %4368 = vmatprep.subr.bf16.mxu0 %v4271
    %4369 = vmatpush1.bf16.msra.mxu0 %v4270
    %4370 = vmatprep.mubr.bf16.mxu0 %v4015
    %4371 = vmatmul.mubr.bf16.gmra.mrb[0].mxu0 %v4014
    %v4372 = vpop.f32.mrb[0].mxu0
    %v4373 = vadd.f32 %v3994, %v4372
    %v4374 = vpop.f32.mrb[0].mxu0
    %v4375 = vadd.f32 %v3998, %v4374
    %v4376 = vpop.f32.mrb[0].mxu0
    %v4377 = vpop.f32.mrb[0].mxu0
    %4378 = vdwg.mxu0
    %4379 = vmatprep.subr.bf16.mxu0 %v4213
    %4380 = vmatpush1.bf16.msra.mxu0 %v4212
    %4381 = vmatprep.subr.bf16.mxu0 %v4217
    %4382 = vmatpush1.bf16.msra.mxu0 %v4216
    %4383 = vmatprep.subr.bf16.mxu0 %v4221
    %4384 = vmatpush1.bf16.msra.mxu0 %v4220
    %4385 = vmatprep.subr.bf16.mxu0 %v4225
    %4386 = vmatpush1.bf16.msra.mxu0 %v4224
    %4387 = vmatprep.subr.bf16.mxu0 %v4229
    %4388 = vmatpush1.bf16.msra.mxu0 %v4228
    %4389 = vmatprep.subr.bf16.mxu0 %v4233
    %4390 = vmatpush1.bf16.msra.mxu0 %v4232
    %4391 = vmatprep.subr.bf16.mxu0 %v4237
    %4392 = vmatpush1.bf16.msra.mxu0 %v4236
    %4393 = vmatprep.subr.bf16.mxu0 %v4241
    %4394 = vmatpush1.bf16.msra.mxu0 %v4240
    %4395 = vmatprep.subr.bf16.mxu0 %v4245
    %4396 = vmatpush1.bf16.msra.mxu0 %v4244
    %4397 = vmatprep.subr.bf16.mxu0 %v4249
    %4398 = vmatpush1.bf16.msra.mxu0 %v4248
    %4399 = vmatprep.subr.bf16.mxu0 %v4253
    %4400 = vmatpush1.bf16.msra.mxu0 %v4252
    %4401 = vmatprep.subr.bf16.mxu0 %v4257
    %4402 = vmatpush1.bf16.msra.mxu0 %v4256
    %4403 = vmatprep.subr.bf16.mxu0 %v4261
    %4404 = vmatpush1.bf16.msra.mxu0 %v4260
    %4405 = vmatprep.subr.bf16.mxu0 %v4265
    %4406 = vmatpush1.bf16.msra.mxu0 %v4264
    %4407 = vmatprep.subr.bf16.mxu0 %v4269
    %4408 = vmatpush1.bf16.msra.mxu0 %v4268
    %4409 = vmatprep.subr.bf16.mxu0 %v4273
    %4410 = vmatpush1.bf16.msra.mxu0 %v4272
    %4411 = vmatprep.mubr.bf16.mxu0 %v4015
    %4412 = vmatmul.mubr.bf16.gmra.mrb[0].mxu0 %v4014
    %v4413 = vpop.f32.mrb[0].mxu0
    %v4414 = vadd.f32 %v4002, %v4413
    %v4415 = vpop.f32.mrb[0].mxu0
    %v4416 = vadd.f32 %v4006, %v4415
    %v4417 = vpop.f32.mrb[0].mxu0
    %v4418 = vpop.f32.mrb[0].mxu0
    %4419 = vdwg.mxu0
    %v4420 = vxor.u32 %v4373, 2147483648
    %v4421 = vmul.f32 %v4420, 1.442695
    %v4422 = vpow.pop %v4421
    %v4423 = vadd.f32 %v4422, 1.0
    %v4424 = vrcp.pop %v4423
    %v4425 = vmul.f32 1.0, %v4424
    %v4426 = vxor.u32 %v4375, 2147483648
    %v4427 = vmul.f32 %v4426, 1.442695
    %v4428 = vpow.pop %v4427
    %v4429 = vadd.f32 %v4428, 1.0
    %v4430 = vrcp.pop %v4429
    %v4431 = vmul.f32 1.0, %v4430
    %v4432 = vtanh.pop %v4414
    %v4433 = vxor.u32 %v4416, 2147483648
    %v4434 = vmul.f32 %v4433, 1.442695
    %v4435 = vpow.pop %v4434
    %v4436 = vadd.f32 %v4435, 1.0
    %v4437 = vrcp.pop %v4436
    %v4438 = vmul.f32 1.0, %v4437
    %v4439 = vld [vmem:[#allocation3] sm:$0xff]
    %v4440 = vmul.f32 %v4431, %v4439
    %v4441 = vmul.f32 %v4425, %v4432
    %v4442 = vadd.f32 %v4440, %v4441
    %v4443 = vtanh.pop %v4442
    %v4444 = vmul.f32 %v4438, %v4443
    %4445 = vst [vmem:[#allocation2] sm:$0xff] %v4444
    %4446 = vst [vmem:[#allocation3] sm:$0xff] %v4442
    %v4447 = vpack.c.bf16 %v4444, %v4444
    %4448 = vst [vmem:[#allocation5] sm:$0xf] %v4447
    %v4449 = vld [vmem:[%s657] sm:$0xff]
    %v4450 = vpack.c.bf16 %v4449, %v4449
    %4451 = vst [vmem:[#allocation5 + $0x4] sm:$0xf] %v4450
    %v4452 = vld [vmem:[#allocation5] sm:$0xff]
    %v4453 = vld [vmem:[%s662] sm:$0xff]
    %v4454 = vld [vmem:[%s662 + $0x8] sm:$0xff]
    %v4455 = vld [vmem:[%s662 + $0x10] sm:$0xff]
    %v4456 = vld [vmem:[%s662 + $0x18] sm:$0xff]
    %v4457 = vld [vmem:[%s662 + $0x20] sm:$0xff]
    %v4458 = vld [vmem:[%s662 + $0x28] sm:$0xff]
    %v4459 = vld [vmem:[%s662 + $0x30] sm:$0xff]
    %v4460 = vld [vmem:[%s662 + $0x38] sm:$0xff]
    %v4461 = vld [vmem:[%s662 + $0x40] sm:$0xff]
    %v4462 = vld [vmem:[%s662 + $0x48] sm:$0xff]
    %v4463 = vld [vmem:[%s662 + $0x50] sm:$0xff]
    %v4464 = vld [vmem:[%s662 + $0x58] sm:$0xff]
    %v4465 = vld [vmem:[%s662 + $0x60] sm:$0xff]
    %v4466 = vld [vmem:[%s662 + $0x68] sm:$0xff]
    %v4467 = vld [vmem:[%s662 + $0x70] sm:$0xff]
    %v4468 = vld [vmem:[%s662 + $0x78] sm:$0xff]
    %v4469 = vld [vmem:[%s662 + $0x80] sm:$0xff]
    %v4470 = vld [vmem:[%s662 + $0x88] sm:$0xff]
    %v4471 = vld [vmem:[%s662 + $0x90] sm:$0xff]
    %v4472 = vld [vmem:[%s662 + $0x98] sm:$0xff]
    %v4473 = vld [vmem:[%s662 + $0xa0] sm:$0xff]
    %v4474 = vld [vmem:[%s662 + $0xa8] sm:$0xff]
    %v4475 = vld [vmem:[%s662 + $0xb0] sm:$0xff]
    %v4476 = vld [vmem:[%s662 + $0xb8] sm:$0xff]
    %v4477 = vld [vmem:[%s662 + $0xc0] sm:$0xff]
    %v4478 = vld [vmem:[%s662 + $0xc8] sm:$0xff]
    %v4479 = vld [vmem:[%s662 + $0xd0] sm:$0xff]
    %v4480 = vld [vmem:[%s662 + $0xd8] sm:$0xff]
    %v4481 = vld [vmem:[%s662 + $0xe0] sm:$0xff]
    %v4482 = vld [vmem:[%s662 + $0xe8] sm:$0xff]
    %v4483 = vld [vmem:[%s662 + $0xf0] sm:$0xff]
    %v4484 = vld [vmem:[%s662 + $0xf8] sm:$0xff]
    %v4485 = vld [vmem:[%s662 + $0x100] sm:$0xff]
    %v4486 = vld [vmem:[%s662 + $0x108] sm:$0xff]
    %v4487 = vld [vmem:[%s662 + $0x110] sm:$0xff]
    %v4488 = vld [vmem:[%s662 + $0x118] sm:$0xff]
    %v4489 = vld [vmem:[%s662 + $0x120] sm:$0xff]
    %v4490 = vld [vmem:[%s662 + $0x128] sm:$0xff]
    %v4491 = vld [vmem:[%s662 + $0x130] sm:$0xff]
    %v4492 = vld [vmem:[%s662 + $0x138] sm:$0xff]
    %v4493 = vld [vmem:[%s662 + $0x140] sm:$0xff]
    %v4494 = vld [vmem:[%s662 + $0x148] sm:$0xff]
    %v4495 = vld [vmem:[%s662 + $0x150] sm:$0xff]
    %v4496 = vld [vmem:[%s662 + $0x158] sm:$0xff]
    %v4497 = vld [vmem:[%s662 + $0x160] sm:$0xff]
    %v4498 = vld [vmem:[%s662 + $0x168] sm:$0xff]
    %v4499 = vld [vmem:[%s662 + $0x170] sm:$0xff]
    %v4500 = vld [vmem:[%s662 + $0x178] sm:$0xff]
    %v4501 = vld [vmem:[%s662 + $0x180] sm:$0xff]
    %v4502 = vld [vmem:[%s662 + $0x188] sm:$0xff]
    %v4503 = vld [vmem:[%s662 + $0x190] sm:$0xff]
    %v4504 = vld [vmem:[%s662 + $0x198] sm:$0xff]
    %v4505 = vld [vmem:[%s662 + $0x1a0] sm:$0xff]
    %v4506 = vld [vmem:[%s662 + $0x1a8] sm:$0xff]
    %v4507 = vld [vmem:[%s662 + $0x1b0] sm:$0xff]
    %v4508 = vld [vmem:[%s662 + $0x1b8] sm:$0xff]
    %v4509 = vld [vmem:[%s662 + $0x1c0] sm:$0xff]
    %v4510 = vld [vmem:[%s662 + $0x1c8] sm:$0xff]
    %v4511 = vld [vmem:[%s662 + $0x1d0] sm:$0xff]
    %v4512 = vld [vmem:[%s662 + $0x1d8] sm:$0xff]
    %v4513 = vld [vmem:[%s662 + $0x1e0] sm:$0xff]
    %v4514 = vld [vmem:[%s662 + $0x1e8] sm:$0xff]
    %v4515 = vld [vmem:[%s662 + $0x1f0] sm:$0xff]
    %v4516 = vld [vmem:[%s662 + $0x1f8] sm:$0xff]
    %v4517 = vld [vmem:[%s727] sm:$0xf]
    %v4519 = vlaneseq
    %v4520 = vshrl.u32 %v4519, 7
    %v4521 = vsub.s32 0, %v4520
    %v4522 = vrot.slane %v4517, %v4521
    %v4523 = vlaneseq
    %v4524 = vshrl.u32 %v4523, 7
    %v4525 = vsub.s32 1, %v4524
    %v4526 = vrot.slane %v4517, %v4525
    %v4527 = vlaneseq
    %v4528 = vshrl.u32 %v4527, 7
    %v4529 = vsub.s32 2, %v4528
    %v4530 = vrot.slane %v4517, %v4529
    %v4531 = vlaneseq
    %v4532 = vshrl.u32 %v4531, 7
    %v4533 = vsub.s32 3, %v4532
    %v4534 = vrot.slane %v4517, %v4533
    %v4540 = vunpack.c.l.b16 %v4452
    %v4541 = vunpack.c.h.b16 %v4452
    %v4542 = vpack.c.b16 %v4540, %v4540
    %v4543 = vpack.c.b16 %v4541, %v4541
    %v4610 = vunpack.c.l.b16 %v4453
    %v4611 = vunpack.c.h.b16 %v4453
    %v4612 = vunpack.c.l.b16 %v4454
    %v4613 = vunpack.c.h.b16 %v4454
    %v4614 = vunpack.c.l.b16 %v4455
    %v4615 = vunpack.c.h.b16 %v4455
    %v4616 = vunpack.c.l.b16 %v4456
    %v4617 = vunpack.c.h.b16 %v4456
    %v4618 = vunpack.c.l.b16 %v4457
    %v4619 = vunpack.c.h.b16 %v4457
    %v4620 = vunpack.c.l.b16 %v4458
    %v4621 = vunpack.c.h.b16 %v4458
    %v4622 = vunpack.c.l.b16 %v4459
    %v4623 = vunpack.c.h.b16 %v4459
    %v4624 = vunpack.c.l.b16 %v4460
    %v4625 = vunpack.c.h.b16 %v4460
    %v4626 = vunpack.c.l.b16 %v4461
    %v4627 = vunpack.c.h.b16 %v4461
    %v4628 = vunpack.c.l.b16 %v4462
    %v4629 = vunpack.c.h.b16 %v4462
    %v4630 = vunpack.c.l.b16 %v4463
    %v4631 = vunpack.c.h.b16 %v4463
    %v4632 = vunpack.c.l.b16 %v4464
    %v4633 = vunpack.c.h.b16 %v4464
    %v4634 = vunpack.c.l.b16 %v4465
    %v4635 = vunpack.c.h.b16 %v4465
    %v4636 = vunpack.c.l.b16 %v4466
    %v4637 = vunpack.c.h.b16 %v4466
    %v4638 = vunpack.c.l.b16 %v4467
    %v4639 = vunpack.c.h.b16 %v4467
    %v4640 = vunpack.c.l.b16 %v4468
    %v4641 = vunpack.c.h.b16 %v4468
    %v4642 = vunpack.c.l.b16 %v4469
    %v4643 = vunpack.c.h.b16 %v4469
    %v4644 = vunpack.c.l.b16 %v4470
    %v4645 = vunpack.c.h.b16 %v4470
    %v4646 = vunpack.c.l.b16 %v4471
    %v4647 = vunpack.c.h.b16 %v4471
    %v4648 = vunpack.c.l.b16 %v4472
    %v4649 = vunpack.c.h.b16 %v4472
    %v4650 = vunpack.c.l.b16 %v4473
    %v4651 = vunpack.c.h.b16 %v4473
    %v4652 = vunpack.c.l.b16 %v4474
    %v4653 = vunpack.c.h.b16 %v4474
    %v4654 = vunpack.c.l.b16 %v4475
    %v4655 = vunpack.c.h.b16 %v4475
    %v4656 = vunpack.c.l.b16 %v4476
    %v4657 = vunpack.c.h.b16 %v4476
    %v4658 = vunpack.c.l.b16 %v4477
    %v4659 = vunpack.c.h.b16 %v4477
    %v4660 = vunpack.c.l.b16 %v4478
    %v4661 = vunpack.c.h.b16 %v4478
    %v4662 = vunpack.c.l.b16 %v4479
    %v4663 = vunpack.c.h.b16 %v4479
    %v4664 = vunpack.c.l.b16 %v4480
    %v4665 = vunpack.c.h.b16 %v4480
    %v4666 = vunpack.c.l.b16 %v4481
    %v4667 = vunpack.c.h.b16 %v4481
    %v4668 = vunpack.c.l.b16 %v4482
    %v4669 = vunpack.c.h.b16 %v4482
    %v4670 = vunpack.c.l.b16 %v4483
    %v4671 = vunpack.c.h.b16 %v4483
    %v4672 = vunpack.c.l.b16 %v4484
    %v4673 = vunpack.c.h.b16 %v4484
    %v4674 = vunpack.c.l.b16 %v4485
    %v4675 = vunpack.c.h.b16 %v4485
    %v4676 = vunpack.c.l.b16 %v4486
    %v4677 = vunpack.c.h.b16 %v4486
    %v4678 = vunpack.c.l.b16 %v4487
    %v4679 = vunpack.c.h.b16 %v4487
    %v4680 = vunpack.c.l.b16 %v4488
    %v4681 = vunpack.c.h.b16 %v4488
    %v4682 = vunpack.c.l.b16 %v4489
    %v4683 = vunpack.c.h.b16 %v4489
    %v4684 = vunpack.c.l.b16 %v4490
    %v4685 = vunpack.c.h.b16 %v4490
    %v4686 = vunpack.c.l.b16 %v4491
    %v4687 = vunpack.c.h.b16 %v4491
    %v4688 = vunpack.c.l.b16 %v4492
    %v4689 = vunpack.c.h.b16 %v4492
    %v4690 = vunpack.c.l.b16 %v4493
    %v4691 = vunpack.c.h.b16 %v4493
    %v4692 = vunpack.c.l.b16 %v4494
    %v4693 = vunpack.c.h.b16 %v4494
    %v4694 = vunpack.c.l.b16 %v4495
    %v4695 = vunpack.c.h.b16 %v4495
    %v4696 = vunpack.c.l.b16 %v4496
    %v4697 = vunpack.c.h.b16 %v4496
    %v4698 = vunpack.c.l.b16 %v4497
    %v4699 = vunpack.c.h.b16 %v4497
    %v4700 = vunpack.c.l.b16 %v4498
    %v4701 = vunpack.c.h.b16 %v4498
    %v4702 = vunpack.c.l.b16 %v4499
    %v4703 = vunpack.c.h.b16 %v4499
    %v4704 = vunpack.c.l.b16 %v4500
    %v4705 = vunpack.c.h.b16 %v4500
    %v4706 = vunpack.c.l.b16 %v4501
    %v4707 = vunpack.c.h.b16 %v4501
    %v4708 = vunpack.c.l.b16 %v4502
    %v4709 = vunpack.c.h.b16 %v4502
    %v4710 = vunpack.c.l.b16 %v4503
    %v4711 = vunpack.c.h.b16 %v4503
    %v4712 = vunpack.c.l.b16 %v4504
    %v4713 = vunpack.c.h.b16 %v4504
    %v4714 = vunpack.c.l.b16 %v4505
    %v4715 = vunpack.c.h.b16 %v4505
    %v4716 = vunpack.c.l.b16 %v4506
    %v4717 = vunpack.c.h.b16 %v4506
    %v4718 = vunpack.c.l.b16 %v4507
    %v4719 = vunpack.c.h.b16 %v4507
    %v4720 = vunpack.c.l.b16 %v4508
    %v4721 = vunpack.c.h.b16 %v4508
    %v4722 = vunpack.c.l.b16 %v4509
    %v4723 = vunpack.c.h.b16 %v4509
    %v4724 = vunpack.c.l.b16 %v4510
    %v4725 = vunpack.c.h.b16 %v4510
    %v4726 = vunpack.c.l.b16 %v4511
    %v4727 = vunpack.c.h.b16 %v4511
    %v4728 = vunpack.c.l.b16 %v4512
    %v4729 = vunpack.c.h.b16 %v4512
    %v4730 = vunpack.c.l.b16 %v4513
    %v4731 = vunpack.c.h.b16 %v4513
    %v4732 = vunpack.c.l.b16 %v4514
    %v4733 = vunpack.c.h.b16 %v4514
    %v4734 = vunpack.c.l.b16 %v4515
    %v4735 = vunpack.c.h.b16 %v4515
    %v4736 = vunpack.c.l.b16 %v4516
    %v4737 = vunpack.c.h.b16 %v4516
    %v4738 = vpack.c.b16 %v4614, %v4610
    %v4739 = vpack.c.b16 %v4615, %v4611
    %v4740 = vpack.c.b16 %v4616, %v4612
    %v4741 = vpack.c.b16 %v4617, %v4613
    %v4742 = vpack.c.b16 %v4622, %v4618
    %v4743 = vpack.c.b16 %v4623, %v4619
    %v4744 = vpack.c.b16 %v4624, %v4620
    %v4745 = vpack.c.b16 %v4625, %v4621
    %v4746 = vpack.c.b16 %v4630, %v4626
    %v4747 = vpack.c.b16 %v4631, %v4627
    %v4748 = vpack.c.b16 %v4632, %v4628
    %v4749 = vpack.c.b16 %v4633, %v4629
    %v4750 = vpack.c.b16 %v4638, %v4634
    %v4751 = vpack.c.b16 %v4639, %v4635
    %v4752 = vpack.c.b16 %v4640, %v4636
    %v4753 = vpack.c.b16 %v4641, %v4637
    %v4754 = vpack.c.b16 %v4646, %v4642
    %v4755 = vpack.c.b16 %v4647, %v4643
    %v4756 = vpack.c.b16 %v4648, %v4644
    %v4757 = vpack.c.b16 %v4649, %v4645
    %v4758 = vpack.c.b16 %v4654, %v4650
    %v4759 = vpack.c.b16 %v4655, %v4651
    %v4760 = vpack.c.b16 %v4656, %v4652
    %v4761 = vpack.c.b16 %v4657, %v4653
    %v4762 = vpack.c.b16 %v4662, %v4658
    %v4763 = vpack.c.b16 %v4663, %v4659
    %v4764 = vpack.c.b16 %v4664, %v4660
    %v4765 = vpack.c.b16 %v4665, %v4661
    %v4766 = vpack.c.b16 %v4670, %v4666
    %v4767 = vpack.c.b16 %v4671, %v4667
    %v4768 = vpack.c.b16 %v4672, %v4668
    %v4769 = vpack.c.b16 %v4673, %v4669
    %v4770 = vpack.c.b16 %v4678, %v4674
    %v4771 = vpack.c.b16 %v4679, %v4675
    %v4772 = vpack.c.b16 %v4680, %v4676
    %v4773 = vpack.c.b16 %v4681, %v4677
    %v4774 = vpack.c.b16 %v4686, %v4682
    %v4775 = vpack.c.b16 %v4687, %v4683
    %v4776 = vpack.c.b16 %v4688, %v4684
    %v4777 = vpack.c.b16 %v4689, %v4685
    %v4778 = vpack.c.b16 %v4694, %v4690
    %v4779 = vpack.c.b16 %v4695, %v4691
    %v4780 = vpack.c.b16 %v4696, %v4692
    %v4781 = vpack.c.b16 %v4697, %v4693
    %v4782 = vpack.c.b16 %v4702, %v4698
    %v4783 = vpack.c.b16 %v4703, %v4699
    %v4784 = vpack.c.b16 %v4704, %v4700
    %v4785 = vpack.c.b16 %v4705, %v4701
    %v4786 = vpack.c.b16 %v4710, %v4706
    %v4787 = vpack.c.b16 %v4711, %v4707
    %v4788 = vpack.c.b16 %v4712, %v4708
    %v4789 = vpack.c.b16 %v4713, %v4709
    %v4790 = vpack.c.b16 %v4718, %v4714
    %v4791 = vpack.c.b16 %v4719, %v4715
    %v4792 = vpack.c.b16 %v4720, %v4716
    %v4793 = vpack.c.b16 %v4721, %v4717
    %v4794 = vpack.c.b16 %v4726, %v4722
    %v4795 = vpack.c.b16 %v4727, %v4723
    %v4796 = vpack.c.b16 %v4728, %v4724
    %v4797 = vpack.c.b16 %v4729, %v4725
    %v4798 = vpack.c.b16 %v4734, %v4730
    %v4799 = vpack.c.b16 %v4735, %v4731
    %v4800 = vpack.c.b16 %v4736, %v4732
    %v4801 = vpack.c.b16 %v4737, %v4733
    %4866 = vmatprep.subr.bf16.mxu0 %v4739
    %4867 = vmatpush1.bf16.msra.mxu0 %v4738
    %4868 = vmatprep.subr.bf16.mxu0 %v4743
    %4869 = vmatpush1.bf16.msra.mxu0 %v4742
    %4870 = vmatprep.subr.bf16.mxu0 %v4747
    %4871 = vmatpush1.bf16.msra.mxu0 %v4746
    %4872 = vmatprep.subr.bf16.mxu0 %v4751
    %4873 = vmatpush1.bf16.msra.mxu0 %v4750
    %4874 = vmatprep.subr.bf16.mxu0 %v4755
    %4875 = vmatpush1.bf16.msra.mxu0 %v4754
    %4876 = vmatprep.subr.bf16.mxu0 %v4759
    %4877 = vmatpush1.bf16.msra.mxu0 %v4758
    %4878 = vmatprep.subr.bf16.mxu0 %v4763
    %4879 = vmatpush1.bf16.msra.mxu0 %v4762
    %4880 = vmatprep.subr.bf16.mxu0 %v4767
    %4881 = vmatpush1.bf16.msra.mxu0 %v4766
    %4882 = vmatprep.subr.bf16.mxu0 %v4771
    %4883 = vmatpush1.bf16.msra.mxu0 %v4770
    %4884 = vmatprep.subr.bf16.mxu0 %v4775
    %4885 = vmatpush1.bf16.msra.mxu0 %v4774
    %4886 = vmatprep.subr.bf16.mxu0 %v4779
    %4887 = vmatpush1.bf16.msra.mxu0 %v4778
    %4888 = vmatprep.subr.bf16.mxu0 %v4783
    %4889 = vmatpush1.bf16.msra.mxu0 %v4782
    %4890 = vmatprep.subr.bf16.mxu0 %v4787
    %4891 = vmatpush1.bf16.msra.mxu0 %v4786
    %4892 = vmatprep.subr.bf16.mxu0 %v4791
    %4893 = vmatpush1.bf16.msra.mxu0 %v4790
    %4894 = vmatprep.subr.bf16.mxu0 %v4795
    %4895 = vmatpush1.bf16.msra.mxu0 %v4794
    %4896 = vmatprep.subr.bf16.mxu0 %v4799
    %4897 = vmatpush1.bf16.msra.mxu0 %v4798
    %4898 = vmatprep.mubr.bf16.mxu0 %v4543
    %4899 = vmatmul.mubr.bf16.gmra.mrb[0].mxu0 %v4542
    %v4900 = vpop.f32.mrb[0].mxu0
    %v4901 = vadd.f32 %v4522, %v4900
    %v4902 = vpop.f32.mrb[0].mxu0
    %v4903 = vadd.f32 %v4526, %v4902
    %v4904 = vpop.f32.mrb[0].mxu0
    %v4905 = vpop.f32.mrb[0].mxu0
    %4906 = vdwg.mxu0
    %4907 = vmatprep.subr.bf16.mxu0 %v4741
    %4908 = vmatpush1.bf16.msra.mxu0 %v4740
    %4909 = vmatprep.subr.bf16.mxu0 %v4745
    %4910 = vmatpush1.bf16.msra.mxu0 %v4744
    %4911 = vmatprep.subr.bf16.mxu0 %v4749
    %4912 = vmatpush1.bf16.msra.mxu0 %v4748
    %4913 = vmatprep.subr.bf16.mxu0 %v4753
    %4914 = vmatpush1.bf16.msra.mxu0 %v4752
    %4915 = vmatprep.subr.bf16.mxu0 %v4757
    %4916 = vmatpush1.bf16.msra.mxu0 %v4756
    %4917 = vmatprep.subr.bf16.mxu0 %v4761
    %4918 = vmatpush1.bf16.msra.mxu0 %v4760
    %4919 = vmatprep.subr.bf16.mxu0 %v4765
    %4920 = vmatpush1.bf16.msra.mxu0 %v4764
    %4921 = vmatprep.subr.bf16.mxu0 %v4769
    %4922 = vmatpush1.bf16.msra.mxu0 %v4768
    %4923 = vmatprep.subr.bf16.mxu0 %v4773
    %4924 = vmatpush1.bf16.msra.mxu0 %v4772
    %4925 = vmatprep.subr.bf16.mxu0 %v4777
    %4926 = vmatpush1.bf16.msra.mxu0 %v4776
    %4927 = vmatprep.subr.bf16.mxu0 %v4781
    %4928 = vmatpush1.bf16.msra.mxu0 %v4780
    %4929 = vmatprep.subr.bf16.mxu0 %v4785
    %4930 = vmatpush1.bf16.msra.mxu0 %v4784
    %4931 = vmatprep.subr.bf16.mxu0 %v4789
    %4932 = vmatpush1.bf16.msra.mxu0 %v4788
    %4933 = vmatprep.subr.bf16.mxu0 %v4793
    %4934 = vmatpush1.bf16.msra.mxu0 %v4792
    %4935 = vmatprep.subr.bf16.mxu0 %v4797
    %4936 = vmatpush1.bf16.msra.mxu0 %v4796
    %4937 = vmatprep.subr.bf16.mxu0 %v4801
    %4938 = vmatpush1.bf16.msra.mxu0 %v4800
    %4939 = vmatprep.mubr.bf16.mxu0 %v4543
    %4940 = vmatmul.mubr.bf16.gmra.mrb[0].mxu0 %v4542
    %v4941 = vpop.f32.mrb[0].mxu0
    %v4942 = vadd.f32 %v4530, %v4941
    %v4943 = vpop.f32.mrb[0].mxu0
    %v4944 = vadd.f32 %v4534, %v4943
    %v4945 = vpop.f32.mrb[0].mxu0
    %v4946 = vpop.f32.mrb[0].mxu0
    %4947 = vdwg.mxu0
    %v4948 = vxor.u32 %v4901, 2147483648
    %v4949 = vmul.f32 %v4948, 1.442695
    %v4950 = vpow.pop %v4949
    %v4951 = vadd.f32 %v4950, 1.0
    %v4952 = vrcp.pop %v4951
    %v4953 = vmul.f32 1.0, %v4952
    %v4954 = vxor.u32 %v4903, 2147483648
    %v4955 = vmul.f32 %v4954, 1.442695
    %v4956 = vpow.pop %v4955
    %v4957 = vadd.f32 %v4956, 1.0
    %v4958 = vrcp.pop %v4957
    %v4959 = vmul.f32 1.0, %v4958
    %v4960 = vtanh.pop %v4942
    %v4961 = vxor.u32 %v4944, 2147483648
    %v4962 = vmul.f32 %v4961, 1.442695
    %v4963 = vpow.pop %v4962
    %v4964 = vadd.f32 %v4963, 1.0
    %v4965 = vrcp.pop %v4964
    %v4966 = vmul.f32 1.0, %v4965
    %v4967 = vld [vmem:[%s1178] sm:$0xff]
    %v4968 = vmul.f32 %v4959, %v4967
    %v4969 = vmul.f32 %v4953, %v4960
    %v4970 = vadd.f32 %v4968, %v4969
    %v4971 = vtanh.pop %v4970
    %v4972 = vmul.f32 %v4966, %v4971
    %4973 = vst [vmem:[%s657] sm:$0xff] %v4972
    %4974 = vst [vmem:[%s1178] sm:$0xff] %v4970
    %v4975 = vpack.c.bf16 %v4972, %v4972
    %4976 = vst [vmem:[#allocation5] sm:$0xf] %v4975
    %v4977 = vld [vmem:[#allocation6] sm:$0xf]
    %4978 = vst [vmem:[#allocation5 + $0x4] sm:$0xf] %v4977
    %v4979 = vld [vmem:[#allocation5] sm:$0xff]
    %v4980 = vld [vmem:[#allocation12] sm:$0xf]
    %v4981 = vld [vmem:[#allocation12 + $0x4] sm:$0xf]
    %v4982 = vld [vmem:[#allocation12 + $0x8] sm:$0xf]
    %v4983 = vld [vmem:[#allocation12 + $0xc] sm:$0xf]
    %v4984 = vld [vmem:[#allocation12 + $0x10] sm:$0xf]
    %v4985 = vld [vmem:[#allocation12 + $0x14] sm:$0xf]
    %v4986 = vld [vmem:[#allocation12 + $0x18] sm:$0xf]
    %v4987 = vld [vmem:[#allocation12 + $0x1c] sm:$0xf]
    %v4988 = vld [vmem:[#allocation12 + $0x20] sm:$0xf]
    %v4989 = vld [vmem:[#allocation12 + $0x24] sm:$0xf]
    %v4990 = vld [vmem:[#allocation12 + $0x28] sm:$0xf]
    %v4991 = vld [vmem:[#allocation12 + $0x2c] sm:$0xf]
    %v4992 = vld [vmem:[#allocation12 + $0x30] sm:$0xf]
    %v4993 = vld [vmem:[#allocation12 + $0x34] sm:$0xf]
    %v4994 = vld [vmem:[#allocation12 + $0x38] sm:$0xf]
    %v4995 = vld [vmem:[#allocation12 + $0x3c] sm:$0xf]
    %v4996 = vld [vmem:[#allocation12 + $0x40] sm:$0xf]
    %v4997 = vld [vmem:[#allocation12 + $0x44] sm:$0xf]
    %v4998 = vld [vmem:[#allocation12 + $0x48] sm:$0xf]
    %v4999 = vld [vmem:[#allocation12 + $0x4c] sm:$0xf]
    %v5000 = vld [vmem:[#allocation12 + $0x50] sm:$0xf]
    %v5001 = vld [vmem:[#allocation12 + $0x54] sm:$0xf]
    %v5002 = vld [vmem:[#allocation12 + $0x58] sm:$0xf]
    %v5003 = vld [vmem:[#allocation12 + $0x5c] sm:$0xf]
    %v5004 = vld [vmem:[#allocation12 + $0x60] sm:$0xf]
    %v5005 = vld [vmem:[#allocation12 + $0x64] sm:$0xf]
    %v5006 = vld [vmem:[#allocation12 + $0x68] sm:$0xf]
    %v5007 = vld [vmem:[#allocation12 + $0x6c] sm:$0xf]
    %v5008 = vld [vmem:[#allocation12 + $0x70] sm:$0xf]
    %v5009 = vld [vmem:[#allocation12 + $0x74] sm:$0xf]
    %v5010 = vld [vmem:[#allocation12 + $0x78] sm:$0xf]
    %v5011 = vld [vmem:[#allocation12 + $0x7c] sm:$0xf]
    %v5012 = vld [vmem:[%s4] sm:$0x1]
    %v5014 = vlaneseq
    %v5015 = vshrl.u32 %v5014, 7
    %v5016 = vsub.s32 0, %v5015
    %v5017 = vrot.slane %v5012, %v5016
    %v5020 = vunpack.c.l.b16 %v4979
    %v5021 = vunpack.c.h.b16 %v4979
    %v5022 = vpack.c.b16 %v5020, %v5020
    %v5023 = vpack.c.b16 %v5021, %v5021
    %v5058 = vunpack.c.l.b16 %v4980
    %v5059 = vunpack.c.l.b16 %v4981
    %v5060 = vunpack.c.l.b16 %v4982
    %v5061 = vunpack.c.l.b16 %v4983
    %v5062 = vunpack.c.l.b16 %v4984
    %v5063 = vunpack.c.l.b16 %v4985
    %v5064 = vunpack.c.l.b16 %v4986
    %v5065 = vunpack.c.l.b16 %v4987
    %v5066 = vunpack.c.l.b16 %v4988
    %v5067 = vunpack.c.l.b16 %v4989
    %v5068 = vunpack.c.l.b16 %v4990
    %v5069 = vunpack.c.l.b16 %v4991
    %v5070 = vunpack.c.l.b16 %v4992
    %v5071 = vunpack.c.l.b16 %v4993
    %v5072 = vunpack.c.l.b16 %v4994
    %v5073 = vunpack.c.l.b16 %v4995
    %v5074 = vunpack.c.l.b16 %v4996
    %v5075 = vunpack.c.l.b16 %v4997
    %v5076 = vunpack.c.l.b16 %v4998
    %v5077 = vunpack.c.l.b16 %v4999
    %v5078 = vunpack.c.l.b16 %v5000
    %v5079 = vunpack.c.l.b16 %v5001
    %v5080 = vunpack.c.l.b16 %v5002
    %v5081 = vunpack.c.l.b16 %v5003
    %v5082 = vunpack.c.l.b16 %v5004
    %v5083 = vunpack.c.l.b16 %v5005
    %v5084 = vunpack.c.l.b16 %v5006
    %v5085 = vunpack.c.l.b16 %v5007
    %v5086 = vunpack.c.l.b16 %v5008
    %v5087 = vunpack.c.l.b16 %v5009
    %v5088 = vunpack.c.l.b16 %v5010
    %v5089 = vunpack.c.l.b16 %v5011
    %v5090 = vpack.c.b16 %v5059, %v5058
    %v5091 = vpack.c.b16 %v5061, %v5060
    %v5092 = vpack.c.b16 %v5063, %v5062
    %v5093 = vpack.c.b16 %v5065, %v5064
    %v5094 = vpack.c.b16 %v5067, %v5066
    %v5095 = vpack.c.b16 %v5069, %v5068
    %v5096 = vpack.c.b16 %v5071, %v5070
    %v5097 = vpack.c.b16 %v5073, %v5072
    %v5098 = vpack.c.b16 %v5075, %v5074
    %v5099 = vpack.c.b16 %v5077, %v5076
    %v5100 = vpack.c.b16 %v5079, %v5078
    %v5101 = vpack.c.b16 %v5081, %v5080
    %v5102 = vpack.c.b16 %v5083, %v5082
    %v5103 = vpack.c.b16 %v5085, %v5084
    %v5104 = vpack.c.b16 %v5087, %v5086
    %v5105 = vpack.c.b16 %v5089, %v5088
    %5122 = vmatprep.subr.bf16.mxu0 0
    %5123 = vmatpush1.bf16.msra.mxu0 %v5090
    %5124 = vmatprep.subr.bf16.mxu0 0
    %5125 = vmatpush1.bf16.msra.mxu0 %v5091
    %5126 = vmatprep.subr.bf16.mxu0 0
    %5127 = vmatpush1.bf16.msra.mxu0 %v5092
    %5128 = vmatprep.subr.bf16.mxu0 0
    %5129 = vmatpush1.bf16.msra.mxu0 %v5093
    %5130 = vmatprep.subr.bf16.mxu0 0
    %5131 = vmatpush1.bf16.msra.mxu0 %v5094
    %5132 = vmatprep.subr.bf16.mxu0 0
    %5133 = vmatpush1.bf16.msra.mxu0 %v5095
    %5134 = vmatprep.subr.bf16.mxu0 0
    %5135 = vmatpush1.bf16.msra.mxu0 %v5096
    %5136 = vmatprep.subr.bf16.mxu0 0
    %5137 = vmatpush1.bf16.msra.mxu0 %v5097
    %5138 = vmatprep.subr.bf16.mxu0 0
    %5139 = vmatpush1.bf16.msra.mxu0 %v5098
    %5140 = vmatprep.subr.bf16.mxu0 0
    %5141 = vmatpush1.bf16.msra.mxu0 %v5099
    %5142 = vmatprep.subr.bf16.mxu0 0
    %5143 = vmatpush1.bf16.msra.mxu0 %v5100
    %5144 = vmatprep.subr.bf16.mxu0 0
    %5145 = vmatpush1.bf16.msra.mxu0 %v5101
    %5146 = vmatprep.subr.bf16.mxu0 0
    %5147 = vmatpush1.bf16.msra.mxu0 %v5102
    %5148 = vmatprep.subr.bf16.mxu0 0
    %5149 = vmatpush1.bf16.msra.mxu0 %v5103
    %5150 = vmatprep.subr.bf16.mxu0 0
    %5151 = vmatpush1.bf16.msra.mxu0 %v5104
    %5152 = vmatprep.subr.bf16.mxu0 0
    %5153 = vmatpush1.bf16.msra.mxu0 %v5105
    %5154 = vmatprep.mubr.bf16.mxu0 %v5023
    %5155 = vmatmul.mubr.bf16.gmra.mrb[0].mxu0 %v5022
    %v5156 = vpop.f32.mrb[0].mxu0
    %v5157 = vadd.f32 %v5017, %v5156
    %v5158 = vpop.f32.mrb[0].mxu0
    %v5159 = vpop.f32.mrb[0].mxu0
    %v5160 = vpop.f32.mrb[0].mxu0
    %5161 = vdwg.mxu0
    %v5162 = vmax.f32 %v5157, 0.0
    %v5163 = vpack.c.bf16 %v5162, %v5162
    %v5164 = vld [vmem:[#allocation14] sm:$0xf]
    %v5165 = vld [vmem:[#allocation14 + $0x4] sm:$0xf]
    %v5166 = vld [vmem:[#allocation14 + $0x8] sm:$0xf]
    %v5167 = vld [vmem:[#allocation14 + $0xc] sm:$0xf]
    %v5168 = vld [vmem:[#allocation14 + $0x10] sm:$0xf]
    %v5169 = vld [vmem:[#allocation14 + $0x14] sm:$0xf]
    %v5170 = vld [vmem:[#allocation14 + $0x18] sm:$0xf]
    %v5171 = vld [vmem:[#allocation14 + $0x1c] sm:$0xf]
    %v5172 = vld [vmem:[#allocation14 + $0x20] sm:$0xf]
    %v5173 = vld [vmem:[#allocation14 + $0x24] sm:$0xf]
    %v5174 = vld [vmem:[#allocation14 + $0x28] sm:$0xf]
    %v5175 = vld [vmem:[#allocation14 + $0x2c] sm:$0xf]
    %v5176 = vld [vmem:[#allocation14 + $0x30] sm:$0xf]
    %v5177 = vld [vmem:[#allocation14 + $0x34] sm:$0xf]
    %v5178 = vld [vmem:[#allocation14 + $0x38] sm:$0xf]
    %v5179 = vld [vmem:[#allocation14 + $0x3c] sm:$0xf]
    %v5180 = vld [vmem:[%s6] sm:$0x1]
    %v5182 = vlaneseq
    %v5183 = vshrl.u32 %v5182, 7
    %v5184 = vsub.s32 0, %v5183
    %v5185 = vrot.slane %v5180, %v5184
    %v5203 = vunpack.c.l.b16 %v5164
    %v5204 = vunpack.c.l.b16 %v5165
    %v5205 = vunpack.c.l.b16 %v5166
    %v5206 = vunpack.c.l.b16 %v5167
    %v5207 = vunpack.c.l.b16 %v5168
    %v5208 = vunpack.c.l.b16 %v5169
    %v5209 = vunpack.c.l.b16 %v5170
    %v5210 = vunpack.c.l.b16 %v5171
    %v5211 = vunpack.c.l.b16 %v5172
    %v5212 = vunpack.c.l.b16 %v5173
    %v5213 = vunpack.c.l.b16 %v5174
    %v5214 = vunpack.c.l.b16 %v5175
    %v5215 = vunpack.c.l.b16 %v5176
    %v5216 = vunpack.c.l.b16 %v5177
    %v5217 = vunpack.c.l.b16 %v5178
    %v5218 = vunpack.c.l.b16 %v5179
    %v5219 = vpack.c.b16 %v5204, %v5203
    %v5220 = vpack.c.b16 %v5206, %v5205
    %v5221 = vpack.c.b16 %v5208, %v5207
    %v5222 = vpack.c.b16 %v5210, %v5209
    %v5223 = vpack.c.b16 %v5212, %v5211
    %v5224 = vpack.c.b16 %v5214, %v5213
    %v5225 = vpack.c.b16 %v5216, %v5215
    %v5226 = vpack.c.b16 %v5218, %v5217
    %5235 = vmatprep.subr.bf16.mxu0 0
    %5236 = vmatpush1.bf16.msra.mxu0 %v5219
    %5237 = vmatprep.subr.bf16.mxu0 0
    %5238 = vmatpush1.bf16.msra.mxu0 %v5220
    %5239 = vmatprep.subr.bf16.mxu0 0
    %5240 = vmatpush1.bf16.msra.mxu0 %v5221
    %5241 = vmatprep.subr.bf16.mxu0 0
    %5242 = vmatpush1.bf16.msra.mxu0 %v5222
    %5243 = vmatprep.subr.bf16.mxu0 0
    %5244 = vmatpush1.bf16.msra.mxu0 %v5223
    %5245 = vmatprep.subr.bf16.mxu0 0
    %5246 = vmatpush1.bf16.msra.mxu0 %v5224
    %5247 = vmatprep.subr.bf16.mxu0 0
    %5248 = vmatpush1.bf16.msra.mxu0 %v5225
    %5249 = vmatprep.subr.bf16.mxu0 0
    %5250 = vmatpush1.bf16.msra.mxu0 %v5226
    %5251 = vmatprep.subr.bf16.mxu0 0
    %5252 = vmatpush1.bf16.msra.mxu0 0
    %5253 = vmatprep.subr.bf16.mxu0 0
    %5254 = vmatpush1.bf16.msra.mxu0 0
    %5255 = vmatprep.subr.bf16.mxu0 0
    %5256 = vmatpush1.bf16.msra.mxu0 0
    %5257 = vmatprep.subr.bf16.mxu0 0
    %5258 = vmatpush1.bf16.msra.mxu0 0
    %5259 = vmatprep.subr.bf16.mxu0 0
    %5260 = vmatpush1.bf16.msra.mxu0 0
    %5261 = vmatprep.subr.bf16.mxu0 0
    %5262 = vmatpush1.bf16.msra.mxu0 0
    %5263 = vmatprep.subr.bf16.mxu0 0
    %5264 = vmatpush1.bf16.msra.mxu0 0
    %5265 = vmatprep.subr.bf16.mxu0 0
    %5266 = vmatpush1.bf16.msra.mxu0 0
    %5267 = vmatprep.mubr.bf16.mxu0 0
    %5268 = vmatmul.mubr.bf16.gmra.mrb[0].mxu0 %v5163
    %v5269 = vpop.f32.mrb[0].mxu0
    %v5270 = vadd.f32 %v5185, %v5269
    %v5271 = vpop.f32.mrb[0].mxu0
    %v5272 = vpop.f32.mrb[0].mxu0
    %v5273 = vpop.f32.mrb[0].mxu0
    %5274 = vdwg.mxu0
    %s5275 = scalar_lea.vmem [#allocation15], 512
    %v5276 = vld [vmem:[%s5275] sm:$0xf]
    %v5277 = vld [vmem:[%s5275 + $0x4] sm:$0xf]
    %v5278 = vld [vmem:[%s5275 + $0x8] sm:$0xf]
    %v5279 = vld [vmem:[%s5275 + $0xc] sm:$0xf]
    %v5280 = vld [vmem:[%s5275 + $0x10] sm:$0xf]
    %v5281 = vld [vmem:[%s5275 + $0x14] sm:$0xf]
    %v5282 = vld [vmem:[%s5275 + $0x18] sm:$0xf]
    %v5283 = vld [vmem:[%s5275 + $0x1c] sm:$0xf]
    %v5284 = vld [vmem:[%s5275 + $0x20] sm:$0xf]
    %v5285 = vld [vmem:[%s5275 + $0x24] sm:$0xf]
    %v5286 = vld [vmem:[%s5275 + $0x28] sm:$0xf]
    %v5287 = vld [vmem:[%s5275 + $0x2c] sm:$0xf]
    %v5288 = vld [vmem:[%s5275 + $0x30] sm:$0xf]
    %v5289 = vld [vmem:[%s5275 + $0x34] sm:$0xf]
    %v5290 = vld [vmem:[%s5275 + $0x38] sm:$0xf]
    %v5291 = vld [vmem:[%s5275 + $0x3c] sm:$0xf]
    %v5292 = vld [vmem:[%s5275 + $0x40] sm:$0xf]
    %v5293 = vld [vmem:[%s5275 + $0x44] sm:$0xf]
    %v5294 = vld [vmem:[%s5275 + $0x48] sm:$0xf]
    %v5295 = vld [vmem:[%s5275 + $0x4c] sm:$0xf]
    %v5296 = vld [vmem:[%s5275 + $0x50] sm:$0xf]
    %v5297 = vld [vmem:[%s5275 + $0x54] sm:$0xf]
    %v5298 = vld [vmem:[%s5275 + $0x58] sm:$0xf]
    %v5299 = vld [vmem:[%s5275 + $0x5c] sm:$0xf]
    %v5300 = vld [vmem:[%s5275 + $0x60] sm:$0xf]
    %v5301 = vld [vmem:[%s5275 + $0x64] sm:$0xf]
    %v5302 = vld [vmem:[%s5275 + $0x68] sm:$0xf]
    %v5303 = vld [vmem:[%s5275 + $0x6c] sm:$0xf]
    %v5304 = vld [vmem:[%s5275 + $0x70] sm:$0xf]
    %v5305 = vld [vmem:[%s5275 + $0x74] sm:$0xf]
    %v5306 = vld [vmem:[%s5275 + $0x78] sm:$0xf]
    %v5307 = vld [vmem:[%s5275 + $0x7c] sm:$0xf]
    %v5308 = vld [vmem:[%s5275 + $0x80] sm:$0xf]
    %v5309 = vld [vmem:[%s5275 + $0x84] sm:$0xf]
    %v5310 = vld [vmem:[%s5275 + $0x88] sm:$0xf]
    %v5311 = vld [vmem:[%s5275 + $0x8c] sm:$0xf]
    %v5312 = vld [vmem:[%s5275 + $0x90] sm:$0xf]
    %v5313 = vld [vmem:[%s5275 + $0x94] sm:$0xf]
    %v5314 = vld [vmem:[%s5275 + $0x98] sm:$0xf]
    %v5315 = vld [vmem:[%s5275 + $0x9c] sm:$0xf]
    %v5316 = vld [vmem:[%s5275 + $0xa0] sm:$0xf]
    %v5317 = vld [vmem:[%s5275 + $0xa4] sm:$0xf]
    %v5318 = vld [vmem:[%s5275 + $0xa8] sm:$0xf]
    %v5319 = vld [vmem:[%s5275 + $0xac] sm:$0xf]
    %v5320 = vld [vmem:[%s5275 + $0xb0] sm:$0xf]
    %v5321 = vld [vmem:[%s5275 + $0xb4] sm:$0xf]
    %v5322 = vld [vmem:[%s5275 + $0xb8] sm:$0xf]
    %v5323 = vld [vmem:[%s5275 + $0xbc] sm:$0xf]
    %v5324 = vld [vmem:[%s5275 + $0xc0] sm:$0xf]
    %v5325 = vld [vmem:[%s5275 + $0xc4] sm:$0xf]
    %v5326 = vld [vmem:[%s5275 + $0xc8] sm:$0xf]
    %v5327 = vld [vmem:[%s5275 + $0xcc] sm:$0xf]
    %v5328 = vld [vmem:[%s5275 + $0xd0] sm:$0xf]
    %v5329 = vld [vmem:[%s5275 + $0xd4] sm:$0xf]
    %v5330 = vld [vmem:[%s5275 + $0xd8] sm:$0xf]
    %v5331 = vld [vmem:[%s5275 + $0xdc] sm:$0xf]
    %v5332 = vld [vmem:[%s5275 + $0xe0] sm:$0xf]
    %v5333 = vld [vmem:[%s5275 + $0xe4] sm:$0xf]
    %v5334 = vld [vmem:[%s5275 + $0xe8] sm:$0xf]
    %v5335 = vld [vmem:[%s5275 + $0xec] sm:$0xf]
    %v5336 = vld [vmem:[%s5275 + $0xf0] sm:$0xf]
    %v5337 = vld [vmem:[%s5275 + $0xf4] sm:$0xf]
    %v5338 = vld [vmem:[%s5275 + $0xf8] sm:$0xf]
    %v5339 = vld [vmem:[%s5275 + $0xfc] sm:$0xf]
    %v5340 = vld [vmem:[%s5275 + $0x100] sm:$0xf]
    %v5341 = vld [vmem:[%s5275 + $0x104] sm:$0xf]
    %v5342 = vld [vmem:[%s5275 + $0x108] sm:$0xf]
    %v5343 = vld [vmem:[%s5275 + $0x10c] sm:$0xf]
    %v5344 = vld [vmem:[%s5275 + $0x110] sm:$0xf]
    %v5345 = vld [vmem:[%s5275 + $0x114] sm:$0xf]
    %v5346 = vld [vmem:[%s5275 + $0x118] sm:$0xf]
    %v5347 = vld [vmem:[%s5275 + $0x11c] sm:$0xf]
    %v5348 = vld [vmem:[%s5275 + $0x120] sm:$0xf]
    %v5349 = vld [vmem:[%s5275 + $0x124] sm:$0xf]
    %v5350 = vld [vmem:[%s5275 + $0x128] sm:$0xf]
    %v5351 = vld [vmem:[%s5275 + $0x12c] sm:$0xf]
    %v5352 = vld [vmem:[%s5275 + $0x130] sm:$0xf]
    %v5353 = vld [vmem:[%s5275 + $0x134] sm:$0xf]
    %v5354 = vld [vmem:[%s5275 + $0x138] sm:$0xf]
    %v5355 = vld [vmem:[%s5275 + $0x13c] sm:$0xf]
    %v5356 = vld [vmem:[%s5275 + $0x140] sm:$0xf]
    %v5357 = vld [vmem:[%s5275 + $0x144] sm:$0xf]
    %v5358 = vld [vmem:[%s5275 + $0x148] sm:$0xf]
    %v5359 = vld [vmem:[%s5275 + $0x14c] sm:$0xf]
    %v5360 = vld [vmem:[%s5275 + $0x150] sm:$0xf]
    %v5361 = vld [vmem:[%s5275 + $0x154] sm:$0xf]
    %v5362 = vld [vmem:[%s5275 + $0x158] sm:$0xf]
    %v5363 = vld [vmem:[%s5275 + $0x15c] sm:$0xf]
    %v5364 = vld [vmem:[%s5275 + $0x160] sm:$0xf]
    %v5365 = vld [vmem:[%s5275 + $0x164] sm:$0xf]
    %v5366 = vld [vmem:[%s5275 + $0x168] sm:$0xf]
    %v5367 = vld [vmem:[%s5275 + $0x16c] sm:$0xf]
    %v5368 = vld [vmem:[%s5275 + $0x170] sm:$0xf]
    %v5369 = vld [vmem:[%s5275 + $0x174] sm:$0xf]
    %v5370 = vld [vmem:[%s5275 + $0x178] sm:$0xf]
    %v5371 = vld [vmem:[%s5275 + $0x17c] sm:$0xf]
    %v5372 = vld [vmem:[%s5275 + $0x180] sm:$0xf]
    %v5373 = vld [vmem:[%s5275 + $0x184] sm:$0xf]
    %v5374 = vld [vmem:[%s5275 + $0x188] sm:$0xf]
    %v5375 = vld [vmem:[%s5275 + $0x18c] sm:$0xf]
    %v5376 = vld [vmem:[%s5275 + $0x190] sm:$0xf]
    %v5377 = vld [vmem:[%s5275 + $0x194] sm:$0xf]
    %v5378 = vld [vmem:[%s5275 + $0x198] sm:$0xf]
    %v5379 = vld [vmem:[%s5275 + $0x19c] sm:$0xf]
    %v5380 = vld [vmem:[%s5275 + $0x1a0] sm:$0xf]
    %v5381 = vld [vmem:[%s5275 + $0x1a4] sm:$0xf]
    %v5382 = vld [vmem:[%s5275 + $0x1a8] sm:$0xf]
    %v5383 = vld [vmem:[%s5275 + $0x1ac] sm:$0xf]
    %v5384 = vld [vmem:[%s5275 + $0x1b0] sm:$0xf]
    %v5385 = vld [vmem:[%s5275 + $0x1b4] sm:$0xf]
    %v5386 = vld [vmem:[%s5275 + $0x1b8] sm:$0xf]
    %v5387 = vld [vmem:[%s5275 + $0x1bc] sm:$0xf]
    %v5388 = vld [vmem:[%s5275 + $0x1c0] sm:$0xf]
    %v5389 = vld [vmem:[%s5275 + $0x1c4] sm:$0xf]
    %v5390 = vld [vmem:[%s5275 + $0x1c8] sm:$0xf]
    %v5391 = vld [vmem:[%s5275 + $0x1cc] sm:$0xf]
    %v5392 = vld [vmem:[%s5275 + $0x1d0] sm:$0xf]
    %v5393 = vld [vmem:[%s5275 + $0x1d4] sm:$0xf]
    %v5394 = vld [vmem:[%s5275 + $0x1d8] sm:$0xf]
    %v5395 = vld [vmem:[%s5275 + $0x1dc] sm:$0xf]
    %v5396 = vld [vmem:[%s5275 + $0x1e0] sm:$0xf]
    %v5397 = vld [vmem:[%s5275 + $0x1e4] sm:$0xf]
    %v5398 = vld [vmem:[%s5275 + $0x1e8] sm:$0xf]
    %v5399 = vld [vmem:[%s5275 + $0x1ec] sm:$0xf]
    %v5400 = vld [vmem:[%s5275 + $0x1f0] sm:$0xf]
    %v5401 = vld [vmem:[%s5275 + $0x1f4] sm:$0xf]
    %v5402 = vld [vmem:[%s5275 + $0x1f8] sm:$0xf]
    %v5403 = vld [vmem:[%s5275 + $0x1fc] sm:$0xf]
    %v5405 = vcombine.high %v5270, %v5270
    %v5407 = vunpack.c.l.s4 1966171168
    %v5408 = vunpack.c.0.s8 %v5407
    %v5409 = vlaneseq
    %v5410 = vshrl.u32 %v5409, 7
    %v5411 = vsub.s32 %v5408, %v5410
    %v5412 = vrot.slane %v5270, %v5411
    %v5414 = vunpack.c.l.s4 1966171168
    %v5415 = vunpack.c.0.s8 %v5414
    %v5416 = vlaneseq
    %v5417 = vshrl.u32 %v5416, 7
    %v5418 = vsub.s32 %v5415, %v5417
    %v5419 = vrot.slane %v5405, %v5418
    %v5420 = vcombine.high %v5412, %v5412
    %v5421 = vcombine.high %v5419, %v5419
    %v5423 = vunpack.c.l.s4 1966171168
    %v5424 = vunpack.c.0.s8 %v5423
    %v5425 = vlaneseq
    %v5426 = vshrl.u32 %v5425, 7
    %v5427 = vsub.s32 %v5424, %v5426
    %v5428 = vrot.slane %v5412, %v5427
    %v5430 = vunpack.c.l.s4 1966171168
    %v5431 = vunpack.c.0.s8 %v5430
    %v5432 = vlaneseq
    %v5433 = vshrl.u32 %v5432, 7
    %v5434 = vsub.s32 %v5431, %v5433
    %v5435 = vrot.slane %v5419, %v5434
    %v5437 = vunpack.c.l.s4 1966171168
    %v5438 = vunpack.c.0.s8 %v5437
    %v5439 = vlaneseq
    %v5440 = vshrl.u32 %v5439, 7
    %v5441 = vsub.s32 %v5438, %v5440
    %v5442 = vrot.slane %v5420, %v5441
    %v5444 = vunpack.c.l.s4 1966171168
    %v5445 = vunpack.c.0.s8 %v5444
    %v5446 = vlaneseq
    %v5447 = vshrl.u32 %v5446, 7
    %v5448 = vsub.s32 %v5445, %v5447
    %v5449 = vrot.slane %v5421, %v5448
    %v5450 = vcombine.high %v5428, %v5428
    %v5451 = vcombine.high %v5435, %v5435
    %v5452 = vcombine.high %v5442, %v5442
    %v5453 = vcombine.high %v5449, %v5449
    %v5454 = vunpack.c.l.bf16 %v5276
    %v5455 = vunpack.c.l.bf16 %v5277
    %v5456 = vunpack.c.l.bf16 %v5278
    %v5457 = vunpack.c.l.bf16 %v5279
    %v5458 = vunpack.c.l.bf16 %v5280
    %v5459 = vunpack.c.l.bf16 %v5281
    %v5460 = vunpack.c.l.bf16 %v5282
    %v5461 = vunpack.c.l.bf16 %v5283
    %v5462 = vunpack.c.l.bf16 %v5284
    %v5463 = vunpack.c.l.bf16 %v5285
    %v5464 = vunpack.c.l.bf16 %v5286
    %v5465 = vunpack.c.l.bf16 %v5287
    %v5466 = vunpack.c.l.bf16 %v5288
    %v5467 = vunpack.c.l.bf16 %v5289
    %v5468 = vunpack.c.l.bf16 %v5290
    %v5469 = vunpack.c.l.bf16 %v5291
    %v5470 = vunpack.c.l.bf16 %v5292
    %v5471 = vunpack.c.l.bf16 %v5293
    %v5472 = vunpack.c.l.bf16 %v5294
    %v5473 = vunpack.c.l.bf16 %v5295
    %v5474 = vunpack.c.l.bf16 %v5296
    %v5475 = vunpack.c.l.bf16 %v5297
    %v5476 = vunpack.c.l.bf16 %v5298
    %v5477 = vunpack.c.l.bf16 %v5299
    %v5478 = vunpack.c.l.bf16 %v5300
    %v5479 = vunpack.c.l.bf16 %v5301
    %v5480 = vunpack.c.l.bf16 %v5302
    %v5481 = vunpack.c.l.bf16 %v5303
    %v5482 = vunpack.c.l.bf16 %v5304
    %v5483 = vunpack.c.l.bf16 %v5305
    %v5484 = vunpack.c.l.bf16 %v5306
    %v5485 = vunpack.c.l.bf16 %v5307
    %v5486 = vunpack.c.l.bf16 %v5308
    %v5487 = vunpack.c.l.bf16 %v5309
    %v5488 = vunpack.c.l.bf16 %v5310
    %v5489 = vunpack.c.l.bf16 %v5311
    %v5490 = vunpack.c.l.bf16 %v5312
    %v5491 = vunpack.c.l.bf16 %v5313
    %v5492 = vunpack.c.l.bf16 %v5314
    %v5493 = vunpack.c.l.bf16 %v5315
    %v5494 = vunpack.c.l.bf16 %v5316
    %v5495 = vunpack.c.l.bf16 %v5317
    %v5496 = vunpack.c.l.bf16 %v5318
    %v5497 = vunpack.c.l.bf16 %v5319
    %v5498 = vunpack.c.l.bf16 %v5320
    %v5499 = vunpack.c.l.bf16 %v5321
    %v5500 = vunpack.c.l.bf16 %v5322
    %v5501 = vunpack.c.l.bf16 %v5323
    %v5502 = vunpack.c.l.bf16 %v5324
    %v5503 = vunpack.c.l.bf16 %v5325
    %v5504 = vunpack.c.l.bf16 %v5326
    %v5505 = vunpack.c.l.bf16 %v5327
    %v5506 = vunpack.c.l.bf16 %v5328
    %v5507 = vunpack.c.l.bf16 %v5329
    %v5508 = vunpack.c.l.bf16 %v5330
    %v5509 = vunpack.c.l.bf16 %v5331
    %v5510 = vunpack.c.l.bf16 %v5332
    %v5511 = vunpack.c.l.bf16 %v5333
    %v5512 = vunpack.c.l.bf16 %v5334
    %v5513 = vunpack.c.l.bf16 %v5335
    %v5514 = vunpack.c.l.bf16 %v5336
    %v5515 = vunpack.c.l.bf16 %v5337
    %v5516 = vunpack.c.l.bf16 %v5338
    %v5517 = vunpack.c.l.bf16 %v5339
    %v5518 = vunpack.c.l.bf16 %v5340
    %v5519 = vunpack.c.l.bf16 %v5341
    %v5520 = vunpack.c.l.bf16 %v5342
    %v5521 = vunpack.c.l.bf16 %v5343
    %v5522 = vunpack.c.l.bf16 %v5344
    %v5523 = vunpack.c.l.bf16 %v5345
    %v5524 = vunpack.c.l.bf16 %v5346
    %v5525 = vunpack.c.l.bf16 %v5347
    %v5526 = vunpack.c.l.bf16 %v5348
    %v5527 = vunpack.c.l.bf16 %v5349
    %v5528 = vunpack.c.l.bf16 %v5350
    %v5529 = vunpack.c.l.bf16 %v5351
    %v5530 = vunpack.c.l.bf16 %v5352
    %v5531 = vunpack.c.l.bf16 %v5353
    %v5532 = vunpack.c.l.bf16 %v5354
    %v5533 = vunpack.c.l.bf16 %v5355
    %v5534 = vunpack.c.l.bf16 %v5356
    %v5535 = vunpack.c.l.bf16 %v5357
    %v5536 = vunpack.c.l.bf16 %v5358
    %v5537 = vunpack.c.l.bf16 %v5359
    %v5538 = vunpack.c.l.bf16 %v5360
    %v5539 = vunpack.c.l.bf16 %v5361
    %v5540 = vunpack.c.l.bf16 %v5362
    %v5541 = vunpack.c.l.bf16 %v5363
    %v5542 = vunpack.c.l.bf16 %v5364
    %v5543 = vunpack.c.l.bf16 %v5365
    %v5544 = vunpack.c.l.bf16 %v5366
    %v5545 = vunpack.c.l.bf16 %v5367
    %v5546 = vunpack.c.l.bf16 %v5368
    %v5547 = vunpack.c.l.bf16 %v5369
    %v5548 = vunpack.c.l.bf16 %v5370
    %v5549 = vunpack.c.l.bf16 %v5371
    %v5550 = vunpack.c.l.bf16 %v5372
    %v5551 = vunpack.c.l.bf16 %v5373
    %v5552 = vunpack.c.l.bf16 %v5374
    %v5553 = vunpack.c.l.bf16 %v5375
    %v5554 = vunpack.c.l.bf16 %v5376
    %v5555 = vunpack.c.l.bf16 %v5377
    %v5556 = vunpack.c.l.bf16 %v5378
    %v5557 = vunpack.c.l.bf16 %v5379
    %v5558 = vunpack.c.l.bf16 %v5380
    %v5559 = vunpack.c.l.bf16 %v5381
    %v5560 = vunpack.c.l.bf16 %v5382
    %v5561 = vunpack.c.l.bf16 %v5383
    %v5562 = vunpack.c.l.bf16 %v5384
    %v5563 = vunpack.c.l.bf16 %v5385
    %v5564 = vunpack.c.l.bf16 %v5386
    %v5565 = vunpack.c.l.bf16 %v5387
    %v5566 = vunpack.c.l.bf16 %v5388
    %v5567 = vunpack.c.l.bf16 %v5389
    %v5568 = vunpack.c.l.bf16 %v5390
    %v5569 = vunpack.c.l.bf16 %v5391
    %v5570 = vunpack.c.l.bf16 %v5392
    %v5571 = vunpack.c.l.bf16 %v5393
    %v5572 = vunpack.c.l.bf16 %v5394
    %v5573 = vunpack.c.l.bf16 %v5395
    %v5574 = vunpack.c.l.bf16 %v5396
    %v5575 = vunpack.c.l.bf16 %v5397
    %v5576 = vunpack.c.l.bf16 %v5398
    %v5577 = vunpack.c.l.bf16 %v5399
    %v5578 = vunpack.c.l.bf16 %v5400
    %v5579 = vunpack.c.l.bf16 %v5401
    %v5580 = vunpack.c.l.bf16 %v5402
    %v5581 = vunpack.c.l.bf16 %v5403
    %v5582 = vlaneseq
    %v5583 = vshrl.u32 %v5582, 7
    %v5584 = vsub.s32 0, %v5583
    %v5585 = vrot.slane %v5428, %v5584
    %v5586 = vlaneseq
    %v5587 = vshrl.u32 %v5586, 7
    %v5588 = vsub.s32 0, %v5587
    %v5589 = vrot.slane %v5442, %v5588
    %v5590 = vlaneseq
    %v5591 = vshrl.u32 %v5590, 7
    %v5592 = vsub.s32 0, %v5591
    %v5593 = vrot.slane %v5450, %v5592
    %v5594 = vlaneseq
    %v5595 = vshrl.u32 %v5594, 7
    %v5596 = vsub.s32 0, %v5595
    %v5597 = vrot.slane %v5452, %v5596
    %v5598 = vlaneseq
    %v5599 = vshrl.u32 %v5598, 7
    %v5600 = vsub.s32 0, %v5599
    %v5601 = vrot.slane %v5435, %v5600
    %v5602 = vlaneseq
    %v5603 = vshrl.u32 %v5602, 7
    %v5604 = vsub.s32 0, %v5603
    %v5605 = vrot.slane %v5449, %v5604
    %v5606 = vlaneseq
    %v5607 = vshrl.u32 %v5606, 7
    %v5608 = vsub.s32 0, %v5607
    %v5609 = vrot.slane %v5451, %v5608
    %v5610 = vlaneseq
    %v5611 = vshrl.u32 %v5610, 7
    %v5612 = vsub.s32 0, %v5611
    %v5613 = vrot.slane %v5453, %v5612
    %v5622 = vmul.f32 %v5585, %v5454
    %v5623 = vmul.f32 %v5585, %v5455
    %v5624 = vmul.f32 %v5585, %v5456
    %v5625 = vmul.f32 %v5585, %v5457
    %v5626 = vmul.f32 %v5585, %v5458
    %v5627 = vmul.f32 %v5585, %v5459
    %v5628 = vmul.f32 %v5585, %v5460
    %v5629 = vmul.f32 %v5585, %v5461
    %v5630 = vmul.f32 %v5585, %v5462
    %v5631 = vmul.f32 %v5585, %v5463
    %v5632 = vmul.f32 %v5585, %v5464
    %v5633 = vmul.f32 %v5585, %v5465
    %v5634 = vmul.f32 %v5585, %v5466
    %v5635 = vmul.f32 %v5585, %v5467
    %v5636 = vmul.f32 %v5585, %v5468
    %v5637 = vmul.f32 %v5585, %v5469
    %v5638 = vmul.f32 %v5589, %v5470
    %v5639 = vmul.f32 %v5589, %v5471
    %v5640 = vmul.f32 %v5589, %v5472
    %v5641 = vmul.f32 %v5589, %v5473
    %v5642 = vmul.f32 %v5589, %v5474
    %v5643 = vmul.f32 %v5589, %v5475
    %v5644 = vmul.f32 %v5589, %v5476
    %v5645 = vmul.f32 %v5589, %v5477
    %v5646 = vmul.f32 %v5589, %v5478
    %v5647 = vmul.f32 %v5589, %v5479
    %v5648 = vmul.f32 %v5589, %v5480
    %v5649 = vmul.f32 %v5589, %v5481
    %v5650 = vmul.f32 %v5589, %v5482
    %v5651 = vmul.f32 %v5589, %v5483
    %v5652 = vmul.f32 %v5589, %v5484
    %v5653 = vmul.f32 %v5589, %v5485
    %v5654 = vmul.f32 %v5593, %v5486
    %v5655 = vmul.f32 %v5593, %v5487
    %v5656 = vmul.f32 %v5593, %v5488
    %v5657 = vmul.f32 %v5593, %v5489
    %v5658 = vmul.f32 %v5593, %v5490
    %v5659 = vmul.f32 %v5593, %v5491
    %v5660 = vmul.f32 %v5593, %v5492
    %v5661 = vmul.f32 %v5593, %v5493
    %v5662 = vmul.f32 %v5593, %v5494
    %v5663 = vmul.f32 %v5593, %v5495
    %v5664 = vmul.f32 %v5593, %v5496
    %v5665 = vmul.f32 %v5593, %v5497
    %v5666 = vmul.f32 %v5593, %v5498
    %v5667 = vmul.f32 %v5593, %v5499
    %v5668 = vmul.f32 %v5593, %v5500
    %v5669 = vmul.f32 %v5593, %v5501
    %v5670 = vmul.f32 %v5597, %v5502
    %v5671 = vmul.f32 %v5597, %v5503
    %v5672 = vmul.f32 %v5597, %v5504
    %v5673 = vmul.f32 %v5597, %v5505
    %v5674 = vmul.f32 %v5597, %v5506
    %v5675 = vmul.f32 %v5597, %v5507
    %v5676 = vmul.f32 %v5597, %v5508
    %v5677 = vmul.f32 %v5597, %v5509
    %v5678 = vmul.f32 %v5597, %v5510
    %v5679 = vmul.f32 %v5597, %v5511
    %v5680 = vmul.f32 %v5597, %v5512
    %v5681 = vmul.f32 %v5597, %v5513
    %v5682 = vmul.f32 %v5597, %v5514
    %v5683 = vmul.f32 %v5597, %v5515
    %v5684 = vmul.f32 %v5597, %v5516
    %v5685 = vmul.f32 %v5597, %v5517
    %v5686 = vmul.f32 %v5601, %v5518
    %v5687 = vmul.f32 %v5601, %v5519
    %v5688 = vmul.f32 %v5601, %v5520
    %v5689 = vmul.f32 %v5601, %v5521
    %v5690 = vmul.f32 %v5601, %v5522
    %v5691 = vmul.f32 %v5601, %v5523
    %v5692 = vmul.f32 %v5601, %v5524
    %v5693 = vmul.f32 %v5601, %v5525
    %v5694 = vmul.f32 %v5601, %v5526
    %v5695 = vmul.f32 %v5601, %v5527
    %v5696 = vmul.f32 %v5601, %v5528
    %v5697 = vmul.f32 %v5601, %v5529
    %v5698 = vmul.f32 %v5601, %v5530
    %v5699 = vmul.f32 %v5601, %v5531
    %v5700 = vmul.f32 %v5601, %v5532
    %v5701 = vmul.f32 %v5601, %v5533
    %v5702 = vmul.f32 %v5605, %v5534
    %v5703 = vmul.f32 %v5605, %v5535
    %v5704 = vmul.f32 %v5605, %v5536
    %v5705 = vmul.f32 %v5605, %v5537
    %v5706 = vmul.f32 %v5605, %v5538
    %v5707 = vmul.f32 %v5605, %v5539
    %v5708 = vmul.f32 %v5605, %v5540
    %v5709 = vmul.f32 %v5605, %v5541
    %v5710 = vmul.f32 %v5605, %v5542
    %v5711 = vmul.f32 %v5605, %v5543
    %v5712 = vmul.f32 %v5605, %v5544
    %v5713 = vmul.f32 %v5605, %v5545
    %v5714 = vmul.f32 %v5605, %v5546
    %v5715 = vmul.f32 %v5605, %v5547
    %v5716 = vmul.f32 %v5605, %v5548
    %v5717 = vmul.f32 %v5605, %v5549
    %v5718 = vmul.f32 %v5609, %v5550
    %v5719 = vmul.f32 %v5609, %v5551
    %v5720 = vmul.f32 %v5609, %v5552
    %v5721 = vmul.f32 %v5609, %v5553
    %v5722 = vmul.f32 %v5609, %v5554
    %v5723 = vmul.f32 %v5609, %v5555
    %v5724 = vmul.f32 %v5609, %v5556
    %v5725 = vmul.f32 %v5609, %v5557
    %v5726 = vmul.f32 %v5609, %v5558
    %v5727 = vmul.f32 %v5609, %v5559
    %v5728 = vmul.f32 %v5609, %v5560
    %v5729 = vmul.f32 %v5609, %v5561
    %v5730 = vmul.f32 %v5609, %v5562
    %v5731 = vmul.f32 %v5609, %v5563
    %v5732 = vmul.f32 %v5609, %v5564
    %v5733 = vmul.f32 %v5609, %v5565
    %v5734 = vmul.f32 %v5613, %v5566
    %v5735 = vmul.f32 %v5613, %v5567
    %v5736 = vmul.f32 %v5613, %v5568
    %v5737 = vmul.f32 %v5613, %v5569
    %v5738 = vmul.f32 %v5613, %v5570
    %v5739 = vmul.f32 %v5613, %v5571
    %v5740 = vmul.f32 %v5613, %v5572
    %v5741 = vmul.f32 %v5613, %v5573
    %v5742 = vmul.f32 %v5613, %v5574
    %v5743 = vmul.f32 %v5613, %v5575
    %v5744 = vmul.f32 %v5613, %v5576
    %v5745 = vmul.f32 %v5613, %v5577
    %v5746 = vmul.f32 %v5613, %v5578
    %v5747 = vmul.f32 %v5613, %v5579
    %v5748 = vmul.f32 %v5613, %v5580
    %v5749 = vmul.f32 %v5613, %v5581
    %5750 = vadd.xlane.f32.xlu0 %v5622
    %v5751 = vpop.xlane.xlu0 %5750
    %5752 = vadd.xlane.f32.xlu0 %v5623
    %v5753 = vpop.xlane.xlu0 %5752
    %5754 = vadd.xlane.f32.xlu0 %v5624
    %v5755 = vpop.xlane.xlu0 %5754
    %5756 = vadd.xlane.f32.xlu0 %v5625
    %v5757 = vpop.xlane.xlu0 %5756
    %5758 = vadd.xlane.f32.xlu0 %v5626
    %v5759 = vpop.xlane.xlu0 %5758
    %5760 = vadd.xlane.f32.xlu0 %v5627
    %v5761 = vpop.xlane.xlu0 %5760
    %5762 = vadd.xlane.f32.xlu0 %v5628
    %v5763 = vpop.xlane.xlu0 %5762
    %5764 = vadd.xlane.f32.xlu0 %v5629
    %v5765 = vpop.xlane.xlu0 %5764
    %5766 = vadd.xlane.f32.xlu0 %v5630
    %v5767 = vpop.xlane.xlu0 %5766
    %5768 = vadd.xlane.f32.xlu0 %v5631
    %v5769 = vpop.xlane.xlu0 %5768
    %5770 = vadd.xlane.f32.xlu0 %v5632
    %v5771 = vpop.xlane.xlu0 %5770
    %5772 = vadd.xlane.f32.xlu0 %v5633
    %v5773 = vpop.xlane.xlu0 %5772
    %5774 = vadd.xlane.f32.xlu0 %v5634
    %v5775 = vpop.xlane.xlu0 %5774
    %5776 = vadd.xlane.f32.xlu0 %v5635
    %v5777 = vpop.xlane.xlu0 %5776
    %5778 = vadd.xlane.f32.xlu0 %v5636
    %v5779 = vpop.xlane.xlu0 %5778
    %5780 = vadd.xlane.f32.xlu0 %v5637
    %v5781 = vpop.xlane.xlu0 %5780
    %5782 = vadd.xlane.f32.xlu0 %v5638
    %v5783 = vpop.xlane.xlu0 %5782
    %5784 = vadd.xlane.f32.xlu0 %v5639
    %v5785 = vpop.xlane.xlu0 %5784
    %5786 = vadd.xlane.f32.xlu0 %v5640
    %v5787 = vpop.xlane.xlu0 %5786
    %5788 = vadd.xlane.f32.xlu0 %v5641
    %v5789 = vpop.xlane.xlu0 %5788
    %5790 = vadd.xlane.f32.xlu0 %v5642
    %v5791 = vpop.xlane.xlu0 %5790
    %5792 = vadd.xlane.f32.xlu0 %v5643
    %v5793 = vpop.xlane.xlu0 %5792
    %5794 = vadd.xlane.f32.xlu0 %v5644
    %v5795 = vpop.xlane.xlu0 %5794
    %5796 = vadd.xlane.f32.xlu0 %v5645
    %v5797 = vpop.xlane.xlu0 %5796
    %5798 = vadd.xlane.f32.xlu0 %v5646
    %v5799 = vpop.xlane.xlu0 %5798
    %5800 = vadd.xlane.f32.xlu0 %v5647
    %v5801 = vpop.xlane.xlu0 %5800
    %5802 = vadd.xlane.f32.xlu0 %v5648
    %v5803 = vpop.xlane.xlu0 %5802
    %5804 = vadd.xlane.f32.xlu0 %v5649
    %v5805 = vpop.xlane.xlu0 %5804
    %5806 = vadd.xlane.f32.xlu0 %v5650
    %v5807 = vpop.xlane.xlu0 %5806
    %5808 = vadd.xlane.f32.xlu0 %v5651
    %v5809 = vpop.xlane.xlu0 %5808
    %5810 = vadd.xlane.f32.xlu0 %v5652
    %v5811 = vpop.xlane.xlu0 %5810
    %5812 = vadd.xlane.f32.xlu0 %v5653
    %v5813 = vpop.xlane.xlu0 %5812
    %5814 = vadd.xlane.f32.xlu0 %v5654
    %v5815 = vpop.xlane.xlu0 %5814
    %5816 = vadd.xlane.f32.xlu0 %v5655
    %v5817 = vpop.xlane.xlu0 %5816
    %5818 = vadd.xlane.f32.xlu0 %v5656
    %v5819 = vpop.xlane.xlu0 %5818
    %5820 = vadd.xlane.f32.xlu0 %v5657
    %v5821 = vpop.xlane.xlu0 %5820
    %5822 = vadd.xlane.f32.xlu0 %v5658
    %v5823 = vpop.xlane.xlu0 %5822
    %5824 = vadd.xlane.f32.xlu0 %v5659
    %v5825 = vpop.xlane.xlu0 %5824
    %5826 = vadd.xlane.f32.xlu0 %v5660
    %v5827 = vpop.xlane.xlu0 %5826
    %5828 = vadd.xlane.f32.xlu0 %v5661
    %v5829 = vpop.xlane.xlu0 %5828
    %5830 = vadd.xlane.f32.xlu0 %v5662
    %v5831 = vpop.xlane.xlu0 %5830
    %5832 = vadd.xlane.f32.xlu0 %v5663
    %v5833 = vpop.xlane.xlu0 %5832
    %5834 = vadd.xlane.f32.xlu0 %v5664
    %v5835 = vpop.xlane.xlu0 %5834
    %5836 = vadd.xlane.f32.xlu0 %v5665
    %v5837 = vpop.xlane.xlu0 %5836
    %5838 = vadd.xlane.f32.xlu0 %v5666
    %v5839 = vpop.xlane.xlu0 %5838
    %5840 = vadd.xlane.f32.xlu0 %v5667
    %v5841 = vpop.xlane.xlu0 %5840
    %5842 = vadd.xlane.f32.xlu0 %v5668
    %v5843 = vpop.xlane.xlu0 %5842
    %5844 = vadd.xlane.f32.xlu0 %v5669
    %v5845 = vpop.xlane.xlu0 %5844
    %5846 = vadd.xlane.f32.xlu0 %v5670
    %v5847 = vpop.xlane.xlu0 %5846
    %5848 = vadd.xlane.f32.xlu0 %v5671
    %v5849 = vpop.xlane.xlu0 %5848
    %5850 = vadd.xlane.f32.xlu0 %v5672
    %v5851 = vpop.xlane.xlu0 %5850
    %5852 = vadd.xlane.f32.xlu0 %v5673
    %v5853 = vpop.xlane.xlu0 %5852
    %5854 = vadd.xlane.f32.xlu0 %v5674
    %v5855 = vpop.xlane.xlu0 %5854
    %5856 = vadd.xlane.f32.xlu0 %v5675
    %v5857 = vpop.xlane.xlu0 %5856
    %5858 = vadd.xlane.f32.xlu0 %v5676
    %v5859 = vpop.xlane.xlu0 %5858
    %5860 = vadd.xlane.f32.xlu0 %v5677
    %v5861 = vpop.xlane.xlu0 %5860
    %5862 = vadd.xlane.f32.xlu0 %v5678
    %v5863 = vpop.xlane.xlu0 %5862
    %5864 = vadd.xlane.f32.xlu0 %v5679
    %v5865 = vpop.xlane.xlu0 %5864
    %5866 = vadd.xlane.f32.xlu0 %v5680
    %v5867 = vpop.xlane.xlu0 %5866
    %5868 = vadd.xlane.f32.xlu0 %v5681
    %v5869 = vpop.xlane.xlu0 %5868
    %5870 = vadd.xlane.f32.xlu0 %v5682
    %v5871 = vpop.xlane.xlu0 %5870
    %5872 = vadd.xlane.f32.xlu0 %v5683
    %v5873 = vpop.xlane.xlu0 %5872
    %5874 = vadd.xlane.f32.xlu0 %v5684
    %v5875 = vpop.xlane.xlu0 %5874
    %5876 = vadd.xlane.f32.xlu0 %v5685
    %v5877 = vpop.xlane.xlu0 %5876
    %5878 = vadd.xlane.f32.xlu0 %v5686
    %v5879 = vpop.xlane.xlu0 %5878
    %5880 = vadd.xlane.f32.xlu0 %v5687
    %v5881 = vpop.xlane.xlu0 %5880
    %5882 = vadd.xlane.f32.xlu0 %v5688
    %v5883 = vpop.xlane.xlu0 %5882
    %5884 = vadd.xlane.f32.xlu0 %v5689
    %v5885 = vpop.xlane.xlu0 %5884
    %5886 = vadd.xlane.f32.xlu0 %v5690
    %v5887 = vpop.xlane.xlu0 %5886
    %5888 = vadd.xlane.f32.xlu0 %v5691
    %v5889 = vpop.xlane.xlu0 %5888
    %5890 = vadd.xlane.f32.xlu0 %v5692
    %v5891 = vpop.xlane.xlu0 %5890
    %5892 = vadd.xlane.f32.xlu0 %v5693
    %v5893 = vpop.xlane.xlu0 %5892
    %5894 = vadd.xlane.f32.xlu0 %v5694
    %v5895 = vpop.xlane.xlu0 %5894
    %5896 = vadd.xlane.f32.xlu0 %v5695
    %v5897 = vpop.xlane.xlu0 %5896
    %5898 = vadd.xlane.f32.xlu0 %v5696
    %v5899 = vpop.xlane.xlu0 %5898
    %5900 = vadd.xlane.f32.xlu0 %v5697
    %v5901 = vpop.xlane.xlu0 %5900
    %5902 = vadd.xlane.f32.xlu0 %v5698
    %v5903 = vpop.xlane.xlu0 %5902
    %5904 = vadd.xlane.f32.xlu0 %v5699
    %v5905 = vpop.xlane.xlu0 %5904
    %5906 = vadd.xlane.f32.xlu0 %v5700
    %v5907 = vpop.xlane.xlu0 %5906
    %5908 = vadd.xlane.f32.xlu0 %v5701
    %v5909 = vpop.xlane.xlu0 %5908
    %5910 = vadd.xlane.f32.xlu0 %v5702
    %v5911 = vpop.xlane.xlu0 %5910
    %5912 = vadd.xlane.f32.xlu0 %v5703
    %v5913 = vpop.xlane.xlu0 %5912
    %5914 = vadd.xlane.f32.xlu0 %v5704
    %v5915 = vpop.xlane.xlu0 %5914
    %5916 = vadd.xlane.f32.xlu0 %v5705
    %v5917 = vpop.xlane.xlu0 %5916
    %5918 = vadd.xlane.f32.xlu0 %v5706
    %v5919 = vpop.xlane.xlu0 %5918
    %5920 = vadd.xlane.f32.xlu0 %v5707
    %v5921 = vpop.xlane.xlu0 %5920
    %5922 = vadd.xlane.f32.xlu0 %v5708
    %v5923 = vpop.xlane.xlu0 %5922
    %5924 = vadd.xlane.f32.xlu0 %v5709
    %v5925 = vpop.xlane.xlu0 %5924
    %5926 = vadd.xlane.f32.xlu0 %v5710
    %v5927 = vpop.xlane.xlu0 %5926
    %5928 = vadd.xlane.f32.xlu0 %v5711
    %v5929 = vpop.xlane.xlu0 %5928
    %5930 = vadd.xlane.f32.xlu0 %v5712
    %v5931 = vpop.xlane.xlu0 %5930
    %5932 = vadd.xlane.f32.xlu0 %v5713
    %v5933 = vpop.xlane.xlu0 %5932
    %5934 = vadd.xlane.f32.xlu0 %v5714
    %v5935 = vpop.xlane.xlu0 %5934
    %5936 = vadd.xlane.f32.xlu0 %v5715
    %v5937 = vpop.xlane.xlu0 %5936
    %5938 = vadd.xlane.f32.xlu0 %v5716
    %v5939 = vpop.xlane.xlu0 %5938
    %5940 = vadd.xlane.f32.xlu0 %v5717
    %v5941 = vpop.xlane.xlu0 %5940
    %5942 = vadd.xlane.f32.xlu0 %v5718
    %v5943 = vpop.xlane.xlu0 %5942
    %5944 = vadd.xlane.f32.xlu0 %v5719
    %v5945 = vpop.xlane.xlu0 %5944
    %5946 = vadd.xlane.f32.xlu0 %v5720
    %v5947 = vpop.xlane.xlu0 %5946
    %5948 = vadd.xlane.f32.xlu0 %v5721
    %v5949 = vpop.xlane.xlu0 %5948
    %5950 = vadd.xlane.f32.xlu0 %v5722
    %v5951 = vpop.xlane.xlu0 %5950
    %5952 = vadd.xlane.f32.xlu0 %v5723
    %v5953 = vpop.xlane.xlu0 %5952
    %5954 = vadd.xlane.f32.xlu0 %v5724
    %v5955 = vpop.xlane.xlu0 %5954
    %5956 = vadd.xlane.f32.xlu0 %v5725
    %v5957 = vpop.xlane.xlu0 %5956
    %5958 = vadd.xlane.f32.xlu0 %v5726
    %v5959 = vpop.xlane.xlu0 %5958
    %5960 = vadd.xlane.f32.xlu0 %v5727
    %v5961 = vpop.xlane.xlu0 %5960
    %5962 = vadd.xlane.f32.xlu0 %v5728
    %v5963 = vpop.xlane.xlu0 %5962
    %5964 = vadd.xlane.f32.xlu0 %v5729
    %v5965 = vpop.xlane.xlu0 %5964
    %5966 = vadd.xlane.f32.xlu0 %v5730
    %v5967 = vpop.xlane.xlu0 %5966
    %5968 = vadd.xlane.f32.xlu0 %v5731
    %v5969 = vpop.xlane.xlu0 %5968
    %5970 = vadd.xlane.f32.xlu0 %v5732
    %v5971 = vpop.xlane.xlu0 %5970
    %5972 = vadd.xlane.f32.xlu0 %v5733
    %v5973 = vpop.xlane.xlu0 %5972
    %5974 = vadd.xlane.f32.xlu0 %v5734
    %v5975 = vpop.xlane.xlu0 %5974
    %5976 = vadd.xlane.f32.xlu0 %v5735
    %v5977 = vpop.xlane.xlu0 %5976
    %5978 = vadd.xlane.f32.xlu0 %v5736
    %v5979 = vpop.xlane.xlu0 %5978
    %5980 = vadd.xlane.f32.xlu0 %v5737
    %v5981 = vpop.xlane.xlu0 %5980
    %5982 = vadd.xlane.f32.xlu0 %v5738
    %v5983 = vpop.xlane.xlu0 %5982
    %5984 = vadd.xlane.f32.xlu0 %v5739
    %v5985 = vpop.xlane.xlu0 %5984
    %5986 = vadd.xlane.f32.xlu0 %v5740
    %v5987 = vpop.xlane.xlu0 %5986
    %5988 = vadd.xlane.f32.xlu0 %v5741
    %v5989 = vpop.xlane.xlu0 %5988
    %5990 = vadd.xlane.f32.xlu0 %v5742
    %v5991 = vpop.xlane.xlu0 %5990
    %5992 = vadd.xlane.f32.xlu0 %v5743
    %v5993 = vpop.xlane.xlu0 %5992
    %5994 = vadd.xlane.f32.xlu0 %v5744
    %v5995 = vpop.xlane.xlu0 %5994
    %5996 = vadd.xlane.f32.xlu0 %v5745
    %v5997 = vpop.xlane.xlu0 %5996
    %5998 = vadd.xlane.f32.xlu0 %v5746
    %v5999 = vpop.xlane.xlu0 %5998
    %6000 = vadd.xlane.f32.xlu0 %v5747
    %v6001 = vpop.xlane.xlu0 %6000
    %6002 = vadd.xlane.f32.xlu0 %v5748
    %v6003 = vpop.xlane.xlu0 %6002
    %6004 = vadd.xlane.f32.xlu0 %v5749
    %v6005 = vpop.xlane.xlu0 %6004
    %s6006 = scalar_lea.vmem %s8, 8
    %v6007 = vld [vmem:[%s6006] sm:$0xff]
    %vm6008 = vcmp.gt.f32.partialorder %v6007, 0.5
    %v6137 = vlaneseq
    %v6138 = vshrl.u32 %v6137, 7
    %v6139 = vsub.s32 %v2348, %v6138
    %v6140 = vrot.slane %v5751, %v6139
    %v6141 = vlaneseq
    %v6142 = vshrl.u32 %v6141, 7
    %v6143 = vsub.s32 %v2353, %v6142
    %v6144 = vrot.slane %v5753, %v6143
    %v6145 = vsel %vm2358, %v6144, %v6140
    %v6146 = vlaneseq
    %v6147 = vshrl.u32 %v6146, 7
    %v6148 = vsub.s32 %v2360, %v6147
    %v6149 = vrot.slane %v5755, %v6148
    %v6150 = vsel %vm2365, %v6149, %v6145
    %v6151 = vlaneseq
    %v6152 = vshrl.u32 %v6151, 7
    %v6153 = vsub.s32 %v2367, %v6152
    %v6154 = vrot.slane %v5757, %v6153
    %v6155 = vsel %vm2372, %v6154, %v6150
    %v6156 = vlaneseq
    %v6157 = vshrl.u32 %v6156, 7
    %v6158 = vsub.s32 %v2374, %v6157
    %v6159 = vrot.slane %v5759, %v6158
    %v6160 = vsel %vm2379, %v6159, %v6155
    %v6161 = vlaneseq
    %v6162 = vshrl.u32 %v6161, 7
    %v6163 = vsub.s32 %v2381, %v6162
    %v6164 = vrot.slane %v5761, %v6163
    %v6165 = vsel %vm2386, %v6164, %v6160
    %v6166 = vlaneseq
    %v6167 = vshrl.u32 %v6166, 7
    %v6168 = vsub.s32 %v2388, %v6167
    %v6169 = vrot.slane %v5763, %v6168
    %v6170 = vsel %vm2393, %v6169, %v6165
    %v6171 = vlaneseq
    %v6172 = vshrl.u32 %v6171, 7
    %v6173 = vsub.s32 %v2395, %v6172
    %v6174 = vrot.slane %v5765, %v6173
    %v6175 = vsel %vm2400, %v6174, %v6170
    %v6176 = vlaneseq
    %v6177 = vshrl.u32 %v6176, 7
    %v6178 = vsub.s32 %v2402, %v6177
    %v6179 = vrot.slane %v5767, %v6178
    %v6180 = vsel %vm2407, %v6179, %v6175
    %v6181 = vlaneseq
    %v6182 = vshrl.u32 %v6181, 7
    %v6183 = vsub.s32 %v2409, %v6182
    %v6184 = vrot.slane %v5769, %v6183
    %v6185 = vsel %vm2414, %v6184, %v6180
    %v6186 = vlaneseq
    %v6187 = vshrl.u32 %v6186, 7
    %v6188 = vsub.s32 %v2416, %v6187
    %v6189 = vrot.slane %v5771, %v6188
    %v6190 = vsel %vm2421, %v6189, %v6185
    %v6191 = vlaneseq
    %v6192 = vshrl.u32 %v6191, 7
    %v6193 = vsub.s32 %v2423, %v6192
    %v6194 = vrot.slane %v5773, %v6193
    %v6195 = vsel %vm2428, %v6194, %v6190
    %v6196 = vlaneseq
    %v6197 = vshrl.u32 %v6196, 7
    %v6198 = vsub.s32 %v2430, %v6197
    %v6199 = vrot.slane %v5775, %v6198
    %v6200 = vsel %vm2435, %v6199, %v6195
    %v6201 = vlaneseq
    %v6202 = vshrl.u32 %v6201, 7
    %v6203 = vsub.s32 %v2437, %v6202
    %v6204 = vrot.slane %v5777, %v6203
    %v6205 = vsel %vm2442, %v6204, %v6200
    %v6206 = vlaneseq
    %v6207 = vshrl.u32 %v6206, 7
    %v6208 = vsub.s32 %v2444, %v6207
    %v6209 = vrot.slane %v5779, %v6208
    %v6210 = vsel %vm2449, %v6209, %v6205
    %v6211 = vlaneseq
    %v6212 = vshrl.u32 %v6211, 7
    %v6213 = vsub.s32 %v2451, %v6212
    %v6214 = vrot.slane %v5781, %v6213
    %v6215 = vsel %vm2456, %v6214, %v6210
    %v6216 = vlaneseq
    %v6217 = vshrl.u32 %v6216, 7
    %v6218 = vsub.s32 %v2348, %v6217
    %v6219 = vrot.slane %v5783, %v6218
    %v6220 = vlaneseq
    %v6221 = vshrl.u32 %v6220, 7
    %v6222 = vsub.s32 %v2353, %v6221
    %v6223 = vrot.slane %v5785, %v6222
    %v6224 = vsel %vm2358, %v6223, %v6219
    %v6225 = vlaneseq
    %v6226 = vshrl.u32 %v6225, 7
    %v6227 = vsub.s32 %v2360, %v6226
    %v6228 = vrot.slane %v5787, %v6227
    %v6229 = vsel %vm2365, %v6228, %v6224
    %v6230 = vlaneseq
    %v6231 = vshrl.u32 %v6230, 7
    %v6232 = vsub.s32 %v2367, %v6231
    %v6233 = vrot.slane %v5789, %v6232
    %v6234 = vsel %vm2372, %v6233, %v6229
    %v6235 = vlaneseq
    %v6236 = vshrl.u32 %v6235, 7
    %v6237 = vsub.s32 %v2374, %v6236
    %v6238 = vrot.slane %v5791, %v6237
    %v6239 = vsel %vm2379, %v6238, %v6234
    %v6240 = vlaneseq
    %v6241 = vshrl.u32 %v6240, 7
    %v6242 = vsub.s32 %v2381, %v6241
    %v6243 = vrot.slane %v5793, %v6242
    %v6244 = vsel %vm2386, %v6243, %v6239
    %v6245 = vlaneseq
    %v6246 = vshrl.u32 %v6245, 7
    %v6247 = vsub.s32 %v2388, %v6246
    %v6248 = vrot.slane %v5795, %v6247
    %v6249 = vsel %vm2393, %v6248, %v6244
    %v6250 = vlaneseq
    %v6251 = vshrl.u32 %v6250, 7
    %v6252 = vsub.s32 %v2395, %v6251
    %v6253 = vrot.slane %v5797, %v6252
    %v6254 = vsel %vm2400, %v6253, %v6249
    %v6255 = vlaneseq
    %v6256 = vshrl.u32 %v6255, 7
    %v6257 = vsub.s32 %v2402, %v6256
    %v6258 = vrot.slane %v5799, %v6257
    %v6259 = vsel %vm2407, %v6258, %v6254
    %v6260 = vlaneseq
    %v6261 = vshrl.u32 %v6260, 7
    %v6262 = vsub.s32 %v2409, %v6261
    %v6263 = vrot.slane %v5801, %v6262
    %v6264 = vsel %vm2414, %v6263, %v6259
    %v6265 = vlaneseq
    %v6266 = vshrl.u32 %v6265, 7
    %v6267 = vsub.s32 %v2416, %v6266
    %v6268 = vrot.slane %v5803, %v6267
    %v6269 = vsel %vm2421, %v6268, %v6264
    %v6270 = vlaneseq
    %v6271 = vshrl.u32 %v6270, 7
    %v6272 = vsub.s32 %v2423, %v6271
    %v6273 = vrot.slane %v5805, %v6272
    %v6274 = vsel %vm2428, %v6273, %v6269
    %v6275 = vlaneseq
    %v6276 = vshrl.u32 %v6275, 7
    %v6277 = vsub.s32 %v2430, %v6276
    %v6278 = vrot.slane %v5807, %v6277
    %v6279 = vsel %vm2435, %v6278, %v6274
    %v6280 = vlaneseq
    %v6281 = vshrl.u32 %v6280, 7
    %v6282 = vsub.s32 %v2437, %v6281
    %v6283 = vrot.slane %v5809, %v6282
    %v6284 = vsel %vm2442, %v6283, %v6279
    %v6285 = vlaneseq
    %v6286 = vshrl.u32 %v6285, 7
    %v6287 = vsub.s32 %v2444, %v6286
    %v6288 = vrot.slane %v5811, %v6287
    %v6289 = vsel %vm2449, %v6288, %v6284
    %v6290 = vlaneseq
    %v6291 = vshrl.u32 %v6290, 7
    %v6292 = vsub.s32 %v2451, %v6291
    %v6293 = vrot.slane %v5813, %v6292
    %v6294 = vsel %vm2456, %v6293, %v6289
    %v6295 = vlaneseq
    %v6296 = vshrl.u32 %v6295, 7
    %v6297 = vsub.s32 %v2348, %v6296
    %v6298 = vrot.slane %v5815, %v6297
    %v6299 = vlaneseq
    %v6300 = vshrl.u32 %v6299, 7
    %v6301 = vsub.s32 %v2353, %v6300
    %v6302 = vrot.slane %v5817, %v6301
    %v6303 = vsel %vm2358, %v6302, %v6298
    %v6304 = vlaneseq
    %v6305 = vshrl.u32 %v6304, 7
    %v6306 = vsub.s32 %v2360, %v6305
    %v6307 = vrot.slane %v5819, %v6306
    %v6308 = vsel %vm2365, %v6307, %v6303
    %v6309 = vlaneseq
    %v6310 = vshrl.u32 %v6309, 7
    %v6311 = vsub.s32 %v2367, %v6310
    %v6312 = vrot.slane %v5821, %v6311
    %v6313 = vsel %vm2372, %v6312, %v6308
    %v6314 = vlaneseq
    %v6315 = vshrl.u32 %v6314, 7
    %v6316 = vsub.s32 %v2374, %v6315
    %v6317 = vrot.slane %v5823, %v6316
    %v6318 = vsel %vm2379, %v6317, %v6313
    %v6319 = vlaneseq
    %v6320 = vshrl.u32 %v6319, 7
    %v6321 = vsub.s32 %v2381, %v6320
    %v6322 = vrot.slane %v5825, %v6321
    %v6323 = vsel %vm2386, %v6322, %v6318
    %v6324 = vlaneseq
    %v6325 = vshrl.u32 %v6324, 7
    %v6326 = vsub.s32 %v2388, %v6325
    %v6327 = vrot.slane %v5827, %v6326
    %v6328 = vsel %vm2393, %v6327, %v6323
    %v6329 = vlaneseq
    %v6330 = vshrl.u32 %v6329, 7
    %v6331 = vsub.s32 %v2395, %v6330
    %v6332 = vrot.slane %v5829, %v6331
    %v6333 = vsel %vm2400, %v6332, %v6328
    %v6334 = vlaneseq
    %v6335 = vshrl.u32 %v6334, 7
    %v6336 = vsub.s32 %v2402, %v6335
    %v6337 = vrot.slane %v5831, %v6336
    %v6338 = vsel %vm2407, %v6337, %v6333
    %v6339 = vlaneseq
    %v6340 = vshrl.u32 %v6339, 7
    %v6341 = vsub.s32 %v2409, %v6340
    %v6342 = vrot.slane %v5833, %v6341
    %v6343 = vsel %vm2414, %v6342, %v6338
    %v6344 = vlaneseq
    %v6345 = vshrl.u32 %v6344, 7
    %v6346 = vsub.s32 %v2416, %v6345
    %v6347 = vrot.slane %v5835, %v6346
    %v6348 = vsel %vm2421, %v6347, %v6343
    %v6349 = vlaneseq
    %v6350 = vshrl.u32 %v6349, 7
    %v6351 = vsub.s32 %v2423, %v6350
    %v6352 = vrot.slane %v5837, %v6351
    %v6353 = vsel %vm2428, %v6352, %v6348
    %v6354 = vlaneseq
    %v6355 = vshrl.u32 %v6354, 7
    %v6356 = vsub.s32 %v2430, %v6355
    %v6357 = vrot.slane %v5839, %v6356
    %v6358 = vsel %vm2435, %v6357, %v6353
    %v6359 = vlaneseq
    %v6360 = vshrl.u32 %v6359, 7
    %v6361 = vsub.s32 %v2437, %v6360
    %v6362 = vrot.slane %v5841, %v6361
    %v6363 = vsel %vm2442, %v6362, %v6358
    %v6364 = vlaneseq
    %v6365 = vshrl.u32 %v6364, 7
    %v6366 = vsub.s32 %v2444, %v6365
    %v6367 = vrot.slane %v5843, %v6366
    %v6368 = vsel %vm2449, %v6367, %v6363
    %v6369 = vlaneseq
    %v6370 = vshrl.u32 %v6369, 7
    %v6371 = vsub.s32 %v2451, %v6370
    %v6372 = vrot.slane %v5845, %v6371
    %v6373 = vsel %vm2456, %v6372, %v6368
    %v6374 = vlaneseq
    %v6375 = vshrl.u32 %v6374, 7
    %v6376 = vsub.s32 %v2348, %v6375
    %v6377 = vrot.slane %v5847, %v6376
    %v6378 = vlaneseq
    %v6379 = vshrl.u32 %v6378, 7
    %v6380 = vsub.s32 %v2353, %v6379
    %v6381 = vrot.slane %v5849, %v6380
    %v6382 = vsel %vm2358, %v6381, %v6377
    %v6383 = vlaneseq
    %v6384 = vshrl.u32 %v6383, 7
    %v6385 = vsub.s32 %v2360, %v6384
    %v6386 = vrot.slane %v5851, %v6385
    %v6387 = vsel %vm2365, %v6386, %v6382
    %v6388 = vlaneseq
    %v6389 = vshrl.u32 %v6388, 7
    %v6390 = vsub.s32 %v2367, %v6389
    %v6391 = vrot.slane %v5853, %v6390
    %v6392 = vsel %vm2372, %v6391, %v6387
    %v6393 = vlaneseq
    %v6394 = vshrl.u32 %v6393, 7
    %v6395 = vsub.s32 %v2374, %v6394
    %v6396 = vrot.slane %v5855, %v6395
    %v6397 = vsel %vm2379, %v6396, %v6392
    %v6398 = vlaneseq
    %v6399 = vshrl.u32 %v6398, 7
    %v6400 = vsub.s32 %v2381, %v6399
    %v6401 = vrot.slane %v5857, %v6400
    %v6402 = vsel %vm2386, %v6401, %v6397
    %v6403 = vlaneseq
    %v6404 = vshrl.u32 %v6403, 7
    %v6405 = vsub.s32 %v2388, %v6404
    %v6406 = vrot.slane %v5859, %v6405
    %v6407 = vsel %vm2393, %v6406, %v6402
    %v6408 = vlaneseq
    %v6409 = vshrl.u32 %v6408, 7
    %v6410 = vsub.s32 %v2395, %v6409
    %v6411 = vrot.slane %v5861, %v6410
    %v6412 = vsel %vm2400, %v6411, %v6407
    %v6413 = vlaneseq
    %v6414 = vshrl.u32 %v6413, 7
    %v6415 = vsub.s32 %v2402, %v6414
    %v6416 = vrot.slane %v5863, %v6415
    %v6417 = vsel %vm2407, %v6416, %v6412
    %v6418 = vlaneseq
    %v6419 = vshrl.u32 %v6418, 7
    %v6420 = vsub.s32 %v2409, %v6419
    %v6421 = vrot.slane %v5865, %v6420
    %v6422 = vsel %vm2414, %v6421, %v6417
    %v6423 = vlaneseq
    %v6424 = vshrl.u32 %v6423, 7
    %v6425 = vsub.s32 %v2416, %v6424
    %v6426 = vrot.slane %v5867, %v6425
    %v6427 = vsel %vm2421, %v6426, %v6422
    %v6428 = vlaneseq
    %v6429 = vshrl.u32 %v6428, 7
    %v6430 = vsub.s32 %v2423, %v6429
    %v6431 = vrot.slane %v5869, %v6430
    %v6432 = vsel %vm2428, %v6431, %v6427
    %v6433 = vlaneseq
    %v6434 = vshrl.u32 %v6433, 7
    %v6435 = vsub.s32 %v2430, %v6434
    %v6436 = vrot.slane %v5871, %v6435
    %v6437 = vsel %vm2435, %v6436, %v6432
    %v6438 = vlaneseq
    %v6439 = vshrl.u32 %v6438, 7
    %v6440 = vsub.s32 %v2437, %v6439
    %v6441 = vrot.slane %v5873, %v6440
    %v6442 = vsel %vm2442, %v6441, %v6437
    %v6443 = vlaneseq
    %v6444 = vshrl.u32 %v6443, 7
    %v6445 = vsub.s32 %v2444, %v6444
    %v6446 = vrot.slane %v5875, %v6445
    %v6447 = vsel %vm2449, %v6446, %v6442
    %v6448 = vlaneseq
    %v6449 = vshrl.u32 %v6448, 7
    %v6450 = vsub.s32 %v2451, %v6449
    %v6451 = vrot.slane %v5877, %v6450
    %v6452 = vsel %vm2456, %v6451, %v6447
    %v6453 = vlaneseq
    %v6454 = vshrl.u32 %v6453, 7
    %v6455 = vsub.s32 %v2348, %v6454
    %v6456 = vrot.slane %v5879, %v6455
    %v6457 = vlaneseq
    %v6458 = vshrl.u32 %v6457, 7
    %v6459 = vsub.s32 %v2353, %v6458
    %v6460 = vrot.slane %v5881, %v6459
    %v6461 = vsel %vm2358, %v6460, %v6456
    %v6462 = vlaneseq
    %v6463 = vshrl.u32 %v6462, 7
    %v6464 = vsub.s32 %v2360, %v6463
    %v6465 = vrot.slane %v5883, %v6464
    %v6466 = vsel %vm2365, %v6465, %v6461
    %v6467 = vlaneseq
    %v6468 = vshrl.u32 %v6467, 7
    %v6469 = vsub.s32 %v2367, %v6468
    %v6470 = vrot.slane %v5885, %v6469
    %v6471 = vsel %vm2372, %v6470, %v6466
    %v6472 = vlaneseq
    %v6473 = vshrl.u32 %v6472, 7
    %v6474 = vsub.s32 %v2374, %v6473
    %v6475 = vrot.slane %v5887, %v6474
    %v6476 = vsel %vm2379, %v6475, %v6471
    %v6477 = vlaneseq
    %v6478 = vshrl.u32 %v6477, 7
    %v6479 = vsub.s32 %v2381, %v6478
    %v6480 = vrot.slane %v5889, %v6479
    %v6481 = vsel %vm2386, %v6480, %v6476
    %v6482 = vlaneseq
    %v6483 = vshrl.u32 %v6482, 7
    %v6484 = vsub.s32 %v2388, %v6483
    %v6485 = vrot.slane %v5891, %v6484
    %v6486 = vsel %vm2393, %v6485, %v6481
    %v6487 = vlaneseq
    %v6488 = vshrl.u32 %v6487, 7
    %v6489 = vsub.s32 %v2395, %v6488
    %v6490 = vrot.slane %v5893, %v6489
    %v6491 = vsel %vm2400, %v6490, %v6486
    %v6492 = vlaneseq
    %v6493 = vshrl.u32 %v6492, 7
    %v6494 = vsub.s32 %v2402, %v6493
    %v6495 = vrot.slane %v5895, %v6494
    %v6496 = vsel %vm2407, %v6495, %v6491
    %v6497 = vlaneseq
    %v6498 = vshrl.u32 %v6497, 7
    %v6499 = vsub.s32 %v2409, %v6498
    %v6500 = vrot.slane %v5897, %v6499
    %v6501 = vsel %vm2414, %v6500, %v6496
    %v6502 = vlaneseq
    %v6503 = vshrl.u32 %v6502, 7
    %v6504 = vsub.s32 %v2416, %v6503
    %v6505 = vrot.slane %v5899, %v6504
    %v6506 = vsel %vm2421, %v6505, %v6501
    %v6507 = vlaneseq
    %v6508 = vshrl.u32 %v6507, 7
    %v6509 = vsub.s32 %v2423, %v6508
    %v6510 = vrot.slane %v5901, %v6509
    %v6511 = vsel %vm2428, %v6510, %v6506
    %v6512 = vlaneseq
    %v6513 = vshrl.u32 %v6512, 7
    %v6514 = vsub.s32 %v2430, %v6513
    %v6515 = vrot.slane %v5903, %v6514
    %v6516 = vsel %vm2435, %v6515, %v6511
    %v6517 = vlaneseq
    %v6518 = vshrl.u32 %v6517, 7
    %v6519 = vsub.s32 %v2437, %v6518
    %v6520 = vrot.slane %v5905, %v6519
    %v6521 = vsel %vm2442, %v6520, %v6516
    %v6522 = vlaneseq
    %v6523 = vshrl.u32 %v6522, 7
    %v6524 = vsub.s32 %v2444, %v6523
    %v6525 = vrot.slane %v5907, %v6524
    %v6526 = vsel %vm2449, %v6525, %v6521
    %v6527 = vlaneseq
    %v6528 = vshrl.u32 %v6527, 7
    %v6529 = vsub.s32 %v2451, %v6528
    %v6530 = vrot.slane %v5909, %v6529
    %v6531 = vsel %vm2456, %v6530, %v6526
    %v6532 = vlaneseq
    %v6533 = vshrl.u32 %v6532, 7
    %v6534 = vsub.s32 %v2348, %v6533
    %v6535 = vrot.slane %v5911, %v6534
    %v6536 = vlaneseq
    %v6537 = vshrl.u32 %v6536, 7
    %v6538 = vsub.s32 %v2353, %v6537
    %v6539 = vrot.slane %v5913, %v6538
    %v6540 = vsel %vm2358, %v6539, %v6535
    %v6541 = vlaneseq
    %v6542 = vshrl.u32 %v6541, 7
    %v6543 = vsub.s32 %v2360, %v6542
    %v6544 = vrot.slane %v5915, %v6543
    %v6545 = vsel %vm2365, %v6544, %v6540
    %v6546 = vlaneseq
    %v6547 = vshrl.u32 %v6546, 7
    %v6548 = vsub.s32 %v2367, %v6547
    %v6549 = vrot.slane %v5917, %v6548
    %v6550 = vsel %vm2372, %v6549, %v6545
    %v6551 = vlaneseq
    %v6552 = vshrl.u32 %v6551, 7
    %v6553 = vsub.s32 %v2374, %v6552
    %v6554 = vrot.slane %v5919, %v6553
    %v6555 = vsel %vm2379, %v6554, %v6550
    %v6556 = vlaneseq
    %v6557 = vshrl.u32 %v6556, 7
    %v6558 = vsub.s32 %v2381, %v6557
    %v6559 = vrot.slane %v5921, %v6558
    %v6560 = vsel %vm2386, %v6559, %v6555
    %v6561 = vlaneseq
    %v6562 = vshrl.u32 %v6561, 7
    %v6563 = vsub.s32 %v2388, %v6562
    %v6564 = vrot.slane %v5923, %v6563
    %v6565 = vsel %vm2393, %v6564, %v6560
    %v6566 = vlaneseq
    %v6567 = vshrl.u32 %v6566, 7
    %v6568 = vsub.s32 %v2395, %v6567
    %v6569 = vrot.slane %v5925, %v6568
    %v6570 = vsel %vm2400, %v6569, %v6565
    %v6571 = vlaneseq
    %v6572 = vshrl.u32 %v6571, 7
    %v6573 = vsub.s32 %v2402, %v6572
    %v6574 = vrot.slane %v5927, %v6573
    %v6575 = vsel %vm2407, %v6574, %v6570
    %v6576 = vlaneseq
    %v6577 = vshrl.u32 %v6576, 7
    %v6578 = vsub.s32 %v2409, %v6577
    %v6579 = vrot.slane %v5929, %v6578
    %v6580 = vsel %vm2414, %v6579, %v6575
    %v6581 = vlaneseq
    %v6582 = vshrl.u32 %v6581, 7
    %v6583 = vsub.s32 %v2416, %v6582
    %v6584 = vrot.slane %v5931, %v6583
    %v6585 = vsel %vm2421, %v6584, %v6580
    %v6586 = vlaneseq
    %v6587 = vshrl.u32 %v6586, 7
    %v6588 = vsub.s32 %v2423, %v6587
    %v6589 = vrot.slane %v5933, %v6588
    %v6590 = vsel %vm2428, %v6589, %v6585
    %v6591 = vlaneseq
    %v6592 = vshrl.u32 %v6591, 7
    %v6593 = vsub.s32 %v2430, %v6592
    %v6594 = vrot.slane %v5935, %v6593
    %v6595 = vsel %vm2435, %v6594, %v6590
    %v6596 = vlaneseq
    %v6597 = vshrl.u32 %v6596, 7
    %v6598 = vsub.s32 %v2437, %v6597
    %v6599 = vrot.slane %v5937, %v6598
    %v6600 = vsel %vm2442, %v6599, %v6595
    %v6601 = vlaneseq
    %v6602 = vshrl.u32 %v6601, 7
    %v6603 = vsub.s32 %v2444, %v6602
    %v6604 = vrot.slane %v5939, %v6603
    %v6605 = vsel %vm2449, %v6604, %v6600
    %v6606 = vlaneseq
    %v6607 = vshrl.u32 %v6606, 7
    %v6608 = vsub.s32 %v2451, %v6607
    %v6609 = vrot.slane %v5941, %v6608
    %v6610 = vsel %vm2456, %v6609, %v6605
    %v6611 = vlaneseq
    %v6612 = vshrl.u32 %v6611, 7
    %v6613 = vsub.s32 %v2348, %v6612
    %v6614 = vrot.slane %v5943, %v6613
    %v6615 = vlaneseq
    %v6616 = vshrl.u32 %v6615, 7
    %v6617 = vsub.s32 %v2353, %v6616
    %v6618 = vrot.slane %v5945, %v6617
    %v6619 = vsel %vm2358, %v6618, %v6614
    %v6620 = vlaneseq
    %v6621 = vshrl.u32 %v6620, 7
    %v6622 = vsub.s32 %v2360, %v6621
    %v6623 = vrot.slane %v5947, %v6622
    %v6624 = vsel %vm2365, %v6623, %v6619
    %v6625 = vlaneseq
    %v6626 = vshrl.u32 %v6625, 7
    %v6627 = vsub.s32 %v2367, %v6626
    %v6628 = vrot.slane %v5949, %v6627
    %v6629 = vsel %vm2372, %v6628, %v6624
    %v6630 = vlaneseq
    %v6631 = vshrl.u32 %v6630, 7
    %v6632 = vsub.s32 %v2374, %v6631
    %v6633 = vrot.slane %v5951, %v6632
    %v6634 = vsel %vm2379, %v6633, %v6629
    %v6635 = vlaneseq
    %v6636 = vshrl.u32 %v6635, 7
    %v6637 = vsub.s32 %v2381, %v6636
    %v6638 = vrot.slane %v5953, %v6637
    %v6639 = vsel %vm2386, %v6638, %v6634
    %v6640 = vlaneseq
    %v6641 = vshrl.u32 %v6640, 7
    %v6642 = vsub.s32 %v2388, %v6641
    %v6643 = vrot.slane %v5955, %v6642
    %v6644 = vsel %vm2393, %v6643, %v6639
    %v6645 = vlaneseq
    %v6646 = vshrl.u32 %v6645, 7
    %v6647 = vsub.s32 %v2395, %v6646
    %v6648 = vrot.slane %v5957, %v6647
    %v6649 = vsel %vm2400, %v6648, %v6644
    %v6650 = vlaneseq
    %v6651 = vshrl.u32 %v6650, 7
    %v6652 = vsub.s32 %v2402, %v6651
    %v6653 = vrot.slane %v5959, %v6652
    %v6654 = vsel %vm2407, %v6653, %v6649
    %v6655 = vlaneseq
    %v6656 = vshrl.u32 %v6655, 7
    %v6657 = vsub.s32 %v2409, %v6656
    %v6658 = vrot.slane %v5961, %v6657
    %v6659 = vsel %vm2414, %v6658, %v6654
    %v6660 = vlaneseq
    %v6661 = vshrl.u32 %v6660, 7
    %v6662 = vsub.s32 %v2416, %v6661
    %v6663 = vrot.slane %v5963, %v6662
    %v6664 = vsel %vm2421, %v6663, %v6659
    %v6665 = vlaneseq
    %v6666 = vshrl.u32 %v6665, 7
    %v6667 = vsub.s32 %v2423, %v6666
    %v6668 = vrot.slane %v5965, %v6667
    %v6669 = vsel %vm2428, %v6668, %v6664
    %v6670 = vlaneseq
    %v6671 = vshrl.u32 %v6670, 7
    %v6672 = vsub.s32 %v2430, %v6671
    %v6673 = vrot.slane %v5967, %v6672
    %v6674 = vsel %vm2435, %v6673, %v6669
    %v6675 = vlaneseq
    %v6676 = vshrl.u32 %v6675, 7
    %v6677 = vsub.s32 %v2437, %v6676
    %v6678 = vrot.slane %v5969, %v6677
    %v6679 = vsel %vm2442, %v6678, %v6674
    %v6680 = vlaneseq
    %v6681 = vshrl.u32 %v6680, 7
    %v6682 = vsub.s32 %v2444, %v6681
    %v6683 = vrot.slane %v5971, %v6682
    %v6684 = vsel %vm2449, %v6683, %v6679
    %v6685 = vlaneseq
    %v6686 = vshrl.u32 %v6685, 7
    %v6687 = vsub.s32 %v2451, %v6686
    %v6688 = vrot.slane %v5973, %v6687
    %v6689 = vsel %vm2456, %v6688, %v6684
    %v6690 = vlaneseq
    %v6691 = vshrl.u32 %v6690, 7
    %v6692 = vsub.s32 %v2348, %v6691
    %v6693 = vrot.slane %v5975, %v6692
    %v6694 = vlaneseq
    %v6695 = vshrl.u32 %v6694, 7
    %v6696 = vsub.s32 %v2353, %v6695
    %v6697 = vrot.slane %v5977, %v6696
    %v6698 = vsel %vm2358, %v6697, %v6693
    %v6699 = vlaneseq
    %v6700 = vshrl.u32 %v6699, 7
    %v6701 = vsub.s32 %v2360, %v6700
    %v6702 = vrot.slane %v5979, %v6701
    %v6703 = vsel %vm2365, %v6702, %v6698
    %v6704 = vlaneseq
    %v6705 = vshrl.u32 %v6704, 7
    %v6706 = vsub.s32 %v2367, %v6705
    %v6707 = vrot.slane %v5981, %v6706
    %v6708 = vsel %vm2372, %v6707, %v6703
    %v6709 = vlaneseq
    %v6710 = vshrl.u32 %v6709, 7
    %v6711 = vsub.s32 %v2374, %v6710
    %v6712 = vrot.slane %v5983, %v6711
    %v6713 = vsel %vm2379, %v6712, %v6708
    %v6714 = vlaneseq
    %v6715 = vshrl.u32 %v6714, 7
    %v6716 = vsub.s32 %v2381, %v6715
    %v6717 = vrot.slane %v5985, %v6716
    %v6718 = vsel %vm2386, %v6717, %v6713
    %v6719 = vlaneseq
    %v6720 = vshrl.u32 %v6719, 7
    %v6721 = vsub.s32 %v2388, %v6720
    %v6722 = vrot.slane %v5987, %v6721
    %v6723 = vsel %vm2393, %v6722, %v6718
    %v6724 = vlaneseq
    %v6725 = vshrl.u32 %v6724, 7
    %v6726 = vsub.s32 %v2395, %v6725
    %v6727 = vrot.slane %v5989, %v6726
    %v6728 = vsel %vm2400, %v6727, %v6723
    %v6729 = vlaneseq
    %v6730 = vshrl.u32 %v6729, 7
    %v6731 = vsub.s32 %v2402, %v6730
    %v6732 = vrot.slane %v5991, %v6731
    %v6733 = vsel %vm2407, %v6732, %v6728
    %v6734 = vlaneseq
    %v6735 = vshrl.u32 %v6734, 7
    %v6736 = vsub.s32 %v2409, %v6735
    %v6737 = vrot.slane %v5993, %v6736
    %v6738 = vsel %vm2414, %v6737, %v6733
    %v6739 = vlaneseq
    %v6740 = vshrl.u32 %v6739, 7
    %v6741 = vsub.s32 %v2416, %v6740
    %v6742 = vrot.slane %v5995, %v6741
    %v6743 = vsel %vm2421, %v6742, %v6738
    %v6744 = vlaneseq
    %v6745 = vshrl.u32 %v6744, 7
    %v6746 = vsub.s32 %v2423, %v6745
    %v6747 = vrot.slane %v5997, %v6746
    %v6748 = vsel %vm2428, %v6747, %v6743
    %v6749 = vlaneseq
    %v6750 = vshrl.u32 %v6749, 7
    %v6751 = vsub.s32 %v2430, %v6750
    %v6752 = vrot.slane %v5999, %v6751
    %v6753 = vsel %vm2435, %v6752, %v6748
    %v6754 = vlaneseq
    %v6755 = vshrl.u32 %v6754, 7
    %v6756 = vsub.s32 %v2437, %v6755
    %v6757 = vrot.slane %v6001, %v6756
    %v6758 = vsel %vm2442, %v6757, %v6753
    %v6759 = vlaneseq
    %v6760 = vshrl.u32 %v6759, 7
    %v6761 = vsub.s32 %v2444, %v6760
    %v6762 = vrot.slane %v6003, %v6761
    %v6763 = vsel %vm2449, %v6762, %v6758
    %v6764 = vlaneseq
    %v6765 = vshrl.u32 %v6764, 7
    %v6766 = vsub.s32 %v2451, %v6765
    %v6767 = vrot.slane %v6005, %v6766
    %v6768 = vsel %vm2456, %v6767, %v6763
    %v6769 = vsel %vm3011, %v6294, %v6215
    %v6770 = vsel %vm3013, %v6373, %v6769
    %v6771 = vsel %vm3015, %v6452, %v6770
    %v6772 = vsel %vm3017, %v6531, %v6771
    %v6773 = vsel %vm3019, %v6610, %v6772
    %v6774 = vsel %vm3021, %v6689, %v6773
    %v6775 = vsel %vm3023, %v6768, %v6774
    %v6777 = vsel %vm6008, -99999.9, %v6775
    %6778 = vmax.xlane.f32.xlu0 %v6777
    %v6779 = vpop.xlane.xlu0 %6778
    %v6780 = vsub.f32 %v6777, %v6779
    %v6781 = vmul.f32 %v6780, 1.442695
    %v6782 = vpow.pop %v6781
    %6783 = vadd.xlane.f32.xlu0 %v6782
    %v6784 = vpop.xlane.xlu0 %6783
    %v6785 = vlog2.pop %v6784
    %v6786 = vmul.f32 %v6785, 0.6931472
    %v6787 = vsub.f32 %v6780, %v6786
    %v6788 = vrcp.pop %v6784
    %v6789 = vmul.f32 %v6782, %v6788
    %v6790 = vsub.f32 0.0, %v6789
    %v6791 = vmul.f32 %v6790, %v6787
    %6792 = vadd.xlane.f32.xlu0 %v6791
    %v6793 = vpop.xlane.xlu0 %6792
    %s6794 = scalar_lea.vmem %s9, 8
    %v6795 = vld [vmem:[%s6794] sm:$0xff]
    %v6796 = vadd.f32 %v6777, %v6795
    %6797 = vmax.xlane.f32.xlu0 %v6796
    %v6798 = vpop.xlane.xlu0 %6797
    %vm6799 = vcmp.ge.f32.partialorder %v6796, %v6798
    %v6800 = vsel %vm6799, %v3048, 128.0
    %6801 = vmin.xlane.f32.xlu0 %v6800
    %v6802 = vpop.xlane.xlu0 %6801
    %v6803 = vcvt.f32.s32.to.zero.pseudo %v6802
    %vm6804 = vcmp.eq.s32.totalorder %v2348, %v6803
    %v6805 = vsel %vm6804, 1, 0
    %v6806 = vcvt.s32.f32 %v6805
    %v6807 = vmul.f32 %v6806, %v6787
    %6808 = vadd.xlane.f32.xlu0 %v6807
    %v6809 = vpop.xlane.xlu0 %6808
    %v6810 = vsub.f32 0.0, %v6809
    %v6811 = vlaneseq
    %v6812 = vshrl.u32 %v6811, 7
    %v6813 = vsub.s32 0, %v6812
    %v6814 = vrot.slane %v6806, %v6813
    %6816 = vbcast.lane.b32.xlu0 %v6814, 256
    %v6817 = vpop.permute.xlu0 %6816
    %s6819 = sor.u32 256, 8
    %6820 = vbcast.lane.b32.xlu0 %v6814, %s6819
    %v6821 = vpop.permute.xlu0 %6820
    %s6823 = sor.u32 256, 16
    %6824 = vbcast.lane.b32.xlu0 %v6814, %s6823
    %v6825 = vpop.permute.xlu0 %6824
    %s6827 = sor.u32 256, 24
    %6828 = vbcast.lane.b32.xlu0 %v6814, %s6827
    %v6829 = vpop.permute.xlu0 %6828
    %s6831 = sor.u32 256, 32
    %6832 = vbcast.lane.b32.xlu0 %v6814, %s6831
    %v6833 = vpop.permute.xlu0 %6832
    %s6835 = sor.u32 256, 40
    %6836 = vbcast.lane.b32.xlu0 %v6814, %s6835
    %v6837 = vpop.permute.xlu0 %6836
    %s6839 = sor.u32 256, 48
    %6840 = vbcast.lane.b32.xlu0 %v6814, %s6839
    %v6841 = vpop.permute.xlu0 %6840
    %s6843 = sor.u32 256, 56
    %6844 = vbcast.lane.b32.xlu0 %v6814, %s6843
    %v6845 = vpop.permute.xlu0 %6844
    %s6847 = sor.u32 256, 64
    %6848 = vbcast.lane.b32.xlu0 %v6814, %s6847
    %v6849 = vpop.permute.xlu0 %6848
    %s6851 = sor.u32 256, 72
    %6852 = vbcast.lane.b32.xlu0 %v6814, %s6851
    %v6853 = vpop.permute.xlu0 %6852
    %s6855 = sor.u32 256, 80
    %6856 = vbcast.lane.b32.xlu0 %v6814, %s6855
    %v6857 = vpop.permute.xlu0 %6856
    %s6859 = sor.u32 256, 88
    %6860 = vbcast.lane.b32.xlu0 %v6814, %s6859
    %v6861 = vpop.permute.xlu0 %6860
    %s6863 = sor.u32 256, 96
    %6864 = vbcast.lane.b32.xlu0 %v6814, %s6863
    %v6865 = vpop.permute.xlu0 %6864
    %s6867 = sor.u32 256, 104
    %6868 = vbcast.lane.b32.xlu0 %v6814, %s6867
    %v6869 = vpop.permute.xlu0 %6868
    %s6871 = sor.u32 256, 112
    %6872 = vbcast.lane.b32.xlu0 %v6814, %s6871
    %v6873 = vpop.permute.xlu0 %6872
    %s6875 = sor.u32 256, 120
    %6876 = vbcast.lane.b32.xlu0 %v6814, %s6875
    %v6877 = vpop.permute.xlu0 %6876
    %v6878 = vlaneseq
    %v6879 = vshrl.u32 %v6878, 7
    %v6880 = vsub.s32 1, %v6879
    %v6881 = vrot.slane %v6806, %v6880
    %6883 = vbcast.lane.b32.xlu0 %v6881, 256
    %v6884 = vpop.permute.xlu0 %6883
    %s6886 = sor.u32 256, 8
    %6887 = vbcast.lane.b32.xlu0 %v6881, %s6886
    %v6888 = vpop.permute.xlu0 %6887
    %s6890 = sor.u32 256, 16
    %6891 = vbcast.lane.b32.xlu0 %v6881, %s6890
    %v6892 = vpop.permute.xlu0 %6891
    %s6894 = sor.u32 256, 24
    %6895 = vbcast.lane.b32.xlu0 %v6881, %s6894
    %v6896 = vpop.permute.xlu0 %6895
    %s6898 = sor.u32 256, 32
    %6899 = vbcast.lane.b32.xlu0 %v6881, %s6898
    %v6900 = vpop.permute.xlu0 %6899
    %s6902 = sor.u32 256, 40
    %6903 = vbcast.lane.b32.xlu0 %v6881, %s6902
    %v6904 = vpop.permute.xlu0 %6903
    %s6906 = sor.u32 256, 48
    %6907 = vbcast.lane.b32.xlu0 %v6881, %s6906
    %v6908 = vpop.permute.xlu0 %6907
    %s6910 = sor.u32 256, 56
    %6911 = vbcast.lane.b32.xlu0 %v6881, %s6910
    %v6912 = vpop.permute.xlu0 %6911
    %s6914 = sor.u32 256, 64
    %6915 = vbcast.lane.b32.xlu0 %v6881, %s6914
    %v6916 = vpop.permute.xlu0 %6915
    %s6918 = sor.u32 256, 72
    %6919 = vbcast.lane.b32.xlu0 %v6881, %s6918
    %v6920 = vpop.permute.xlu0 %6919
    %s6922 = sor.u32 256, 80
    %6923 = vbcast.lane.b32.xlu0 %v6881, %s6922
    %v6924 = vpop.permute.xlu0 %6923
    %s6926 = sor.u32 256, 88
    %6927 = vbcast.lane.b32.xlu0 %v6881, %s6926
    %v6928 = vpop.permute.xlu0 %6927
    %s6930 = sor.u32 256, 96
    %6931 = vbcast.lane.b32.xlu0 %v6881, %s6930
    %v6932 = vpop.permute.xlu0 %6931
    %s6934 = sor.u32 256, 104
    %6935 = vbcast.lane.b32.xlu0 %v6881, %s6934
    %v6936 = vpop.permute.xlu0 %6935
    %s6938 = sor.u32 256, 112
    %6939 = vbcast.lane.b32.xlu0 %v6881, %s6938
    %v6940 = vpop.permute.xlu0 %6939
    %s6942 = sor.u32 256, 120
    %6943 = vbcast.lane.b32.xlu0 %v6881, %s6942
    %v6944 = vpop.permute.xlu0 %6943
    %v6945 = vlaneseq
    %v6946 = vshrl.u32 %v6945, 7
    %v6947 = vsub.s32 2, %v6946
    %v6948 = vrot.slane %v6806, %v6947
    %6950 = vbcast.lane.b32.xlu0 %v6948, 256
    %v6951 = vpop.permute.xlu0 %6950
    %s6953 = sor.u32 256, 8
    %6954 = vbcast.lane.b32.xlu0 %v6948, %s6953
    %v6955 = vpop.permute.xlu0 %6954
    %s6957 = sor.u32 256, 16
    %6958 = vbcast.lane.b32.xlu0 %v6948, %s6957
    %v6959 = vpop.permute.xlu0 %6958
    %s6961 = sor.u32 256, 24
    %6962 = vbcast.lane.b32.xlu0 %v6948, %s6961
    %v6963 = vpop.permute.xlu0 %6962
    %s6965 = sor.u32 256, 32
    %6966 = vbcast.lane.b32.xlu0 %v6948, %s6965
    %v6967 = vpop.permute.xlu0 %6966
    %s6969 = sor.u32 256, 40
    %6970 = vbcast.lane.b32.xlu0 %v6948, %s6969
    %v6971 = vpop.permute.xlu0 %6970
    %s6973 = sor.u32 256, 48
    %6974 = vbcast.lane.b32.xlu0 %v6948, %s6973
    %v6975 = vpop.permute.xlu0 %6974
    %s6977 = sor.u32 256, 56
    %6978 = vbcast.lane.b32.xlu0 %v6948, %s6977
    %v6979 = vpop.permute.xlu0 %6978
    %s6981 = sor.u32 256, 64
    %6982 = vbcast.lane.b32.xlu0 %v6948, %s6981
    %v6983 = vpop.permute.xlu0 %6982
    %s6985 = sor.u32 256, 72
    %6986 = vbcast.lane.b32.xlu0 %v6948, %s6985
    %v6987 = vpop.permute.xlu0 %6986
    %s6989 = sor.u32 256, 80
    %6990 = vbcast.lane.b32.xlu0 %v6948, %s6989
    %v6991 = vpop.permute.xlu0 %6990
    %s6993 = sor.u32 256, 88
    %6994 = vbcast.lane.b32.xlu0 %v6948, %s6993
    %v6995 = vpop.permute.xlu0 %6994
    %s6997 = sor.u32 256, 96
    %6998 = vbcast.lane.b32.xlu0 %v6948, %s6997
    %v6999 = vpop.permute.xlu0 %6998
    %s7001 = sor.u32 256, 104
    %7002 = vbcast.lane.b32.xlu0 %v6948, %s7001
    %v7003 = vpop.permute.xlu0 %7002
    %s7005 = sor.u32 256, 112
    %7006 = vbcast.lane.b32.xlu0 %v6948, %s7005
    %v7007 = vpop.permute.xlu0 %7006
    %s7009 = sor.u32 256, 120
    %7010 = vbcast.lane.b32.xlu0 %v6948, %s7009
    %v7011 = vpop.permute.xlu0 %7010
    %v7012 = vlaneseq
    %v7013 = vshrl.u32 %v7012, 7
    %v7014 = vsub.s32 3, %v7013
    %v7015 = vrot.slane %v6806, %v7014
    %7017 = vbcast.lane.b32.xlu0 %v7015, 256
    %v7018 = vpop.permute.xlu0 %7017
    %s7020 = sor.u32 256, 8
    %7021 = vbcast.lane.b32.xlu0 %v7015, %s7020
    %v7022 = vpop.permute.xlu0 %7021
    %s7024 = sor.u32 256, 16
    %7025 = vbcast.lane.b32.xlu0 %v7015, %s7024
    %v7026 = vpop.permute.xlu0 %7025
    %s7028 = sor.u32 256, 24
    %7029 = vbcast.lane.b32.xlu0 %v7015, %s7028
    %v7030 = vpop.permute.xlu0 %7029
    %s7032 = sor.u32 256, 32
    %7033 = vbcast.lane.b32.xlu0 %v7015, %s7032
    %v7034 = vpop.permute.xlu0 %7033
    %s7036 = sor.u32 256, 40
    %7037 = vbcast.lane.b32.xlu0 %v7015, %s7036
    %v7038 = vpop.permute.xlu0 %7037
    %s7040 = sor.u32 256, 48
    %7041 = vbcast.lane.b32.xlu0 %v7015, %s7040
    %v7042 = vpop.permute.xlu0 %7041
    %s7044 = sor.u32 256, 56
    %7045 = vbcast.lane.b32.xlu0 %v7015, %s7044
    %v7046 = vpop.permute.xlu0 %7045
    %s7048 = sor.u32 256, 64
    %7049 = vbcast.lane.b32.xlu0 %v7015, %s7048
    %v7050 = vpop.permute.xlu0 %7049
    %s7052 = sor.u32 256, 72
    %7053 = vbcast.lane.b32.xlu0 %v7015, %s7052
    %v7054 = vpop.permute.xlu0 %7053
    %s7056 = sor.u32 256, 80
    %7057 = vbcast.lane.b32.xlu0 %v7015, %s7056
    %v7058 = vpop.permute.xlu0 %7057
    %s7060 = sor.u32 256, 88
    %7061 = vbcast.lane.b32.xlu0 %v7015, %s7060
    %v7062 = vpop.permute.xlu0 %7061
    %s7064 = sor.u32 256, 96
    %7065 = vbcast.lane.b32.xlu0 %v7015, %s7064
    %v7066 = vpop.permute.xlu0 %7065
    %s7068 = sor.u32 256, 104
    %7069 = vbcast.lane.b32.xlu0 %v7015, %s7068
    %v7070 = vpop.permute.xlu0 %7069
    %s7072 = sor.u32 256, 112
    %7073 = vbcast.lane.b32.xlu0 %v7015, %s7072
    %v7074 = vpop.permute.xlu0 %7073
    %s7076 = sor.u32 256, 120
    %7077 = vbcast.lane.b32.xlu0 %v7015, %s7076
    %v7078 = vpop.permute.xlu0 %7077
    %v7079 = vlaneseq
    %v7080 = vshrl.u32 %v7079, 7
    %v7081 = vsub.s32 4, %v7080
    %v7082 = vrot.slane %v6806, %v7081
    %7084 = vbcast.lane.b32.xlu0 %v7082, 256
    %v7085 = vpop.permute.xlu0 %7084
    %s7087 = sor.u32 256, 8
    %7088 = vbcast.lane.b32.xlu0 %v7082, %s7087
    %v7089 = vpop.permute.xlu0 %7088
    %s7091 = sor.u32 256, 16
    %7092 = vbcast.lane.b32.xlu0 %v7082, %s7091
    %v7093 = vpop.permute.xlu0 %7092
    %s7095 = sor.u32 256, 24
    %7096 = vbcast.lane.b32.xlu0 %v7082, %s7095
    %v7097 = vpop.permute.xlu0 %7096
    %s7099 = sor.u32 256, 32
    %7100 = vbcast.lane.b32.xlu0 %v7082, %s7099
    %v7101 = vpop.permute.xlu0 %7100
    %s7103 = sor.u32 256, 40
    %7104 = vbcast.lane.b32.xlu0 %v7082, %s7103
    %v7105 = vpop.permute.xlu0 %7104
    %s7107 = sor.u32 256, 48
    %7108 = vbcast.lane.b32.xlu0 %v7082, %s7107
    %v7109 = vpop.permute.xlu0 %7108
    %s7111 = sor.u32 256, 56
    %7112 = vbcast.lane.b32.xlu0 %v7082, %s7111
    %v7113 = vpop.permute.xlu0 %7112
    %s7115 = sor.u32 256, 64
    %7116 = vbcast.lane.b32.xlu0 %v7082, %s7115
    %v7117 = vpop.permute.xlu0 %7116
    %s7119 = sor.u32 256, 72
    %7120 = vbcast.lane.b32.xlu0 %v7082, %s7119
    %v7121 = vpop.permute.xlu0 %7120
    %s7123 = sor.u32 256, 80
    %7124 = vbcast.lane.b32.xlu0 %v7082, %s7123
    %v7125 = vpop.permute.xlu0 %7124
    %s7127 = sor.u32 256, 88
    %7128 = vbcast.lane.b32.xlu0 %v7082, %s7127
    %v7129 = vpop.permute.xlu0 %7128
    %s7131 = sor.u32 256, 96
    %7132 = vbcast.lane.b32.xlu0 %v7082, %s7131
    %v7133 = vpop.permute.xlu0 %7132
    %s7135 = sor.u32 256, 104
    %7136 = vbcast.lane.b32.xlu0 %v7082, %s7135
    %v7137 = vpop.permute.xlu0 %7136
    %s7139 = sor.u32 256, 112
    %7140 = vbcast.lane.b32.xlu0 %v7082, %s7139
    %v7141 = vpop.permute.xlu0 %7140
    %s7143 = sor.u32 256, 120
    %7144 = vbcast.lane.b32.xlu0 %v7082, %s7143
    %v7145 = vpop.permute.xlu0 %7144
    %v7146 = vlaneseq
    %v7147 = vshrl.u32 %v7146, 7
    %v7148 = vsub.s32 5, %v7147
    %v7149 = vrot.slane %v6806, %v7148
    %7151 = vbcast.lane.b32.xlu0 %v7149, 256
    %v7152 = vpop.permute.xlu0 %7151
    %s7154 = sor.u32 256, 8
    %7155 = vbcast.lane.b32.xlu0 %v7149, %s7154
    %v7156 = vpop.permute.xlu0 %7155
    %s7158 = sor.u32 256, 16
    %7159 = vbcast.lane.b32.xlu0 %v7149, %s7158
    %v7160 = vpop.permute.xlu0 %7159
    %s7162 = sor.u32 256, 24
    %7163 = vbcast.lane.b32.xlu0 %v7149, %s7162
    %v7164 = vpop.permute.xlu0 %7163
    %s7166 = sor.u32 256, 32
    %7167 = vbcast.lane.b32.xlu0 %v7149, %s7166
    %v7168 = vpop.permute.xlu0 %7167
    %s7170 = sor.u32 256, 40
    %7171 = vbcast.lane.b32.xlu0 %v7149, %s7170
    %v7172 = vpop.permute.xlu0 %7171
    %s7174 = sor.u32 256, 48
    %7175 = vbcast.lane.b32.xlu0 %v7149, %s7174
    %v7176 = vpop.permute.xlu0 %7175
    %s7178 = sor.u32 256, 56
    %7179 = vbcast.lane.b32.xlu0 %v7149, %s7178
    %v7180 = vpop.permute.xlu0 %7179
    %s7182 = sor.u32 256, 64
    %7183 = vbcast.lane.b32.xlu0 %v7149, %s7182
    %v7184 = vpop.permute.xlu0 %7183
    %s7186 = sor.u32 256, 72
    %7187 = vbcast.lane.b32.xlu0 %v7149, %s7186
    %v7188 = vpop.permute.xlu0 %7187
    %s7190 = sor.u32 256, 80
    %7191 = vbcast.lane.b32.xlu0 %v7149, %s7190
    %v7192 = vpop.permute.xlu0 %7191
    %s7194 = sor.u32 256, 88
    %7195 = vbcast.lane.b32.xlu0 %v7149, %s7194
    %v7196 = vpop.permute.xlu0 %7195
    %s7198 = sor.u32 256, 96
    %7199 = vbcast.lane.b32.xlu0 %v7149, %s7198
    %v7200 = vpop.permute.xlu0 %7199
    %s7202 = sor.u32 256, 104
    %7203 = vbcast.lane.b32.xlu0 %v7149, %s7202
    %v7204 = vpop.permute.xlu0 %7203
    %s7206 = sor.u32 256, 112
    %7207 = vbcast.lane.b32.xlu0 %v7149, %s7206
    %v7208 = vpop.permute.xlu0 %7207
    %s7210 = sor.u32 256, 120
    %7211 = vbcast.lane.b32.xlu0 %v7149, %s7210
    %v7212 = vpop.permute.xlu0 %7211
    %v7213 = vlaneseq
    %v7214 = vshrl.u32 %v7213, 7
    %v7215 = vsub.s32 6, %v7214
    %v7216 = vrot.slane %v6806, %v7215
    %7218 = vbcast.lane.b32.xlu0 %v7216, 256
    %v7219 = vpop.permute.xlu0 %7218
    %s7221 = sor.u32 256, 8
    %7222 = vbcast.lane.b32.xlu0 %v7216, %s7221
    %v7223 = vpop.permute.xlu0 %7222
    %s7225 = sor.u32 256, 16
    %7226 = vbcast.lane.b32.xlu0 %v7216, %s7225
    %v7227 = vpop.permute.xlu0 %7226
    %s7229 = sor.u32 256, 24
    %7230 = vbcast.lane.b32.xlu0 %v7216, %s7229
    %v7231 = vpop.permute.xlu0 %7230
    %s7233 = sor.u32 256, 32
    %7234 = vbcast.lane.b32.xlu0 %v7216, %s7233
    %v7235 = vpop.permute.xlu0 %7234
    %s7237 = sor.u32 256, 40
    %7238 = vbcast.lane.b32.xlu0 %v7216, %s7237
    %v7239 = vpop.permute.xlu0 %7238
    %s7241 = sor.u32 256, 48
    %7242 = vbcast.lane.b32.xlu0 %v7216, %s7241
    %v7243 = vpop.permute.xlu0 %7242
    %s7245 = sor.u32 256, 56
    %7246 = vbcast.lane.b32.xlu0 %v7216, %s7245
    %v7247 = vpop.permute.xlu0 %7246
    %s7249 = sor.u32 256, 64
    %7250 = vbcast.lane.b32.xlu0 %v7216, %s7249
    %v7251 = vpop.permute.xlu0 %7250
    %s7253 = sor.u32 256, 72
    %7254 = vbcast.lane.b32.xlu0 %v7216, %s7253
    %v7255 = vpop.permute.xlu0 %7254
    %s7257 = sor.u32 256, 80
    %7258 = vbcast.lane.b32.xlu0 %v7216, %s7257
    %v7259 = vpop.permute.xlu0 %7258
    %s7261 = sor.u32 256, 88
    %7262 = vbcast.lane.b32.xlu0 %v7216, %s7261
    %v7263 = vpop.permute.xlu0 %7262
    %s7265 = sor.u32 256, 96
    %7266 = vbcast.lane.b32.xlu0 %v7216, %s7265
    %v7267 = vpop.permute.xlu0 %7266
    %s7269 = sor.u32 256, 104
    %7270 = vbcast.lane.b32.xlu0 %v7216, %s7269
    %v7271 = vpop.permute.xlu0 %7270
    %s7273 = sor.u32 256, 112
    %7274 = vbcast.lane.b32.xlu0 %v7216, %s7273
    %v7275 = vpop.permute.xlu0 %7274
    %s7277 = sor.u32 256, 120
    %7278 = vbcast.lane.b32.xlu0 %v7216, %s7277
    %v7279 = vpop.permute.xlu0 %7278
    %v7280 = vlaneseq
    %v7281 = vshrl.u32 %v7280, 7
    %v7282 = vsub.s32 7, %v7281
    %v7283 = vrot.slane %v6806, %v7282
    %7285 = vbcast.lane.b32.xlu0 %v7283, 256
    %v7286 = vpop.permute.xlu0 %7285
    %s7288 = sor.u32 256, 8
    %7289 = vbcast.lane.b32.xlu0 %v7283, %s7288
    %v7290 = vpop.permute.xlu0 %7289
    %s7292 = sor.u32 256, 16
    %7293 = vbcast.lane.b32.xlu0 %v7283, %s7292
    %v7294 = vpop.permute.xlu0 %7293
    %s7296 = sor.u32 256, 24
    %7297 = vbcast.lane.b32.xlu0 %v7283, %s7296
    %v7298 = vpop.permute.xlu0 %7297
    %s7300 = sor.u32 256, 32
    %7301 = vbcast.lane.b32.xlu0 %v7283, %s7300
    %v7302 = vpop.permute.xlu0 %7301
    %s7304 = sor.u32 256, 40
    %7305 = vbcast.lane.b32.xlu0 %v7283, %s7304
    %v7306 = vpop.permute.xlu0 %7305
    %s7308 = sor.u32 256, 48
    %7309 = vbcast.lane.b32.xlu0 %v7283, %s7308
    %v7310 = vpop.permute.xlu0 %7309
    %s7312 = sor.u32 256, 56
    %7313 = vbcast.lane.b32.xlu0 %v7283, %s7312
    %v7314 = vpop.permute.xlu0 %7313
    %s7316 = sor.u32 256, 64
    %7317 = vbcast.lane.b32.xlu0 %v7283, %s7316
    %v7318 = vpop.permute.xlu0 %7317
    %s7320 = sor.u32 256, 72
    %7321 = vbcast.lane.b32.xlu0 %v7283, %s7320
    %v7322 = vpop.permute.xlu0 %7321
    %s7324 = sor.u32 256, 80
    %7325 = vbcast.lane.b32.xlu0 %v7283, %s7324
    %v7326 = vpop.permute.xlu0 %7325
    %s7328 = sor.u32 256, 88
    %7329 = vbcast.lane.b32.xlu0 %v7283, %s7328
    %v7330 = vpop.permute.xlu0 %7329
    %s7332 = sor.u32 256, 96
    %7333 = vbcast.lane.b32.xlu0 %v7283, %s7332
    %v7334 = vpop.permute.xlu0 %7333
    %s7336 = sor.u32 256, 104
    %7337 = vbcast.lane.b32.xlu0 %v7283, %s7336
    %v7338 = vpop.permute.xlu0 %7337
    %s7340 = sor.u32 256, 112
    %7341 = vbcast.lane.b32.xlu0 %v7283, %s7340
    %v7342 = vpop.permute.xlu0 %7341
    %s7344 = sor.u32 256, 120
    %7345 = vbcast.lane.b32.xlu0 %v7283, %s7344
    %v7346 = vpop.permute.xlu0 %7345
    %v7347 = vmul.f32 %v6817, %v5454
    %v7348 = vmul.f32 %v6821, %v5455
    %v7349 = vmul.f32 %v6825, %v5456
    %v7350 = vmul.f32 %v6829, %v5457
    %v7351 = vmul.f32 %v6833, %v5458
    %v7352 = vmul.f32 %v6837, %v5459
    %v7353 = vmul.f32 %v6841, %v5460
    %v7354 = vmul.f32 %v6845, %v5461
    %v7355 = vmul.f32 %v6849, %v5462
    %v7356 = vmul.f32 %v6853, %v5463
    %v7357 = vmul.f32 %v6857, %v5464
    %v7358 = vmul.f32 %v6861, %v5465
    %v7359 = vmul.f32 %v6865, %v5466
    %v7360 = vmul.f32 %v6869, %v5467
    %v7361 = vmul.f32 %v6873, %v5468
    %v7362 = vmul.f32 %v6877, %v5469
    %v7363 = vmul.f32 %v6884, %v5470
    %v7364 = vmul.f32 %v6888, %v5471
    %v7365 = vmul.f32 %v6892, %v5472
    %v7366 = vmul.f32 %v6896, %v5473
    %v7367 = vmul.f32 %v6900, %v5474
    %v7368 = vmul.f32 %v6904, %v5475
    %v7369 = vmul.f32 %v6908, %v5476
    %v7370 = vmul.f32 %v6912, %v5477
    %v7371 = vmul.f32 %v6916, %v5478
    %v7372 = vmul.f32 %v6920, %v5479
    %v7373 = vmul.f32 %v6924, %v5480
    %v7374 = vmul.f32 %v6928, %v5481
    %v7375 = vmul.f32 %v6932, %v5482
    %v7376 = vmul.f32 %v6936, %v5483
    %v7377 = vmul.f32 %v6940, %v5484
    %v7378 = vmul.f32 %v6944, %v5485
    %v7379 = vmul.f32 %v6951, %v5486
    %v7380 = vmul.f32 %v6955, %v5487
    %v7381 = vmul.f32 %v6959, %v5488
    %v7382 = vmul.f32 %v6963, %v5489
    %v7383 = vmul.f32 %v6967, %v5490
    %v7384 = vmul.f32 %v6971, %v5491
    %v7385 = vmul.f32 %v6975, %v5492
    %v7386 = vmul.f32 %v6979, %v5493
    %v7387 = vmul.f32 %v6983, %v5494
    %v7388 = vmul.f32 %v6987, %v5495
    %v7389 = vmul.f32 %v6991, %v5496
    %v7390 = vmul.f32 %v6995, %v5497
    %v7391 = vmul.f32 %v6999, %v5498
    %v7392 = vmul.f32 %v7003, %v5499
    %v7393 = vmul.f32 %v7007, %v5500
    %v7394 = vmul.f32 %v7011, %v5501
    %v7395 = vmul.f32 %v7018, %v5502
    %v7396 = vmul.f32 %v7022, %v5503
    %v7397 = vmul.f32 %v7026, %v5504
    %v7398 = vmul.f32 %v7030, %v5505
    %v7399 = vmul.f32 %v7034, %v5506
    %v7400 = vmul.f32 %v7038, %v5507
    %v7401 = vmul.f32 %v7042, %v5508
    %v7402 = vmul.f32 %v7046, %v5509
    %v7403 = vmul.f32 %v7050, %v5510
    %v7404 = vmul.f32 %v7054, %v5511
    %v7405 = vmul.f32 %v7058, %v5512
    %v7406 = vmul.f32 %v7062, %v5513
    %v7407 = vmul.f32 %v7066, %v5514
    %v7408 = vmul.f32 %v7070, %v5515
    %v7409 = vmul.f32 %v7074, %v5516
    %v7410 = vmul.f32 %v7078, %v5517
    %v7411 = vmul.f32 %v7085, %v5518
    %v7412 = vmul.f32 %v7089, %v5519
    %v7413 = vmul.f32 %v7093, %v5520
    %v7414 = vmul.f32 %v7097, %v5521
    %v7415 = vmul.f32 %v7101, %v5522
    %v7416 = vmul.f32 %v7105, %v5523
    %v7417 = vmul.f32 %v7109, %v5524
    %v7418 = vmul.f32 %v7113, %v5525
    %v7419 = vmul.f32 %v7117, %v5526
    %v7420 = vmul.f32 %v7121, %v5527
    %v7421 = vmul.f32 %v7125, %v5528
    %v7422 = vmul.f32 %v7129, %v5529
    %v7423 = vmul.f32 %v7133, %v5530
    %v7424 = vmul.f32 %v7137, %v5531
    %v7425 = vmul.f32 %v7141, %v5532
    %v7426 = vmul.f32 %v7145, %v5533
    %v7427 = vmul.f32 %v7152, %v5534
    %v7428 = vmul.f32 %v7156, %v5535
    %v7429 = vmul.f32 %v7160, %v5536
    %v7430 = vmul.f32 %v7164, %v5537
    %v7431 = vmul.f32 %v7168, %v5538
    %v7432 = vmul.f32 %v7172, %v5539
    %v7433 = vmul.f32 %v7176, %v5540
    %v7434 = vmul.f32 %v7180, %v5541
    %v7435 = vmul.f32 %v7184, %v5542
    %v7436 = vmul.f32 %v7188, %v5543
    %v7437 = vmul.f32 %v7192, %v5544
    %v7438 = vmul.f32 %v7196, %v5545
    %v7439 = vmul.f32 %v7200, %v5546
    %v7440 = vmul.f32 %v7204, %v5547
    %v7441 = vmul.f32 %v7208, %v5548
    %v7442 = vmul.f32 %v7212, %v5549
    %v7443 = vmul.f32 %v7219, %v5550
    %v7444 = vmul.f32 %v7223, %v5551
    %v7445 = vmul.f32 %v7227, %v5552
    %v7446 = vmul.f32 %v7231, %v5553
    %v7447 = vmul.f32 %v7235, %v5554
    %v7448 = vmul.f32 %v7239, %v5555
    %v7449 = vmul.f32 %v7243, %v5556
    %v7450 = vmul.f32 %v7247, %v5557
    %v7451 = vmul.f32 %v7251, %v5558
    %v7452 = vmul.f32 %v7255, %v5559
    %v7453 = vmul.f32 %v7259, %v5560
    %v7454 = vmul.f32 %v7263, %v5561
    %v7455 = vmul.f32 %v7267, %v5562
    %v7456 = vmul.f32 %v7271, %v5563
    %v7457 = vmul.f32 %v7275, %v5564
    %v7458 = vmul.f32 %v7279, %v5565
    %v7459 = vmul.f32 %v7286, %v5566
    %v7460 = vmul.f32 %v7290, %v5567
    %v7461 = vmul.f32 %v7294, %v5568
    %v7462 = vmul.f32 %v7298, %v5569
    %v7463 = vmul.f32 %v7302, %v5570
    %v7464 = vmul.f32 %v7306, %v5571
    %v7465 = vmul.f32 %v7310, %v5572
    %v7466 = vmul.f32 %v7314, %v5573
    %v7467 = vmul.f32 %v7318, %v5574
    %v7468 = vmul.f32 %v7322, %v5575
    %v7469 = vmul.f32 %v7326, %v5576
    %v7470 = vmul.f32 %v7330, %v5577
    %v7471 = vmul.f32 %v7334, %v5578
    %v7472 = vmul.f32 %v7338, %v5579
    %v7473 = vmul.f32 %v7342, %v5580
    %v7474 = vmul.f32 %v7346, %v5581
    %v7475 = vadd.f32 %v7347, %v7348
    %v7476 = vadd.f32 %v7475, %v7349
    %v7477 = vadd.f32 %v7476, %v7350
    %v7478 = vadd.f32 %v7477, %v7351
    %v7479 = vadd.f32 %v7478, %v7352
    %v7480 = vadd.f32 %v7479, %v7353
    %v7481 = vadd.f32 %v7480, %v7354
    %v7482 = vadd.f32 %v7481, %v7355
    %v7483 = vadd.f32 %v7482, %v7356
    %v7484 = vadd.f32 %v7483, %v7357
    %v7485 = vadd.f32 %v7484, %v7358
    %v7486 = vadd.f32 %v7485, %v7359
    %v7487 = vadd.f32 %v7486, %v7360
    %v7488 = vadd.f32 %v7487, %v7361
    %v7489 = vadd.f32 %v7488, %v7362
    %v7490 = vrot.slane %v7489, 4
    %v7491 = vadd.f32 %v7489, %v7490
    %v7492 = vrot.slane %v7491, 2
    %v7493 = vadd.f32 %v7491, %v7492
    %v7494 = vrot.slane %v7493, 1
    %v7495 = vadd.f32 %v7493, %v7494
    %v7496 = vadd.f32 %v7363, %v7364
    %v7497 = vadd.f32 %v7496, %v7365
    %v7498 = vadd.f32 %v7497, %v7366
    %v7499 = vadd.f32 %v7498, %v7367
    %v7500 = vadd.f32 %v7499, %v7368
    %v7501 = vadd.f32 %v7500, %v7369
    %v7502 = vadd.f32 %v7501, %v7370
    %v7503 = vadd.f32 %v7502, %v7371
    %v7504 = vadd.f32 %v7503, %v7372
    %v7505 = vadd.f32 %v7504, %v7373
    %v7506 = vadd.f32 %v7505, %v7374
    %v7507 = vadd.f32 %v7506, %v7375
    %v7508 = vadd.f32 %v7507, %v7376
    %v7509 = vadd.f32 %v7508, %v7377
    %v7510 = vadd.f32 %v7509, %v7378
    %v7511 = vrot.slane %v7510, 4
    %v7512 = vadd.f32 %v7510, %v7511
    %v7513 = vrot.slane %v7512, 2
    %v7514 = vadd.f32 %v7512, %v7513
    %v7515 = vrot.slane %v7514, 1
    %v7516 = vadd.f32 %v7514, %v7515
    %v7517 = vadd.f32 %v7379, %v7380
    %v7518 = vadd.f32 %v7517, %v7381
    %v7519 = vadd.f32 %v7518, %v7382
    %v7520 = vadd.f32 %v7519, %v7383
    %v7521 = vadd.f32 %v7520, %v7384
    %v7522 = vadd.f32 %v7521, %v7385
    %v7523 = vadd.f32 %v7522, %v7386
    %v7524 = vadd.f32 %v7523, %v7387
    %v7525 = vadd.f32 %v7524, %v7388
    %v7526 = vadd.f32 %v7525, %v7389
    %v7527 = vadd.f32 %v7526, %v7390
    %v7528 = vadd.f32 %v7527, %v7391
    %v7529 = vadd.f32 %v7528, %v7392
    %v7530 = vadd.f32 %v7529, %v7393
    %v7531 = vadd.f32 %v7530, %v7394
    %v7532 = vrot.slane %v7531, 4
    %v7533 = vadd.f32 %v7531, %v7532
    %v7534 = vrot.slane %v7533, 2
    %v7535 = vadd.f32 %v7533, %v7534
    %v7536 = vrot.slane %v7535, 1
    %v7537 = vadd.f32 %v7535, %v7536
    %v7538 = vadd.f32 %v7395, %v7396
    %v7539 = vadd.f32 %v7538, %v7397
    %v7540 = vadd.f32 %v7539, %v7398
    %v7541 = vadd.f32 %v7540, %v7399
    %v7542 = vadd.f32 %v7541, %v7400
    %v7543 = vadd.f32 %v7542, %v7401
    %v7544 = vadd.f32 %v7543, %v7402
    %v7545 = vadd.f32 %v7544, %v7403
    %v7546 = vadd.f32 %v7545, %v7404
    %v7547 = vadd.f32 %v7546, %v7405
    %v7548 = vadd.f32 %v7547, %v7406
    %v7549 = vadd.f32 %v7548, %v7407
    %v7550 = vadd.f32 %v7549, %v7408
    %v7551 = vadd.f32 %v7550, %v7409
    %v7552 = vadd.f32 %v7551, %v7410
    %v7553 = vrot.slane %v7552, 4
    %v7554 = vadd.f32 %v7552, %v7553
    %v7555 = vrot.slane %v7554, 2
    %v7556 = vadd.f32 %v7554, %v7555
    %v7557 = vrot.slane %v7556, 1
    %v7558 = vadd.f32 %v7556, %v7557
    %v7559 = vadd.f32 %v7411, %v7412
    %v7560 = vadd.f32 %v7559, %v7413
    %v7561 = vadd.f32 %v7560, %v7414
    %v7562 = vadd.f32 %v7561, %v7415
    %v7563 = vadd.f32 %v7562, %v7416
    %v7564 = vadd.f32 %v7563, %v7417
    %v7565 = vadd.f32 %v7564, %v7418
    %v7566 = vadd.f32 %v7565, %v7419
    %v7567 = vadd.f32 %v7566, %v7420
    %v7568 = vadd.f32 %v7567, %v7421
    %v7569 = vadd.f32 %v7568, %v7422
    %v7570 = vadd.f32 %v7569, %v7423
    %v7571 = vadd.f32 %v7570, %v7424
    %v7572 = vadd.f32 %v7571, %v7425
    %v7573 = vadd.f32 %v7572, %v7426
    %v7574 = vrot.slane %v7573, 4
    %v7575 = vadd.f32 %v7573, %v7574
    %v7576 = vrot.slane %v7575, 2
    %v7577 = vadd.f32 %v7575, %v7576
    %v7578 = vrot.slane %v7577, 1
    %v7579 = vadd.f32 %v7577, %v7578
    %v7580 = vadd.f32 %v7427, %v7428
    %v7581 = vadd.f32 %v7580, %v7429
    %v7582 = vadd.f32 %v7581, %v7430
    %v7583 = vadd.f32 %v7582, %v7431
    %v7584 = vadd.f32 %v7583, %v7432
    %v7585 = vadd.f32 %v7584, %v7433
    %v7586 = vadd.f32 %v7585, %v7434
    %v7587 = vadd.f32 %v7586, %v7435
    %v7588 = vadd.f32 %v7587, %v7436
    %v7589 = vadd.f32 %v7588, %v7437
    %v7590 = vadd.f32 %v7589, %v7438
    %v7591 = vadd.f32 %v7590, %v7439
    %v7592 = vadd.f32 %v7591, %v7440
    %v7593 = vadd.f32 %v7592, %v7441
    %v7594 = vadd.f32 %v7593, %v7442
    %v7595 = vrot.slane %v7594, 4
    %v7596 = vadd.f32 %v7594, %v7595
    %v7597 = vrot.slane %v7596, 2
    %v7598 = vadd.f32 %v7596, %v7597
    %v7599 = vrot.slane %v7598, 1
    %v7600 = vadd.f32 %v7598, %v7599
    %v7601 = vadd.f32 %v7443, %v7444
    %v7602 = vadd.f32 %v7601, %v7445
    %v7603 = vadd.f32 %v7602, %v7446
    %v7604 = vadd.f32 %v7603, %v7447
    %v7605 = vadd.f32 %v7604, %v7448
    %v7606 = vadd.f32 %v7605, %v7449
    %v7607 = vadd.f32 %v7606, %v7450
    %v7608 = vadd.f32 %v7607, %v7451
    %v7609 = vadd.f32 %v7608, %v7452
    %v7610 = vadd.f32 %v7609, %v7453
    %v7611 = vadd.f32 %v7610, %v7454
    %v7612 = vadd.f32 %v7611, %v7455
    %v7613 = vadd.f32 %v7612, %v7456
    %v7614 = vadd.f32 %v7613, %v7457
    %v7615 = vadd.f32 %v7614, %v7458
    %v7616 = vrot.slane %v7615, 4
    %v7617 = vadd.f32 %v7615, %v7616
    %v7618 = vrot.slane %v7617, 2
    %v7619 = vadd.f32 %v7617, %v7618
    %v7620 = vrot.slane %v7619, 1
    %v7621 = vadd.f32 %v7619, %v7620
    %v7622 = vadd.f32 %v7459, %v7460
    %v7623 = vadd.f32 %v7622, %v7461
    %v7624 = vadd.f32 %v7623, %v7462
    %v7625 = vadd.f32 %v7624, %v7463
    %v7626 = vadd.f32 %v7625, %v7464
    %v7627 = vadd.f32 %v7626, %v7465
    %v7628 = vadd.f32 %v7627, %v7466
    %v7629 = vadd.f32 %v7628, %v7467
    %v7630 = vadd.f32 %v7629, %v7468
    %v7631 = vadd.f32 %v7630, %v7469
    %v7632 = vadd.f32 %v7631, %v7470
    %v7633 = vadd.f32 %v7632, %v7471
    %v7634 = vadd.f32 %v7633, %v7472
    %v7635 = vadd.f32 %v7634, %v7473
    %v7636 = vadd.f32 %v7635, %v7474
    %v7637 = vrot.slane %v7636, 4
    %v7638 = vadd.f32 %v7636, %v7637
    %v7639 = vrot.slane %v7638, 2
    %v7640 = vadd.f32 %v7638, %v7639
    %v7641 = vrot.slane %v7640, 1
    %v7642 = vadd.f32 %v7640, %v7641
    %v7651 = vsel %vm3011, %v7516, %v7495
    %v7652 = vsel %vm3013, %v7537, %v7651
    %v7653 = vsel %vm3015, %v7558, %v7652
    %v7654 = vsel %vm3017, %v7579, %v7653
    %v7655 = vsel %vm3019, %v7600, %v7654
    %v7656 = vsel %vm3021, %v7621, %v7655
    %v7657 = vsel %vm3023, %v7642, %v7656
    %7659 = vst [vmem:[#allocation4] sm:$0xff] %v7657
    %v7660 = vsel %vm3909, %v6810, 0.0
    %v7661 = vsel %vm3911, %v6793, 0.0
    %v7662 = vadd.f32 %v7660, %v7661
    %v7663 = vsel %vm3914, %v6802, 0.0
    %v7664 = vadd.f32 %v7662, %v7663
    %s7665 = scalar_lea.vmem [#allocation17], 8
    %7666 = vst [vmem:[%s7665] sm:$0xff] %v7664
    // Predicated region
    $region70: #{tpu_custom_call.1} parent=1 // pred_check
      _
    $region71: #{tpu_custom_call.1} parent=1 // pred_check_branch
      %7668 = sbr.rel (0) target = $region73
    $region72: #{tpu_custom_call.1} parent=1 // pred_region
      %s7670 = ssub.s32 256, 256
      %7671 = vsyncadd [#allocation8], %s7670
      %s7672 = sshll.u32 [#allocation17], 4
      %s7673 = int_to_ptr.vmem [resolvable:$true] %s7672
      %7678 = dma.vmem_to_hbm [thread:$0]  %s7673, 256, %s10, [#allocation8], 128, 128, 8
    $region73: #{tpu_custom_call.1} parent=1 // pred_fallthru
      _
    // Predicated region
    $region74: #{tpu_custom_call.1} parent=1 // pred_check
      _
    $region75: #{tpu_custom_call.1} parent=1 // pred_check_branch
      %7680 = sbr.rel (0) target = $region77
    $region76: #{tpu_custom_call.1} parent=1 // pred_region
      %7681 = dma.done [#allocation8], 256
    $region77: #{tpu_custom_call.1} parent=1 // pred_fallthru
      _
    %7682 = vsyncpa [#allocation7], 1
    %7683 = vsyncpa [#allocation10], 1
    %7684 = vsyncpa [#allocation13], 1
    %7685 = vsyncpa [#allocation16], 1
    %7686 = vsyncpa [#allocation8], 1

</llo_original>
